<compile_context>
chip_gen: v7x
topology: tpu7x:2x2x1
jax: 0.10.0
libtpu: 0.0.40
codegen_flags: <defaults>
</compile_context>

<pallas_src>
import functools
import math

import jax
import jax.numpy as jnp
from jax.experimental import pallas as pl
from jax.experimental.pallas import tpu as pltpu


# Order in which stacked parameters are passed to the kernel.
PARAM_ORDER = (
    "ft_w", "ft_b", "ln_g", "ln_b",
    "sa_wqkv", "sa_bqkv", "sa_wfc", "sa_bfc",
    "ea_wq", "ea_bq", "ea_wkv", "ea_bkv", "ea_wfc", "ea_bfc",
    "pf_w1", "pf_b1", "pf_w2", "pf_b2",
    "att_w", "att_b", "fc1_w", "fc1_b", "fc2_w", "fc2_b",
)


# ----------------------------------------------------------------------------
# Single fused decoder kernel: one grid step == one batch element.
# ----------------------------------------------------------------------------
def _decoder_kernel(trg_ref, src_ref,
                    ft_w, ft_b, ln_g, ln_b,
                    sa_wqkv, sa_bqkv, sa_wfc, sa_bfc,
                    ea_wq, ea_bq, ea_wkv, ea_bkv, ea_wfc, ea_bfc,
                    pf_w1, pf_b1, pf_w2, pf_b2,
                    att_w, att_b, fc1_w, fc1_b, fc2_w, fc2_b,
                    out_ref, *, n_layers, n_heads):
    f32 = jnp.float32
    x = trg_ref[0]                         # [Lt, H]
    src = src_ref[0]                       # [Ls, H]
    H = x.shape[-1]
    dh = H // n_heads
    inv_scale = 1.0 / math.sqrt(dh)

    def matmul(a, w, bias):
        return jnp.dot(a, w, preferred_element_type=f32) + bias

    def layer_norm(z, g, b):
        mu = jnp.mean(z, axis=-1, keepdims=True)
        var = jnp.mean(jnp.square(z - mu), axis=-1, keepdims=True)
        return (z - mu) * jax.lax.rsqrt(var + 1e-5) * g + b

    def split_heads(a):                    # [L, H] -> [nh, L, dh]
        return jnp.stack([a[:, h * dh:(h + 1) * dh] for h in range(n_heads)],
                         axis=0)

    def mha(q, k, v):
        qh, kh, vh = split_heads(q), split_heads(k), split_heads(v)
        # scores for all heads in one batched MXU contraction: [nh, Lq, Lk]
        s = jnp.einsum('hqd,hkd->hqk', qh, kh,
                       preferred_element_type=f32) * inv_scale
        s = s - jnp.max(s, axis=-1, keepdims=True)
        p = jnp.exp(s)
        p = p * pl.reciprocal(jnp.sum(p, axis=-1, keepdims=True), approx=True)
        ctx = jnp.einsum('hqk,hkd->hqd', p, vh,
                         preferred_element_type=f32)          # [nh, Lq, dh]
        # merge heads in-register; single lane-contiguous [Lq, H] value
        return jnp.concatenate([ctx[h] for h in range(n_heads)], axis=-1)

    # self.ft
    x = matmul(x, ft_w[...], ft_b[...])

    # decoder layers (n_layers is small & static -> unrolled)
    for l in range(n_layers):
        g, b = ln_g[l], ln_b[l]

        # --- self attention (fused QKV projection) ---
        qkv = matmul(x, sa_wqkv[l], sa_bqkv[l])                 # [Lt, 3H]
        ctx = mha(qkv[:, 0:H], qkv[:, H:2 * H], qkv[:, 2 * H:3 * H])
        ctx = matmul(ctx, sa_wfc[l], sa_bfc[l])
        x = layer_norm(x + ctx, g, b)

        # --- encoder (src) attention (fused KV projection) ---
        q = matmul(x, ea_wq[l], ea_bq[l])                       # [Lt, H]
        kv = matmul(src, ea_wkv[l], ea_bkv[l])                  # [Ls, 2H]
        ctx = mha(q, kv[:, 0:H], kv[:, H:2 * H])
        ctx = matmul(ctx, ea_wfc[l], ea_bfc[l])
        x = layer_norm(x + ctx, g, b)

        # --- positionwise feedforward (Conv1d k=1 == per-position linear) ---
        ff = jnp.maximum(matmul(x, pf_w1[l], pf_b1[l]), 0.0)
        ff = matmul(ff, pf_w2[l], pf_b2[l])
        x = layer_norm(x + ff, g, b)

    # attention pooling over atoms: softmax over seq dim, weighted sum
    score = matmul(x, att_w[...], att_b[...])                   # [Lt, 1]
    score = score - jnp.max(score, axis=0, keepdims=True)
    p = jnp.exp(score)
    p = p * pl.reciprocal(jnp.sum(p, axis=0, keepdims=True), approx=True)
    pooled = jnp.sum(p * x, axis=0, keepdims=True)              # [1, H]

    # label head
    h1 = jnp.maximum(matmul(pooled, fc1_w[...], fc1_b[...]), 0.0)   # [1, 256]
    label = matmul(h1, fc2_w[...], fc2_b[...])                      # [1, 2]
    out_ref[0] = label.astype(out_ref.dtype)


def _full_block_spec(shape):
    zeros = (0,) * len(shape)
    return pl.BlockSpec(shape, lambda b, _z=zeros: _z)


def decoder_forward(params, trg, src, n_heads):
    B, Lt, H = trg.shape
    _, Ls, _ = src.shape
    n_layers = params["ln_g"].shape[0]
    weights = [params[k] for k in PARAM_ORDER]

    in_specs = [
        pl.BlockSpec((1, Lt, H), lambda b: (b, 0, 0)),          # trg (per batch)
        pl.BlockSpec((1, Ls, H), lambda b: (b, 0, 0)),          # src (per batch)
    ] + [_full_block_spec(w.shape) for w in weights]            # all weights

    out = pl.pallas_call(
        functools.partial(_decoder_kernel, n_layers=n_layers, n_heads=n_heads),
        out_shape=jax.ShapeDtypeStruct((B, 1, 2), jnp.float32),
        grid=(B,),
        in_specs=in_specs,
        out_specs=pl.BlockSpec((1, 1, 2), lambda b: (b, 0, 0)),
        compiler_params=pltpu.CompilerParams(
            dimension_semantics=("parallel",)),
    )(trg, src, *weights)
    return out[:, 0, :]                                         # [B, 2]


# ----------------------------------------------------------------------------
# Parameter initialization (deterministic, synthetic, per-layer stacked)
# ----------------------------------------------------------------------------
def init_params(key, hid_dim, n_layers, pf_dim):
    H, PF, nl = hid_dim, pf_dim, n_layers
    keys = iter(jax.random.split(key, 64))

    def w(shape, fan_in):
        return jax.random.normal(next(keys), shape, jnp.float32) / math.sqrt(fan_in)

    def b(shape):
        return 0.01 * jax.random.normal(next(keys), shape, jnp.float32)

    return {
        "ft_w": w((H, H), H),               "ft_b": b((1, H)),
        "ln_g": jnp.ones((nl, 1, H), jnp.float32),
        "ln_b": jnp.zeros((nl, 1, H), jnp.float32),
        "sa_wqkv": w((nl, H, 3 * H), H),    "sa_bqkv": b((nl, 1, 3 * H)),
        "sa_wfc": w((nl, H, H), H),         "sa_bfc": b((nl, 1, H)),
        "ea_wq": w((nl, H, H), H),          "ea_bq": b((nl, 1, H)),
        "ea_wkv": w((nl, H, 2 * H), H),     "ea_bkv": b((nl, 1, 2 * H)),
        "ea_wfc": w((nl, H, H), H),         "ea_bfc": b((nl, 1, H)),
        "pf_w1": w((nl, H, PF), H),         "pf_b1": b((nl, 1, PF)),
        "pf_w2": w((nl, PF, H), PF),        "pf_b2": b((nl, 1, H)),
        "att_w": w((H, 1), H),              "att_b": b((1, 1)),
        "fc1_w": w((H, 256), H),            "fc1_b": b((1, 256)),
        "fc2_w": w((256, 2), 256),          "fc2_b": b((1, 2)),
    }


# ----------------------------------------------------------------------------
if __name__ == "__main__":
    B, L_TRG, L_SRC = 2, 8, 12
    HID, N_LAYERS, N_HEADS, PF_DIM = 32, 2, 4, 64

    root = jax.random.PRNGKey(0)
    k_p, k_t, k_s = jax.random.split(root, 3)

    params = init_params(k_p, HID, N_LAYERS, PF_DIM)
    trg = jax.random.normal(k_t, (B, L_TRG, HID), jnp.float32)   # compound atoms
    src = jax.random.normal(k_s, (B, L_SRC, HID), jnp.float32)   # protein features

    label = decoder_forward(params, trg, src, N_HEADS)
    label = jax.block_until_ready(label)

    assert label.shape == (B, 2), label.shape
    assert bool(jnp.all(jnp.isfinite(label)))
    print("KERNEL_OK")
</pallas_src>

<mosaic_0001>
module attributes {stable_mosaic.version = 11 : i64} {
  func.func @_decoder_kernel(%arg0: i32, %arg1: memref<1x8x32xf32, #tpu.memory_space<vmem>>, %arg2: memref<1x12x32xf32, #tpu.memory_space<vmem>>, %arg3: memref<32x32xf32, #tpu.memory_space<vmem>>, %arg4: memref<1x32xf32, #tpu.memory_space<vmem>>, %arg5: memref<2x1x32xf32, #tpu.memory_space<vmem>>, %arg6: memref<2x1x32xf32, #tpu.memory_space<vmem>>, %arg7: memref<2x32x96xf32, #tpu.memory_space<vmem>>, %arg8: memref<2x1x96xf32, #tpu.memory_space<vmem>>, %arg9: memref<2x32x32xf32, #tpu.memory_space<vmem>>, %arg10: memref<2x1x32xf32, #tpu.memory_space<vmem>>, %arg11: memref<2x32x32xf32, #tpu.memory_space<vmem>>, %arg12: memref<2x1x32xf32, #tpu.memory_space<vmem>>, %arg13: memref<2x32x64xf32, #tpu.memory_space<vmem>>, %arg14: memref<2x1x64xf32, #tpu.memory_space<vmem>>, %arg15: memref<2x32x32xf32, #tpu.memory_space<vmem>>, %arg16: memref<2x1x32xf32, #tpu.memory_space<vmem>>, %arg17: memref<2x32x64xf32, #tpu.memory_space<vmem>>, %arg18: memref<2x1x64xf32, #tpu.memory_space<vmem>>, %arg19: memref<2x64x32xf32, #tpu.memory_space<vmem>>, %arg20: memref<2x1x32xf32, #tpu.memory_space<vmem>>, %arg21: memref<32x1xf32, #tpu.memory_space<vmem>>, %arg22: memref<1x1xf32, #tpu.memory_space<vmem>>, %arg23: memref<32x256xf32, #tpu.memory_space<vmem>>, %arg24: memref<1x256xf32, #tpu.memory_space<vmem>>, %arg25: memref<256x2xf32, #tpu.memory_space<vmem>>, %arg26: memref<1x2xf32, #tpu.memory_space<vmem>>, %arg27: memref<1x1x2xf32, #tpu.memory_space<vmem>>) attributes {dimension_semantics = [#tpu.dimension_semantics<parallel>], iteration_bounds = array<i64: 2>, scalar_prefetch = 0 : i64, scratch_operands = 0 : i64, tpu.core_type = #tpu.core_type<tc>, window_params = [{transform_indices = @transform_0, window_bounds = array<i64: 1, 8, 32>}, {transform_indices = @transform_1, window_bounds = array<i64: 1, 12, 32>}, {pipeline_mode = #tpu.pipeline_mode<synchronous>, transform_indices = @transform_2, window_bounds = array<i64: 32, 32>}, {pipeline_mode = #tpu.pipeline_mode<synchronous>, transform_indices = @transform_3, window_bounds = array<i64: 1, 32>}, {pipeline_mode = #tpu.pipeline_mode<synchronous>, transform_indices = @transform_4, window_bounds = array<i64: 2, 1, 32>}, {pipeline_mode = #tpu.pipeline_mode<synchronous>, transform_indices = @transform_5, window_bounds = array<i64: 2, 1, 32>}, {pipeline_mode = #tpu.pipeline_mode<synchronous>, transform_indices = @transform_6, window_bounds = array<i64: 2, 32, 96>}, {pipeline_mode = #tpu.pipeline_mode<synchronous>, transform_indices = @transform_7, window_bounds = array<i64: 2, 1, 96>}, {pipeline_mode = #tpu.pipeline_mode<synchronous>, transform_indices = @transform_8, window_bounds = array<i64: 2, 32, 32>}, {pipeline_mode = #tpu.pipeline_mode<synchronous>, transform_indices = @transform_9, window_bounds = array<i64: 2, 1, 32>}, {pipeline_mode = #tpu.pipeline_mode<synchronous>, transform_indices = @transform_10, window_bounds = array<i64: 2, 32, 32>}, {pipeline_mode = #tpu.pipeline_mode<synchronous>, transform_indices = @transform_11, window_bounds = array<i64: 2, 1, 32>}, {pipeline_mode = #tpu.pipeline_mode<synchronous>, transform_indices = @transform_12, window_bounds = array<i64: 2, 32, 64>}, {pipeline_mode = #tpu.pipeline_mode<synchronous>, transform_indices = @transform_13, window_bounds = array<i64: 2, 1, 64>}, {pipeline_mode = #tpu.pipeline_mode<synchronous>, transform_indices = @transform_14, window_bounds = array<i64: 2, 32, 32>}, {pipeline_mode = #tpu.pipeline_mode<synchronous>, transform_indices = @transform_15, window_bounds = array<i64: 2, 1, 32>}, {pipeline_mode = #tpu.pipeline_mode<synchronous>, transform_indices = @transform_16, window_bounds = array<i64: 2, 32, 64>}, {pipeline_mode = #tpu.pipeline_mode<synchronous>, transform_indices = @transform_17, window_bounds = array<i64: 2, 1, 64>}, {pipeline_mode = #tpu.pipeline_mode<synchronous>, transform_indices = @transform_18, window_bounds = array<i64: 2, 64, 32>}, {pipeline_mode = #tpu.pipeline_mode<synchronous>, transform_indices = @transform_19, window_bounds = array<i64: 2, 1, 32>}, {pipeline_mode = #tpu.pipeline_mode<synchronous>, transform_indices = @transform_20, window_bounds = array<i64: 32, 1>}, {pipeline_mode = #tpu.pipeline_mode<synchronous>, transform_indices = @transform_21, window_bounds = array<i64: 1, 1>}, {pipeline_mode = #tpu.pipeline_mode<synchronous>, transform_indices = @transform_22, window_bounds = array<i64: 32, 256>}, {pipeline_mode = #tpu.pipeline_mode<synchronous>, transform_indices = @transform_23, window_bounds = array<i64: 1, 256>}, {pipeline_mode = #tpu.pipeline_mode<synchronous>, transform_indices = @transform_24, window_bounds = array<i64: 256, 2>}, {pipeline_mode = #tpu.pipeline_mode<synchronous>, transform_indices = @transform_25, window_bounds = array<i64: 1, 2>}, {transform_indices = @transform_26, window_bounds = array<i64: 1, 1, 2>}]} {
    %c0 = arith.constant 0 : index
    %c0_0 = arith.constant 0 : index
    %c0_1 = arith.constant 0 : index
    %0 = vector.load %arg1[%c0, %c0_0, %c0_1] : memref<1x8x32xf32, #tpu.memory_space<vmem>>, vector<1x8x32xf32>
    %1 = vector.shape_cast %0 : vector<1x8x32xf32> to vector<8x32xf32>
    %c0_2 = arith.constant 0 : index
    %c0_3 = arith.constant 0 : index
    %c0_4 = arith.constant 0 : index
    %2 = vector.load %arg2[%c0_2, %c0_3, %c0_4] : memref<1x12x32xf32, #tpu.memory_space<vmem>>, vector<1x12x32xf32>
    %3 = vector.shape_cast %2 : vector<1x12x32xf32> to vector<12x32xf32>
    %c0_5 = arith.constant 0 : index
    %c0_6 = arith.constant 0 : index
    %4 = vector.load %arg3[%c0_5, %c0_6] : memref<32x32xf32, #tpu.memory_space<vmem>>, vector<32x32xf32>
    %c0_7 = arith.constant 0 : index
    %c0_8 = arith.constant 0 : index
    %5 = vector.load %arg4[%c0_7, %c0_8] : memref<1x32xf32, #tpu.memory_space<vmem>>, vector<1x32xf32>
    %cst = arith.constant dense<0.000000e+00> : vector<8x32xf32>
    %6 = tpu.matmul %1, %4, %cst {dimension_numbers = #tpu.dot_dimension_numbers<[1], [0], [0], [1], [0, 0, 1, 1], [], []>} : vector<8x32xf32>, vector<32x32xf32>, vector<8x32xf32> -> vector<8x32xf32>
    %7 = vector.broadcast %5 : vector<1x32xf32> to vector<8x32xf32>
    %8 = arith.addf %6, %7 : vector<8x32xf32>
    %c0_9 = arith.constant 0 : index
    %c0_10 = arith.constant 0 : index
    %c0_11 = arith.constant 0 : index
    %9 = vector.load %arg5[%c0_9, %c0_10, %c0_11] : memref<2x1x32xf32, #tpu.memory_space<vmem>>, vector<1x1x32xf32>
    %10 = vector.shape_cast %9 : vector<1x1x32xf32> to vector<1x32xf32>
    %c0_12 = arith.constant 0 : index
    %c0_13 = arith.constant 0 : index
    %c0_14 = arith.constant 0 : index
    %11 = vector.load %arg6[%c0_12, %c0_13, %c0_14] : memref<2x1x32xf32, #tpu.memory_space<vmem>>, vector<1x1x32xf32>
    %12 = vector.shape_cast %11 : vector<1x1x32xf32> to vector<1x32xf32>
    %c0_15 = arith.constant 0 : index
    %c0_16 = arith.constant 0 : index
    %c0_17 = arith.constant 0 : index
    %13 = vector.load %arg7[%c0_15, %c0_16, %c0_17] : memref<2x32x96xf32, #tpu.memory_space<vmem>>, vector<1x32x96xf32>
    %14 = vector.shape_cast %13 : vector<1x32x96xf32> to vector<32x96xf32>
    %c0_18 = arith.constant 0 : index
    %c0_19 = arith.constant 0 : index
    %c0_20 = arith.constant 0 : index
    %15 = vector.load %arg8[%c0_18, %c0_19, %c0_20] : memref<2x1x96xf32, #tpu.memory_space<vmem>>, vector<1x1x96xf32>
    %16 = vector.shape_cast %15 : vector<1x1x96xf32> to vector<1x96xf32>
    %cst_21 = arith.constant dense<0.000000e+00> : vector<8x96xf32>
    %17 = tpu.matmul %8, %14, %cst_21 {dimension_numbers = #tpu.dot_dimension_numbers<[1], [0], [0], [1], [0, 0, 1, 1], [], []>} : vector<8x32xf32>, vector<32x96xf32>, vector<8x96xf32> -> vector<8x96xf32>
    %18 = vector.broadcast %16 : vector<1x96xf32> to vector<8x96xf32>
    %19 = arith.addf %17, %18 : vector<8x96xf32>
    %20 = vector.extract_strided_slice %19 {offsets = [0, 0], sizes = [8, 32], strides = [1, 1]} : vector<8x96xf32> to vector<8x32xf32>
    %21 = vector.extract_strided_slice %19 {offsets = [0, 32], sizes = [8, 32], strides = [1, 1]} : vector<8x96xf32> to vector<8x32xf32>
    %22 = vector.extract_strided_slice %19 {offsets = [0, 64], sizes = [8, 32], strides = [1, 1]} : vector<8x96xf32> to vector<8x32xf32>
    %23 = vector.extract_strided_slice %20 {offsets = [0, 0], sizes = [8, 8], strides = [1, 1]} : vector<8x32xf32> to vector<8x8xf32>
    %24 = vector.extract_strided_slice %20 {offsets = [0, 8], sizes = [8, 8], strides = [1, 1]} : vector<8x32xf32> to vector<8x8xf32>
    %25 = vector.extract_strided_slice %20 {offsets = [0, 16], sizes = [8, 8], strides = [1, 1]} : vector<8x32xf32> to vector<8x8xf32>
    %26 = vector.extract_strided_slice %20 {offsets = [0, 24], sizes = [8, 8], strides = [1, 1]} : vector<8x32xf32> to vector<8x8xf32>
    %27 = vector.shape_cast %23 : vector<8x8xf32> to vector<1x8x8xf32>
    %28 = vector.shape_cast %24 : vector<8x8xf32> to vector<1x8x8xf32>
    %29 = vector.shape_cast %25 : vector<8x8xf32> to vector<1x8x8xf32>
    %30 = vector.shape_cast %26 : vector<8x8xf32> to vector<1x8x8xf32>
    %31 = tpu.concatenate %27, %28, %29, %30 in 0 : vector<1x8x8xf32>, vector<1x8x8xf32>, vector<1x8x8xf32>, vector<1x8x8xf32> -> vector<4x8x8xf32>
    %32 = vector.extract_strided_slice %21 {offsets = [0, 0], sizes = [8, 8], strides = [1, 1]} : vector<8x32xf32> to vector<8x8xf32>
    %33 = vector.extract_strided_slice %21 {offsets = [0, 8], sizes = [8, 8], strides = [1, 1]} : vector<8x32xf32> to vector<8x8xf32>
    %34 = vector.extract_strided_slice %21 {offsets = [0, 16], sizes = [8, 8], strides = [1, 1]} : vector<8x32xf32> to vector<8x8xf32>
    %35 = vector.extract_strided_slice %21 {offsets = [0, 24], sizes = [8, 8], strides = [1, 1]} : vector<8x32xf32> to vector<8x8xf32>
    %36 = vector.shape_cast %32 : vector<8x8xf32> to vector<1x8x8xf32>
    %37 = vector.shape_cast %33 : vector<8x8xf32> to vector<1x8x8xf32>
    %38 = vector.shape_cast %34 : vector<8x8xf32> to vector<1x8x8xf32>
    %39 = vector.shape_cast %35 : vector<8x8xf32> to vector<1x8x8xf32>
    %40 = tpu.concatenate %36, %37, %38, %39 in 0 : vector<1x8x8xf32>, vector<1x8x8xf32>, vector<1x8x8xf32>, vector<1x8x8xf32> -> vector<4x8x8xf32>
    %41 = vector.extract_strided_slice %22 {offsets = [0, 0], sizes = [8, 8], strides = [1, 1]} : vector<8x32xf32> to vector<8x8xf32>
    %42 = vector.extract_strided_slice %22 {offsets = [0, 8], sizes = [8, 8], strides = [1, 1]} : vector<8x32xf32> to vector<8x8xf32>
    %43 = vector.extract_strided_slice %22 {offsets = [0, 16], sizes = [8, 8], strides = [1, 1]} : vector<8x32xf32> to vector<8x8xf32>
    %44 = vector.extract_strided_slice %22 {offsets = [0, 24], sizes = [8, 8], strides = [1, 1]} : vector<8x32xf32> to vector<8x8xf32>
    %45 = vector.shape_cast %41 : vector<8x8xf32> to vector<1x8x8xf32>
    %46 = vector.shape_cast %42 : vector<8x8xf32> to vector<1x8x8xf32>
    %47 = vector.shape_cast %43 : vector<8x8xf32> to vector<1x8x8xf32>
    %48 = vector.shape_cast %44 : vector<8x8xf32> to vector<1x8x8xf32>
    %49 = tpu.concatenate %45, %46, %47, %48 in 0 : vector<1x8x8xf32>, vector<1x8x8xf32>, vector<1x8x8xf32>, vector<1x8x8xf32> -> vector<4x8x8xf32>
    "tpu.trace_start"() <{level = 10 : i32, message = "hqd,hkd->hqk"}> : () -> ()
    %cst_22 = arith.constant dense<0.000000e+00> : vector<4x8x8xf32>
    %50 = tpu.matmul %31, %40, %cst_22 {dimension_numbers = #tpu.dot_dimension_numbers<[2], [2], [1], [1], [0, 0, 0, 1, 1, 1], [0], [0]>} : vector<4x8x8xf32>, vector<4x8x8xf32>, vector<4x8x8xf32> -> vector<4x8x8xf32>
    "tpu.trace_stop"() : () -> ()
    %cst_23 = arith.constant 0.353553385 : f32
    %51 = vector.broadcast %cst_23 : f32 to vector<4x8x8xf32>
    %52 = arith.mulf %50, %51 : vector<4x8x8xf32>
    %cst_24 = arith.constant dense<0xFF800000> : vector<4x8xf32>
    %53 = vector.multi_reduction <maximumf>, %52, %cst_24 [2] : vector<4x8x8xf32> to vector<4x8xf32>
    %54 = vector.shape_cast %53 : vector<4x8xf32> to vector<4x8x1xf32>
    %55 = vector.broadcast %54 : vector<4x8x1xf32> to vector<4x8x8xf32>
    %56 = arith.subf %52, %55 : vector<4x8x8xf32>
    %57 = math.exp %56 : vector<4x8x8xf32>
    %cst_25 = arith.constant dense<0.000000e+00> : vector<4x8xf32>
    %58 = vector.multi_reduction <add>, %57, %cst_25 [2] : vector<4x8x8xf32> to vector<4x8xf32>
    %59 = vector.shape_cast %58 : vector<4x8xf32> to vector<4x8x1xf32>
    %60 = tpu.reciprocal %59 {approx = true} : vector<4x8x1xf32> -> vector<4x8x1xf32>
    %61 = vector.broadcast %60 : vector<4x8x1xf32> to vector<4x8x8xf32>
    %62 = arith.mulf %57, %61 : vector<4x8x8xf32>
    "tpu.trace_start"() <{level = 10 : i32, message = "hqk,hkd->hqd"}> : () -> ()
    %cst_26 = arith.constant dense<0.000000e+00> : vector<4x8x8xf32>
    %63 = tpu.matmul %62, %49, %cst_26 {dimension_numbers = #tpu.dot_dimension_numbers<[2], [1], [1], [2], [0, 0, 0, 1, 1, 2], [0], [0]>} : vector<4x8x8xf32>, vector<4x8x8xf32>, vector<4x8x8xf32> -> vector<4x8x8xf32>
    "tpu.trace_stop"() : () -> ()
    %64 = vector.extract_strided_slice %63 {offsets = [0, 0, 0], sizes = [1, 8, 8], strides = [1, 1, 1]} : vector<4x8x8xf32> to vector<1x8x8xf32>
    %65 = vector.shape_cast %64 : vector<1x8x8xf32> to vector<8x8xf32>
    %66 = vector.extract_strided_slice %63 {offsets = [1, 0, 0], sizes = [1, 8, 8], strides = [1, 1, 1]} : vector<4x8x8xf32> to vector<1x8x8xf32>
    %67 = vector.shape_cast %66 : vector<1x8x8xf32> to vector<8x8xf32>
    %68 = vector.extract_strided_slice %63 {offsets = [2, 0, 0], sizes = [1, 8, 8], strides = [1, 1, 1]} : vector<4x8x8xf32> to vector<1x8x8xf32>
    %69 = vector.shape_cast %68 : vector<1x8x8xf32> to vector<8x8xf32>
    %70 = vector.extract_strided_slice %63 {offsets = [3, 0, 0], sizes = [1, 8, 8], strides = [1, 1, 1]} : vector<4x8x8xf32> to vector<1x8x8xf32>
    %71 = vector.shape_cast %70 : vector<1x8x8xf32> to vector<8x8xf32>
    %72 = tpu.concatenate %65, %67, %69, %71 in 1 : vector<8x8xf32>, vector<8x8xf32>, vector<8x8xf32>, vector<8x8xf32> -> vector<8x32xf32>
    %c0_27 = arith.constant 0 : index
    %c0_28 = arith.constant 0 : index
    %c0_29 = arith.constant 0 : index
    %73 = vector.load %arg9[%c0_27, %c0_28, %c0_29] : memref<2x32x32xf32, #tpu.memory_space<vmem>>, vector<1x32x32xf32>
    %74 = vector.shape_cast %73 : vector<1x32x32xf32> to vector<32x32xf32>
    %c0_30 = arith.constant 0 : index
    %c0_31 = arith.constant 0 : index
    %c0_32 = arith.constant 0 : index
    %75 = vector.load %arg10[%c0_30, %c0_31, %c0_32] : memref<2x1x32xf32, #tpu.memory_space<vmem>>, vector<1x1x32xf32>
    %76 = vector.shape_cast %75 : vector<1x1x32xf32> to vector<1x32xf32>
    %cst_33 = arith.constant dense<0.000000e+00> : vector<8x32xf32>
    %77 = tpu.matmul %72, %74, %cst_33 {dimension_numbers = #tpu.dot_dimension_numbers<[1], [0], [0], [1], [0, 0, 1, 1], [], []>} : vector<8x32xf32>, vector<32x32xf32>, vector<8x32xf32> -> vector<8x32xf32>
    %78 = vector.broadcast %76 : vector<1x32xf32> to vector<8x32xf32>
    %79 = arith.addf %77, %78 : vector<8x32xf32>
    %80 = arith.addf %8, %79 : vector<8x32xf32>
    %cst_34 = arith.constant dense<0.000000e+00> : vector<8xf32>
    %81 = vector.multi_reduction <add>, %80, %cst_34 [1] : vector<8x32xf32> to vector<8xf32>
    %82 = vector.shape_cast %81 : vector<8xf32> to vector<8x1xf32>
    %cst_35 = arith.constant 3.200000e+01 : f32
    %83 = vector.broadcast %cst_35 : f32 to vector<8x1xf32>
    %84 = arith.divf %82, %83 : vector<8x1xf32>
    %85 = vector.broadcast %84 : vector<8x1xf32> to vector<8x32xf32>
    %86 = arith.subf %80, %85 : vector<8x32xf32>
    %87 = arith.mulf %86, %86 : vector<8x32xf32>
    %cst_36 = arith.constant dense<0.000000e+00> : vector<8xf32>
    %88 = vector.multi_reduction <add>, %87, %cst_36 [1] : vector<8x32xf32> to vector<8xf32>
    %89 = vector.shape_cast %88 : vector<8xf32> to vector<8x1xf32>
    %cst_37 = arith.constant 3.200000e+01 : f32
    %90 = vector.broadcast %cst_37 : f32 to vector<8x1xf32>
    %91 = arith.divf %89, %90 : vector<8x1xf32>
    %92 = vector.broadcast %84 : vector<8x1xf32> to vector<8x32xf32>
    %93 = arith.subf %80, %92 : vector<8x32xf32>
    %cst_38 = arith.constant 9.99999974E-6 : f32
    %94 = vector.broadcast %cst_38 : f32 to vector<8x1xf32>
    %95 = arith.addf %91, %94 : vector<8x1xf32>
    %96 = math.rsqrt %95 : vector<8x1xf32>
    %97 = vector.broadcast %96 : vector<8x1xf32> to vector<8x32xf32>
    %98 = arith.mulf %93, %97 : vector<8x32xf32>
    %99 = vector.broadcast %10 : vector<1x32xf32> to vector<8x32xf32>
    %100 = arith.mulf %98, %99 : vector<8x32xf32>
    %101 = vector.broadcast %12 : vector<1x32xf32> to vector<8x32xf32>
    %102 = arith.addf %100, %101 : vector<8x32xf32>
    %c0_39 = arith.constant 0 : index
    %c0_40 = arith.constant 0 : index
    %c0_41 = arith.constant 0 : index
    %103 = vector.load %arg11[%c0_39, %c0_40, %c0_41] : memref<2x32x32xf32, #tpu.memory_space<vmem>>, vector<1x32x32xf32>
    %104 = vector.shape_cast %103 : vector<1x32x32xf32> to vector<32x32xf32>
    %c0_42 = arith.constant 0 : index
    %c0_43 = arith.constant 0 : index
    %c0_44 = arith.constant 0 : index
    %105 = vector.load %arg12[%c0_42, %c0_43, %c0_44] : memref<2x1x32xf32, #tpu.memory_space<vmem>>, vector<1x1x32xf32>
    %106 = vector.shape_cast %105 : vector<1x1x32xf32> to vector<1x32xf32>
    %cst_45 = arith.constant dense<0.000000e+00> : vector<8x32xf32>
    %107 = tpu.matmul %102, %104, %cst_45 {dimension_numbers = #tpu.dot_dimension_numbers<[1], [0], [0], [1], [0, 0, 1, 1], [], []>} : vector<8x32xf32>, vector<32x32xf32>, vector<8x32xf32> -> vector<8x32xf32>
    %108 = vector.broadcast %106 : vector<1x32xf32> to vector<8x32xf32>
    %109 = arith.addf %107, %108 : vector<8x32xf32>
    %c0_46 = arith.constant 0 : index
    %c0_47 = arith.constant 0 : index
    %c0_48 = arith.constant 0 : index
    %110 = vector.load %arg13[%c0_46, %c0_47, %c0_48] : memref<2x32x64xf32, #tpu.memory_space<vmem>>, vector<1x32x64xf32>
    %111 = vector.shape_cast %110 : vector<1x32x64xf32> to vector<32x64xf32>
    %c0_49 = arith.constant 0 : index
    %c0_50 = arith.constant 0 : index
    %c0_51 = arith.constant 0 : index
    %112 = vector.load %arg14[%c0_49, %c0_50, %c0_51] : memref<2x1x64xf32, #tpu.memory_space<vmem>>, vector<1x1x64xf32>
    %113 = vector.shape_cast %112 : vector<1x1x64xf32> to vector<1x64xf32>
    %cst_52 = arith.constant dense<0.000000e+00> : vector<12x64xf32>
    %114 = tpu.matmul %3, %111, %cst_52 {dimension_numbers = #tpu.dot_dimension_numbers<[1], [0], [0], [1], [0, 0, 1, 1], [], []>} : vector<12x32xf32>, vector<32x64xf32>, vector<12x64xf32> -> vector<12x64xf32>
    %115 = vector.broadcast %113 : vector<1x64xf32> to vector<12x64xf32>
    %116 = arith.addf %114, %115 : vector<12x64xf32>
    %117 = vector.extract_strided_slice %116 {offsets = [0, 0], sizes = [12, 32], strides = [1, 1]} : vector<12x64xf32> to vector<12x32xf32>
    %118 = vector.extract_strided_slice %116 {offsets = [0, 32], sizes = [12, 32], strides = [1, 1]} : vector<12x64xf32> to vector<12x32xf32>
    %119 = vector.extract_strided_slice %109 {offsets = [0, 0], sizes = [8, 8], strides = [1, 1]} : vector<8x32xf32> to vector<8x8xf32>
    %120 = vector.extract_strided_slice %109 {offsets = [0, 8], sizes = [8, 8], strides = [1, 1]} : vector<8x32xf32> to vector<8x8xf32>
    %121 = vector.extract_strided_slice %109 {offsets = [0, 16], sizes = [8, 8], strides = [1, 1]} : vector<8x32xf32> to vector<8x8xf32>
    %122 = vector.extract_strided_slice %109 {offsets = [0, 24], sizes = [8, 8], strides = [1, 1]} : vector<8x32xf32> to vector<8x8xf32>
    %123 = vector.shape_cast %119 : vector<8x8xf32> to vector<1x8x8xf32>
    %124 = vector.shape_cast %120 : vector<8x8xf32> to vector<1x8x8xf32>
    %125 = vector.shape_cast %121 : vector<8x8xf32> to vector<1x8x8xf32>
    %126 = vector.shape_cast %122 : vector<8x8xf32> to vector<1x8x8xf32>
    %127 = tpu.concatenate %123, %124, %125, %126 in 0 : vector<1x8x8xf32>, vector<1x8x8xf32>, vector<1x8x8xf32>, vector<1x8x8xf32> -> vector<4x8x8xf32>
    %128 = vector.extract_strided_slice %117 {offsets = [0, 0], sizes = [12, 8], strides = [1, 1]} : vector<12x32xf32> to vector<12x8xf32>
    %129 = vector.extract_strided_slice %117 {offsets = [0, 8], sizes = [12, 8], strides = [1, 1]} : vector<12x32xf32> to vector<12x8xf32>
    %130 = vector.extract_strided_slice %117 {offsets = [0, 16], sizes = [12, 8], strides = [1, 1]} : vector<12x32xf32> to vector<12x8xf32>
    %131 = vector.extract_strided_slice %117 {offsets = [0, 24], sizes = [12, 8], strides = [1, 1]} : vector<12x32xf32> to vector<12x8xf32>
    %132 = vector.shape_cast %128 : vector<12x8xf32> to vector<1x12x8xf32>
    %133 = vector.shape_cast %129 : vector<12x8xf32> to vector<1x12x8xf32>
    %134 = vector.shape_cast %130 : vector<12x8xf32> to vector<1x12x8xf32>
    %135 = vector.shape_cast %131 : vector<12x8xf32> to vector<1x12x8xf32>
    %136 = tpu.concatenate %132, %133, %134, %135 in 0 : vector<1x12x8xf32>, vector<1x12x8xf32>, vector<1x12x8xf32>, vector<1x12x8xf32> -> vector<4x12x8xf32>
    %137 = vector.extract_strided_slice %118 {offsets = [0, 0], sizes = [12, 8], strides = [1, 1]} : vector<12x32xf32> to vector<12x8xf32>
    %138 = vector.extract_strided_slice %118 {offsets = [0, 8], sizes = [12, 8], strides = [1, 1]} : vector<12x32xf32> to vector<12x8xf32>
    %139 = vector.extract_strided_slice %118 {offsets = [0, 16], sizes = [12, 8], strides = [1, 1]} : vector<12x32xf32> to vector<12x8xf32>
    %140 = vector.extract_strided_slice %118 {offsets = [0, 24], sizes = [12, 8], strides = [1, 1]} : vector<12x32xf32> to vector<12x8xf32>
    %141 = vector.shape_cast %137 : vector<12x8xf32> to vector<1x12x8xf32>
    %142 = vector.shape_cast %138 : vector<12x8xf32> to vector<1x12x8xf32>
    %143 = vector.shape_cast %139 : vector<12x8xf32> to vector<1x12x8xf32>
    %144 = vector.shape_cast %140 : vector<12x8xf32> to vector<1x12x8xf32>
    %145 = tpu.concatenate %141, %142, %143, %144 in 0 : vector<1x12x8xf32>, vector<1x12x8xf32>, vector<1x12x8xf32>, vector<1x12x8xf32> -> vector<4x12x8xf32>
    "tpu.trace_start"() <{level = 10 : i32, message = "hqd,hkd->hqk"}> : () -> ()
    %cst_53 = arith.constant dense<0.000000e+00> : vector<4x8x12xf32>
    %146 = tpu.matmul %127, %136, %cst_53 {dimension_numbers = #tpu.dot_dimension_numbers<[2], [2], [1], [1], [0, 0, 0, 1, 1, 1], [0], [0]>} : vector<4x8x8xf32>, vector<4x12x8xf32>, vector<4x8x12xf32> -> vector<4x8x12xf32>
    "tpu.trace_stop"() : () -> ()
    %cst_54 = arith.constant 0.353553385 : f32
    %147 = vector.broadcast %cst_54 : f32 to vector<4x8x12xf32>
    %148 = arith.mulf %146, %147 : vector<4x8x12xf32>
    %cst_55 = arith.constant dense<0xFF800000> : vector<4x8xf32>
    %149 = vector.multi_reduction <maximumf>, %148, %cst_55 [2] : vector<4x8x12xf32> to vector<4x8xf32>
    %150 = vector.shape_cast %149 : vector<4x8xf32> to vector<4x8x1xf32>
    %151 = vector.broadcast %150 : vector<4x8x1xf32> to vector<4x8x12xf32>
    %152 = arith.subf %148, %151 : vector<4x8x12xf32>
    %153 = math.exp %152 : vector<4x8x12xf32>
    %cst_56 = arith.constant dense<0.000000e+00> : vector<4x8xf32>
    %154 = vector.multi_reduction <add>, %153, %cst_56 [2] : vector<4x8x12xf32> to vector<4x8xf32>
    %155 = vector.shape_cast %154 : vector<4x8xf32> to vector<4x8x1xf32>
    %156 = tpu.reciprocal %155 {approx = true} : vector<4x8x1xf32> -> vector<4x8x1xf32>
    %157 = vector.broadcast %156 : vector<4x8x1xf32> to vector<4x8x12xf32>
    %158 = arith.mulf %153, %157 : vector<4x8x12xf32>
    "tpu.trace_start"() <{level = 10 : i32, message = "hqk,hkd->hqd"}> : () -> ()
    %cst_57 = arith.constant dense<0.000000e+00> : vector<4x8x8xf32>
    %159 = tpu.matmul %158, %145, %cst_57 {dimension_numbers = #tpu.dot_dimension_numbers<[2], [1], [1], [2], [0, 0, 0, 1, 1, 2], [0], [0]>} : vector<4x8x12xf32>, vector<4x12x8xf32>, vector<4x8x8xf32> -> vector<4x8x8xf32>
    "tpu.trace_stop"() : () -> ()
    %160 = vector.extract_strided_slice %159 {offsets = [0, 0, 0], sizes = [1, 8, 8], strides = [1, 1, 1]} : vector<4x8x8xf32> to vector<1x8x8xf32>
    %161 = vector.shape_cast %160 : vector<1x8x8xf32> to vector<8x8xf32>
    %162 = vector.extract_strided_slice %159 {offsets = [1, 0, 0], sizes = [1, 8, 8], strides = [1, 1, 1]} : vector<4x8x8xf32> to vector<1x8x8xf32>
    %163 = vector.shape_cast %162 : vector<1x8x8xf32> to vector<8x8xf32>
    %164 = vector.extract_strided_slice %159 {offsets = [2, 0, 0], sizes = [1, 8, 8], strides = [1, 1, 1]} : vector<4x8x8xf32> to vector<1x8x8xf32>
    %165 = vector.shape_cast %164 : vector<1x8x8xf32> to vector<8x8xf32>
    %166 = vector.extract_strided_slice %159 {offsets = [3, 0, 0], sizes = [1, 8, 8], strides = [1, 1, 1]} : vector<4x8x8xf32> to vector<1x8x8xf32>
    %167 = vector.shape_cast %166 : vector<1x8x8xf32> to vector<8x8xf32>
    %168 = tpu.concatenate %161, %163, %165, %167 in 1 : vector<8x8xf32>, vector<8x8xf32>, vector<8x8xf32>, vector<8x8xf32> -> vector<8x32xf32>
    %c0_58 = arith.constant 0 : index
    %c0_59 = arith.constant 0 : index
    %c0_60 = arith.constant 0 : index
    %169 = vector.load %arg15[%c0_58, %c0_59, %c0_60] : memref<2x32x32xf32, #tpu.memory_space<vmem>>, vector<1x32x32xf32>
    %170 = vector.shape_cast %169 : vector<1x32x32xf32> to vector<32x32xf32>
    %c0_61 = arith.constant 0 : index
    %c0_62 = arith.constant 0 : index
    %c0_63 = arith.constant 0 : index
    %171 = vector.load %arg16[%c0_61, %c0_62, %c0_63] : memref<2x1x32xf32, #tpu.memory_space<vmem>>, vector<1x1x32xf32>
    %172 = vector.shape_cast %171 : vector<1x1x32xf32> to vector<1x32xf32>
    %cst_64 = arith.constant dense<0.000000e+00> : vector<8x32xf32>
    %173 = tpu.matmul %168, %170, %cst_64 {dimension_numbers = #tpu.dot_dimension_numbers<[1], [0], [0], [1], [0, 0, 1, 1], [], []>} : vector<8x32xf32>, vector<32x32xf32>, vector<8x32xf32> -> vector<8x32xf32>
    %174 = vector.broadcast %172 : vector<1x32xf32> to vector<8x32xf32>
    %175 = arith.addf %173, %174 : vector<8x32xf32>
    %176 = arith.addf %102, %175 : vector<8x32xf32>
    %cst_65 = arith.constant dense<0.000000e+00> : vector<8xf32>
    %177 = vector.multi_reduction <add>, %176, %cst_65 [1] : vector<8x32xf32> to vector<8xf32>
    %178 = vector.shape_cast %177 : vector<8xf32> to vector<8x1xf32>
    %cst_66 = arith.constant 3.200000e+01 : f32
    %179 = vector.broadcast %cst_66 : f32 to vector<8x1xf32>
    %180 = arith.divf %178, %179 : vector<8x1xf32>
    %181 = vector.broadcast %180 : vector<8x1xf32> to vector<8x32xf32>
    %182 = arith.subf %176, %181 : vector<8x32xf32>
    %183 = arith.mulf %182, %182 : vector<8x32xf32>
    %cst_67 = arith.constant dense<0.000000e+00> : vector<8xf32>
    %184 = vector.multi_reduction <add>, %183, %cst_67 [1] : vector<8x32xf32> to vector<8xf32>
    %185 = vector.shape_cast %184 : vector<8xf32> to vector<8x1xf32>
    %cst_68 = arith.constant 3.200000e+01 : f32
    %186 = vector.broadcast %cst_68 : f32 to vector<8x1xf32>
    %187 = arith.divf %185, %186 : vector<8x1xf32>
    %188 = vector.broadcast %180 : vector<8x1xf32> to vector<8x32xf32>
    %189 = arith.subf %176, %188 : vector<8x32xf32>
    %cst_69 = arith.constant 9.99999974E-6 : f32
    %190 = vector.broadcast %cst_69 : f32 to vector<8x1xf32>
    %191 = arith.addf %187, %190 : vector<8x1xf32>
    %192 = math.rsqrt %191 : vector<8x1xf32>
    %193 = vector.broadcast %192 : vector<8x1xf32> to vector<8x32xf32>
    %194 = arith.mulf %189, %193 : vector<8x32xf32>
    %195 = vector.broadcast %10 : vector<1x32xf32> to vector<8x32xf32>
    %196 = arith.mulf %194, %195 : vector<8x32xf32>
    %197 = vector.broadcast %12 : vector<1x32xf32> to vector<8x32xf32>
    %198 = arith.addf %196, %197 : vector<8x32xf32>
    %c0_70 = arith.constant 0 : index
    %c0_71 = arith.constant 0 : index
    %c0_72 = arith.constant 0 : index
    %199 = vector.load %arg17[%c0_70, %c0_71, %c0_72] : memref<2x32x64xf32, #tpu.memory_space<vmem>>, vector<1x32x64xf32>
    %200 = vector.shape_cast %199 : vector<1x32x64xf32> to vector<32x64xf32>
    %c0_73 = arith.constant 0 : index
    %c0_74 = arith.constant 0 : index
    %c0_75 = arith.constant 0 : index
    %201 = vector.load %arg18[%c0_73, %c0_74, %c0_75] : memref<2x1x64xf32, #tpu.memory_space<vmem>>, vector<1x1x64xf32>
    %202 = vector.shape_cast %201 : vector<1x1x64xf32> to vector<1x64xf32>
    %cst_76 = arith.constant dense<0.000000e+00> : vector<8x64xf32>
    %203 = tpu.matmul %198, %200, %cst_76 {dimension_numbers = #tpu.dot_dimension_numbers<[1], [0], [0], [1], [0, 0, 1, 1], [], []>} : vector<8x32xf32>, vector<32x64xf32>, vector<8x64xf32> -> vector<8x64xf32>
    %204 = vector.broadcast %202 : vector<1x64xf32> to vector<8x64xf32>
    %205 = arith.addf %203, %204 : vector<8x64xf32>
    %cst_77 = arith.constant 0.000000e+00 : f32
    %206 = vector.broadcast %cst_77 : f32 to vector<8x64xf32>
    %207 = arith.maximumf %205, %206 : vector<8x64xf32>
    %c0_78 = arith.constant 0 : index
    %c0_79 = arith.constant 0 : index
    %c0_80 = arith.constant 0 : index
    %208 = vector.load %arg19[%c0_78, %c0_79, %c0_80] : memref<2x64x32xf32, #tpu.memory_space<vmem>>, vector<1x64x32xf32>
    %209 = vector.shape_cast %208 : vector<1x64x32xf32> to vector<64x32xf32>
    %c0_81 = arith.constant 0 : index
    %c0_82 = arith.constant 0 : index
    %c0_83 = arith.constant 0 : index
    %210 = vector.load %arg20[%c0_81, %c0_82, %c0_83] : memref<2x1x32xf32, #tpu.memory_space<vmem>>, vector<1x1x32xf32>
    %211 = vector.shape_cast %210 : vector<1x1x32xf32> to vector<1x32xf32>
    %cst_84 = arith.constant dense<0.000000e+00> : vector<8x32xf32>
    %212 = tpu.matmul %207, %209, %cst_84 {dimension_numbers = #tpu.dot_dimension_numbers<[1], [0], [0], [1], [0, 0, 1, 1], [], []>} : vector<8x64xf32>, vector<64x32xf32>, vector<8x32xf32> -> vector<8x32xf32>
    %213 = vector.broadcast %211 : vector<1x32xf32> to vector<8x32xf32>
    %214 = arith.addf %212, %213 : vector<8x32xf32>
    %215 = arith.addf %198, %214 : vector<8x32xf32>
    %cst_85 = arith.constant dense<0.000000e+00> : vector<8xf32>
    %216 = vector.multi_reduction <add>, %215, %cst_85 [1] : vector<8x32xf32> to vector<8xf32>
    %217 = vector.shape_cast %216 : vector<8xf32> to vector<8x1xf32>
    %cst_86 = arith.constant 3.200000e+01 : f32
    %218 = vector.broadcast %cst_86 : f32 to vector<8x1xf32>
    %219 = arith.divf %217, %218 : vector<8x1xf32>
    %220 = vector.broadcast %219 : vector<8x1xf32> to vector<8x32xf32>
    %221 = arith.subf %215, %220 : vector<8x32xf32>
    %222 = arith.mulf %221, %221 : vector<8x32xf32>
    %cst_87 = arith.constant dense<0.000000e+00> : vector<8xf32>
    %223 = vector.multi_reduction <add>, %222, %cst_87 [1] : vector<8x32xf32> to vector<8xf32>
    %224 = vector.shape_cast %223 : vector<8xf32> to vector<8x1xf32>
    %cst_88 = arith.constant 3.200000e+01 : f32
    %225 = vector.broadcast %cst_88 : f32 to vector<8x1xf32>
    %226 = arith.divf %224, %225 : vector<8x1xf32>
    %227 = vector.broadcast %219 : vector<8x1xf32> to vector<8x32xf32>
    %228 = arith.subf %215, %227 : vector<8x32xf32>
    %cst_89 = arith.constant 9.99999974E-6 : f32
    %229 = vector.broadcast %cst_89 : f32 to vector<8x1xf32>
    %230 = arith.addf %226, %229 : vector<8x1xf32>
    %231 = math.rsqrt %230 : vector<8x1xf32>
    %232 = vector.broadcast %231 : vector<8x1xf32> to vector<8x32xf32>
    %233 = arith.mulf %228, %232 : vector<8x32xf32>
    %234 = vector.broadcast %10 : vector<1x32xf32> to vector<8x32xf32>
    %235 = arith.mulf %233, %234 : vector<8x32xf32>
    %236 = vector.broadcast %12 : vector<1x32xf32> to vector<8x32xf32>
    %237 = arith.addf %235, %236 : vector<8x32xf32>
    %c1 = arith.constant 1 : index
    %c0_90 = arith.constant 0 : index
    %c0_91 = arith.constant 0 : index
    %238 = vector.load %arg5[%c1, %c0_90, %c0_91] : memref<2x1x32xf32, #tpu.memory_space<vmem>>, vector<1x1x32xf32>
    %239 = vector.shape_cast %238 : vector<1x1x32xf32> to vector<1x32xf32>
    %c1_92 = arith.constant 1 : index
    %c0_93 = arith.constant 0 : index
    %c0_94 = arith.constant 0 : index
    %240 = vector.load %arg6[%c1_92, %c0_93, %c0_94] : memref<2x1x32xf32, #tpu.memory_space<vmem>>, vector<1x1x32xf32>
    %241 = vector.shape_cast %240 : vector<1x1x32xf32> to vector<1x32xf32>
    %c1_95 = arith.constant 1 : index
    %c0_96 = arith.constant 0 : index
    %c0_97 = arith.constant 0 : index
    %242 = vector.load %arg7[%c1_95, %c0_96, %c0_97] : memref<2x32x96xf32, #tpu.memory_space<vmem>>, vector<1x32x96xf32>
    %243 = vector.shape_cast %242 : vector<1x32x96xf32> to vector<32x96xf32>
    %c1_98 = arith.constant 1 : index
    %c0_99 = arith.constant 0 : index
    %c0_100 = arith.constant 0 : index
    %244 = vector.load %arg8[%c1_98, %c0_99, %c0_100] : memref<2x1x96xf32, #tpu.memory_space<vmem>>, vector<1x1x96xf32>
    %245 = vector.shape_cast %244 : vector<1x1x96xf32> to vector<1x96xf32>
    %cst_101 = arith.constant dense<0.000000e+00> : vector<8x96xf32>
    %246 = tpu.matmul %237, %243, %cst_101 {dimension_numbers = #tpu.dot_dimension_numbers<[1], [0], [0], [1], [0, 0, 1, 1], [], []>} : vector<8x32xf32>, vector<32x96xf32>, vector<8x96xf32> -> vector<8x96xf32>
    %247 = vector.broadcast %245 : vector<1x96xf32> to vector<8x96xf32>
    %248 = arith.addf %246, %247 : vector<8x96xf32>
    %249 = vector.extract_strided_slice %248 {offsets = [0, 0], sizes = [8, 32], strides = [1, 1]} : vector<8x96xf32> to vector<8x32xf32>
    %250 = vector.extract_strided_slice %248 {offsets = [0, 32], sizes = [8, 32], strides = [1, 1]} : vector<8x96xf32> to vector<8x32xf32>
    %251 = vector.extract_strided_slice %248 {offsets = [0, 64], sizes = [8, 32], strides = [1, 1]} : vector<8x96xf32> to vector<8x32xf32>
    %252 = vector.extract_strided_slice %249 {offsets = [0, 0], sizes = [8, 8], strides = [1, 1]} : vector<8x32xf32> to vector<8x8xf32>
    %253 = vector.extract_strided_slice %249 {offsets = [0, 8], sizes = [8, 8], strides = [1, 1]} : vector<8x32xf32> to vector<8x8xf32>
    %254 = vector.extract_strided_slice %249 {offsets = [0, 16], sizes = [8, 8], strides = [1, 1]} : vector<8x32xf32> to vector<8x8xf32>
    %255 = vector.extract_strided_slice %249 {offsets = [0, 24], sizes = [8, 8], strides = [1, 1]} : vector<8x32xf32> to vector<8x8xf32>
    %256 = vector.shape_cast %252 : vector<8x8xf32> to vector<1x8x8xf32>
    %257 = vector.shape_cast %253 : vector<8x8xf32> to vector<1x8x8xf32>
    %258 = vector.shape_cast %254 : vector<8x8xf32> to vector<1x8x8xf32>
    %259 = vector.shape_cast %255 : vector<8x8xf32> to vector<1x8x8xf32>
    %260 = tpu.concatenate %256, %257, %258, %259 in 0 : vector<1x8x8xf32>, vector<1x8x8xf32>, vector<1x8x8xf32>, vector<1x8x8xf32> -> vector<4x8x8xf32>
    %261 = vector.extract_strided_slice %250 {offsets = [0, 0], sizes = [8, 8], strides = [1, 1]} : vector<8x32xf32> to vector<8x8xf32>
    %262 = vector.extract_strided_slice %250 {offsets = [0, 8], sizes = [8, 8], strides = [1, 1]} : vector<8x32xf32> to vector<8x8xf32>
    %263 = vector.extract_strided_slice %250 {offsets = [0, 16], sizes = [8, 8], strides = [1, 1]} : vector<8x32xf32> to vector<8x8xf32>
    %264 = vector.extract_strided_slice %250 {offsets = [0, 24], sizes = [8, 8], strides = [1, 1]} : vector<8x32xf32> to vector<8x8xf32>
    %265 = vector.shape_cast %261 : vector<8x8xf32> to vector<1x8x8xf32>
    %266 = vector.shape_cast %262 : vector<8x8xf32> to vector<1x8x8xf32>
    %267 = vector.shape_cast %263 : vector<8x8xf32> to vector<1x8x8xf32>
    %268 = vector.shape_cast %264 : vector<8x8xf32> to vector<1x8x8xf32>
    %269 = tpu.concatenate %265, %266, %267, %268 in 0 : vector<1x8x8xf32>, vector<1x8x8xf32>, vector<1x8x8xf32>, vector<1x8x8xf32> -> vector<4x8x8xf32>
    %270 = vector.extract_strided_slice %251 {offsets = [0, 0], sizes = [8, 8], strides = [1, 1]} : vector<8x32xf32> to vector<8x8xf32>
    %271 = vector.extract_strided_slice %251 {offsets = [0, 8], sizes = [8, 8], strides = [1, 1]} : vector<8x32xf32> to vector<8x8xf32>
    %272 = vector.extract_strided_slice %251 {offsets = [0, 16], sizes = [8, 8], strides = [1, 1]} : vector<8x32xf32> to vector<8x8xf32>
    %273 = vector.extract_strided_slice %251 {offsets = [0, 24], sizes = [8, 8], strides = [1, 1]} : vector<8x32xf32> to vector<8x8xf32>
    %274 = vector.shape_cast %270 : vector<8x8xf32> to vector<1x8x8xf32>
    %275 = vector.shape_cast %271 : vector<8x8xf32> to vector<1x8x8xf32>
    %276 = vector.shape_cast %272 : vector<8x8xf32> to vector<1x8x8xf32>
    %277 = vector.shape_cast %273 : vector<8x8xf32> to vector<1x8x8xf32>
    %278 = tpu.concatenate %274, %275, %276, %277 in 0 : vector<1x8x8xf32>, vector<1x8x8xf32>, vector<1x8x8xf32>, vector<1x8x8xf32> -> vector<4x8x8xf32>
    "tpu.trace_start"() <{level = 10 : i32, message = "hqd,hkd->hqk"}> : () -> ()
    %cst_102 = arith.constant dense<0.000000e+00> : vector<4x8x8xf32>
    %279 = tpu.matmul %260, %269, %cst_102 {dimension_numbers = #tpu.dot_dimension_numbers<[2], [2], [1], [1], [0, 0, 0, 1, 1, 1], [0], [0]>} : vector<4x8x8xf32>, vector<4x8x8xf32>, vector<4x8x8xf32> -> vector<4x8x8xf32>
    "tpu.trace_stop"() : () -> ()
    %cst_103 = arith.constant 0.353553385 : f32
    %280 = vector.broadcast %cst_103 : f32 to vector<4x8x8xf32>
    %281 = arith.mulf %279, %280 : vector<4x8x8xf32>
    %cst_104 = arith.constant dense<0xFF800000> : vector<4x8xf32>
    %282 = vector.multi_reduction <maximumf>, %281, %cst_104 [2] : vector<4x8x8xf32> to vector<4x8xf32>
    %283 = vector.shape_cast %282 : vector<4x8xf32> to vector<4x8x1xf32>
    %284 = vector.broadcast %283 : vector<4x8x1xf32> to vector<4x8x8xf32>
    %285 = arith.subf %281, %284 : vector<4x8x8xf32>
    %286 = math.exp %285 : vector<4x8x8xf32>
    %cst_105 = arith.constant dense<0.000000e+00> : vector<4x8xf32>
    %287 = vector.multi_reduction <add>, %286, %cst_105 [2] : vector<4x8x8xf32> to vector<4x8xf32>
    %288 = vector.shape_cast %287 : vector<4x8xf32> to vector<4x8x1xf32>
    %289 = tpu.reciprocal %288 {approx = true} : vector<4x8x1xf32> -> vector<4x8x1xf32>
    %290 = vector.broadcast %289 : vector<4x8x1xf32> to vector<4x8x8xf32>
    %291 = arith.mulf %286, %290 : vector<4x8x8xf32>
    "tpu.trace_start"() <{level = 10 : i32, message = "hqk,hkd->hqd"}> : () -> ()
    %cst_106 = arith.constant dense<0.000000e+00> : vector<4x8x8xf32>
    %292 = tpu.matmul %291, %278, %cst_106 {dimension_numbers = #tpu.dot_dimension_numbers<[2], [1], [1], [2], [0, 0, 0, 1, 1, 2], [0], [0]>} : vector<4x8x8xf32>, vector<4x8x8xf32>, vector<4x8x8xf32> -> vector<4x8x8xf32>
    "tpu.trace_stop"() : () -> ()
    %293 = vector.extract_strided_slice %292 {offsets = [0, 0, 0], sizes = [1, 8, 8], strides = [1, 1, 1]} : vector<4x8x8xf32> to vector<1x8x8xf32>
    %294 = vector.shape_cast %293 : vector<1x8x8xf32> to vector<8x8xf32>
    %295 = vector.extract_strided_slice %292 {offsets = [1, 0, 0], sizes = [1, 8, 8], strides = [1, 1, 1]} : vector<4x8x8xf32> to vector<1x8x8xf32>
    %296 = vector.shape_cast %295 : vector<1x8x8xf32> to vector<8x8xf32>
    %297 = vector.extract_strided_slice %292 {offsets = [2, 0, 0], sizes = [1, 8, 8], strides = [1, 1, 1]} : vector<4x8x8xf32> to vector<1x8x8xf32>
    %298 = vector.shape_cast %297 : vector<1x8x8xf32> to vector<8x8xf32>
    %299 = vector.extract_strided_slice %292 {offsets = [3, 0, 0], sizes = [1, 8, 8], strides = [1, 1, 1]} : vector<4x8x8xf32> to vector<1x8x8xf32>
    %300 = vector.shape_cast %299 : vector<1x8x8xf32> to vector<8x8xf32>
    %301 = tpu.concatenate %294, %296, %298, %300 in 1 : vector<8x8xf32>, vector<8x8xf32>, vector<8x8xf32>, vector<8x8xf32> -> vector<8x32xf32>
    %c1_107 = arith.constant 1 : index
    %c0_108 = arith.constant 0 : index
    %c0_109 = arith.constant 0 : index
    %302 = vector.load %arg9[%c1_107, %c0_108, %c0_109] : memref<2x32x32xf32, #tpu.memory_space<vmem>>, vector<1x32x32xf32>
    %303 = vector.shape_cast %302 : vector<1x32x32xf32> to vector<32x32xf32>
    %c1_110 = arith.constant 1 : index
    %c0_111 = arith.constant 0 : index
    %c0_112 = arith.constant 0 : index
    %304 = vector.load %arg10[%c1_110, %c0_111, %c0_112] : memref<2x1x32xf32, #tpu.memory_space<vmem>>, vector<1x1x32xf32>
    %305 = vector.shape_cast %304 : vector<1x1x32xf32> to vector<1x32xf32>
    %cst_113 = arith.constant dense<0.000000e+00> : vector<8x32xf32>
    %306 = tpu.matmul %301, %303, %cst_113 {dimension_numbers = #tpu.dot_dimension_numbers<[1], [0], [0], [1], [0, 0, 1, 1], [], []>} : vector<8x32xf32>, vector<32x32xf32>, vector<8x32xf32> -> vector<8x32xf32>
    %307 = vector.broadcast %305 : vector<1x32xf32> to vector<8x32xf32>
    %308 = arith.addf %306, %307 : vector<8x32xf32>
    %309 = arith.addf %237, %308 : vector<8x32xf32>
    %cst_114 = arith.constant dense<0.000000e+00> : vector<8xf32>
    %310 = vector.multi_reduction <add>, %309, %cst_114 [1] : vector<8x32xf32> to vector<8xf32>
    %311 = vector.shape_cast %310 : vector<8xf32> to vector<8x1xf32>
    %cst_115 = arith.constant 3.200000e+01 : f32
    %312 = vector.broadcast %cst_115 : f32 to vector<8x1xf32>
    %313 = arith.divf %311, %312 : vector<8x1xf32>
    %314 = vector.broadcast %313 : vector<8x1xf32> to vector<8x32xf32>
    %315 = arith.subf %309, %314 : vector<8x32xf32>
    %316 = arith.mulf %315, %315 : vector<8x32xf32>
    %cst_116 = arith.constant dense<0.000000e+00> : vector<8xf32>
    %317 = vector.multi_reduction <add>, %316, %cst_116 [1] : vector<8x32xf32> to vector<8xf32>
    %318 = vector.shape_cast %317 : vector<8xf32> to vector<8x1xf32>
    %cst_117 = arith.constant 3.200000e+01 : f32
    %319 = vector.broadcast %cst_117 : f32 to vector<8x1xf32>
    %320 = arith.divf %318, %319 : vector<8x1xf32>
    %321 = vector.broadcast %313 : vector<8x1xf32> to vector<8x32xf32>
    %322 = arith.subf %309, %321 : vector<8x32xf32>
    %cst_118 = arith.constant 9.99999974E-6 : f32
    %323 = vector.broadcast %cst_118 : f32 to vector<8x1xf32>
    %324 = arith.addf %320, %323 : vector<8x1xf32>
    %325 = math.rsqrt %324 : vector<8x1xf32>
    %326 = vector.broadcast %325 : vector<8x1xf32> to vector<8x32xf32>
    %327 = arith.mulf %322, %326 : vector<8x32xf32>
    %328 = vector.broadcast %239 : vector<1x32xf32> to vector<8x32xf32>
    %329 = arith.mulf %327, %328 : vector<8x32xf32>
    %330 = vector.broadcast %241 : vector<1x32xf32> to vector<8x32xf32>
    %331 = arith.addf %329, %330 : vector<8x32xf32>
    %c1_119 = arith.constant 1 : index
    %c0_120 = arith.constant 0 : index
    %c0_121 = arith.constant 0 : index
    %332 = vector.load %arg11[%c1_119, %c0_120, %c0_121] : memref<2x32x32xf32, #tpu.memory_space<vmem>>, vector<1x32x32xf32>
    %333 = vector.shape_cast %332 : vector<1x32x32xf32> to vector<32x32xf32>
    %c1_122 = arith.constant 1 : index
    %c0_123 = arith.constant 0 : index
    %c0_124 = arith.constant 0 : index
    %334 = vector.load %arg12[%c1_122, %c0_123, %c0_124] : memref<2x1x32xf32, #tpu.memory_space<vmem>>, vector<1x1x32xf32>
    %335 = vector.shape_cast %334 : vector<1x1x32xf32> to vector<1x32xf32>
    %cst_125 = arith.constant dense<0.000000e+00> : vector<8x32xf32>
    %336 = tpu.matmul %331, %333, %cst_125 {dimension_numbers = #tpu.dot_dimension_numbers<[1], [0], [0], [1], [0, 0, 1, 1], [], []>} : vector<8x32xf32>, vector<32x32xf32>, vector<8x32xf32> -> vector<8x32xf32>
    %337 = vector.broadcast %335 : vector<1x32xf32> to vector<8x32xf32>
    %338 = arith.addf %336, %337 : vector<8x32xf32>
    %c1_126 = arith.constant 1 : index
    %c0_127 = arith.constant 0 : index
    %c0_128 = arith.constant 0 : index
    %339 = vector.load %arg13[%c1_126, %c0_127, %c0_128] : memref<2x32x64xf32, #tpu.memory_space<vmem>>, vector<1x32x64xf32>
    %340 = vector.shape_cast %339 : vector<1x32x64xf32> to vector<32x64xf32>
    %c1_129 = arith.constant 1 : index
    %c0_130 = arith.constant 0 : index
    %c0_131 = arith.constant 0 : index
    %341 = vector.load %arg14[%c1_129, %c0_130, %c0_131] : memref<2x1x64xf32, #tpu.memory_space<vmem>>, vector<1x1x64xf32>
    %342 = vector.shape_cast %341 : vector<1x1x64xf32> to vector<1x64xf32>
    %cst_132 = arith.constant dense<0.000000e+00> : vector<12x64xf32>
    %343 = tpu.matmul %3, %340, %cst_132 {dimension_numbers = #tpu.dot_dimension_numbers<[1], [0], [0], [1], [0, 0, 1, 1], [], []>} : vector<12x32xf32>, vector<32x64xf32>, vector<12x64xf32> -> vector<12x64xf32>
    %344 = vector.broadcast %342 : vector<1x64xf32> to vector<12x64xf32>
    %345 = arith.addf %343, %344 : vector<12x64xf32>
    %346 = vector.extract_strided_slice %345 {offsets = [0, 0], sizes = [12, 32], strides = [1, 1]} : vector<12x64xf32> to vector<12x32xf32>
    %347 = vector.extract_strided_slice %345 {offsets = [0, 32], sizes = [12, 32], strides = [1, 1]} : vector<12x64xf32> to vector<12x32xf32>
    %348 = vector.extract_strided_slice %338 {offsets = [0, 0], sizes = [8, 8], strides = [1, 1]} : vector<8x32xf32> to vector<8x8xf32>
    %349 = vector.extract_strided_slice %338 {offsets = [0, 8], sizes = [8, 8], strides = [1, 1]} : vector<8x32xf32> to vector<8x8xf32>
    %350 = vector.extract_strided_slice %338 {offsets = [0, 16], sizes = [8, 8], strides = [1, 1]} : vector<8x32xf32> to vector<8x8xf32>
    %351 = vector.extract_strided_slice %338 {offsets = [0, 24], sizes = [8, 8], strides = [1, 1]} : vector<8x32xf32> to vector<8x8xf32>
    %352 = vector.shape_cast %348 : vector<8x8xf32> to vector<1x8x8xf32>
    %353 = vector.shape_cast %349 : vector<8x8xf32> to vector<1x8x8xf32>
    %354 = vector.shape_cast %350 : vector<8x8xf32> to vector<1x8x8xf32>
    %355 = vector.shape_cast %351 : vector<8x8xf32> to vector<1x8x8xf32>
    %356 = tpu.concatenate %352, %353, %354, %355 in 0 : vector<1x8x8xf32>, vector<1x8x8xf32>, vector<1x8x8xf32>, vector<1x8x8xf32> -> vector<4x8x8xf32>
    %357 = vector.extract_strided_slice %346 {offsets = [0, 0], sizes = [12, 8], strides = [1, 1]} : vector<12x32xf32> to vector<12x8xf32>
    %358 = vector.extract_strided_slice %346 {offsets = [0, 8], sizes = [12, 8], strides = [1, 1]} : vector<12x32xf32> to vector<12x8xf32>
    %359 = vector.extract_strided_slice %346 {offsets = [0, 16], sizes = [12, 8], strides = [1, 1]} : vector<12x32xf32> to vector<12x8xf32>
    %360 = vector.extract_strided_slice %346 {offsets = [0, 24], sizes = [12, 8], strides = [1, 1]} : vector<12x32xf32> to vector<12x8xf32>
    %361 = vector.shape_cast %357 : vector<12x8xf32> to vector<1x12x8xf32>
    %362 = vector.shape_cast %358 : vector<12x8xf32> to vector<1x12x8xf32>
    %363 = vector.shape_cast %359 : vector<12x8xf32> to vector<1x12x8xf32>
    %364 = vector.shape_cast %360 : vector<12x8xf32> to vector<1x12x8xf32>
    %365 = tpu.concatenate %361, %362, %363, %364 in 0 : vector<1x12x8xf32>, vector<1x12x8xf32>, vector<1x12x8xf32>, vector<1x12x8xf32> -> vector<4x12x8xf32>
    %366 = vector.extract_strided_slice %347 {offsets = [0, 0], sizes = [12, 8], strides = [1, 1]} : vector<12x32xf32> to vector<12x8xf32>
    %367 = vector.extract_strided_slice %347 {offsets = [0, 8], sizes = [12, 8], strides = [1, 1]} : vector<12x32xf32> to vector<12x8xf32>
    %368 = vector.extract_strided_slice %347 {offsets = [0, 16], sizes = [12, 8], strides = [1, 1]} : vector<12x32xf32> to vector<12x8xf32>
    %369 = vector.extract_strided_slice %347 {offsets = [0, 24], sizes = [12, 8], strides = [1, 1]} : vector<12x32xf32> to vector<12x8xf32>
    %370 = vector.shape_cast %366 : vector<12x8xf32> to vector<1x12x8xf32>
    %371 = vector.shape_cast %367 : vector<12x8xf32> to vector<1x12x8xf32>
    %372 = vector.shape_cast %368 : vector<12x8xf32> to vector<1x12x8xf32>
    %373 = vector.shape_cast %369 : vector<12x8xf32> to vector<1x12x8xf32>
    %374 = tpu.concatenate %370, %371, %372, %373 in 0 : vector<1x12x8xf32>, vector<1x12x8xf32>, vector<1x12x8xf32>, vector<1x12x8xf32> -> vector<4x12x8xf32>
    "tpu.trace_start"() <{level = 10 : i32, message = "hqd,hkd->hqk"}> : () -> ()
    %cst_133 = arith.constant dense<0.000000e+00> : vector<4x8x12xf32>
    %375 = tpu.matmul %356, %365, %cst_133 {dimension_numbers = #tpu.dot_dimension_numbers<[2], [2], [1], [1], [0, 0, 0, 1, 1, 1], [0], [0]>} : vector<4x8x8xf32>, vector<4x12x8xf32>, vector<4x8x12xf32> -> vector<4x8x12xf32>
    "tpu.trace_stop"() : () -> ()
    %cst_134 = arith.constant 0.353553385 : f32
    %376 = vector.broadcast %cst_134 : f32 to vector<4x8x12xf32>
    %377 = arith.mulf %375, %376 : vector<4x8x12xf32>
    %cst_135 = arith.constant dense<0xFF800000> : vector<4x8xf32>
    %378 = vector.multi_reduction <maximumf>, %377, %cst_135 [2] : vector<4x8x12xf32> to vector<4x8xf32>
    %379 = vector.shape_cast %378 : vector<4x8xf32> to vector<4x8x1xf32>
    %380 = vector.broadcast %379 : vector<4x8x1xf32> to vector<4x8x12xf32>
    %381 = arith.subf %377, %380 : vector<4x8x12xf32>
    %382 = math.exp %381 : vector<4x8x12xf32>
    %cst_136 = arith.constant dense<0.000000e+00> : vector<4x8xf32>
    %383 = vector.multi_reduction <add>, %382, %cst_136 [2] : vector<4x8x12xf32> to vector<4x8xf32>
    %384 = vector.shape_cast %383 : vector<4x8xf32> to vector<4x8x1xf32>
    %385 = tpu.reciprocal %384 {approx = true} : vector<4x8x1xf32> -> vector<4x8x1xf32>
    %386 = vector.broadcast %385 : vector<4x8x1xf32> to vector<4x8x12xf32>
    %387 = arith.mulf %382, %386 : vector<4x8x12xf32>
    "tpu.trace_start"() <{level = 10 : i32, message = "hqk,hkd->hqd"}> : () -> ()
    %cst_137 = arith.constant dense<0.000000e+00> : vector<4x8x8xf32>
    %388 = tpu.matmul %387, %374, %cst_137 {dimension_numbers = #tpu.dot_dimension_numbers<[2], [1], [1], [2], [0, 0, 0, 1, 1, 2], [0], [0]>} : vector<4x8x12xf32>, vector<4x12x8xf32>, vector<4x8x8xf32> -> vector<4x8x8xf32>
    "tpu.trace_stop"() : () -> ()
    %389 = vector.extract_strided_slice %388 {offsets = [0, 0, 0], sizes = [1, 8, 8], strides = [1, 1, 1]} : vector<4x8x8xf32> to vector<1x8x8xf32>
    %390 = vector.shape_cast %389 : vector<1x8x8xf32> to vector<8x8xf32>
    %391 = vector.extract_strided_slice %388 {offsets = [1, 0, 0], sizes = [1, 8, 8], strides = [1, 1, 1]} : vector<4x8x8xf32> to vector<1x8x8xf32>
    %392 = vector.shape_cast %391 : vector<1x8x8xf32> to vector<8x8xf32>
    %393 = vector.extract_strided_slice %388 {offsets = [2, 0, 0], sizes = [1, 8, 8], strides = [1, 1, 1]} : vector<4x8x8xf32> to vector<1x8x8xf32>
    %394 = vector.shape_cast %393 : vector<1x8x8xf32> to vector<8x8xf32>
    %395 = vector.extract_strided_slice %388 {offsets = [3, 0, 0], sizes = [1, 8, 8], strides = [1, 1, 1]} : vector<4x8x8xf32> to vector<1x8x8xf32>
    %396 = vector.shape_cast %395 : vector<1x8x8xf32> to vector<8x8xf32>
    %397 = tpu.concatenate %390, %392, %394, %396 in 1 : vector<8x8xf32>, vector<8x8xf32>, vector<8x8xf32>, vector<8x8xf32> -> vector<8x32xf32>
    %c1_138 = arith.constant 1 : index
    %c0_139 = arith.constant 0 : index
    %c0_140 = arith.constant 0 : index
    %398 = vector.load %arg15[%c1_138, %c0_139, %c0_140] : memref<2x32x32xf32, #tpu.memory_space<vmem>>, vector<1x32x32xf32>
    %399 = vector.shape_cast %398 : vector<1x32x32xf32> to vector<32x32xf32>
    %c1_141 = arith.constant 1 : index
    %c0_142 = arith.constant 0 : index
    %c0_143 = arith.constant 0 : index
    %400 = vector.load %arg16[%c1_141, %c0_142, %c0_143] : memref<2x1x32xf32, #tpu.memory_space<vmem>>, vector<1x1x32xf32>
    %401 = vector.shape_cast %400 : vector<1x1x32xf32> to vector<1x32xf32>
    %cst_144 = arith.constant dense<0.000000e+00> : vector<8x32xf32>
    %402 = tpu.matmul %397, %399, %cst_144 {dimension_numbers = #tpu.dot_dimension_numbers<[1], [0], [0], [1], [0, 0, 1, 1], [], []>} : vector<8x32xf32>, vector<32x32xf32>, vector<8x32xf32> -> vector<8x32xf32>
    %403 = vector.broadcast %401 : vector<1x32xf32> to vector<8x32xf32>
    %404 = arith.addf %402, %403 : vector<8x32xf32>
    %405 = arith.addf %331, %404 : vector<8x32xf32>
    %cst_145 = arith.constant dense<0.000000e+00> : vector<8xf32>
    %406 = vector.multi_reduction <add>, %405, %cst_145 [1] : vector<8x32xf32> to vector<8xf32>
    %407 = vector.shape_cast %406 : vector<8xf32> to vector<8x1xf32>
    %cst_146 = arith.constant 3.200000e+01 : f32
    %408 = vector.broadcast %cst_146 : f32 to vector<8x1xf32>
    %409 = arith.divf %407, %408 : vector<8x1xf32>
    %410 = vector.broadcast %409 : vector<8x1xf32> to vector<8x32xf32>
    %411 = arith.subf %405, %410 : vector<8x32xf32>
    %412 = arith.mulf %411, %411 : vector<8x32xf32>
    %cst_147 = arith.constant dense<0.000000e+00> : vector<8xf32>
    %413 = vector.multi_reduction <add>, %412, %cst_147 [1] : vector<8x32xf32> to vector<8xf32>
    %414 = vector.shape_cast %413 : vector<8xf32> to vector<8x1xf32>
    %cst_148 = arith.constant 3.200000e+01 : f32
    %415 = vector.broadcast %cst_148 : f32 to vector<8x1xf32>
    %416 = arith.divf %414, %415 : vector<8x1xf32>
    %417 = vector.broadcast %409 : vector<8x1xf32> to vector<8x32xf32>
    %418 = arith.subf %405, %417 : vector<8x32xf32>
    %cst_149 = arith.constant 9.99999974E-6 : f32
    %419 = vector.broadcast %cst_149 : f32 to vector<8x1xf32>
    %420 = arith.addf %416, %419 : vector<8x1xf32>
    %421 = math.rsqrt %420 : vector<8x1xf32>
    %422 = vector.broadcast %421 : vector<8x1xf32> to vector<8x32xf32>
    %423 = arith.mulf %418, %422 : vector<8x32xf32>
    %424 = vector.broadcast %239 : vector<1x32xf32> to vector<8x32xf32>
    %425 = arith.mulf %423, %424 : vector<8x32xf32>
    %426 = vector.broadcast %241 : vector<1x32xf32> to vector<8x32xf32>
    %427 = arith.addf %425, %426 : vector<8x32xf32>
    %c1_150 = arith.constant 1 : index
    %c0_151 = arith.constant 0 : index
    %c0_152 = arith.constant 0 : index
    %428 = vector.load %arg17[%c1_150, %c0_151, %c0_152] : memref<2x32x64xf32, #tpu.memory_space<vmem>>, vector<1x32x64xf32>
    %429 = vector.shape_cast %428 : vector<1x32x64xf32> to vector<32x64xf32>
    %c1_153 = arith.constant 1 : index
    %c0_154 = arith.constant 0 : index
    %c0_155 = arith.constant 0 : index
    %430 = vector.load %arg18[%c1_153, %c0_154, %c0_155] : memref<2x1x64xf32, #tpu.memory_space<vmem>>, vector<1x1x64xf32>
    %431 = vector.shape_cast %430 : vector<1x1x64xf32> to vector<1x64xf32>
    %cst_156 = arith.constant dense<0.000000e+00> : vector<8x64xf32>
    %432 = tpu.matmul %427, %429, %cst_156 {dimension_numbers = #tpu.dot_dimension_numbers<[1], [0], [0], [1], [0, 0, 1, 1], [], []>} : vector<8x32xf32>, vector<32x64xf32>, vector<8x64xf32> -> vector<8x64xf32>
    %433 = vector.broadcast %431 : vector<1x64xf32> to vector<8x64xf32>
    %434 = arith.addf %432, %433 : vector<8x64xf32>
    %cst_157 = arith.constant 0.000000e+00 : f32
    %435 = vector.broadcast %cst_157 : f32 to vector<8x64xf32>
    %436 = arith.maximumf %434, %435 : vector<8x64xf32>
    %c1_158 = arith.constant 1 : index
    %c0_159 = arith.constant 0 : index
    %c0_160 = arith.constant 0 : index
    %437 = vector.load %arg19[%c1_158, %c0_159, %c0_160] : memref<2x64x32xf32, #tpu.memory_space<vmem>>, vector<1x64x32xf32>
    %438 = vector.shape_cast %437 : vector<1x64x32xf32> to vector<64x32xf32>
    %c1_161 = arith.constant 1 : index
    %c0_162 = arith.constant 0 : index
    %c0_163 = arith.constant 0 : index
    %439 = vector.load %arg20[%c1_161, %c0_162, %c0_163] : memref<2x1x32xf32, #tpu.memory_space<vmem>>, vector<1x1x32xf32>
    %440 = vector.shape_cast %439 : vector<1x1x32xf32> to vector<1x32xf32>
    %cst_164 = arith.constant dense<0.000000e+00> : vector<8x32xf32>
    %441 = tpu.matmul %436, %438, %cst_164 {dimension_numbers = #tpu.dot_dimension_numbers<[1], [0], [0], [1], [0, 0, 1, 1], [], []>} : vector<8x64xf32>, vector<64x32xf32>, vector<8x32xf32> -> vector<8x32xf32>
    %442 = vector.broadcast %440 : vector<1x32xf32> to vector<8x32xf32>
    %443 = arith.addf %441, %442 : vector<8x32xf32>
    %444 = arith.addf %427, %443 : vector<8x32xf32>
    %cst_165 = arith.constant dense<0.000000e+00> : vector<8xf32>
    %445 = vector.multi_reduction <add>, %444, %cst_165 [1] : vector<8x32xf32> to vector<8xf32>
    %446 = vector.shape_cast %445 : vector<8xf32> to vector<8x1xf32>
    %cst_166 = arith.constant 3.200000e+01 : f32
    %447 = vector.broadcast %cst_166 : f32 to vector<8x1xf32>
    %448 = arith.divf %446, %447 : vector<8x1xf32>
    %449 = vector.broadcast %448 : vector<8x1xf32> to vector<8x32xf32>
    %450 = arith.subf %444, %449 : vector<8x32xf32>
    %451 = arith.mulf %450, %450 : vector<8x32xf32>
    %cst_167 = arith.constant dense<0.000000e+00> : vector<8xf32>
    %452 = vector.multi_reduction <add>, %451, %cst_167 [1] : vector<8x32xf32> to vector<8xf32>
    %453 = vector.shape_cast %452 : vector<8xf32> to vector<8x1xf32>
    %cst_168 = arith.constant 3.200000e+01 : f32
    %454 = vector.broadcast %cst_168 : f32 to vector<8x1xf32>
    %455 = arith.divf %453, %454 : vector<8x1xf32>
    %456 = vector.broadcast %448 : vector<8x1xf32> to vector<8x32xf32>
    %457 = arith.subf %444, %456 : vector<8x32xf32>
    %cst_169 = arith.constant 9.99999974E-6 : f32
    %458 = vector.broadcast %cst_169 : f32 to vector<8x1xf32>
    %459 = arith.addf %455, %458 : vector<8x1xf32>
    %460 = math.rsqrt %459 : vector<8x1xf32>
    %461 = vector.broadcast %460 : vector<8x1xf32> to vector<8x32xf32>
    %462 = arith.mulf %457, %461 : vector<8x32xf32>
    %463 = vector.broadcast %239 : vector<1x32xf32> to vector<8x32xf32>
    %464 = arith.mulf %462, %463 : vector<8x32xf32>
    %465 = vector.broadcast %241 : vector<1x32xf32> to vector<8x32xf32>
    %466 = arith.addf %464, %465 : vector<8x32xf32>
    %c0_170 = arith.constant 0 : index
    %c0_171 = arith.constant 0 : index
    %467 = vector.load %arg21[%c0_170, %c0_171] : memref<32x1xf32, #tpu.memory_space<vmem>>, vector<32x1xf32>
    %c0_172 = arith.constant 0 : index
    %c0_173 = arith.constant 0 : index
    %468 = vector.load %arg22[%c0_172, %c0_173] : memref<1x1xf32, #tpu.memory_space<vmem>>, vector<1x1xf32>
    %cst_174 = arith.constant dense<0.000000e+00> : vector<8x1xf32>
    %469 = tpu.matmul %466, %467, %cst_174 {dimension_numbers = #tpu.dot_dimension_numbers<[1], [0], [0], [1], [0, 0, 1, 1], [], []>} : vector<8x32xf32>, vector<32x1xf32>, vector<8x1xf32> -> vector<8x1xf32>
    %470 = vector.broadcast %468 : vector<1x1xf32> to vector<8x1xf32>
    %471 = arith.addf %469, %470 : vector<8x1xf32>
    %cst_175 = arith.constant dense<0xFF800000> : vector<1xf32>
    %472 = vector.multi_reduction <maximumf>, %471, %cst_175 [0] : vector<8x1xf32> to vector<1xf32>
    %473 = vector.shape_cast %472 : vector<1xf32> to vector<1x1xf32>
    %474 = vector.broadcast %473 : vector<1x1xf32> to vector<8x1xf32>
    %475 = arith.subf %471, %474 : vector<8x1xf32>
    %476 = math.exp %475 : vector<8x1xf32>
    %cst_176 = arith.constant dense<0.000000e+00> : vector<1xf32>
    %477 = vector.multi_reduction <add>, %476, %cst_176 [0] : vector<8x1xf32> to vector<1xf32>
    %478 = vector.shape_cast %477 : vector<1xf32> to vector<1x1xf32>
    %479 = tpu.reciprocal %478 {approx = true} : vector<1x1xf32> -> vector<1x1xf32>
    %480 = vector.broadcast %479 : vector<1x1xf32> to vector<8x1xf32>
    %481 = arith.mulf %476, %480 : vector<8x1xf32>
    %482 = vector.broadcast %481 : vector<8x1xf32> to vector<8x32xf32>
    %483 = arith.mulf %482, %466 : vector<8x32xf32>
    %cst_177 = arith.constant dense<0.000000e+00> : vector<32xf32>
    %484 = vector.multi_reduction <add>, %483, %cst_177 [0] : vector<8x32xf32> to vector<32xf32>
    %485 = vector.shape_cast %484 : vector<32xf32> to vector<1x32xf32>
    %c0_178 = arith.constant 0 : index
    %c0_179 = arith.constant 0 : index
    %486 = vector.load %arg23[%c0_178, %c0_179] : memref<32x256xf32, #tpu.memory_space<vmem>>, vector<32x256xf32>
    %c0_180 = arith.constant 0 : index
    %c0_181 = arith.constant 0 : index
    %487 = vector.load %arg24[%c0_180, %c0_181] : memref<1x256xf32, #tpu.memory_space<vmem>>, vector<1x256xf32>
    %cst_182 = arith.constant dense<0.000000e+00> : vector<1x256xf32>
    %488 = tpu.matmul %485, %486, %cst_182 {dimension_numbers = #tpu.dot_dimension_numbers<[1], [0], [0], [1], [0, 0, 1, 1], [], []>} : vector<1x32xf32>, vector<32x256xf32>, vector<1x256xf32> -> vector<1x256xf32>
    %489 = arith.addf %488, %487 : vector<1x256xf32>
    %cst_183 = arith.constant 0.000000e+00 : f32
    %490 = vector.broadcast %cst_183 : f32 to vector<1x256xf32>
    %491 = arith.maximumf %489, %490 : vector<1x256xf32>
    %c0_184 = arith.constant 0 : index
    %c0_185 = arith.constant 0 : index
    %492 = vector.load %arg25[%c0_184, %c0_185] : memref<256x2xf32, #tpu.memory_space<vmem>>, vector<256x2xf32>
    %c0_186 = arith.constant 0 : index
    %c0_187 = arith.constant 0 : index
    %493 = vector.load %arg26[%c0_186, %c0_187] : memref<1x2xf32, #tpu.memory_space<vmem>>, vector<1x2xf32>
    %cst_188 = arith.constant dense<0.000000e+00> : vector<1x2xf32>
    %494 = tpu.matmul %491, %492, %cst_188 {dimension_numbers = #tpu.dot_dimension_numbers<[1], [0], [0], [1], [0, 0, 1, 1], [], []>} : vector<1x256xf32>, vector<256x2xf32>, vector<1x2xf32> -> vector<1x2xf32>
    %495 = arith.addf %494, %493 : vector<1x2xf32>
    %c0_189 = arith.constant 0 : index
    %c0_190 = arith.constant 0 : index
    %c0_191 = arith.constant 0 : index
    %496 = vector.load %arg27[%c0_189, %c0_190, %c0_191] : memref<1x1x2xf32, #tpu.memory_space<vmem>>, vector<1x1x2xf32>
    %497 = vector.shape_cast %496 : vector<1x1x2xf32> to vector<1x2xf32>
    %498 = vector.shape_cast %495 : vector<1x2xf32> to vector<1x1x2xf32>
    tpu.vector_store %arg27[%c0_189, %c0_190, %c0_191], %498 {strides = array<i32>} : memref<1x1x2xf32, #tpu.memory_space<vmem>>, vector<1x1x2xf32>,
    return
  }
  func.func @transform_0(%arg0: i32) -> (i32, i32, i32) {
    %c0_i32 = arith.constant 0 : i32
    %c0_i32_0 = arith.constant 0 : i32
    %c0_i32_1 = arith.constant 0 : i32
    return %arg0, %c0_i32, %c0_i32_0 : i32, i32, i32
  }
  func.func @transform_1(%arg0: i32) -> (i32, i32, i32) {
    %c0_i32 = arith.constant 0 : i32
    %c0_i32_0 = arith.constant 0 : i32
    %c0_i32_1 = arith.constant 0 : i32
    return %arg0, %c0_i32, %c0_i32_0 : i32, i32, i32
  }
  func.func @transform_2(%arg0: i32) -> (i32, i32) {
    %c0_i32 = arith.constant 0 : i32
    %c0_i32_0 = arith.constant 0 : i32
    %c0_i32_1 = arith.constant 0 : i32
    return %c0_i32, %c0_i32_0 : i32, i32
  }
  func.func @transform_3(%arg0: i32) -> (i32, i32) {
    %c0_i32 = arith.constant 0 : i32
    %c0_i32_0 = arith.constant 0 : i32
    %c0_i32_1 = arith.constant 0 : i32
    return %c0_i32, %c0_i32_0 : i32, i32
  }
  func.func @transform_4(%arg0: i32) -> (i32, i32, i32) {
    %c0_i32 = arith.constant 0 : i32
    %c0_i32_0 = arith.constant 0 : i32
    %c0_i32_1 = arith.constant 0 : i32
    %c0_i32_2 = arith.constant 0 : i32
    return %c0_i32, %c0_i32_0, %c0_i32_1 : i32, i32, i32
  }
  func.func @transform_5(%arg0: i32) -> (i32, i32, i32) {
    %c0_i32 = arith.constant 0 : i32
    %c0_i32_0 = arith.constant 0 : i32
    %c0_i32_1 = arith.constant 0 : i32
    %c0_i32_2 = arith.constant 0 : i32
    return %c0_i32, %c0_i32_0, %c0_i32_1 : i32, i32, i32
  }
  func.func @transform_6(%arg0: i32) -> (i32, i32, i32) {
    %c0_i32 = arith.constant 0 : i32
    %c0_i32_0 = arith.constant 0 : i32
    %c0_i32_1 = arith.constant 0 : i32
    %c0_i32_2 = arith.constant 0 : i32
    return %c0_i32, %c0_i32_0, %c0_i32_1 : i32, i32, i32
  }
  func.func @transform_7(%arg0: i32) -> (i32, i32, i32) {
    %c0_i32 = arith.constant 0 : i32
    %c0_i32_0 = arith.constant 0 : i32
    %c0_i32_1 = arith.constant 0 : i32
    %c0_i32_2 = arith.constant 0 : i32
    return %c0_i32, %c0_i32_0, %c0_i32_1 : i32, i32, i32
  }
  func.func @transform_8(%arg0: i32) -> (i32, i32, i32) {
    %c0_i32 = arith.constant 0 : i32
    %c0_i32_0 = arith.constant 0 : i32
    %c0_i32_1 = arith.constant 0 : i32
    %c0_i32_2 = arith.constant 0 : i32
    return %c0_i32, %c0_i32_0, %c0_i32_1 : i32, i32, i32
  }
  func.func @transform_9(%arg0: i32) -> (i32, i32, i32) {
    %c0_i32 = arith.constant 0 : i32
    %c0_i32_0 = arith.constant 0 : i32
    %c0_i32_1 = arith.constant 0 : i32
    %c0_i32_2 = arith.constant 0 : i32
    return %c0_i32, %c0_i32_0, %c0_i32_1 : i32, i32, i32
  }
  func.func @transform_10(%arg0: i32) -> (i32, i32, i32) {
    %c0_i32 = arith.constant 0 : i32
    %c0_i32_0 = arith.constant 0 : i32
    %c0_i32_1 = arith.constant 0 : i32
    %c0_i32_2 = arith.constant 0 : i32
    return %c0_i32, %c0_i32_0, %c0_i32_1 : i32, i32, i32
  }
  func.func @transform_11(%arg0: i32) -> (i32, i32, i32) {
    %c0_i32 = arith.constant 0 : i32
    %c0_i32_0 = arith.constant 0 : i32
    %c0_i32_1 = arith.constant 0 : i32
    %c0_i32_2 = arith.constant 0 : i32
    return %c0_i32, %c0_i32_0, %c0_i32_1 : i32, i32, i32
  }
  func.func @transform_12(%arg0: i32) -> (i32, i32, i32) {
    %c0_i32 = arith.constant 0 : i32
    %c0_i32_0 = arith.constant 0 : i32
    %c0_i32_1 = arith.constant 0 : i32
    %c0_i32_2 = arith.constant 0 : i32
    return %c0_i32, %c0_i32_0, %c0_i32_1 : i32, i32, i32
  }
  func.func @transform_13(%arg0: i32) -> (i32, i32, i32) {
    %c0_i32 = arith.constant 0 : i32
    %c0_i32_0 = arith.constant 0 : i32
    %c0_i32_1 = arith.constant 0 : i32
    %c0_i32_2 = arith.constant 0 : i32
    return %c0_i32, %c0_i32_0, %c0_i32_1 : i32, i32, i32
  }
  func.func @transform_14(%arg0: i32) -> (i32, i32, i32) {
    %c0_i32 = arith.constant 0 : i32
    %c0_i32_0 = arith.constant 0 : i32
    %c0_i32_1 = arith.constant 0 : i32
    %c0_i32_2 = arith.constant 0 : i32
    return %c0_i32, %c0_i32_0, %c0_i32_1 : i32, i32, i32
  }
  func.func @transform_15(%arg0: i32) -> (i32, i32, i32) {
    %c0_i32 = arith.constant 0 : i32
    %c0_i32_0 = arith.constant 0 : i32
    %c0_i32_1 = arith.constant 0 : i32
    %c0_i32_2 = arith.constant 0 : i32
    return %c0_i32, %c0_i32_0, %c0_i32_1 : i32, i32, i32
  }
  func.func @transform_16(%arg0: i32) -> (i32, i32, i32) {
    %c0_i32 = arith.constant 0 : i32
    %c0_i32_0 = arith.constant 0 : i32
    %c0_i32_1 = arith.constant 0 : i32
    %c0_i32_2 = arith.constant 0 : i32
    return %c0_i32, %c0_i32_0, %c0_i32_1 : i32, i32, i32
  }
  func.func @transform_17(%arg0: i32) -> (i32, i32, i32) {
    %c0_i32 = arith.constant 0 : i32
    %c0_i32_0 = arith.constant 0 : i32
    %c0_i32_1 = arith.constant 0 : i32
    %c0_i32_2 = arith.constant 0 : i32
    return %c0_i32, %c0_i32_0, %c0_i32_1 : i32, i32, i32
  }
  func.func @transform_18(%arg0: i32) -> (i32, i32, i32) {
    %c0_i32 = arith.constant 0 : i32
    %c0_i32_0 = arith.constant 0 : i32
    %c0_i32_1 = arith.constant 0 : i32
    %c0_i32_2 = arith.constant 0 : i32
    return %c0_i32, %c0_i32_0, %c0_i32_1 : i32, i32, i32
  }
  func.func @transform_19(%arg0: i32) -> (i32, i32, i32) {
    %c0_i32 = arith.constant 0 : i32
    %c0_i32_0 = arith.constant 0 : i32
    %c0_i32_1 = arith.constant 0 : i32
    %c0_i32_2 = arith.constant 0 : i32
    return %c0_i32, %c0_i32_0, %c0_i32_1 : i32, i32, i32
  }
  func.func @transform_20(%arg0: i32) -> (i32, i32) {
    %c0_i32 = arith.constant 0 : i32
    %c0_i32_0 = arith.constant 0 : i32
    %c0_i32_1 = arith.constant 0 : i32
    return %c0_i32, %c0_i32_0 : i32, i32
  }
  func.func @transform_21(%arg0: i32) -> (i32, i32) {
    %c0_i32 = arith.constant 0 : i32
    %c0_i32_0 = arith.constant 0 : i32
    %c0_i32_1 = arith.constant 0 : i32
    return %c0_i32, %c0_i32_0 : i32, i32
  }
  func.func @transform_22(%arg0: i32) -> (i32, i32) {
    %c0_i32 = arith.constant 0 : i32
    %c0_i32_0 = arith.constant 0 : i32
    %c0_i32_1 = arith.constant 0 : i32
    return %c0_i32, %c0_i32_0 : i32, i32
  }
  func.func @transform_23(%arg0: i32) -> (i32, i32) {
    %c0_i32 = arith.constant 0 : i32
    %c0_i32_0 = arith.constant 0 : i32
    %c0_i32_1 = arith.constant 0 : i32
    return %c0_i32, %c0_i32_0 : i32, i32
  }
  func.func @transform_24(%arg0: i32) -> (i32, i32) {
    %c0_i32 = arith.constant 0 : i32
    %c0_i32_0 = arith.constant 0 : i32
    %c0_i32_1 = arith.constant 0 : i32
    return %c0_i32, %c0_i32_0 : i32, i32
  }
  func.func @transform_25(%arg0: i32) -> (i32, i32) {
    %c0_i32 = arith.constant 0 : i32
    %c0_i32_0 = arith.constant 0 : i32
    %c0_i32_1 = arith.constant 0 : i32
    return %c0_i32, %c0_i32_0 : i32, i32
  }
  func.func @transform_26(%arg0: i32) -> (i32, i32, i32) {
    %c0_i32 = arith.constant 0 : i32
    %c0_i32_0 = arith.constant 0 : i32
    %c0_i32_1 = arith.constant 0 : i32
    return %arg0, %c0_i32, %c0_i32_0 : i32, i32, i32
  }
}

</mosaic_0001>

<llo_original>
// kernel: tpu_custom_call.1
$region0: #{tpu_custom_call.1}
  #allocation0 [shape = 'u32[]', space=smem, size = 0x4, offset = 0x4, fixed_abs, tag = 'smem constant byte address 0x4 - core index']
  #allocation1 [shape = 'u32[144,128]{1,0:T(1,128)}', space=vmem, size = 0x12000, scoped, tag = 'internal scratch']
  #allocation2 [shape = 'f32[1,1]{1,0:T(1,128)S(1)}', space=vmem, size = 0x200, scoped, tag = 'scoped memory for tpu_custom_call.1']
  %s0 = inlined_call_operand.vmem [shape: f32[2,8,32], index: 0, kind: input, shape index: {}]
  %s1 = inlined_call_operand.vmem [shape: f32[2,12,32], index: 1, kind: input, shape index: {}]
  %s2 = inlined_call_operand.vmem [shape: f32[32,32], index: 2, kind: input, shape index: {}]
  %s3 = inlined_call_operand.hbm [shape: f32[1,32], index: 3, kind: input, shape index: {}]
  %s4 = inlined_call_operand.vmem [shape: f32[2,1,32], index: 4, kind: input, shape index: {}]
  %s5 = inlined_call_operand.vmem [shape: f32[2,1,32], index: 5, kind: input, shape index: {}]
  %s6 = inlined_call_operand.vmem [shape: f32[2,32,96], index: 6, kind: input, shape index: {}]
  %s7 = inlined_call_operand.vmem [shape: f32[2,1,96], index: 7, kind: input, shape index: {}]
  %s8 = inlined_call_operand.vmem [shape: f32[2,32,32], index: 8, kind: input, shape index: {}]
  %s9 = inlined_call_operand.vmem [shape: f32[2,1,32], index: 9, kind: input, shape index: {}]
  %s10 = inlined_call_operand.vmem [shape: f32[2,32,32], index: 10, kind: input, shape index: {}]
  %s11 = inlined_call_operand.vmem [shape: f32[2,1,32], index: 11, kind: input, shape index: {}]
  %s12 = inlined_call_operand.vmem [shape: f32[2,32,64], index: 12, kind: input, shape index: {}]
  %s13 = inlined_call_operand.vmem [shape: f32[2,1,64], index: 13, kind: input, shape index: {}]
  %s14 = inlined_call_operand.vmem [shape: f32[2,32,32], index: 14, kind: input, shape index: {}]
  %s15 = inlined_call_operand.vmem [shape: f32[2,1,32], index: 15, kind: input, shape index: {}]
  %s16 = inlined_call_operand.vmem [shape: f32[2,32,64], index: 16, kind: input, shape index: {}]
  %s17 = inlined_call_operand.vmem [shape: f32[2,1,64], index: 17, kind: input, shape index: {}]
  %s18 = inlined_call_operand.vmem [shape: f32[2,64,32], index: 18, kind: input, shape index: {}]
  %s19 = inlined_call_operand.vmem [shape: f32[2,1,32], index: 19, kind: input, shape index: {}]
  %s20 = inlined_call_operand.vmem [shape: f32[32,1], index: 20, kind: input, shape index: {}]
  %s21 = inlined_call_operand.<no memory space> [shape: f32[1,1], index: 21, kind: input, shape index: {}]
  %s22 = inlined_call_operand.vmem [shape: f32[32,256], index: 22, kind: input, shape index: {}]
  %s23 = inlined_call_operand.vmem [shape: f32[1,256], index: 23, kind: input, shape index: {}]
  %s24 = inlined_call_operand.vmem [shape: f32[256,2], index: 24, kind: input, shape index: {}]
  %s25 = inlined_call_operand.vmem [shape: f32[1,2], index: 25, kind: input, shape index: {}]
  %s26 = inlined_call_operand.hbm [shape: f32[2,1,2], index: 26, kind: output, shape index: {}]
  %s27 = sld [smem:[#allocation0]]
  $region141: #{tpu_custom_call.1} parent=0
    _
  %s29 = ssub.s32 1, %s27
  %s30 = scalar_select 0, %s29, %s27
  %v31 = vstv %s21
  %32 = vst [vmem:[#allocation2] sm:$0x1] %v31
  $region1: #{tpu_custom_call.1} parent=0
    #allocation3 [shape = 'u8[512]{0}', space=vmem, size = 0x400, scoped, tag = 'input window, operand 3, single buffered']
    #allocation4 [shape = 's32[2]{0}', space=sflag, size = 0x8, scoped, tag = 'scoped memory for tpu_custom_call.1']
    #allocation5 [shape = 's32[2]{0}', space=sflag, size = 0x8, scoped, tag = 'scoped memory for tpu_custom_call.1']
    #allocation6 [shape = 'u8[1024]{0}', space=vmem, size = 0x400, scoped, tag = 'output window, operand 0']
    %33 = vsyncpa [#allocation4], 0
    %34 = vsyncpa [#allocation5], 0
    %s35 = scalar_lea.sflag [#allocation5], 1
    %36 = vsyncpa %s35, 0
    loop: start=0, step=1, limit=4
    $region2: #{tpu_custom_call.1} parent=1 // loop_pre_header
      _
    $region3: #{tpu_custom_call.1} parent=1 // loop_header
      %s38 = sphi 0, %s42
      %p39 = scmp.ge.s32.totalorder %s38, 4
      %s48 = sphi 0, %s50
      %s51 = sphi 0, %s48
      %s52 = sphi 0, %s51
      %s68 = sphi 0, %s52
      %s74 = sphi 0, %s76
      %s77 = sphi 0, %s74
      %s78 = sphi 0, %s77
      %s94 = sphi 0, %s78
      %s98 = sphi 0, %s98
      %s100 = sphi 0, %s98
      %s101 = sphi 0, %s100
      %s115 = sphi 0, %s101
      %s119 = sphi 0, %s119
      %s121 = sphi 0, %s119
      %s122 = sphi 0, %s121
      %s136 = sphi 0, %s122
      %s140 = sphi 0, %s140
      %s142 = sphi 0, %s140
      %s143 = sphi 0, %s142
      %s157 = sphi 0, %s143
      %s161 = sphi 0, %s161
      %s163 = sphi 0, %s161
      %s164 = sphi 0, %s163
      %s178 = sphi 0, %s164
      %s182 = sphi 0, %s182
      %s184 = sphi 0, %s182
      %s185 = sphi 0, %s184
      %s199 = sphi 0, %s185
      %s203 = sphi 0, %s203
      %s205 = sphi 0, %s203
      %s206 = sphi 0, %s205
      %s220 = sphi 0, %s206
      %s224 = sphi 0, %s224
      %s226 = sphi 0, %s224
      %s227 = sphi 0, %s226
      %s241 = sphi 0, %s227
      %s245 = sphi 0, %s245
      %s247 = sphi 0, %s245
      %s248 = sphi 0, %s247
      %s262 = sphi 0, %s248
      %s266 = sphi 0, %s266
      %s268 = sphi 0, %s266
      %s269 = sphi 0, %s268
      %s283 = sphi 0, %s269
      %s287 = sphi 0, %s287
      %s289 = sphi 0, %s287
      %s290 = sphi 0, %s289
      %s304 = sphi 0, %s290
      %s308 = sphi 0, %s308
      %s310 = sphi 0, %s308
      %s311 = sphi 0, %s310
      %s325 = sphi 0, %s311
      %s329 = sphi 0, %s329
      %s331 = sphi 0, %s329
      %s332 = sphi 0, %s331
      %s346 = sphi 0, %s332
      %s350 = sphi 0, %s350
      %s352 = sphi 0, %s350
      %s353 = sphi 0, %s352
      %s367 = sphi 0, %s353
      %s371 = sphi 0, %s371
      %s373 = sphi 0, %s371
      %s374 = sphi 0, %s373
      %s388 = sphi 0, %s374
      %s392 = sphi 0, %s392
      %s394 = sphi 0, %s392
      %s395 = sphi 0, %s394
      %s409 = sphi 0, %s395
      %s413 = sphi 0, %s413
      %s415 = sphi 0, %s413
      %s416 = sphi 0, %s415
      %s430 = sphi 0, %s416
      %s434 = sphi 0, %s434
      %s436 = sphi 0, %s434
      %s437 = sphi 0, %s436
      %s451 = sphi 0, %s437
      %s455 = sphi 0, %s455
      %s457 = sphi 0, %s455
      %s458 = sphi 0, %s457
      %s472 = sphi 0, %s458
      %s476 = sphi 0, %s476
      %s478 = sphi 0, %s476
      %s479 = sphi 0, %s478
      %s493 = sphi 0, %s479
      %s497 = sphi 0, %s497
      %s499 = sphi 0, %s497
      %s500 = sphi 0, %s499
      %s514 = sphi 0, %s500
      %s518 = sphi 0, %s518
      %s520 = sphi 0, %s518
      %s521 = sphi 0, %s520
      %s535 = sphi 0, %s521
      %s539 = sphi 0, %s539
      %s541 = sphi 0, %s539
      %s542 = sphi 0, %s541
      %s556 = sphi 0, %s542
      %s560 = sphi 0, %s560
      %s562 = sphi 0, %s560
      %s563 = sphi 0, %s562
      %s577 = sphi 0, %s563
      %s581 = sphi 0, %s581
      %s583 = sphi 0, %s581
      %s584 = sphi 0, %s583
      %s598 = sphi 0, %s584
      %s604 = sphi 0, %s606
      %s607 = sphi 0, %s604
      %s608 = sphi 0, %s607
      %s624 = sphi 0, %s608
    $region4: #{tpu_custom_call.1} parent=1 // loop_header_branch
      %41 = sbr.rel (%p39) target = $region8
    $region5: #{tpu_custom_call.1} parent=1 // loop_body
      %s43 = ssub.s32 %s38, 1
      %s44 = ssub.s32 %s38, 2
      %s45 = sadd.s32 %s38, 1
      %s46 = ssub.s32 %s38, %s45
      %p47 = scmp.eq.s32.totalorder %s46, 0
      %s49 = sadd.s32 %s48, 1
      %s50 = scalar_select %p47, %s48, %s49
      %p53 = pneg %p47
      %p54 = scmp.eq.s32.totalorder %s38, 1
      %p55 = por %p53, %p54
      %p56 = scmp.ne.s32.totalorder %s48, %s51
      %p57 = scmp.eq.s32.totalorder %s38, 0
      %p58 = por %p56, %p57
      %p59 = scmp.ne.s32.totalorder %s48, %s51
      %p60 = scmp.eq.s32.totalorder %s43, 1
      %p61 = por %p59, %p60
      %p62 = scmp.ne.s32.totalorder %s51, %s52
      %p63 = scmp.eq.s32.totalorder %s43, 0
      %p64 = por %p62, %p63
      %p65 = scmp.ne.s32.totalorder %s51, %s52
      %p66 = scmp.eq.s32.totalorder %s44, 1
      %p67 = por %p65, %p66
      %p69 = scmp.ne.s32.totalorder %s52, %s68
      %p70 = scmp.eq.s32.totalorder %s44, 0
      %p71 = por %p69, %p70
      %s72 = ssub.s32 %s38, %s45
      %p73 = scmp.eq.s32.totalorder %s72, 0
      %s75 = sadd.s32 %s74, 1
      %s76 = scalar_select %p73, %s74, %s75
      %p79 = pneg %p73
      %p80 = scmp.eq.s32.totalorder %s38, 1
      %p81 = por %p79, %p80
      %p82 = scmp.ne.s32.totalorder %s74, %s77
      %p83 = scmp.eq.s32.totalorder %s38, 0
      %p84 = por %p82, %p83
      %p85 = scmp.ne.s32.totalorder %s74, %s77
      %p86 = scmp.eq.s32.totalorder %s43, 1
      %p87 = por %p85, %p86
      %p88 = scmp.ne.s32.totalorder %s77, %s78
      %p89 = scmp.eq.s32.totalorder %s43, 0
      %p90 = por %p88, %p89
      %p91 = scmp.ne.s32.totalorder %s77, %s78
      %p92 = scmp.eq.s32.totalorder %s44, 1
      %p93 = por %p91, %p92
      %p95 = scmp.ne.s32.totalorder %s78, %s94
      %p96 = scmp.eq.s32.totalorder %s44, 0
      %p97 = por %p95, %p96
      %s99 = sadd.s32 %s98, 1
      %p102 = scmp.eq.s32.totalorder %s38, 1
      %p103 = scmp.ne.s32.totalorder %s98, %s100
      %p104 = scmp.eq.s32.totalorder %s38, 0
      %p105 = por %p103, %p104
      %p106 = scmp.ne.s32.totalorder %s98, %s100
      %p107 = scmp.eq.s32.totalorder %s43, 1
      %p108 = por %p106, %p107
      %p109 = scmp.ne.s32.totalorder %s100, %s101
      %p110 = scmp.eq.s32.totalorder %s43, 0
      %p111 = por %p109, %p110
      %p112 = scmp.ne.s32.totalorder %s100, %s101
      %p113 = scmp.eq.s32.totalorder %s44, 1
      %p114 = por %p112, %p113
      %p116 = scmp.ne.s32.totalorder %s101, %s115
      %p117 = scmp.eq.s32.totalorder %s44, 0
      %p118 = por %p116, %p117
      %s120 = sadd.s32 %s119, 1
      %p123 = scmp.eq.s32.totalorder %s38, 1
      %p124 = scmp.ne.s32.totalorder %s119, %s121
      %p125 = scmp.eq.s32.totalorder %s38, 0
      %p126 = por %p124, %p125
      %p127 = scmp.ne.s32.totalorder %s119, %s121
      %p128 = scmp.eq.s32.totalorder %s43, 1
      %p129 = por %p127, %p128
      %p130 = scmp.ne.s32.totalorder %s121, %s122
      %p131 = scmp.eq.s32.totalorder %s43, 0
      %p132 = por %p130, %p131
      %p133 = scmp.ne.s32.totalorder %s121, %s122
      %p134 = scmp.eq.s32.totalorder %s44, 1
      %p135 = por %p133, %p134
      %p137 = scmp.ne.s32.totalorder %s122, %s136
      %p138 = scmp.eq.s32.totalorder %s44, 0
      %p139 = por %p137, %p138
      %s141 = sadd.s32 %s140, 1
      %p144 = scmp.eq.s32.totalorder %s38, 1
      %p145 = scmp.ne.s32.totalorder %s140, %s142
      %p146 = scmp.eq.s32.totalorder %s38, 0
      %p147 = por %p145, %p146
      %p148 = scmp.ne.s32.totalorder %s140, %s142
      %p149 = scmp.eq.s32.totalorder %s43, 1
      %p150 = por %p148, %p149
      %p151 = scmp.ne.s32.totalorder %s142, %s143
      %p152 = scmp.eq.s32.totalorder %s43, 0
      %p153 = por %p151, %p152
      %p154 = scmp.ne.s32.totalorder %s142, %s143
      %p155 = scmp.eq.s32.totalorder %s44, 1
      %p156 = por %p154, %p155
      %p158 = scmp.ne.s32.totalorder %s143, %s157
      %p159 = scmp.eq.s32.totalorder %s44, 0
      %p160 = por %p158, %p159
      %s162 = sadd.s32 %s161, 1
      %p165 = scmp.eq.s32.totalorder %s38, 1
      %p166 = scmp.ne.s32.totalorder %s161, %s163
      %p167 = scmp.eq.s32.totalorder %s38, 0
      %p168 = por %p166, %p167
      %p169 = scmp.ne.s32.totalorder %s161, %s163
      %p170 = scmp.eq.s32.totalorder %s43, 1
      %p171 = por %p169, %p170
      %p172 = scmp.ne.s32.totalorder %s163, %s164
      %p173 = scmp.eq.s32.totalorder %s43, 0
      %p174 = por %p172, %p173
      %p175 = scmp.ne.s32.totalorder %s163, %s164
      %p176 = scmp.eq.s32.totalorder %s44, 1
      %p177 = por %p175, %p176
      %p179 = scmp.ne.s32.totalorder %s164, %s178
      %p180 = scmp.eq.s32.totalorder %s44, 0
      %p181 = por %p179, %p180
      %s183 = sadd.s32 %s182, 1
      %p186 = scmp.eq.s32.totalorder %s38, 1
      %p187 = scmp.ne.s32.totalorder %s182, %s184
      %p188 = scmp.eq.s32.totalorder %s38, 0
      %p189 = por %p187, %p188
      %p190 = scmp.ne.s32.totalorder %s182, %s184
      %p191 = scmp.eq.s32.totalorder %s43, 1
      %p192 = por %p190, %p191
      %p193 = scmp.ne.s32.totalorder %s184, %s185
      %p194 = scmp.eq.s32.totalorder %s43, 0
      %p195 = por %p193, %p194
      %p196 = scmp.ne.s32.totalorder %s184, %s185
      %p197 = scmp.eq.s32.totalorder %s44, 1
      %p198 = por %p196, %p197
      %p200 = scmp.ne.s32.totalorder %s185, %s199
      %p201 = scmp.eq.s32.totalorder %s44, 0
      %p202 = por %p200, %p201
      %s204 = sadd.s32 %s203, 1
      %p207 = scmp.eq.s32.totalorder %s38, 1
      %p208 = scmp.ne.s32.totalorder %s203, %s205
      %p209 = scmp.eq.s32.totalorder %s38, 0
      %p210 = por %p208, %p209
      %p211 = scmp.ne.s32.totalorder %s203, %s205
      %p212 = scmp.eq.s32.totalorder %s43, 1
      %p213 = por %p211, %p212
      %p214 = scmp.ne.s32.totalorder %s205, %s206
      %p215 = scmp.eq.s32.totalorder %s43, 0
      %p216 = por %p214, %p215
      %p217 = scmp.ne.s32.totalorder %s205, %s206
      %p218 = scmp.eq.s32.totalorder %s44, 1
      %p219 = por %p217, %p218
      %p221 = scmp.ne.s32.totalorder %s206, %s220
      %p222 = scmp.eq.s32.totalorder %s44, 0
      %p223 = por %p221, %p222
      %s225 = sadd.s32 %s224, 1
      %p228 = scmp.eq.s32.totalorder %s38, 1
      %p229 = scmp.ne.s32.totalorder %s224, %s226
      %p230 = scmp.eq.s32.totalorder %s38, 0
      %p231 = por %p229, %p230
      %p232 = scmp.ne.s32.totalorder %s224, %s226
      %p233 = scmp.eq.s32.totalorder %s43, 1
      %p234 = por %p232, %p233
      %p235 = scmp.ne.s32.totalorder %s226, %s227
      %p236 = scmp.eq.s32.totalorder %s43, 0
      %p237 = por %p235, %p236
      %p238 = scmp.ne.s32.totalorder %s226, %s227
      %p239 = scmp.eq.s32.totalorder %s44, 1
      %p240 = por %p238, %p239
      %p242 = scmp.ne.s32.totalorder %s227, %s241
      %p243 = scmp.eq.s32.totalorder %s44, 0
      %p244 = por %p242, %p243
      %s246 = sadd.s32 %s245, 1
      %p249 = scmp.eq.s32.totalorder %s38, 1
      %p250 = scmp.ne.s32.totalorder %s245, %s247
      %p251 = scmp.eq.s32.totalorder %s38, 0
      %p252 = por %p250, %p251
      %p253 = scmp.ne.s32.totalorder %s245, %s247
      %p254 = scmp.eq.s32.totalorder %s43, 1
      %p255 = por %p253, %p254
      %p256 = scmp.ne.s32.totalorder %s247, %s248
      %p257 = scmp.eq.s32.totalorder %s43, 0
      %p258 = por %p256, %p257
      %p259 = scmp.ne.s32.totalorder %s247, %s248
      %p260 = scmp.eq.s32.totalorder %s44, 1
      %p261 = por %p259, %p260
      %p263 = scmp.ne.s32.totalorder %s248, %s262
      %p264 = scmp.eq.s32.totalorder %s44, 0
      %p265 = por %p263, %p264
      %s267 = sadd.s32 %s266, 1
      %p270 = scmp.eq.s32.totalorder %s38, 1
      %p271 = scmp.ne.s32.totalorder %s266, %s268
      %p272 = scmp.eq.s32.totalorder %s38, 0
      %p273 = por %p271, %p272
      %p274 = scmp.ne.s32.totalorder %s266, %s268
      %p275 = scmp.eq.s32.totalorder %s43, 1
      %p276 = por %p274, %p275
      %p277 = scmp.ne.s32.totalorder %s268, %s269
      %p278 = scmp.eq.s32.totalorder %s43, 0
      %p279 = por %p277, %p278
      %p280 = scmp.ne.s32.totalorder %s268, %s269
      %p281 = scmp.eq.s32.totalorder %s44, 1
      %p282 = por %p280, %p281
      %p284 = scmp.ne.s32.totalorder %s269, %s283
      %p285 = scmp.eq.s32.totalorder %s44, 0
      %p286 = por %p284, %p285
      %s288 = sadd.s32 %s287, 1
      %p291 = scmp.eq.s32.totalorder %s38, 1
      %p292 = scmp.ne.s32.totalorder %s287, %s289
      %p293 = scmp.eq.s32.totalorder %s38, 0
      %p294 = por %p292, %p293
      %p295 = scmp.ne.s32.totalorder %s287, %s289
      %p296 = scmp.eq.s32.totalorder %s43, 1
      %p297 = por %p295, %p296
      %p298 = scmp.ne.s32.totalorder %s289, %s290
      %p299 = scmp.eq.s32.totalorder %s43, 0
      %p300 = por %p298, %p299
      %p301 = scmp.ne.s32.totalorder %s289, %s290
      %p302 = scmp.eq.s32.totalorder %s44, 1
      %p303 = por %p301, %p302
      %p305 = scmp.ne.s32.totalorder %s290, %s304
      %p306 = scmp.eq.s32.totalorder %s44, 0
      %p307 = por %p305, %p306
      %s309 = sadd.s32 %s308, 1
      %p312 = scmp.eq.s32.totalorder %s38, 1
      %p313 = scmp.ne.s32.totalorder %s308, %s310
      %p314 = scmp.eq.s32.totalorder %s38, 0
      %p315 = por %p313, %p314
      %p316 = scmp.ne.s32.totalorder %s308, %s310
      %p317 = scmp.eq.s32.totalorder %s43, 1
      %p318 = por %p316, %p317
      %p319 = scmp.ne.s32.totalorder %s310, %s311
      %p320 = scmp.eq.s32.totalorder %s43, 0
      %p321 = por %p319, %p320
      %p322 = scmp.ne.s32.totalorder %s310, %s311
      %p323 = scmp.eq.s32.totalorder %s44, 1
      %p324 = por %p322, %p323
      %p326 = scmp.ne.s32.totalorder %s311, %s325
      %p327 = scmp.eq.s32.totalorder %s44, 0
      %p328 = por %p326, %p327
      %s330 = sadd.s32 %s329, 1
      %p333 = scmp.eq.s32.totalorder %s38, 1
      %p334 = scmp.ne.s32.totalorder %s329, %s331
      %p335 = scmp.eq.s32.totalorder %s38, 0
      %p336 = por %p334, %p335
      %p337 = scmp.ne.s32.totalorder %s329, %s331
      %p338 = scmp.eq.s32.totalorder %s43, 1
      %p339 = por %p337, %p338
      %p340 = scmp.ne.s32.totalorder %s331, %s332
      %p341 = scmp.eq.s32.totalorder %s43, 0
      %p342 = por %p340, %p341
      %p343 = scmp.ne.s32.totalorder %s331, %s332
      %p344 = scmp.eq.s32.totalorder %s44, 1
      %p345 = por %p343, %p344
      %p347 = scmp.ne.s32.totalorder %s332, %s346
      %p348 = scmp.eq.s32.totalorder %s44, 0
      %p349 = por %p347, %p348
      %s351 = sadd.s32 %s350, 1
      %p354 = scmp.eq.s32.totalorder %s38, 1
      %p355 = scmp.ne.s32.totalorder %s350, %s352
      %p356 = scmp.eq.s32.totalorder %s38, 0
      %p357 = por %p355, %p356
      %p358 = scmp.ne.s32.totalorder %s350, %s352
      %p359 = scmp.eq.s32.totalorder %s43, 1
      %p360 = por %p358, %p359
      %p361 = scmp.ne.s32.totalorder %s352, %s353
      %p362 = scmp.eq.s32.totalorder %s43, 0
      %p363 = por %p361, %p362
      %p364 = scmp.ne.s32.totalorder %s352, %s353
      %p365 = scmp.eq.s32.totalorder %s44, 1
      %p366 = por %p364, %p365
      %p368 = scmp.ne.s32.totalorder %s353, %s367
      %p369 = scmp.eq.s32.totalorder %s44, 0
      %p370 = por %p368, %p369
      %s372 = sadd.s32 %s371, 1
      %p375 = scmp.eq.s32.totalorder %s38, 1
      %p376 = scmp.ne.s32.totalorder %s371, %s373
      %p377 = scmp.eq.s32.totalorder %s38, 0
      %p378 = por %p376, %p377
      %p379 = scmp.ne.s32.totalorder %s371, %s373
      %p380 = scmp.eq.s32.totalorder %s43, 1
      %p381 = por %p379, %p380
      %p382 = scmp.ne.s32.totalorder %s373, %s374
      %p383 = scmp.eq.s32.totalorder %s43, 0
      %p384 = por %p382, %p383
      %p385 = scmp.ne.s32.totalorder %s373, %s374
      %p386 = scmp.eq.s32.totalorder %s44, 1
      %p387 = por %p385, %p386
      %p389 = scmp.ne.s32.totalorder %s374, %s388
      %p390 = scmp.eq.s32.totalorder %s44, 0
      %p391 = por %p389, %p390
      %s393 = sadd.s32 %s392, 1
      %p396 = scmp.eq.s32.totalorder %s38, 1
      %p397 = scmp.ne.s32.totalorder %s392, %s394
      %p398 = scmp.eq.s32.totalorder %s38, 0
      %p399 = por %p397, %p398
      %p400 = scmp.ne.s32.totalorder %s392, %s394
      %p401 = scmp.eq.s32.totalorder %s43, 1
      %p402 = por %p400, %p401
      %p403 = scmp.ne.s32.totalorder %s394, %s395
      %p404 = scmp.eq.s32.totalorder %s43, 0
      %p405 = por %p403, %p404
      %p406 = scmp.ne.s32.totalorder %s394, %s395
      %p407 = scmp.eq.s32.totalorder %s44, 1
      %p408 = por %p406, %p407
      %p410 = scmp.ne.s32.totalorder %s395, %s409
      %p411 = scmp.eq.s32.totalorder %s44, 0
      %p412 = por %p410, %p411
      %s414 = sadd.s32 %s413, 1
      %p417 = scmp.eq.s32.totalorder %s38, 1
      %p418 = scmp.ne.s32.totalorder %s413, %s415
      %p419 = scmp.eq.s32.totalorder %s38, 0
      %p420 = por %p418, %p419
      %p421 = scmp.ne.s32.totalorder %s413, %s415
      %p422 = scmp.eq.s32.totalorder %s43, 1
      %p423 = por %p421, %p422
      %p424 = scmp.ne.s32.totalorder %s415, %s416
      %p425 = scmp.eq.s32.totalorder %s43, 0
      %p426 = por %p424, %p425
      %p427 = scmp.ne.s32.totalorder %s415, %s416
      %p428 = scmp.eq.s32.totalorder %s44, 1
      %p429 = por %p427, %p428
      %p431 = scmp.ne.s32.totalorder %s416, %s430
      %p432 = scmp.eq.s32.totalorder %s44, 0
      %p433 = por %p431, %p432
      %s435 = sadd.s32 %s434, 1
      %p438 = scmp.eq.s32.totalorder %s38, 1
      %p439 = scmp.ne.s32.totalorder %s434, %s436
      %p440 = scmp.eq.s32.totalorder %s38, 0
      %p441 = por %p439, %p440
      %p442 = scmp.ne.s32.totalorder %s434, %s436
      %p443 = scmp.eq.s32.totalorder %s43, 1
      %p444 = por %p442, %p443
      %p445 = scmp.ne.s32.totalorder %s436, %s437
      %p446 = scmp.eq.s32.totalorder %s43, 0
      %p447 = por %p445, %p446
      %p448 = scmp.ne.s32.totalorder %s436, %s437
      %p449 = scmp.eq.s32.totalorder %s44, 1
      %p450 = por %p448, %p449
      %p452 = scmp.ne.s32.totalorder %s437, %s451
      %p453 = scmp.eq.s32.totalorder %s44, 0
      %p454 = por %p452, %p453
      %s456 = sadd.s32 %s455, 1
      %p459 = scmp.eq.s32.totalorder %s38, 1
      %p460 = scmp.ne.s32.totalorder %s455, %s457
      %p461 = scmp.eq.s32.totalorder %s38, 0
      %p462 = por %p460, %p461
      %p463 = scmp.ne.s32.totalorder %s455, %s457
      %p464 = scmp.eq.s32.totalorder %s43, 1
      %p465 = por %p463, %p464
      %p466 = scmp.ne.s32.totalorder %s457, %s458
      %p467 = scmp.eq.s32.totalorder %s43, 0
      %p468 = por %p466, %p467
      %p469 = scmp.ne.s32.totalorder %s457, %s458
      %p470 = scmp.eq.s32.totalorder %s44, 1
      %p471 = por %p469, %p470
      %p473 = scmp.ne.s32.totalorder %s458, %s472
      %p474 = scmp.eq.s32.totalorder %s44, 0
      %p475 = por %p473, %p474
      %s477 = sadd.s32 %s476, 1
      %p480 = scmp.eq.s32.totalorder %s38, 1
      %p481 = scmp.ne.s32.totalorder %s476, %s478
      %p482 = scmp.eq.s32.totalorder %s38, 0
      %p483 = por %p481, %p482
      %p484 = scmp.ne.s32.totalorder %s476, %s478
      %p485 = scmp.eq.s32.totalorder %s43, 1
      %p486 = por %p484, %p485
      %p487 = scmp.ne.s32.totalorder %s478, %s479
      %p488 = scmp.eq.s32.totalorder %s43, 0
      %p489 = por %p487, %p488
      %p490 = scmp.ne.s32.totalorder %s478, %s479
      %p491 = scmp.eq.s32.totalorder %s44, 1
      %p492 = por %p490, %p491
      %p494 = scmp.ne.s32.totalorder %s479, %s493
      %p495 = scmp.eq.s32.totalorder %s44, 0
      %p496 = por %p494, %p495
      %s498 = sadd.s32 %s497, 1
      %p501 = scmp.eq.s32.totalorder %s38, 1
      %p502 = scmp.ne.s32.totalorder %s497, %s499
      %p503 = scmp.eq.s32.totalorder %s38, 0
      %p504 = por %p502, %p503
      %p505 = scmp.ne.s32.totalorder %s497, %s499
      %p506 = scmp.eq.s32.totalorder %s43, 1
      %p507 = por %p505, %p506
      %p508 = scmp.ne.s32.totalorder %s499, %s500
      %p509 = scmp.eq.s32.totalorder %s43, 0
      %p510 = por %p508, %p509
      %p511 = scmp.ne.s32.totalorder %s499, %s500
      %p512 = scmp.eq.s32.totalorder %s44, 1
      %p513 = por %p511, %p512
      %p515 = scmp.ne.s32.totalorder %s500, %s514
      %p516 = scmp.eq.s32.totalorder %s44, 0
      %p517 = por %p515, %p516
      %s519 = sadd.s32 %s518, 1
      %p522 = scmp.eq.s32.totalorder %s38, 1
      %p523 = scmp.ne.s32.totalorder %s518, %s520
      %p524 = scmp.eq.s32.totalorder %s38, 0
      %p525 = por %p523, %p524
      %p526 = scmp.ne.s32.totalorder %s518, %s520
      %p527 = scmp.eq.s32.totalorder %s43, 1
      %p528 = por %p526, %p527
      %p529 = scmp.ne.s32.totalorder %s520, %s521
      %p530 = scmp.eq.s32.totalorder %s43, 0
      %p531 = por %p529, %p530
      %p532 = scmp.ne.s32.totalorder %s520, %s521
      %p533 = scmp.eq.s32.totalorder %s44, 1
      %p534 = por %p532, %p533
      %p536 = scmp.ne.s32.totalorder %s521, %s535
      %p537 = scmp.eq.s32.totalorder %s44, 0
      %p538 = por %p536, %p537
      %s540 = sadd.s32 %s539, 1
      %p543 = scmp.eq.s32.totalorder %s38, 1
      %p544 = scmp.ne.s32.totalorder %s539, %s541
      %p545 = scmp.eq.s32.totalorder %s38, 0
      %p546 = por %p544, %p545
      %p547 = scmp.ne.s32.totalorder %s539, %s541
      %p548 = scmp.eq.s32.totalorder %s43, 1
      %p549 = por %p547, %p548
      %p550 = scmp.ne.s32.totalorder %s541, %s542
      %p551 = scmp.eq.s32.totalorder %s43, 0
      %p552 = por %p550, %p551
      %p553 = scmp.ne.s32.totalorder %s541, %s542
      %p554 = scmp.eq.s32.totalorder %s44, 1
      %p555 = por %p553, %p554
      %p557 = scmp.ne.s32.totalorder %s542, %s556
      %p558 = scmp.eq.s32.totalorder %s44, 0
      %p559 = por %p557, %p558
      %s561 = sadd.s32 %s560, 1
      %p564 = scmp.eq.s32.totalorder %s38, 1
      %p565 = scmp.ne.s32.totalorder %s560, %s562
      %p566 = scmp.eq.s32.totalorder %s38, 0
      %p567 = por %p565, %p566
      %p568 = scmp.ne.s32.totalorder %s560, %s562
      %p569 = scmp.eq.s32.totalorder %s43, 1
      %p570 = por %p568, %p569
      %p571 = scmp.ne.s32.totalorder %s562, %s563
      %p572 = scmp.eq.s32.totalorder %s43, 0
      %p573 = por %p571, %p572
      %p574 = scmp.ne.s32.totalorder %s562, %s563
      %p575 = scmp.eq.s32.totalorder %s44, 1
      %p576 = por %p574, %p575
      %p578 = scmp.ne.s32.totalorder %s563, %s577
      %p579 = scmp.eq.s32.totalorder %s44, 0
      %p580 = por %p578, %p579
      %s582 = sadd.s32 %s581, 1
      %p585 = scmp.eq.s32.totalorder %s38, 1
      %p586 = scmp.ne.s32.totalorder %s581, %s583
      %p587 = scmp.eq.s32.totalorder %s38, 0
      %p588 = por %p586, %p587
      %p589 = scmp.ne.s32.totalorder %s581, %s583
      %p590 = scmp.eq.s32.totalorder %s43, 1
      %p591 = por %p589, %p590
      %p592 = scmp.ne.s32.totalorder %s583, %s584
      %p593 = scmp.eq.s32.totalorder %s43, 0
      %p594 = por %p592, %p593
      %p595 = scmp.ne.s32.totalorder %s583, %s584
      %p596 = scmp.eq.s32.totalorder %s44, 1
      %p597 = por %p595, %p596
      %p599 = scmp.ne.s32.totalorder %s584, %s598
      %p600 = scmp.eq.s32.totalorder %s44, 0
      %p601 = por %p599, %p600
      %s602 = ssub.s32 %s38, %s45
      %p603 = scmp.eq.s32.totalorder %s602, 0
      %s605 = sadd.s32 %s604, 1
      %s606 = scalar_select %p603, %s604, %s605
      %p609 = pneg %p603
      %p610 = scmp.eq.s32.totalorder %s38, 1
      %p611 = por %p609, %p610
      %p612 = scmp.ne.s32.totalorder %s604, %s607
      %p613 = scmp.eq.s32.totalorder %s38, 0
      %p614 = por %p612, %p613
      %p615 = scmp.ne.s32.totalorder %s604, %s607
      %p616 = scmp.eq.s32.totalorder %s43, 1
      %p617 = por %p615, %p616
      %p618 = scmp.ne.s32.totalorder %s607, %s608
      %p619 = scmp.eq.s32.totalorder %s43, 0
      %p620 = por %p618, %p619
      %p621 = scmp.ne.s32.totalorder %s607, %s608
      %p622 = scmp.eq.s32.totalorder %s44, 1
      %p623 = por %p621, %p622
      %p625 = scmp.ne.s32.totalorder %s608, %s624
      %p626 = scmp.eq.s32.totalorder %s44, 0
      %p627 = por %p625, %p626
      %p628 = scmp.le.s32.totalorder 1, %s38
      %p629 = scmp.lt.s32.totalorder %s38, 3
      %p630 = pnand %p628, %p629
      %p631 = pneg %p630
      // Predicated region
      $region9: #{tpu_custom_call.1} parent=5 // pred_check
        _
      $region10: #{tpu_custom_call.1} parent=5 // pred_check_branch
        %633 = sbr.rel (%p630) target = $region12
      $region11: #{tpu_custom_call.1} parent=5 // pred_region
        %s634 = ssub.s32 %s38, 1
        // Predicated region
        $region13: #{tpu_custom_call.1} parent=11 // pred_check
          %p635 = pneg %p111
        $region14: #{tpu_custom_call.1} parent=11 // pred_check_branch
          %637 = sbr.rel (%p635) target = $region16
        $region15: #{tpu_custom_call.1} parent=11 // pred_region
          _
        $region16: #{tpu_custom_call.1} parent=11 // pred_fallthru
          _
        // Predicated region
        $region17: #{tpu_custom_call.1} parent=11 // pred_check
          %p638 = pneg %p132
        $region18: #{tpu_custom_call.1} parent=11 // pred_check_branch
          %640 = sbr.rel (%p638) target = $region20
        $region19: #{tpu_custom_call.1} parent=11 // pred_region
          %s642 = ssub.s32 16, 16
          %643 = vsyncadd [#allocation4], %s642
          %s645 = sshll.u32 [#allocation3], 4
          %s646 = int_to_ptr.vmem [resolvable:$true] %s645
          %648 = dma.hbm_to_vmem [thread:$0]  %s3, 16, %s646, [#allocation4]
        $region20: #{tpu_custom_call.1} parent=11 // pred_fallthru
          _
        // Predicated region
        $region21: #{tpu_custom_call.1} parent=11 // pred_check
          %p649 = pneg %p153
        $region22: #{tpu_custom_call.1} parent=11 // pred_check_branch
          %651 = sbr.rel (%p649) target = $region24
        $region23: #{tpu_custom_call.1} parent=11 // pred_region
          _
        $region24: #{tpu_custom_call.1} parent=11 // pred_fallthru
          _
        // Predicated region
        $region25: #{tpu_custom_call.1} parent=11 // pred_check
          %p652 = pneg %p174
        $region26: #{tpu_custom_call.1} parent=11 // pred_check_branch
          %654 = sbr.rel (%p652) target = $region28
        $region27: #{tpu_custom_call.1} parent=11 // pred_region
          _
        $region28: #{tpu_custom_call.1} parent=11 // pred_fallthru
          _
        // Predicated region
        $region29: #{tpu_custom_call.1} parent=11 // pred_check
          %p655 = pneg %p195
        $region30: #{tpu_custom_call.1} parent=11 // pred_check_branch
          %657 = sbr.rel (%p655) target = $region32
        $region31: #{tpu_custom_call.1} parent=11 // pred_region
          _
        $region32: #{tpu_custom_call.1} parent=11 // pred_fallthru
          _
        // Predicated region
        $region33: #{tpu_custom_call.1} parent=11 // pred_check
          %p658 = pneg %p216
        $region34: #{tpu_custom_call.1} parent=11 // pred_check_branch
          %660 = sbr.rel (%p658) target = $region36
        $region35: #{tpu_custom_call.1} parent=11 // pred_region
          _
        $region36: #{tpu_custom_call.1} parent=11 // pred_fallthru
          _
        // Predicated region
        $region37: #{tpu_custom_call.1} parent=11 // pred_check
          %p661 = pneg %p237
        $region38: #{tpu_custom_call.1} parent=11 // pred_check_branch
          %663 = sbr.rel (%p661) target = $region40
        $region39: #{tpu_custom_call.1} parent=11 // pred_region
          _
        $region40: #{tpu_custom_call.1} parent=11 // pred_fallthru
          _
        // Predicated region
        $region41: #{tpu_custom_call.1} parent=11 // pred_check
          %p664 = pneg %p258
        $region42: #{tpu_custom_call.1} parent=11 // pred_check_branch
          %666 = sbr.rel (%p664) target = $region44
        $region43: #{tpu_custom_call.1} parent=11 // pred_region
          _
        $region44: #{tpu_custom_call.1} parent=11 // pred_fallthru
          _
        // Predicated region
        $region45: #{tpu_custom_call.1} parent=11 // pred_check
          %p667 = pneg %p279
        $region46: #{tpu_custom_call.1} parent=11 // pred_check_branch
          %669 = sbr.rel (%p667) target = $region48
        $region47: #{tpu_custom_call.1} parent=11 // pred_region
          _
        $region48: #{tpu_custom_call.1} parent=11 // pred_fallthru
          _
        // Predicated region
        $region49: #{tpu_custom_call.1} parent=11 // pred_check
          %p670 = pneg %p300
        $region50: #{tpu_custom_call.1} parent=11 // pred_check_branch
          %672 = sbr.rel (%p670) target = $region52
        $region51: #{tpu_custom_call.1} parent=11 // pred_region
          _
        $region52: #{tpu_custom_call.1} parent=11 // pred_fallthru
          _
        // Predicated region
        $region53: #{tpu_custom_call.1} parent=11 // pred_check
          %p673 = pneg %p321
        $region54: #{tpu_custom_call.1} parent=11 // pred_check_branch
          %675 = sbr.rel (%p673) target = $region56
        $region55: #{tpu_custom_call.1} parent=11 // pred_region
          _
        $region56: #{tpu_custom_call.1} parent=11 // pred_fallthru
          _
        // Predicated region
        $region57: #{tpu_custom_call.1} parent=11 // pred_check
          %p676 = pneg %p342
        $region58: #{tpu_custom_call.1} parent=11 // pred_check_branch
          %678 = sbr.rel (%p676) target = $region60
        $region59: #{tpu_custom_call.1} parent=11 // pred_region
          _
        $region60: #{tpu_custom_call.1} parent=11 // pred_fallthru
          _
        // Predicated region
        $region61: #{tpu_custom_call.1} parent=11 // pred_check
          %p679 = pneg %p363
        $region62: #{tpu_custom_call.1} parent=11 // pred_check_branch
          %681 = sbr.rel (%p679) target = $region64
        $region63: #{tpu_custom_call.1} parent=11 // pred_region
          _
        $region64: #{tpu_custom_call.1} parent=11 // pred_fallthru
          _
        // Predicated region
        $region65: #{tpu_custom_call.1} parent=11 // pred_check
          %p682 = pneg %p384
        $region66: #{tpu_custom_call.1} parent=11 // pred_check_branch
          %684 = sbr.rel (%p682) target = $region68
        $region67: #{tpu_custom_call.1} parent=11 // pred_region
          _
        $region68: #{tpu_custom_call.1} parent=11 // pred_fallthru
          _
        // Predicated region
        $region69: #{tpu_custom_call.1} parent=11 // pred_check
          %p685 = pneg %p405
        $region70: #{tpu_custom_call.1} parent=11 // pred_check_branch
          %687 = sbr.rel (%p685) target = $region72
        $region71: #{tpu_custom_call.1} parent=11 // pred_region
          _
        $region72: #{tpu_custom_call.1} parent=11 // pred_fallthru
          _
        // Predicated region
        $region73: #{tpu_custom_call.1} parent=11 // pred_check
          %p688 = pneg %p426
        $region74: #{tpu_custom_call.1} parent=11 // pred_check_branch
          %690 = sbr.rel (%p688) target = $region76
        $region75: #{tpu_custom_call.1} parent=11 // pred_region
          _
        $region76: #{tpu_custom_call.1} parent=11 // pred_fallthru
          _
        // Predicated region
        $region77: #{tpu_custom_call.1} parent=11 // pred_check
          %p691 = pneg %p447
        $region78: #{tpu_custom_call.1} parent=11 // pred_check_branch
          %693 = sbr.rel (%p691) target = $region80
        $region79: #{tpu_custom_call.1} parent=11 // pred_region
          _
        $region80: #{tpu_custom_call.1} parent=11 // pred_fallthru
          _
        // Predicated region
        $region81: #{tpu_custom_call.1} parent=11 // pred_check
          %p694 = pneg %p468
        $region82: #{tpu_custom_call.1} parent=11 // pred_check_branch
          %696 = sbr.rel (%p694) target = $region84
        $region83: #{tpu_custom_call.1} parent=11 // pred_region
          _
        $region84: #{tpu_custom_call.1} parent=11 // pred_fallthru
          _
        // Predicated region
        $region85: #{tpu_custom_call.1} parent=11 // pred_check
          %p697 = pneg %p489
        $region86: #{tpu_custom_call.1} parent=11 // pred_check_branch
          %699 = sbr.rel (%p697) target = $region88
        $region87: #{tpu_custom_call.1} parent=11 // pred_region
          _
        $region88: #{tpu_custom_call.1} parent=11 // pred_fallthru
          _
        // Predicated region
        $region89: #{tpu_custom_call.1} parent=11 // pred_check
          %p700 = pneg %p510
        $region90: #{tpu_custom_call.1} parent=11 // pred_check_branch
          %702 = sbr.rel (%p700) target = $region92
        $region91: #{tpu_custom_call.1} parent=11 // pred_region
          _
        $region92: #{tpu_custom_call.1} parent=11 // pred_fallthru
          _
        // Predicated region
        $region93: #{tpu_custom_call.1} parent=11 // pred_check
          %p703 = pneg %p531
        $region94: #{tpu_custom_call.1} parent=11 // pred_check_branch
          %705 = sbr.rel (%p703) target = $region96
        $region95: #{tpu_custom_call.1} parent=11 // pred_region
          _
        $region96: #{tpu_custom_call.1} parent=11 // pred_fallthru
          _
        // Predicated region
        $region97: #{tpu_custom_call.1} parent=11 // pred_check
          %p706 = pneg %p552
        $region98: #{tpu_custom_call.1} parent=11 // pred_check_branch
          %708 = sbr.rel (%p706) target = $region100
        $region99: #{tpu_custom_call.1} parent=11 // pred_region
          _
        $region100: #{tpu_custom_call.1} parent=11 // pred_fallthru
          _
        // Predicated region
        $region101: #{tpu_custom_call.1} parent=11 // pred_check
          %p709 = pneg %p573
        $region102: #{tpu_custom_call.1} parent=11 // pred_check_branch
          %711 = sbr.rel (%p709) target = $region104
        $region103: #{tpu_custom_call.1} parent=11 // pred_region
          _
        $region104: #{tpu_custom_call.1} parent=11 // pred_fallthru
          _
        // Predicated region
        $region105: #{tpu_custom_call.1} parent=11 // pred_check
          %p712 = pneg %p594
        $region106: #{tpu_custom_call.1} parent=11 // pred_check_branch
          %714 = sbr.rel (%p712) target = $region108
        $region107: #{tpu_custom_call.1} parent=11 // pred_region
          _
        $region108: #{tpu_custom_call.1} parent=11 // pred_fallthru
          _
      $region12: #{tpu_custom_call.1} parent=5 // pred_fallthru
        _
      %p715 = scmp.lt.s32.totalorder %s38, 2
      // Predicated region
      $region109: #{tpu_custom_call.1} parent=5 // pred_check
        %p716 = pneg %p715
      $region110: #{tpu_custom_call.1} parent=5 // pred_check_branch
        %718 = sbr.rel (%p716) target = $region112
      $region111: #{tpu_custom_call.1} parent=5 // pred_region
        // Predicated region
        $region113: #{tpu_custom_call.1} parent=111 // pred_check
          %p719 = pneg %p58
        $region114: #{tpu_custom_call.1} parent=111 // pred_check_branch
          %721 = sbr.rel (%p719) target = $region116
        $region115: #{tpu_custom_call.1} parent=111 // pred_region
          %p722 = scmp.lt.s32.totalorder %s38, 1
          %s723 = scalar_select %p722, %s38, 1
          %s724 = smul.addr %s723, 8
          %s725 = scalar_lea.vmem %s0, %s724
        $region116: #{tpu_custom_call.1} parent=111 // pred_fallthru
          _
        // Predicated region
        $region117: #{tpu_custom_call.1} parent=111 // pred_check
          %p726 = pneg %p84
        $region118: #{tpu_custom_call.1} parent=111 // pred_check_branch
          %728 = sbr.rel (%p726) target = $region120
        $region119: #{tpu_custom_call.1} parent=111 // pred_region
          %p729 = scmp.lt.s32.totalorder %s38, 1
          %s730 = scalar_select %p729, %s38, 1
          %s731 = smul.addr %s730, 2
          %s732 = smul.addr %s731, 8
          %s733 = scalar_lea.vmem %s1, %s732
        $region120: #{tpu_custom_call.1} parent=111 // pred_fallthru
          _
      $region112: #{tpu_custom_call.1} parent=5 // pred_fallthru
        _
      %p734 = scmp.le.s32.totalorder 1, %s38
      %p735 = scmp.lt.s32.totalorder %s38, 3
      %p736 = pnand %p734, %p735
      %p737 = pneg %p736
      // Predicated region
      $region121: #{tpu_custom_call.1} parent=5 // pred_check
        _
      $region122: #{tpu_custom_call.1} parent=5 // pred_check_branch
        %739 = sbr.rel (%p736) target = $region124
      $region123: #{tpu_custom_call.1} parent=5 // pred_region
        %s740 = ssub.s32 %s38, 1
        // Predicated region
        $region125: #{tpu_custom_call.1} parent=123 // pred_check
          %p741 = pneg %p132
        $region126: #{tpu_custom_call.1} parent=123 // pred_check_branch
          %743 = sbr.rel (%p741) target = $region128
        $region127: #{tpu_custom_call.1} parent=123 // pred_region
          %744 = dma.done [#allocation4], 16
        $region128: #{tpu_custom_call.1} parent=123 // pred_fallthru
          _
        %p745 = scmp.lt.s32.totalorder %s43, 1
        %s746 = scalar_select %p745, %s43, 1
        %s747 = smul.addr %s746, 8
        %s748 = scalar_lea.vmem %s0, %s747
        %p749 = pneg %p64
        %p750 = pneg %p61
        %p751 = scmp.lt.s32.totalorder %s43, 1
        %s752 = scalar_select %p751, %s43, 1
        %s753 = smul.addr %s752, 2
        %s754 = smul.addr %s753, 8
        %s755 = scalar_lea.vmem %s1, %s754
        %p756 = pneg %p90
        %p757 = pneg %p87
        %p758 = pneg %p111
        %p759 = pneg %p108
        %p760 = pneg %p132
        %p761 = pneg %p129
        %p762 = pneg %p153
        %p763 = pneg %p150
        %p764 = pneg %p174
        %p765 = pneg %p171
        %p766 = pneg %p195
        %p767 = pneg %p192
        %p768 = pneg %p216
        %p769 = pneg %p213
        %p770 = pneg %p237
        %p771 = pneg %p234
        %p772 = pneg %p258
        %p773 = pneg %p255
        %p774 = pneg %p279
        %p775 = pneg %p276
        %p776 = pneg %p300
        %p777 = pneg %p297
        %p778 = pneg %p321
        %p779 = pneg %p318
        %p780 = pneg %p342
        %p781 = pneg %p339
        %p782 = pneg %p363
        %p783 = pneg %p360
        %p784 = pneg %p384
        %p785 = pneg %p381
        %p786 = pneg %p405
        %p787 = pneg %p402
        %p788 = pneg %p426
        %p789 = pneg %p423
        %p790 = pneg %p447
        %p791 = pneg %p444
        %p792 = pneg %p468
        %p793 = pneg %p465
        %p794 = pneg %p489
        %p795 = pneg %p486
        %p796 = pneg %p510
        %p797 = pneg %p507
        %p798 = pneg %p531
        %p799 = pneg %p528
        %p800 = pneg %p552
        %p801 = pneg %p549
        %p802 = pneg %p573
        %p803 = pneg %p570
        %p804 = pneg %p594
        %p805 = pneg %p591
        %p806 = pneg %p620
        %p807 = pneg %p617
        %s808 = sand.u32 %s607, 1
        %s809 = scalar_lea.sflag [#allocation5], %s808
        %s810 = sand.u32 %s607, 1
        %s811 = scalar_lea.vmem [#allocation6], %s810
        %p812 = scmp.lt.s32.totalorder %s43, 1
        %s813 = scalar_select %p812, %s43, 1
        %s814 = smul.addr %s813, 8
        %s815 = scalar_lea.vmem %s0, %s814
        %p816 = scmp.lt.s32.totalorder %s43, 1
        %s817 = scalar_select %p816, %s43, 1
        %s818 = smul.addr %s817, 2
        %s819 = smul.addr %s818, 8
        %s820 = scalar_lea.vmem %s1, %s819
        %v821 = vld [vmem:[%s815] sm:$0xff]
        %v822 = vld [vmem:[%s820] sm:$0xff]
        %v823 = vld [vmem:[%s820 + $0x8] sm:$0xf]
        %v824 = vld [vmem:[%s2] sm:$0xff]
        %v825 = vld [vmem:[%s2 + $0x8] sm:$0xff]
        %v826 = vld [vmem:[%s2 + $0x10] sm:$0xff]
        %v827 = vld [vmem:[%s2 + $0x18] sm:$0xff]
        %v828 = vld [vmem:[#allocation3] sm:$0x1]
        %v830 = vlaneseq
        %v831 = vshrl.u32 %v830, 7
        %v832 = vsub.s32 0, %v831
        %v833 = vrot.slane %v828, %v832
        %vm835 = vcmask 261120
        %v837 = vsel %vm835, %v821, 0
        %839 = vmatprep.subr.mxu0 0.0
        %840 = vmatpush1.msra.mxu0 %v824
        %841 = vmatprep.subr.mxu0 0.0
        %842 = vmatpush1.msra.mxu0 %v825
        %843 = vmatprep.subr.mxu0 0.0
        %844 = vmatpush1.msra.mxu0 %v826
        %845 = vmatprep.subr.mxu0 0.0
        %846 = vmatpush1.msra.mxu0 %v827
        %847 = vmatprep.subr.mxu0 0.0
        %848 = vmatpush1.msra.mxu0 0.0
        %849 = vmatprep.subr.mxu0 0.0
        %850 = vmatpush1.msra.mxu0 0.0
        %851 = vmatprep.subr.mxu0 0.0
        %852 = vmatpush1.msra.mxu0 0.0
        %853 = vmatprep.subr.mxu0 0.0
        %854 = vmatpush1.msra.mxu0 0.0
        %855 = vmatprep.subr.mxu0 0.0
        %856 = vmatpush1.msra.mxu0 0.0
        %857 = vmatprep.subr.mxu0 0.0
        %858 = vmatpush1.msra.mxu0 0.0
        %859 = vmatprep.subr.mxu0 0.0
        %860 = vmatpush1.msra.mxu0 0.0
        %861 = vmatprep.subr.mxu0 0.0
        %862 = vmatpush1.msra.mxu0 0.0
        %863 = vmatprep.subr.mxu0 0.0
        %864 = vmatpush1.msra.mxu0 0.0
        %865 = vmatprep.subr.mxu0 0.0
        %866 = vmatpush1.msra.mxu0 0.0
        %867 = vmatprep.subr.mxu0 0.0
        %868 = vmatpush1.msra.mxu0 0.0
        %869 = vmatprep.subr.mxu0 0.0
        %870 = vmatpush1.msra.mxu0 0.0
        %871 = vmatprep.subr.mxu0 0.0
        %872 = vmatpush1.msra.mxu0 0.0
        %873 = vmatprep.subr.mxu0 0.0
        %874 = vmatpush1.msra.mxu0 0.0
        %875 = vmatprep.subr.mxu0 0.0
        %876 = vmatpush1.msra.mxu0 0.0
        %877 = vmatprep.subr.mxu0 0.0
        %878 = vmatpush1.msra.mxu0 0.0
        %879 = vmatprep.subr.mxu0 0.0
        %880 = vmatpush1.msra.mxu0 0.0
        %881 = vmatprep.subr.mxu0 0.0
        %882 = vmatpush1.msra.mxu0 0.0
        %883 = vmatprep.subr.mxu0 0.0
        %884 = vmatpush1.msra.mxu0 0.0
        %885 = vmatprep.subr.mxu0 0.0
        %886 = vmatpush1.msra.mxu0 0.0
        %887 = vmatprep.subr.mxu0 0.0
        %888 = vmatpush1.msra.mxu0 0.0
        %889 = vmatprep.subr.mxu0 0.0
        %890 = vmatpush1.msra.mxu0 0.0
        %891 = vmatprep.subr.mxu0 0.0
        %892 = vmatpush1.msra.mxu0 0.0
        %893 = vmatprep.subr.mxu0 0.0
        %894 = vmatpush1.msra.mxu0 0.0
        %895 = vmatprep.subr.mxu0 0.0
        %896 = vmatpush1.msra.mxu0 0.0
        %897 = vmatprep.subr.mxu0 0.0
        %898 = vmatpush1.msra.mxu0 0.0
        %899 = vmatprep.subr.mxu0 0.0
        %900 = vmatpush1.msra.mxu0 0.0
        %901 = vmatprep.subr.mxu0 0.0
        %902 = vmatpush1.msra.mxu0 0.0
        %903 = vmatprep.mubr.f32.mxu0 0.0
        %904 = vmatmul.mubr.f32.gmra.mrb[0].mxu0 %v837
        %v905 = vpop.f32.mrb[0].mxu0
        %v906 = vadd.f32 %v833, %v905
        %v907 = vpop.f32.mrb[0].mxu0
        %908 = vdwg.mxu0
        %v909 = vld [vmem:[%s4] sm:$0x1]
        %v910 = vld [vmem:[%s5] sm:$0x1]
        %v911 = vld [vmem:[%s6] sm:$0xff]
        %v912 = vld [vmem:[%s6 + $0x8] sm:$0xff]
        %v913 = vld [vmem:[%s6 + $0x10] sm:$0xff]
        %v914 = vld [vmem:[%s6 + $0x18] sm:$0xff]
        %v915 = vld [vmem:[%s7] sm:$0x1]
        %v917 = vlaneseq
        %v918 = vshrl.u32 %v917, 7
        %v919 = vsub.s32 0, %v918
        %v920 = vrot.slane %v915, %v919
        %v923 = vsel %vm835, %v906, 0
        %925 = vmatprep.subr.mxu0 0.0
        %926 = vmatpush1.msra.mxu0 %v911
        %927 = vmatprep.subr.mxu0 0.0
        %928 = vmatpush1.msra.mxu0 %v912
        %929 = vmatprep.subr.mxu0 0.0
        %930 = vmatpush1.msra.mxu0 %v913
        %931 = vmatprep.subr.mxu0 0.0
        %932 = vmatpush1.msra.mxu0 %v914
        %933 = vmatprep.subr.mxu0 0.0
        %934 = vmatpush1.msra.mxu0 0.0
        %935 = vmatprep.subr.mxu0 0.0
        %936 = vmatpush1.msra.mxu0 0.0
        %937 = vmatprep.subr.mxu0 0.0
        %938 = vmatpush1.msra.mxu0 0.0
        %939 = vmatprep.subr.mxu0 0.0
        %940 = vmatpush1.msra.mxu0 0.0
        %941 = vmatprep.subr.mxu0 0.0
        %942 = vmatpush1.msra.mxu0 0.0
        %943 = vmatprep.subr.mxu0 0.0
        %944 = vmatpush1.msra.mxu0 0.0
        %945 = vmatprep.subr.mxu0 0.0
        %946 = vmatpush1.msra.mxu0 0.0
        %947 = vmatprep.subr.mxu0 0.0
        %948 = vmatpush1.msra.mxu0 0.0
        %949 = vmatprep.subr.mxu0 0.0
        %950 = vmatpush1.msra.mxu0 0.0
        %951 = vmatprep.subr.mxu0 0.0
        %952 = vmatpush1.msra.mxu0 0.0
        %953 = vmatprep.subr.mxu0 0.0
        %954 = vmatpush1.msra.mxu0 0.0
        %955 = vmatprep.subr.mxu0 0.0
        %956 = vmatpush1.msra.mxu0 0.0
        %957 = vmatprep.subr.mxu0 0.0
        %958 = vmatpush1.msra.mxu0 0.0
        %959 = vmatprep.subr.mxu0 0.0
        %960 = vmatpush1.msra.mxu0 0.0
        %961 = vmatprep.subr.mxu0 0.0
        %962 = vmatpush1.msra.mxu0 0.0
        %963 = vmatprep.subr.mxu0 0.0
        %964 = vmatpush1.msra.mxu0 0.0
        %965 = vmatprep.subr.mxu0 0.0
        %966 = vmatpush1.msra.mxu0 0.0
        %967 = vmatprep.subr.mxu0 0.0
        %968 = vmatpush1.msra.mxu0 0.0
        %969 = vmatprep.subr.mxu0 0.0
        %970 = vmatpush1.msra.mxu0 0.0
        %971 = vmatprep.subr.mxu0 0.0
        %972 = vmatpush1.msra.mxu0 0.0
        %973 = vmatprep.subr.mxu0 0.0
        %974 = vmatpush1.msra.mxu0 0.0
        %975 = vmatprep.subr.mxu0 0.0
        %976 = vmatpush1.msra.mxu0 0.0
        %977 = vmatprep.subr.mxu0 0.0
        %978 = vmatpush1.msra.mxu0 0.0
        %979 = vmatprep.subr.mxu0 0.0
        %980 = vmatpush1.msra.mxu0 0.0
        %981 = vmatprep.subr.mxu0 0.0
        %982 = vmatpush1.msra.mxu0 0.0
        %983 = vmatprep.subr.mxu0 0.0
        %984 = vmatpush1.msra.mxu0 0.0
        %985 = vmatprep.subr.mxu0 0.0
        %986 = vmatpush1.msra.mxu0 0.0
        %987 = vmatprep.subr.mxu0 0.0
        %988 = vmatpush1.msra.mxu0 0.0
        %989 = vmatprep.mubr.f32.mxu0 0.0
        %990 = vmatmul.mubr.f32.gmra.mrb[0].mxu0 %v923
        %v991 = vpop.f32.mrb[0].mxu0
        %v992 = vadd.f32 %v920, %v991
        %v993 = vpop.f32.mrb[0].mxu0
        %994 = vdwg.mxu0
        %996 = vrot.lane.b32.xlu0 %v992, 120
        %v997 = vpop.permute.xlu0 %996
        %998 = vrot.lane.b32.xlu0 %v992, 112
        %v999 = vpop.permute.xlu0 %998
        %1000 = vrot.lane.b32.xlu0 %v992, 104
        %v1001 = vpop.permute.xlu0 %1000
        %1002 = vrot.lane.b32.xlu0 %v992, 96
        %v1003 = vpop.permute.xlu0 %1002
        %vm1004 = vcmask 64512
        %v1005 = vsel %vm1004, %v992, 0
        %v1007 = vsel %vm1004, %v1003, 0
        %1009 = vmatprep.subr.mxu0 0.0
        %1010 = vmatpush1.xpose.msra.mxu0 %v1007
        %1011 = vmatprep.subr.mxu0 0.0
        %1012 = vmatpush1.xpose.msra.mxu0 0.0
        %1013 = vmatprep.subr.mxu0 0.0
        %1014 = vmatpush1.xpose.msra.mxu0 0.0
        %1015 = vmatprep.subr.mxu0 0.0
        %1016 = vmatpush1.xpose.msra.mxu0 0.0
        %1017 = vmatprep.subr.mxu0 0.0
        %1018 = vmatpush1.xpose.msra.mxu0 0.0
        %1019 = vmatprep.subr.mxu0 0.0
        %1020 = vmatpush1.xpose.msra.mxu0 0.0
        %1021 = vmatprep.subr.mxu0 0.0
        %1022 = vmatpush1.xpose.msra.mxu0 0.0
        %1023 = vmatprep.subr.mxu0 0.0
        %1024 = vmatpush1.xpose.msra.mxu0 0.0
        %1025 = vmatprep.subr.mxu0 0.0
        %1026 = vmatpush1.xpose.msra.mxu0 0.0
        %1027 = vmatprep.subr.mxu0 0.0
        %1028 = vmatpush1.xpose.msra.mxu0 0.0
        %1029 = vmatprep.subr.mxu0 0.0
        %1030 = vmatpush1.xpose.msra.mxu0 0.0
        %1031 = vmatprep.subr.mxu0 0.0
        %1032 = vmatpush1.xpose.msra.mxu0 0.0
        %1033 = vmatprep.subr.mxu0 0.0
        %1034 = vmatpush1.xpose.msra.mxu0 0.0
        %1035 = vmatprep.subr.mxu0 0.0
        %1036 = vmatpush1.xpose.msra.mxu0 0.0
        %1037 = vmatprep.subr.mxu0 0.0
        %1038 = vmatpush1.xpose.msra.mxu0 0.0
        %1039 = vmatprep.subr.mxu0 0.0
        %1040 = vmatpush1.xpose.msra.mxu0 0.0
        %1041 = vmatprep.subr.mxu0 0.0
        %1042 = vmatpush1.xpose.msra.mxu0 0.0
        %1043 = vmatprep.subr.mxu0 0.0
        %1044 = vmatpush1.xpose.msra.mxu0 0.0
        %1045 = vmatprep.subr.mxu0 0.0
        %1046 = vmatpush1.xpose.msra.mxu0 0.0
        %1047 = vmatprep.subr.mxu0 0.0
        %1048 = vmatpush1.xpose.msra.mxu0 0.0
        %1049 = vmatprep.subr.mxu0 0.0
        %1050 = vmatpush1.xpose.msra.mxu0 0.0
        %1051 = vmatprep.subr.mxu0 0.0
        %1052 = vmatpush1.xpose.msra.mxu0 0.0
        %1053 = vmatprep.subr.mxu0 0.0
        %1054 = vmatpush1.xpose.msra.mxu0 0.0
        %1055 = vmatprep.subr.mxu0 0.0
        %1056 = vmatpush1.xpose.msra.mxu0 0.0
        %1057 = vmatprep.subr.mxu0 0.0
        %1058 = vmatpush1.xpose.msra.mxu0 0.0
        %1059 = vmatprep.subr.mxu0 0.0
        %1060 = vmatpush1.xpose.msra.mxu0 0.0
        %1061 = vmatprep.subr.mxu0 0.0
        %1062 = vmatpush1.xpose.msra.mxu0 0.0
        %1063 = vmatprep.subr.mxu0 0.0
        %1064 = vmatpush1.xpose.msra.mxu0 0.0
        %1065 = vmatprep.subr.mxu0 0.0
        %1066 = vmatpush1.xpose.msra.mxu0 0.0
        %1067 = vmatprep.subr.mxu0 0.0
        %1068 = vmatpush1.xpose.msra.mxu0 0.0
        %1069 = vmatprep.subr.mxu0 0.0
        %1070 = vmatpush1.xpose.msra.mxu0 0.0
        %1071 = vmatprep.subr.mxu0 0.0
        %1072 = vmatpush1.xpose.msra.mxu0 0.0
        %1073 = vmatprep.mubr.f32.mxu0 0.0
        %1074 = vmatmul.mubr.f32.gmra.mrb[0].mxu0 %v1005
        %v1075 = vpop.f32.mrb[0].mxu0
        %v1076 = vadd.f32 0.0, %v1075
        %v1077 = vpop.f32.mrb[0].mxu0
        %1078 = vdwg.mxu0
        %1079 = vrot.lane.b32.xlu0 %v997, 96
        %v1080 = vpop.permute.xlu0 %1079
        %v1081 = vsel %vm1004, %v997, 0
        %v1083 = vsel %vm1004, %v1080, 0
        %1085 = vmatprep.subr.mxu0 0.0
        %1086 = vmatpush1.xpose.msra.mxu0 %v1083
        %1087 = vmatprep.subr.mxu0 0.0
        %1088 = vmatpush1.xpose.msra.mxu0 0.0
        %1089 = vmatprep.subr.mxu0 0.0
        %1090 = vmatpush1.xpose.msra.mxu0 0.0
        %1091 = vmatprep.subr.mxu0 0.0
        %1092 = vmatpush1.xpose.msra.mxu0 0.0
        %1093 = vmatprep.subr.mxu0 0.0
        %1094 = vmatpush1.xpose.msra.mxu0 0.0
        %1095 = vmatprep.subr.mxu0 0.0
        %1096 = vmatpush1.xpose.msra.mxu0 0.0
        %1097 = vmatprep.subr.mxu0 0.0
        %1098 = vmatpush1.xpose.msra.mxu0 0.0
        %1099 = vmatprep.subr.mxu0 0.0
        %1100 = vmatpush1.xpose.msra.mxu0 0.0
        %1101 = vmatprep.subr.mxu0 0.0
        %1102 = vmatpush1.xpose.msra.mxu0 0.0
        %1103 = vmatprep.subr.mxu0 0.0
        %1104 = vmatpush1.xpose.msra.mxu0 0.0
        %1105 = vmatprep.subr.mxu0 0.0
        %1106 = vmatpush1.xpose.msra.mxu0 0.0
        %1107 = vmatprep.subr.mxu0 0.0
        %1108 = vmatpush1.xpose.msra.mxu0 0.0
        %1109 = vmatprep.subr.mxu0 0.0
        %1110 = vmatpush1.xpose.msra.mxu0 0.0
        %1111 = vmatprep.subr.mxu0 0.0
        %1112 = vmatpush1.xpose.msra.mxu0 0.0
        %1113 = vmatprep.subr.mxu0 0.0
        %1114 = vmatpush1.xpose.msra.mxu0 0.0
        %1115 = vmatprep.subr.mxu0 0.0
        %1116 = vmatpush1.xpose.msra.mxu0 0.0
        %1117 = vmatprep.subr.mxu0 0.0
        %1118 = vmatpush1.xpose.msra.mxu0 0.0
        %1119 = vmatprep.subr.mxu0 0.0
        %1120 = vmatpush1.xpose.msra.mxu0 0.0
        %1121 = vmatprep.subr.mxu0 0.0
        %1122 = vmatpush1.xpose.msra.mxu0 0.0
        %1123 = vmatprep.subr.mxu0 0.0
        %1124 = vmatpush1.xpose.msra.mxu0 0.0
        %1125 = vmatprep.subr.mxu0 0.0
        %1126 = vmatpush1.xpose.msra.mxu0 0.0
        %1127 = vmatprep.subr.mxu0 0.0
        %1128 = vmatpush1.xpose.msra.mxu0 0.0
        %1129 = vmatprep.subr.mxu0 0.0
        %1130 = vmatpush1.xpose.msra.mxu0 0.0
        %1131 = vmatprep.subr.mxu0 0.0
        %1132 = vmatpush1.xpose.msra.mxu0 0.0
        %1133 = vmatprep.subr.mxu0 0.0
        %1134 = vmatpush1.xpose.msra.mxu0 0.0
        %1135 = vmatprep.subr.mxu0 0.0
        %1136 = vmatpush1.xpose.msra.mxu0 0.0
        %1137 = vmatprep.subr.mxu0 0.0
        %1138 = vmatpush1.xpose.msra.mxu0 0.0
        %1139 = vmatprep.subr.mxu0 0.0
        %1140 = vmatpush1.xpose.msra.mxu0 0.0
        %1141 = vmatprep.subr.mxu0 0.0
        %1142 = vmatpush1.xpose.msra.mxu0 0.0
        %1143 = vmatprep.subr.mxu0 0.0
        %1144 = vmatpush1.xpose.msra.mxu0 0.0
        %1145 = vmatprep.subr.mxu0 0.0
        %1146 = vmatpush1.xpose.msra.mxu0 0.0
        %1147 = vmatprep.subr.mxu0 0.0
        %1148 = vmatpush1.xpose.msra.mxu0 0.0
        %1149 = vmatprep.mubr.f32.mxu0 0.0
        %1150 = vmatmul.mubr.f32.gmra.mrb[0].mxu0 %v1081
        %v1151 = vpop.f32.mrb[0].mxu0
        %v1152 = vadd.f32 0.0, %v1151
        %v1153 = vpop.f32.mrb[0].mxu0
        %1154 = vdwg.mxu0
        %1155 = vrot.lane.b32.xlu0 %v999, 96
        %v1156 = vpop.permute.xlu0 %1155
        %v1157 = vsel %vm1004, %v999, 0
        %v1159 = vsel %vm1004, %v1156, 0
        %1161 = vmatprep.subr.mxu0 0.0
        %1162 = vmatpush1.xpose.msra.mxu0 %v1159
        %1163 = vmatprep.subr.mxu0 0.0
        %1164 = vmatpush1.xpose.msra.mxu0 0.0
        %1165 = vmatprep.subr.mxu0 0.0
        %1166 = vmatpush1.xpose.msra.mxu0 0.0
        %1167 = vmatprep.subr.mxu0 0.0
        %1168 = vmatpush1.xpose.msra.mxu0 0.0
        %1169 = vmatprep.subr.mxu0 0.0
        %1170 = vmatpush1.xpose.msra.mxu0 0.0
        %1171 = vmatprep.subr.mxu0 0.0
        %1172 = vmatpush1.xpose.msra.mxu0 0.0
        %1173 = vmatprep.subr.mxu0 0.0
        %1174 = vmatpush1.xpose.msra.mxu0 0.0
        %1175 = vmatprep.subr.mxu0 0.0
        %1176 = vmatpush1.xpose.msra.mxu0 0.0
        %1177 = vmatprep.subr.mxu0 0.0
        %1178 = vmatpush1.xpose.msra.mxu0 0.0
        %1179 = vmatprep.subr.mxu0 0.0
        %1180 = vmatpush1.xpose.msra.mxu0 0.0
        %1181 = vmatprep.subr.mxu0 0.0
        %1182 = vmatpush1.xpose.msra.mxu0 0.0
        %1183 = vmatprep.subr.mxu0 0.0
        %1184 = vmatpush1.xpose.msra.mxu0 0.0
        %1185 = vmatprep.subr.mxu0 0.0
        %1186 = vmatpush1.xpose.msra.mxu0 0.0
        %1187 = vmatprep.subr.mxu0 0.0
        %1188 = vmatpush1.xpose.msra.mxu0 0.0
        %1189 = vmatprep.subr.mxu0 0.0
        %1190 = vmatpush1.xpose.msra.mxu0 0.0
        %1191 = vmatprep.subr.mxu0 0.0
        %1192 = vmatpush1.xpose.msra.mxu0 0.0
        %1193 = vmatprep.subr.mxu0 0.0
        %1194 = vmatpush1.xpose.msra.mxu0 0.0
        %1195 = vmatprep.subr.mxu0 0.0
        %1196 = vmatpush1.xpose.msra.mxu0 0.0
        %1197 = vmatprep.subr.mxu0 0.0
        %1198 = vmatpush1.xpose.msra.mxu0 0.0
        %1199 = vmatprep.subr.mxu0 0.0
        %1200 = vmatpush1.xpose.msra.mxu0 0.0
        %1201 = vmatprep.subr.mxu0 0.0
        %1202 = vmatpush1.xpose.msra.mxu0 0.0
        %1203 = vmatprep.subr.mxu0 0.0
        %1204 = vmatpush1.xpose.msra.mxu0 0.0
        %1205 = vmatprep.subr.mxu0 0.0
        %1206 = vmatpush1.xpose.msra.mxu0 0.0
        %1207 = vmatprep.subr.mxu0 0.0
        %1208 = vmatpush1.xpose.msra.mxu0 0.0
        %1209 = vmatprep.subr.mxu0 0.0
        %1210 = vmatpush1.xpose.msra.mxu0 0.0
        %1211 = vmatprep.subr.mxu0 0.0
        %1212 = vmatpush1.xpose.msra.mxu0 0.0
        %1213 = vmatprep.subr.mxu0 0.0
        %1214 = vmatpush1.xpose.msra.mxu0 0.0
        %1215 = vmatprep.subr.mxu0 0.0
        %1216 = vmatpush1.xpose.msra.mxu0 0.0
        %1217 = vmatprep.subr.mxu0 0.0
        %1218 = vmatpush1.xpose.msra.mxu0 0.0
        %1219 = vmatprep.subr.mxu0 0.0
        %1220 = vmatpush1.xpose.msra.mxu0 0.0
        %1221 = vmatprep.subr.mxu0 0.0
        %1222 = vmatpush1.xpose.msra.mxu0 0.0
        %1223 = vmatprep.subr.mxu0 0.0
        %1224 = vmatpush1.xpose.msra.mxu0 0.0
        %1225 = vmatprep.mubr.f32.mxu0 0.0
        %1226 = vmatmul.mubr.f32.gmra.mrb[0].mxu0 %v1157
        %v1227 = vpop.f32.mrb[0].mxu0
        %v1228 = vadd.f32 0.0, %v1227
        %v1229 = vpop.f32.mrb[0].mxu0
        %1230 = vdwg.mxu0
        %1231 = vrot.lane.b32.xlu0 %v1001, 96
        %v1232 = vpop.permute.xlu0 %1231
        %v1233 = vsel %vm1004, %v1001, 0
        %v1235 = vsel %vm1004, %v1232, 0
        %1237 = vmatprep.subr.mxu0 0.0
        %1238 = vmatpush1.xpose.msra.mxu0 %v1235
        %1239 = vmatprep.subr.mxu0 0.0
        %1240 = vmatpush1.xpose.msra.mxu0 0.0
        %1241 = vmatprep.subr.mxu0 0.0
        %1242 = vmatpush1.xpose.msra.mxu0 0.0
        %1243 = vmatprep.subr.mxu0 0.0
        %1244 = vmatpush1.xpose.msra.mxu0 0.0
        %1245 = vmatprep.subr.mxu0 0.0
        %1246 = vmatpush1.xpose.msra.mxu0 0.0
        %1247 = vmatprep.subr.mxu0 0.0
        %1248 = vmatpush1.xpose.msra.mxu0 0.0
        %1249 = vmatprep.subr.mxu0 0.0
        %1250 = vmatpush1.xpose.msra.mxu0 0.0
        %1251 = vmatprep.subr.mxu0 0.0
        %1252 = vmatpush1.xpose.msra.mxu0 0.0
        %1253 = vmatprep.subr.mxu0 0.0
        %1254 = vmatpush1.xpose.msra.mxu0 0.0
        %1255 = vmatprep.subr.mxu0 0.0
        %1256 = vmatpush1.xpose.msra.mxu0 0.0
        %1257 = vmatprep.subr.mxu0 0.0
        %1258 = vmatpush1.xpose.msra.mxu0 0.0
        %1259 = vmatprep.subr.mxu0 0.0
        %1260 = vmatpush1.xpose.msra.mxu0 0.0
        %1261 = vmatprep.subr.mxu0 0.0
        %1262 = vmatpush1.xpose.msra.mxu0 0.0
        %1263 = vmatprep.subr.mxu0 0.0
        %1264 = vmatpush1.xpose.msra.mxu0 0.0
        %1265 = vmatprep.subr.mxu0 0.0
        %1266 = vmatpush1.xpose.msra.mxu0 0.0
        %1267 = vmatprep.subr.mxu0 0.0
        %1268 = vmatpush1.xpose.msra.mxu0 0.0
        %1269 = vmatprep.subr.mxu0 0.0
        %1270 = vmatpush1.xpose.msra.mxu0 0.0
        %1271 = vmatprep.subr.mxu0 0.0
        %1272 = vmatpush1.xpose.msra.mxu0 0.0
        %1273 = vmatprep.subr.mxu0 0.0
        %1274 = vmatpush1.xpose.msra.mxu0 0.0
        %1275 = vmatprep.subr.mxu0 0.0
        %1276 = vmatpush1.xpose.msra.mxu0 0.0
        %1277 = vmatprep.subr.mxu0 0.0
        %1278 = vmatpush1.xpose.msra.mxu0 0.0
        %1279 = vmatprep.subr.mxu0 0.0
        %1280 = vmatpush1.xpose.msra.mxu0 0.0
        %1281 = vmatprep.subr.mxu0 0.0
        %1282 = vmatpush1.xpose.msra.mxu0 0.0
        %1283 = vmatprep.subr.mxu0 0.0
        %1284 = vmatpush1.xpose.msra.mxu0 0.0
        %1285 = vmatprep.subr.mxu0 0.0
        %1286 = vmatpush1.xpose.msra.mxu0 0.0
        %1287 = vmatprep.subr.mxu0 0.0
        %1288 = vmatpush1.xpose.msra.mxu0 0.0
        %1289 = vmatprep.subr.mxu0 0.0
        %1290 = vmatpush1.xpose.msra.mxu0 0.0
        %1291 = vmatprep.subr.mxu0 0.0
        %1292 = vmatpush1.xpose.msra.mxu0 0.0
        %1293 = vmatprep.subr.mxu0 0.0
        %1294 = vmatpush1.xpose.msra.mxu0 0.0
        %1295 = vmatprep.subr.mxu0 0.0
        %1296 = vmatpush1.xpose.msra.mxu0 0.0
        %1297 = vmatprep.subr.mxu0 0.0
        %1298 = vmatpush1.xpose.msra.mxu0 0.0
        %1299 = vmatprep.subr.mxu0 0.0
        %1300 = vmatpush1.xpose.msra.mxu0 0.0
        %1301 = vmatprep.mubr.f32.mxu0 0.0
        %1302 = vmatmul.mubr.f32.gmra.mrb[0].mxu0 %v1233
        %v1303 = vpop.f32.mrb[0].mxu0
        %v1304 = vadd.f32 0.0, %v1303
        %v1305 = vpop.f32.mrb[0].mxu0
        %1306 = vdwg.mxu0
        %v1307 = vmul.f32 %v1076, 0.35355338
        %v1308 = vmul.f32 %v1152, 0.35355338
        %v1309 = vmul.f32 %v1228, 0.35355338
        %v1310 = vmul.f32 %v1304, 0.35355338
        %v1311 = vsel %vm1004, %v1307, -inf
        %1312 = vmax.xlane.f32.xlu0 %v1311
        %v1313 = vpop.xlane.xlu0 %1312
        %v1314 = vsel %vm1004, %v1308, -inf
        %1315 = vmax.xlane.f32.xlu0 %v1314
        %v1316 = vpop.xlane.xlu0 %1315
        %v1317 = vsel %vm1004, %v1309, -inf
        %1318 = vmax.xlane.f32.xlu0 %v1317
        %v1319 = vpop.xlane.xlu0 %1318
        %v1320 = vsel %vm1004, %v1310, -inf
        %1321 = vmax.xlane.f32.xlu0 %v1320
        %v1322 = vpop.xlane.xlu0 %1321
        %v1323 = vsub.f32 %v1307, %v1313
        %v1324 = vsub.f32 %v1308, %v1316
        %v1325 = vsub.f32 %v1309, %v1319
        %v1326 = vsub.f32 %v1310, %v1322
        %v1327 = vmul.f32 %v1323, 1.442695
        %v1328 = vpow.pop %v1327
        %v1329 = vmul.f32 %v1324, 1.442695
        %v1330 = vpow.pop %v1329
        %v1331 = vmul.f32 %v1325, 1.442695
        %v1332 = vpow.pop %v1331
        %v1333 = vmul.f32 %v1326, 1.442695
        %v1334 = vpow.pop %v1333
        %v1335 = vsel %vm1004, %v1328, 0.0
        %1336 = vadd.xlane.f32.xlu0 %v1335
        %v1337 = vpop.xlane.xlu0 %1336
        %v1338 = vsel %vm1004, %v1330, 0.0
        %1339 = vadd.xlane.f32.xlu0 %v1338
        %v1340 = vpop.xlane.xlu0 %1339
        %v1341 = vsel %vm1004, %v1332, 0.0
        %1342 = vadd.xlane.f32.xlu0 %v1341
        %v1343 = vpop.xlane.xlu0 %1342
        %v1344 = vsel %vm1004, %v1334, 0.0
        %1345 = vadd.xlane.f32.xlu0 %v1344
        %v1346 = vpop.xlane.xlu0 %1345
        %v1347 = vrcp.pop %v1337
        %v1348 = vrcp.pop %v1340
        %v1349 = vrcp.pop %v1343
        %v1350 = vrcp.pop %v1346
        %v1351 = vmul.f32 %v1328, %v1347
        %v1352 = vmul.f32 %v1330, %v1348
        %v1353 = vmul.f32 %v1332, %v1349
        %v1354 = vmul.f32 %v1334, %v1350
        %1355 = vrot.lane.b32.xlu0 %v992, 64
        %v1356 = vpop.permute.xlu0 %1355
        %v1359 = vsel %vm1004, %v1351, 0
        %1361 = vmatprep.subr.mxu0 0.0
        %1362 = vmatpush1.msra.mxu0 %v1356
        %1363 = vmatprep.subr.mxu0 0.0
        %1364 = vmatpush1.msra.mxu0 0.0
        %1365 = vmatprep.subr.mxu0 0.0
        %1366 = vmatpush1.msra.mxu0 0.0
        %1367 = vmatprep.subr.mxu0 0.0
        %1368 = vmatpush1.msra.mxu0 0.0
        %1369 = vmatprep.subr.mxu0 0.0
        %1370 = vmatpush1.msra.mxu0 0.0
        %1371 = vmatprep.subr.mxu0 0.0
        %1372 = vmatpush1.msra.mxu0 0.0
        %1373 = vmatprep.subr.mxu0 0.0
        %1374 = vmatpush1.msra.mxu0 0.0
        %1375 = vmatprep.subr.mxu0 0.0
        %1376 = vmatpush1.msra.mxu0 0.0
        %1377 = vmatprep.subr.mxu0 0.0
        %1378 = vmatpush1.msra.mxu0 0.0
        %1379 = vmatprep.subr.mxu0 0.0
        %1380 = vmatpush1.msra.mxu0 0.0
        %1381 = vmatprep.subr.mxu0 0.0
        %1382 = vmatpush1.msra.mxu0 0.0
        %1383 = vmatprep.subr.mxu0 0.0
        %1384 = vmatpush1.msra.mxu0 0.0
        %1385 = vmatprep.subr.mxu0 0.0
        %1386 = vmatpush1.msra.mxu0 0.0
        %1387 = vmatprep.subr.mxu0 0.0
        %1388 = vmatpush1.msra.mxu0 0.0
        %1389 = vmatprep.subr.mxu0 0.0
        %1390 = vmatpush1.msra.mxu0 0.0
        %1391 = vmatprep.subr.mxu0 0.0
        %1392 = vmatpush1.msra.mxu0 0.0
        %1393 = vmatprep.subr.mxu0 0.0
        %1394 = vmatpush1.msra.mxu0 0.0
        %1395 = vmatprep.subr.mxu0 0.0
        %1396 = vmatpush1.msra.mxu0 0.0
        %1397 = vmatprep.subr.mxu0 0.0
        %1398 = vmatpush1.msra.mxu0 0.0
        %1399 = vmatprep.subr.mxu0 0.0
        %1400 = vmatpush1.msra.mxu0 0.0
        %1401 = vmatprep.subr.mxu0 0.0
        %1402 = vmatpush1.msra.mxu0 0.0
        %1403 = vmatprep.subr.mxu0 0.0
        %1404 = vmatpush1.msra.mxu0 0.0
        %1405 = vmatprep.subr.mxu0 0.0
        %1406 = vmatpush1.msra.mxu0 0.0
        %1407 = vmatprep.subr.mxu0 0.0
        %1408 = vmatpush1.msra.mxu0 0.0
        %1409 = vmatprep.subr.mxu0 0.0
        %1410 = vmatpush1.msra.mxu0 0.0
        %1411 = vmatprep.subr.mxu0 0.0
        %1412 = vmatpush1.msra.mxu0 0.0
        %1413 = vmatprep.subr.mxu0 0.0
        %1414 = vmatpush1.msra.mxu0 0.0
        %1415 = vmatprep.subr.mxu0 0.0
        %1416 = vmatpush1.msra.mxu0 0.0
        %1417 = vmatprep.subr.mxu0 0.0
        %1418 = vmatpush1.msra.mxu0 0.0
        %1419 = vmatprep.subr.mxu0 0.0
        %1420 = vmatpush1.msra.mxu0 0.0
        %1421 = vmatprep.subr.mxu0 0.0
        %1422 = vmatpush1.msra.mxu0 0.0
        %1423 = vmatprep.subr.mxu0 0.0
        %1424 = vmatpush1.msra.mxu0 0.0
        %1425 = vmatprep.mubr.f32.mxu0 0.0
        %1426 = vmatmul.mubr.f32.gmra.mrb[0].mxu0 %v1359
        %v1427 = vpop.f32.mrb[0].mxu0
        %v1428 = vadd.f32 0.0, %v1427
        %v1429 = vpop.f32.mrb[0].mxu0
        %1430 = vdwg.mxu0
        %1431 = vrot.lane.b32.xlu0 %v997, 64
        %v1432 = vpop.permute.xlu0 %1431
        %v1435 = vsel %vm1004, %v1352, 0
        %1437 = vmatprep.subr.mxu0 0.0
        %1438 = vmatpush1.msra.mxu0 %v1432
        %1439 = vmatprep.subr.mxu0 0.0
        %1440 = vmatpush1.msra.mxu0 0.0
        %1441 = vmatprep.subr.mxu0 0.0
        %1442 = vmatpush1.msra.mxu0 0.0
        %1443 = vmatprep.subr.mxu0 0.0
        %1444 = vmatpush1.msra.mxu0 0.0
        %1445 = vmatprep.subr.mxu0 0.0
        %1446 = vmatpush1.msra.mxu0 0.0
        %1447 = vmatprep.subr.mxu0 0.0
        %1448 = vmatpush1.msra.mxu0 0.0
        %1449 = vmatprep.subr.mxu0 0.0
        %1450 = vmatpush1.msra.mxu0 0.0
        %1451 = vmatprep.subr.mxu0 0.0
        %1452 = vmatpush1.msra.mxu0 0.0
        %1453 = vmatprep.subr.mxu0 0.0
        %1454 = vmatpush1.msra.mxu0 0.0
        %1455 = vmatprep.subr.mxu0 0.0
        %1456 = vmatpush1.msra.mxu0 0.0
        %1457 = vmatprep.subr.mxu0 0.0
        %1458 = vmatpush1.msra.mxu0 0.0
        %1459 = vmatprep.subr.mxu0 0.0
        %1460 = vmatpush1.msra.mxu0 0.0
        %1461 = vmatprep.subr.mxu0 0.0
        %1462 = vmatpush1.msra.mxu0 0.0
        %1463 = vmatprep.subr.mxu0 0.0
        %1464 = vmatpush1.msra.mxu0 0.0
        %1465 = vmatprep.subr.mxu0 0.0
        %1466 = vmatpush1.msra.mxu0 0.0
        %1467 = vmatprep.subr.mxu0 0.0
        %1468 = vmatpush1.msra.mxu0 0.0
        %1469 = vmatprep.subr.mxu0 0.0
        %1470 = vmatpush1.msra.mxu0 0.0
        %1471 = vmatprep.subr.mxu0 0.0
        %1472 = vmatpush1.msra.mxu0 0.0
        %1473 = vmatprep.subr.mxu0 0.0
        %1474 = vmatpush1.msra.mxu0 0.0
        %1475 = vmatprep.subr.mxu0 0.0
        %1476 = vmatpush1.msra.mxu0 0.0
        %1477 = vmatprep.subr.mxu0 0.0
        %1478 = vmatpush1.msra.mxu0 0.0
        %1479 = vmatprep.subr.mxu0 0.0
        %1480 = vmatpush1.msra.mxu0 0.0
        %1481 = vmatprep.subr.mxu0 0.0
        %1482 = vmatpush1.msra.mxu0 0.0
        %1483 = vmatprep.subr.mxu0 0.0
        %1484 = vmatpush1.msra.mxu0 0.0
        %1485 = vmatprep.subr.mxu0 0.0
        %1486 = vmatpush1.msra.mxu0 0.0
        %1487 = vmatprep.subr.mxu0 0.0
        %1488 = vmatpush1.msra.mxu0 0.0
        %1489 = vmatprep.subr.mxu0 0.0
        %1490 = vmatpush1.msra.mxu0 0.0
        %1491 = vmatprep.subr.mxu0 0.0
        %1492 = vmatpush1.msra.mxu0 0.0
        %1493 = vmatprep.subr.mxu0 0.0
        %1494 = vmatpush1.msra.mxu0 0.0
        %1495 = vmatprep.subr.mxu0 0.0
        %1496 = vmatpush1.msra.mxu0 0.0
        %1497 = vmatprep.subr.mxu0 0.0
        %1498 = vmatpush1.msra.mxu0 0.0
        %1499 = vmatprep.subr.mxu0 0.0
        %1500 = vmatpush1.msra.mxu0 0.0
        %1501 = vmatprep.mubr.f32.mxu0 0.0
        %1502 = vmatmul.mubr.f32.gmra.mrb[0].mxu0 %v1435
        %v1503 = vpop.f32.mrb[0].mxu0
        %v1504 = vadd.f32 0.0, %v1503
        %v1505 = vpop.f32.mrb[0].mxu0
        %1506 = vdwg.mxu0
        %1507 = vrot.lane.b32.xlu0 %v999, 64
        %v1508 = vpop.permute.xlu0 %1507
        %v1511 = vsel %vm1004, %v1353, 0
        %1513 = vmatprep.subr.mxu0 0.0
        %1514 = vmatpush1.msra.mxu0 %v1508
        %1515 = vmatprep.subr.mxu0 0.0
        %1516 = vmatpush1.msra.mxu0 0.0
        %1517 = vmatprep.subr.mxu0 0.0
        %1518 = vmatpush1.msra.mxu0 0.0
        %1519 = vmatprep.subr.mxu0 0.0
        %1520 = vmatpush1.msra.mxu0 0.0
        %1521 = vmatprep.subr.mxu0 0.0
        %1522 = vmatpush1.msra.mxu0 0.0
        %1523 = vmatprep.subr.mxu0 0.0
        %1524 = vmatpush1.msra.mxu0 0.0
        %1525 = vmatprep.subr.mxu0 0.0
        %1526 = vmatpush1.msra.mxu0 0.0
        %1527 = vmatprep.subr.mxu0 0.0
        %1528 = vmatpush1.msra.mxu0 0.0
        %1529 = vmatprep.subr.mxu0 0.0
        %1530 = vmatpush1.msra.mxu0 0.0
        %1531 = vmatprep.subr.mxu0 0.0
        %1532 = vmatpush1.msra.mxu0 0.0
        %1533 = vmatprep.subr.mxu0 0.0
        %1534 = vmatpush1.msra.mxu0 0.0
        %1535 = vmatprep.subr.mxu0 0.0
        %1536 = vmatpush1.msra.mxu0 0.0
        %1537 = vmatprep.subr.mxu0 0.0
        %1538 = vmatpush1.msra.mxu0 0.0
        %1539 = vmatprep.subr.mxu0 0.0
        %1540 = vmatpush1.msra.mxu0 0.0
        %1541 = vmatprep.subr.mxu0 0.0
        %1542 = vmatpush1.msra.mxu0 0.0
        %1543 = vmatprep.subr.mxu0 0.0
        %1544 = vmatpush1.msra.mxu0 0.0
        %1545 = vmatprep.subr.mxu0 0.0
        %1546 = vmatpush1.msra.mxu0 0.0
        %1547 = vmatprep.subr.mxu0 0.0
        %1548 = vmatpush1.msra.mxu0 0.0
        %1549 = vmatprep.subr.mxu0 0.0
        %1550 = vmatpush1.msra.mxu0 0.0
        %1551 = vmatprep.subr.mxu0 0.0
        %1552 = vmatpush1.msra.mxu0 0.0
        %1553 = vmatprep.subr.mxu0 0.0
        %1554 = vmatpush1.msra.mxu0 0.0
        %1555 = vmatprep.subr.mxu0 0.0
        %1556 = vmatpush1.msra.mxu0 0.0
        %1557 = vmatprep.subr.mxu0 0.0
        %1558 = vmatpush1.msra.mxu0 0.0
        %1559 = vmatprep.subr.mxu0 0.0
        %1560 = vmatpush1.msra.mxu0 0.0
        %1561 = vmatprep.subr.mxu0 0.0
        %1562 = vmatpush1.msra.mxu0 0.0
        %1563 = vmatprep.subr.mxu0 0.0
        %1564 = vmatpush1.msra.mxu0 0.0
        %1565 = vmatprep.subr.mxu0 0.0
        %1566 = vmatpush1.msra.mxu0 0.0
        %1567 = vmatprep.subr.mxu0 0.0
        %1568 = vmatpush1.msra.mxu0 0.0
        %1569 = vmatprep.subr.mxu0 0.0
        %1570 = vmatpush1.msra.mxu0 0.0
        %1571 = vmatprep.subr.mxu0 0.0
        %1572 = vmatpush1.msra.mxu0 0.0
        %1573 = vmatprep.subr.mxu0 0.0
        %1574 = vmatpush1.msra.mxu0 0.0
        %1575 = vmatprep.subr.mxu0 0.0
        %1576 = vmatpush1.msra.mxu0 0.0
        %1577 = vmatprep.mubr.f32.mxu0 0.0
        %1578 = vmatmul.mubr.f32.gmra.mrb[0].mxu0 %v1511
        %v1579 = vpop.f32.mrb[0].mxu0
        %v1580 = vadd.f32 0.0, %v1579
        %v1581 = vpop.f32.mrb[0].mxu0
        %1582 = vdwg.mxu0
        %1583 = vrot.lane.b32.xlu0 %v1001, 64
        %v1584 = vpop.permute.xlu0 %1583
        %v1587 = vsel %vm1004, %v1354, 0
        %1589 = vmatprep.subr.mxu0 0.0
        %1590 = vmatpush1.msra.mxu0 %v1584
        %1591 = vmatprep.subr.mxu0 0.0
        %1592 = vmatpush1.msra.mxu0 0.0
        %1593 = vmatprep.subr.mxu0 0.0
        %1594 = vmatpush1.msra.mxu0 0.0
        %1595 = vmatprep.subr.mxu0 0.0
        %1596 = vmatpush1.msra.mxu0 0.0
        %1597 = vmatprep.subr.mxu0 0.0
        %1598 = vmatpush1.msra.mxu0 0.0
        %1599 = vmatprep.subr.mxu0 0.0
        %1600 = vmatpush1.msra.mxu0 0.0
        %1601 = vmatprep.subr.mxu0 0.0
        %1602 = vmatpush1.msra.mxu0 0.0
        %1603 = vmatprep.subr.mxu0 0.0
        %1604 = vmatpush1.msra.mxu0 0.0
        %1605 = vmatprep.subr.mxu0 0.0
        %1606 = vmatpush1.msra.mxu0 0.0
        %1607 = vmatprep.subr.mxu0 0.0
        %1608 = vmatpush1.msra.mxu0 0.0
        %1609 = vmatprep.subr.mxu0 0.0
        %1610 = vmatpush1.msra.mxu0 0.0
        %1611 = vmatprep.subr.mxu0 0.0
        %1612 = vmatpush1.msra.mxu0 0.0
        %1613 = vmatprep.subr.mxu0 0.0
        %1614 = vmatpush1.msra.mxu0 0.0
        %1615 = vmatprep.subr.mxu0 0.0
        %1616 = vmatpush1.msra.mxu0 0.0
        %1617 = vmatprep.subr.mxu0 0.0
        %1618 = vmatpush1.msra.mxu0 0.0
        %1619 = vmatprep.subr.mxu0 0.0
        %1620 = vmatpush1.msra.mxu0 0.0
        %1621 = vmatprep.subr.mxu0 0.0
        %1622 = vmatpush1.msra.mxu0 0.0
        %1623 = vmatprep.subr.mxu0 0.0
        %1624 = vmatpush1.msra.mxu0 0.0
        %1625 = vmatprep.subr.mxu0 0.0
        %1626 = vmatpush1.msra.mxu0 0.0
        %1627 = vmatprep.subr.mxu0 0.0
        %1628 = vmatpush1.msra.mxu0 0.0
        %1629 = vmatprep.subr.mxu0 0.0
        %1630 = vmatpush1.msra.mxu0 0.0
        %1631 = vmatprep.subr.mxu0 0.0
        %1632 = vmatpush1.msra.mxu0 0.0
        %1633 = vmatprep.subr.mxu0 0.0
        %1634 = vmatpush1.msra.mxu0 0.0
        %1635 = vmatprep.subr.mxu0 0.0
        %1636 = vmatpush1.msra.mxu0 0.0
        %1637 = vmatprep.subr.mxu0 0.0
        %1638 = vmatpush1.msra.mxu0 0.0
        %1639 = vmatprep.subr.mxu0 0.0
        %1640 = vmatpush1.msra.mxu0 0.0
        %1641 = vmatprep.subr.mxu0 0.0
        %1642 = vmatpush1.msra.mxu0 0.0
        %1643 = vmatprep.subr.mxu0 0.0
        %1644 = vmatpush1.msra.mxu0 0.0
        %1645 = vmatprep.subr.mxu0 0.0
        %1646 = vmatpush1.msra.mxu0 0.0
        %1647 = vmatprep.subr.mxu0 0.0
        %1648 = vmatpush1.msra.mxu0 0.0
        %1649 = vmatprep.subr.mxu0 0.0
        %1650 = vmatpush1.msra.mxu0 0.0
        %1651 = vmatprep.subr.mxu0 0.0
        %1652 = vmatpush1.msra.mxu0 0.0
        %1653 = vmatprep.mubr.f32.mxu0 0.0
        %1654 = vmatmul.mubr.f32.gmra.mrb[0].mxu0 %v1587
        %v1655 = vpop.f32.mrb[0].mxu0
        %v1656 = vadd.f32 0.0, %v1655
        %v1657 = vpop.f32.mrb[0].mxu0
        %1658 = vdwg.mxu0
        %1660 = vrot.lane.b32.xlu0 %v1504, 8
        %v1661 = vpop.permute.xlu0 %1660
        %1664 = vrot.lane.b32.xlu0 %v1580, 16
        %v1665 = vpop.permute.xlu0 %1664
        %1668 = vrot.lane.b32.xlu0 %v1656, 24
        %v1669 = vpop.permute.xlu0 %1668
        %v1671 = vsel %vm1004, %v1428, %v1661
        %vm1672 = vcmask 130048
        %v1673 = vsel %vm1672, %v1671, %v1665
        %vm1674 = vcmask 195584
        %v1675 = vsel %vm1674, %v1673, %v1669
        %v1676 = vld [vmem:[%s8] sm:$0xff]
        %v1677 = vld [vmem:[%s8 + $0x8] sm:$0xff]
        %v1678 = vld [vmem:[%s8 + $0x10] sm:$0xff]
        %v1679 = vld [vmem:[%s8 + $0x18] sm:$0xff]
        %v1680 = vld [vmem:[%s9] sm:$0x1]
        %v1682 = vlaneseq
        %v1683 = vshrl.u32 %v1682, 7
        %v1684 = vsub.s32 0, %v1683
        %v1685 = vrot.slane %v1680, %v1684
        %v1688 = vsel %vm835, %v1675, 0
        %1690 = vmatprep.subr.mxu0 0.0
        %1691 = vmatpush1.msra.mxu0 %v1676
        %1692 = vmatprep.subr.mxu0 0.0
        %1693 = vmatpush1.msra.mxu0 %v1677
        %1694 = vmatprep.subr.mxu0 0.0
        %1695 = vmatpush1.msra.mxu0 %v1678
        %1696 = vmatprep.subr.mxu0 0.0
        %1697 = vmatpush1.msra.mxu0 %v1679
        %1698 = vmatprep.subr.mxu0 0.0
        %1699 = vmatpush1.msra.mxu0 0.0
        %1700 = vmatprep.subr.mxu0 0.0
        %1701 = vmatpush1.msra.mxu0 0.0
        %1702 = vmatprep.subr.mxu0 0.0
        %1703 = vmatpush1.msra.mxu0 0.0
        %1704 = vmatprep.subr.mxu0 0.0
        %1705 = vmatpush1.msra.mxu0 0.0
        %1706 = vmatprep.subr.mxu0 0.0
        %1707 = vmatpush1.msra.mxu0 0.0
        %1708 = vmatprep.subr.mxu0 0.0
        %1709 = vmatpush1.msra.mxu0 0.0
        %1710 = vmatprep.subr.mxu0 0.0
        %1711 = vmatpush1.msra.mxu0 0.0
        %1712 = vmatprep.subr.mxu0 0.0
        %1713 = vmatpush1.msra.mxu0 0.0
        %1714 = vmatprep.subr.mxu0 0.0
        %1715 = vmatpush1.msra.mxu0 0.0
        %1716 = vmatprep.subr.mxu0 0.0
        %1717 = vmatpush1.msra.mxu0 0.0
        %1718 = vmatprep.subr.mxu0 0.0
        %1719 = vmatpush1.msra.mxu0 0.0
        %1720 = vmatprep.subr.mxu0 0.0
        %1721 = vmatpush1.msra.mxu0 0.0
        %1722 = vmatprep.subr.mxu0 0.0
        %1723 = vmatpush1.msra.mxu0 0.0
        %1724 = vmatprep.subr.mxu0 0.0
        %1725 = vmatpush1.msra.mxu0 0.0
        %1726 = vmatprep.subr.mxu0 0.0
        %1727 = vmatpush1.msra.mxu0 0.0
        %1728 = vmatprep.subr.mxu0 0.0
        %1729 = vmatpush1.msra.mxu0 0.0
        %1730 = vmatprep.subr.mxu0 0.0
        %1731 = vmatpush1.msra.mxu0 0.0
        %1732 = vmatprep.subr.mxu0 0.0
        %1733 = vmatpush1.msra.mxu0 0.0
        %1734 = vmatprep.subr.mxu0 0.0
        %1735 = vmatpush1.msra.mxu0 0.0
        %1736 = vmatprep.subr.mxu0 0.0
        %1737 = vmatpush1.msra.mxu0 0.0
        %1738 = vmatprep.subr.mxu0 0.0
        %1739 = vmatpush1.msra.mxu0 0.0
        %1740 = vmatprep.subr.mxu0 0.0
        %1741 = vmatpush1.msra.mxu0 0.0
        %1742 = vmatprep.subr.mxu0 0.0
        %1743 = vmatpush1.msra.mxu0 0.0
        %1744 = vmatprep.subr.mxu0 0.0
        %1745 = vmatpush1.msra.mxu0 0.0
        %1746 = vmatprep.subr.mxu0 0.0
        %1747 = vmatpush1.msra.mxu0 0.0
        %1748 = vmatprep.subr.mxu0 0.0
        %1749 = vmatpush1.msra.mxu0 0.0
        %1750 = vmatprep.subr.mxu0 0.0
        %1751 = vmatpush1.msra.mxu0 0.0
        %1752 = vmatprep.subr.mxu0 0.0
        %1753 = vmatpush1.msra.mxu0 0.0
        %1754 = vmatprep.mubr.f32.mxu0 0.0
        %1755 = vmatmul.mubr.f32.gmra.mrb[0].mxu0 %v1688
        %v1756 = vpop.f32.mrb[0].mxu0
        %v1757 = vadd.f32 %v1685, %v1756
        %v1758 = vpop.f32.mrb[0].mxu0
        %1759 = vdwg.mxu0
        %v1760 = vadd.f32 %v906, %v1757
        %v1761 = vsel %vm835, %v1760, 0.0
        %1762 = vadd.xlane.f32.xlu0 %v1761
        %v1763 = vpop.xlane.xlu0 %1762
        %v1764 = vrcp.pop 32.0
        %v1765 = vmul.f32 %v1763, %v1764
        %v1766 = vsub.f32 %v1760, %v1765
        %v1767 = vmul.f32 %v1766, %v1766
        %v1768 = vsel %vm835, %v1767, 0.0
        %1769 = vadd.xlane.f32.xlu0 %v1768
        %v1770 = vpop.xlane.xlu0 %1769
        %v1771 = vmul.f32 %v1770, %v1764
        %v1772 = vadd.f32 %v1771, 1e-05
        %v1773 = vrsqrt.pop %v1772
        %v1774 = vmul.f32 %v1766, %v1773
        %v1776 = vlaneseq
        %v1777 = vshrl.u32 %v1776, 7
        %v1778 = vsub.s32 0, %v1777
        %v1779 = vrot.slane %v909, %v1778
        %v1781 = vmul.f32 %v1774, %v1779
        %v1783 = vlaneseq
        %v1784 = vshrl.u32 %v1783, 7
        %v1785 = vsub.s32 0, %v1784
        %v1786 = vrot.slane %v910, %v1785
        %v1788 = vadd.f32 %v1781, %v1786
        %v1789 = vld [vmem:[%s10] sm:$0xff]
        %v1790 = vld [vmem:[%s10 + $0x8] sm:$0xff]
        %v1791 = vld [vmem:[%s10 + $0x10] sm:$0xff]
        %v1792 = vld [vmem:[%s10 + $0x18] sm:$0xff]
        %v1793 = vld [vmem:[%s11] sm:$0x1]
        %v1795 = vlaneseq
        %v1796 = vshrl.u32 %v1795, 7
        %v1797 = vsub.s32 0, %v1796
        %v1798 = vrot.slane %v1793, %v1797
        %v1801 = vsel %vm835, %v1788, 0
        %1803 = vmatprep.subr.mxu0 0.0
        %1804 = vmatpush1.msra.mxu0 %v1789
        %1805 = vmatprep.subr.mxu0 0.0
        %1806 = vmatpush1.msra.mxu0 %v1790
        %1807 = vmatprep.subr.mxu0 0.0
        %1808 = vmatpush1.msra.mxu0 %v1791
        %1809 = vmatprep.subr.mxu0 0.0
        %1810 = vmatpush1.msra.mxu0 %v1792
        %1811 = vmatprep.subr.mxu0 0.0
        %1812 = vmatpush1.msra.mxu0 0.0
        %1813 = vmatprep.subr.mxu0 0.0
        %1814 = vmatpush1.msra.mxu0 0.0
        %1815 = vmatprep.subr.mxu0 0.0
        %1816 = vmatpush1.msra.mxu0 0.0
        %1817 = vmatprep.subr.mxu0 0.0
        %1818 = vmatpush1.msra.mxu0 0.0
        %1819 = vmatprep.subr.mxu0 0.0
        %1820 = vmatpush1.msra.mxu0 0.0
        %1821 = vmatprep.subr.mxu0 0.0
        %1822 = vmatpush1.msra.mxu0 0.0
        %1823 = vmatprep.subr.mxu0 0.0
        %1824 = vmatpush1.msra.mxu0 0.0
        %1825 = vmatprep.subr.mxu0 0.0
        %1826 = vmatpush1.msra.mxu0 0.0
        %1827 = vmatprep.subr.mxu0 0.0
        %1828 = vmatpush1.msra.mxu0 0.0
        %1829 = vmatprep.subr.mxu0 0.0
        %1830 = vmatpush1.msra.mxu0 0.0
        %1831 = vmatprep.subr.mxu0 0.0
        %1832 = vmatpush1.msra.mxu0 0.0
        %1833 = vmatprep.subr.mxu0 0.0
        %1834 = vmatpush1.msra.mxu0 0.0
        %1835 = vmatprep.subr.mxu0 0.0
        %1836 = vmatpush1.msra.mxu0 0.0
        %1837 = vmatprep.subr.mxu0 0.0
        %1838 = vmatpush1.msra.mxu0 0.0
        %1839 = vmatprep.subr.mxu0 0.0
        %1840 = vmatpush1.msra.mxu0 0.0
        %1841 = vmatprep.subr.mxu0 0.0
        %1842 = vmatpush1.msra.mxu0 0.0
        %1843 = vmatprep.subr.mxu0 0.0
        %1844 = vmatpush1.msra.mxu0 0.0
        %1845 = vmatprep.subr.mxu0 0.0
        %1846 = vmatpush1.msra.mxu0 0.0
        %1847 = vmatprep.subr.mxu0 0.0
        %1848 = vmatpush1.msra.mxu0 0.0
        %1849 = vmatprep.subr.mxu0 0.0
        %1850 = vmatpush1.msra.mxu0 0.0
        %1851 = vmatprep.subr.mxu0 0.0
        %1852 = vmatpush1.msra.mxu0 0.0
        %1853 = vmatprep.subr.mxu0 0.0
        %1854 = vmatpush1.msra.mxu0 0.0
        %1855 = vmatprep.subr.mxu0 0.0
        %1856 = vmatpush1.msra.mxu0 0.0
        %1857 = vmatprep.subr.mxu0 0.0
        %1858 = vmatpush1.msra.mxu0 0.0
        %1859 = vmatprep.subr.mxu0 0.0
        %1860 = vmatpush1.msra.mxu0 0.0
        %1861 = vmatprep.subr.mxu0 0.0
        %1862 = vmatpush1.msra.mxu0 0.0
        %1863 = vmatprep.subr.mxu0 0.0
        %1864 = vmatpush1.msra.mxu0 0.0
        %1865 = vmatprep.subr.mxu0 0.0
        %1866 = vmatpush1.msra.mxu0 0.0
        %1867 = vmatprep.mubr.f32.mxu0 0.0
        %1868 = vmatmul.mubr.f32.gmra.mrb[0].mxu0 %v1801
        %v1869 = vpop.f32.mrb[0].mxu0
        %v1870 = vadd.f32 %v1798, %v1869
        %v1871 = vpop.f32.mrb[0].mxu0
        %1872 = vdwg.mxu0
        %v1873 = vld [vmem:[%s12] sm:$0xff]
        %v1874 = vld [vmem:[%s12 + $0x8] sm:$0xff]
        %v1875 = vld [vmem:[%s12 + $0x10] sm:$0xff]
        %v1876 = vld [vmem:[%s12 + $0x18] sm:$0xff]
        %v1877 = vld [vmem:[%s13] sm:$0x1]
        %v1879 = vlaneseq
        %v1880 = vshrl.u32 %v1879, 7
        %v1881 = vsub.s32 0, %v1880
        %v1882 = vrot.slane %v1877, %v1881
        %v1885 = vsel %vm835, %v822, 0
        %v1888 = vsel %vm835, %v823, 0
        %1890 = vmatprep.subr.mxu0 0.0
        %1891 = vmatpush1.msra.mxu0 %v1873
        %1892 = vmatprep.subr.mxu0 0.0
        %1893 = vmatpush1.msra.mxu0 %v1874
        %1894 = vmatprep.subr.mxu0 0.0
        %1895 = vmatpush1.msra.mxu0 %v1875
        %1896 = vmatprep.subr.mxu0 0.0
        %1897 = vmatpush1.msra.mxu0 %v1876
        %1898 = vmatprep.subr.mxu0 0.0
        %1899 = vmatpush1.msra.mxu0 0.0
        %1900 = vmatprep.subr.mxu0 0.0
        %1901 = vmatpush1.msra.mxu0 0.0
        %1902 = vmatprep.subr.mxu0 0.0
        %1903 = vmatpush1.msra.mxu0 0.0
        %1904 = vmatprep.subr.mxu0 0.0
        %1905 = vmatpush1.msra.mxu0 0.0
        %1906 = vmatprep.subr.mxu0 0.0
        %1907 = vmatpush1.msra.mxu0 0.0
        %1908 = vmatprep.subr.mxu0 0.0
        %1909 = vmatpush1.msra.mxu0 0.0
        %1910 = vmatprep.subr.mxu0 0.0
        %1911 = vmatpush1.msra.mxu0 0.0
        %1912 = vmatprep.subr.mxu0 0.0
        %1913 = vmatpush1.msra.mxu0 0.0
        %1914 = vmatprep.subr.mxu0 0.0
        %1915 = vmatpush1.msra.mxu0 0.0
        %1916 = vmatprep.subr.mxu0 0.0
        %1917 = vmatpush1.msra.mxu0 0.0
        %1918 = vmatprep.subr.mxu0 0.0
        %1919 = vmatpush1.msra.mxu0 0.0
        %1920 = vmatprep.subr.mxu0 0.0
        %1921 = vmatpush1.msra.mxu0 0.0
        %1922 = vmatprep.subr.mxu0 0.0
        %1923 = vmatpush1.msra.mxu0 0.0
        %1924 = vmatprep.subr.mxu0 0.0
        %1925 = vmatpush1.msra.mxu0 0.0
        %1926 = vmatprep.subr.mxu0 0.0
        %1927 = vmatpush1.msra.mxu0 0.0
        %1928 = vmatprep.subr.mxu0 0.0
        %1929 = vmatpush1.msra.mxu0 0.0
        %1930 = vmatprep.subr.mxu0 0.0
        %1931 = vmatpush1.msra.mxu0 0.0
        %1932 = vmatprep.subr.mxu0 0.0
        %1933 = vmatpush1.msra.mxu0 0.0
        %1934 = vmatprep.subr.mxu0 0.0
        %1935 = vmatpush1.msra.mxu0 0.0
        %1936 = vmatprep.subr.mxu0 0.0
        %1937 = vmatpush1.msra.mxu0 0.0
        %1938 = vmatprep.subr.mxu0 0.0
        %1939 = vmatpush1.msra.mxu0 0.0
        %1940 = vmatprep.subr.mxu0 0.0
        %1941 = vmatpush1.msra.mxu0 0.0
        %1942 = vmatprep.subr.mxu0 0.0
        %1943 = vmatpush1.msra.mxu0 0.0
        %1944 = vmatprep.subr.mxu0 0.0
        %1945 = vmatpush1.msra.mxu0 0.0
        %1946 = vmatprep.subr.mxu0 0.0
        %1947 = vmatpush1.msra.mxu0 0.0
        %1948 = vmatprep.subr.mxu0 0.0
        %1949 = vmatpush1.msra.mxu0 0.0
        %1950 = vmatprep.subr.mxu0 0.0
        %1951 = vmatpush1.msra.mxu0 0.0
        %1952 = vmatprep.subr.mxu0 0.0
        %1953 = vmatpush1.msra.mxu0 0.0
        %1954 = vmatprep.mubr.f32.mxu0 0.0
        %1955 = vmatmul.mubr.f32.gmra.mrb[0].mxu0 %v1885
        %v1956 = vpop.f32.mrb[0].mxu0
        %v1957 = vadd.f32 %v1882, %v1956
        %v1958 = vpop.f32.mrb[0].mxu0
        %1959 = vmatprep.mubr.f32.mxu0 0.0
        %1960 = vmatmul.mubr.f32.gmra.mrb[0].mxu0 %v1888
        %v1961 = vpop.f32.mrb[0].mxu0
        %v1962 = vadd.f32 %v1882, %v1961
        %v1963 = vpop.f32.mrb[0].mxu0
        %1964 = vdwg.mxu0
        %1966 = vrot.lane.b32.xlu0 %v1870, 120
        %v1967 = vpop.permute.xlu0 %1966
        %1968 = vrot.lane.b32.xlu0 %v1870, 112
        %v1969 = vpop.permute.xlu0 %1968
        %1970 = vrot.lane.b32.xlu0 %v1870, 104
        %v1971 = vpop.permute.xlu0 %1970
        %1974 = vrot.lane.b32.xlu0 %v1957, 120
        %v1975 = vpop.permute.xlu0 %1974
        %1976 = vrot.lane.b32.xlu0 %v1962, 120
        %v1977 = vpop.permute.xlu0 %1976
        %1978 = vrot.lane.b32.xlu0 %v1957, 112
        %v1979 = vpop.permute.xlu0 %1978
        %1980 = vrot.lane.b32.xlu0 %v1962, 112
        %v1981 = vpop.permute.xlu0 %1980
        %1982 = vrot.lane.b32.xlu0 %v1957, 104
        %v1983 = vpop.permute.xlu0 %1982
        %1984 = vrot.lane.b32.xlu0 %v1962, 104
        %v1985 = vpop.permute.xlu0 %1984
        %v1986 = vsel %vm1004, %v1870, 0
        %v1988 = vsel %vm1004, %v1957, 0
        %v1990 = vsel %vm1004, %v1962, 0
        %1992 = vmatprep.subr.mxu0 0.0
        %1993 = vmatpush1.xpose.msra.mxu0 %v1988
        %1994 = vmatprep.subr.mxu0 0.0
        %1995 = vmatpush1.xpose.msra.mxu0 %v1990
        %1996 = vmatprep.subr.mxu0 0.0
        %1997 = vmatpush1.xpose.msra.mxu0 0.0
        %1998 = vmatprep.subr.mxu0 0.0
        %1999 = vmatpush1.xpose.msra.mxu0 0.0
        %2000 = vmatprep.subr.mxu0 0.0
        %2001 = vmatpush1.xpose.msra.mxu0 0.0
        %2002 = vmatprep.subr.mxu0 0.0
        %2003 = vmatpush1.xpose.msra.mxu0 0.0
        %2004 = vmatprep.subr.mxu0 0.0
        %2005 = vmatpush1.xpose.msra.mxu0 0.0
        %2006 = vmatprep.subr.mxu0 0.0
        %2007 = vmatpush1.xpose.msra.mxu0 0.0
        %2008 = vmatprep.subr.mxu0 0.0
        %2009 = vmatpush1.xpose.msra.mxu0 0.0
        %2010 = vmatprep.subr.mxu0 0.0
        %2011 = vmatpush1.xpose.msra.mxu0 0.0
        %2012 = vmatprep.subr.mxu0 0.0
        %2013 = vmatpush1.xpose.msra.mxu0 0.0
        %2014 = vmatprep.subr.mxu0 0.0
        %2015 = vmatpush1.xpose.msra.mxu0 0.0
        %2016 = vmatprep.subr.mxu0 0.0
        %2017 = vmatpush1.xpose.msra.mxu0 0.0
        %2018 = vmatprep.subr.mxu0 0.0
        %2019 = vmatpush1.xpose.msra.mxu0 0.0
        %2020 = vmatprep.subr.mxu0 0.0
        %2021 = vmatpush1.xpose.msra.mxu0 0.0
        %2022 = vmatprep.subr.mxu0 0.0
        %2023 = vmatpush1.xpose.msra.mxu0 0.0
        %2024 = vmatprep.subr.mxu0 0.0
        %2025 = vmatpush1.xpose.msra.mxu0 0.0
        %2026 = vmatprep.subr.mxu0 0.0
        %2027 = vmatpush1.xpose.msra.mxu0 0.0
        %2028 = vmatprep.subr.mxu0 0.0
        %2029 = vmatpush1.xpose.msra.mxu0 0.0
        %2030 = vmatprep.subr.mxu0 0.0
        %2031 = vmatpush1.xpose.msra.mxu0 0.0
        %2032 = vmatprep.subr.mxu0 0.0
        %2033 = vmatpush1.xpose.msra.mxu0 0.0
        %2034 = vmatprep.subr.mxu0 0.0
        %2035 = vmatpush1.xpose.msra.mxu0 0.0
        %2036 = vmatprep.subr.mxu0 0.0
        %2037 = vmatpush1.xpose.msra.mxu0 0.0
        %2038 = vmatprep.subr.mxu0 0.0
        %2039 = vmatpush1.xpose.msra.mxu0 0.0
        %2040 = vmatprep.subr.mxu0 0.0
        %2041 = vmatpush1.xpose.msra.mxu0 0.0
        %2042 = vmatprep.subr.mxu0 0.0
        %2043 = vmatpush1.xpose.msra.mxu0 0.0
        %2044 = vmatprep.subr.mxu0 0.0
        %2045 = vmatpush1.xpose.msra.mxu0 0.0
        %2046 = vmatprep.subr.mxu0 0.0
        %2047 = vmatpush1.xpose.msra.mxu0 0.0
        %2048 = vmatprep.subr.mxu0 0.0
        %2049 = vmatpush1.xpose.msra.mxu0 0.0
        %2050 = vmatprep.subr.mxu0 0.0
        %2051 = vmatpush1.xpose.msra.mxu0 0.0
        %2052 = vmatprep.subr.mxu0 0.0
        %2053 = vmatpush1.xpose.msra.mxu0 0.0
        %2054 = vmatprep.subr.mxu0 0.0
        %2055 = vmatpush1.xpose.msra.mxu0 0.0
        %2056 = vmatprep.mubr.f32.mxu0 0.0
        %2057 = vmatmul.mubr.f32.gmra.mrb[0].mxu0 %v1986
        %v2058 = vpop.f32.mrb[0].mxu0
        %v2059 = vadd.f32 0.0, %v2058
        %v2060 = vpop.f32.mrb[0].mxu0
        %2061 = vdwg.mxu0
        %v2062 = vsel %vm1004, %v1967, 0
        %v2064 = vsel %vm1004, %v1975, 0
        %v2066 = vsel %vm1004, %v1977, 0
        %2068 = vmatprep.subr.mxu0 0.0
        %2069 = vmatpush1.xpose.msra.mxu0 %v2064
        %2070 = vmatprep.subr.mxu0 0.0
        %2071 = vmatpush1.xpose.msra.mxu0 %v2066
        %2072 = vmatprep.subr.mxu0 0.0
        %2073 = vmatpush1.xpose.msra.mxu0 0.0
        %2074 = vmatprep.subr.mxu0 0.0
        %2075 = vmatpush1.xpose.msra.mxu0 0.0
        %2076 = vmatprep.subr.mxu0 0.0
        %2077 = vmatpush1.xpose.msra.mxu0 0.0
        %2078 = vmatprep.subr.mxu0 0.0
        %2079 = vmatpush1.xpose.msra.mxu0 0.0
        %2080 = vmatprep.subr.mxu0 0.0
        %2081 = vmatpush1.xpose.msra.mxu0 0.0
        %2082 = vmatprep.subr.mxu0 0.0
        %2083 = vmatpush1.xpose.msra.mxu0 0.0
        %2084 = vmatprep.subr.mxu0 0.0
        %2085 = vmatpush1.xpose.msra.mxu0 0.0
        %2086 = vmatprep.subr.mxu0 0.0
        %2087 = vmatpush1.xpose.msra.mxu0 0.0
        %2088 = vmatprep.subr.mxu0 0.0
        %2089 = vmatpush1.xpose.msra.mxu0 0.0
        %2090 = vmatprep.subr.mxu0 0.0
        %2091 = vmatpush1.xpose.msra.mxu0 0.0
        %2092 = vmatprep.subr.mxu0 0.0
        %2093 = vmatpush1.xpose.msra.mxu0 0.0
        %2094 = vmatprep.subr.mxu0 0.0
        %2095 = vmatpush1.xpose.msra.mxu0 0.0
        %2096 = vmatprep.subr.mxu0 0.0
        %2097 = vmatpush1.xpose.msra.mxu0 0.0
        %2098 = vmatprep.subr.mxu0 0.0
        %2099 = vmatpush1.xpose.msra.mxu0 0.0
        %2100 = vmatprep.subr.mxu0 0.0
        %2101 = vmatpush1.xpose.msra.mxu0 0.0
        %2102 = vmatprep.subr.mxu0 0.0
        %2103 = vmatpush1.xpose.msra.mxu0 0.0
        %2104 = vmatprep.subr.mxu0 0.0
        %2105 = vmatpush1.xpose.msra.mxu0 0.0
        %2106 = vmatprep.subr.mxu0 0.0
        %2107 = vmatpush1.xpose.msra.mxu0 0.0
        %2108 = vmatprep.subr.mxu0 0.0
        %2109 = vmatpush1.xpose.msra.mxu0 0.0
        %2110 = vmatprep.subr.mxu0 0.0
        %2111 = vmatpush1.xpose.msra.mxu0 0.0
        %2112 = vmatprep.subr.mxu0 0.0
        %2113 = vmatpush1.xpose.msra.mxu0 0.0
        %2114 = vmatprep.subr.mxu0 0.0
        %2115 = vmatpush1.xpose.msra.mxu0 0.0
        %2116 = vmatprep.subr.mxu0 0.0
        %2117 = vmatpush1.xpose.msra.mxu0 0.0
        %2118 = vmatprep.subr.mxu0 0.0
        %2119 = vmatpush1.xpose.msra.mxu0 0.0
        %2120 = vmatprep.subr.mxu0 0.0
        %2121 = vmatpush1.xpose.msra.mxu0 0.0
        %2122 = vmatprep.subr.mxu0 0.0
        %2123 = vmatpush1.xpose.msra.mxu0 0.0
        %2124 = vmatprep.subr.mxu0 0.0
        %2125 = vmatpush1.xpose.msra.mxu0 0.0
        %2126 = vmatprep.subr.mxu0 0.0
        %2127 = vmatpush1.xpose.msra.mxu0 0.0
        %2128 = vmatprep.subr.mxu0 0.0
        %2129 = vmatpush1.xpose.msra.mxu0 0.0
        %2130 = vmatprep.subr.mxu0 0.0
        %2131 = vmatpush1.xpose.msra.mxu0 0.0
        %2132 = vmatprep.mubr.f32.mxu0 0.0
        %2133 = vmatmul.mubr.f32.gmra.mrb[0].mxu0 %v2062
        %v2134 = vpop.f32.mrb[0].mxu0
        %v2135 = vadd.f32 0.0, %v2134
        %v2136 = vpop.f32.mrb[0].mxu0
        %2137 = vdwg.mxu0
        %v2138 = vsel %vm1004, %v1969, 0
        %v2140 = vsel %vm1004, %v1979, 0
        %v2142 = vsel %vm1004, %v1981, 0
        %2144 = vmatprep.subr.mxu0 0.0
        %2145 = vmatpush1.xpose.msra.mxu0 %v2140
        %2146 = vmatprep.subr.mxu0 0.0
        %2147 = vmatpush1.xpose.msra.mxu0 %v2142
        %2148 = vmatprep.subr.mxu0 0.0
        %2149 = vmatpush1.xpose.msra.mxu0 0.0
        %2150 = vmatprep.subr.mxu0 0.0
        %2151 = vmatpush1.xpose.msra.mxu0 0.0
        %2152 = vmatprep.subr.mxu0 0.0
        %2153 = vmatpush1.xpose.msra.mxu0 0.0
        %2154 = vmatprep.subr.mxu0 0.0
        %2155 = vmatpush1.xpose.msra.mxu0 0.0
        %2156 = vmatprep.subr.mxu0 0.0
        %2157 = vmatpush1.xpose.msra.mxu0 0.0
        %2158 = vmatprep.subr.mxu0 0.0
        %2159 = vmatpush1.xpose.msra.mxu0 0.0
        %2160 = vmatprep.subr.mxu0 0.0
        %2161 = vmatpush1.xpose.msra.mxu0 0.0
        %2162 = vmatprep.subr.mxu0 0.0
        %2163 = vmatpush1.xpose.msra.mxu0 0.0
        %2164 = vmatprep.subr.mxu0 0.0
        %2165 = vmatpush1.xpose.msra.mxu0 0.0
        %2166 = vmatprep.subr.mxu0 0.0
        %2167 = vmatpush1.xpose.msra.mxu0 0.0
        %2168 = vmatprep.subr.mxu0 0.0
        %2169 = vmatpush1.xpose.msra.mxu0 0.0
        %2170 = vmatprep.subr.mxu0 0.0
        %2171 = vmatpush1.xpose.msra.mxu0 0.0
        %2172 = vmatprep.subr.mxu0 0.0
        %2173 = vmatpush1.xpose.msra.mxu0 0.0
        %2174 = vmatprep.subr.mxu0 0.0
        %2175 = vmatpush1.xpose.msra.mxu0 0.0
        %2176 = vmatprep.subr.mxu0 0.0
        %2177 = vmatpush1.xpose.msra.mxu0 0.0
        %2178 = vmatprep.subr.mxu0 0.0
        %2179 = vmatpush1.xpose.msra.mxu0 0.0
        %2180 = vmatprep.subr.mxu0 0.0
        %2181 = vmatpush1.xpose.msra.mxu0 0.0
        %2182 = vmatprep.subr.mxu0 0.0
        %2183 = vmatpush1.xpose.msra.mxu0 0.0
        %2184 = vmatprep.subr.mxu0 0.0
        %2185 = vmatpush1.xpose.msra.mxu0 0.0
        %2186 = vmatprep.subr.mxu0 0.0
        %2187 = vmatpush1.xpose.msra.mxu0 0.0
        %2188 = vmatprep.subr.mxu0 0.0
        %2189 = vmatpush1.xpose.msra.mxu0 0.0
        %2190 = vmatprep.subr.mxu0 0.0
        %2191 = vmatpush1.xpose.msra.mxu0 0.0
        %2192 = vmatprep.subr.mxu0 0.0
        %2193 = vmatpush1.xpose.msra.mxu0 0.0
        %2194 = vmatprep.subr.mxu0 0.0
        %2195 = vmatpush1.xpose.msra.mxu0 0.0
        %2196 = vmatprep.subr.mxu0 0.0
        %2197 = vmatpush1.xpose.msra.mxu0 0.0
        %2198 = vmatprep.subr.mxu0 0.0
        %2199 = vmatpush1.xpose.msra.mxu0 0.0
        %2200 = vmatprep.subr.mxu0 0.0
        %2201 = vmatpush1.xpose.msra.mxu0 0.0
        %2202 = vmatprep.subr.mxu0 0.0
        %2203 = vmatpush1.xpose.msra.mxu0 0.0
        %2204 = vmatprep.subr.mxu0 0.0
        %2205 = vmatpush1.xpose.msra.mxu0 0.0
        %2206 = vmatprep.subr.mxu0 0.0
        %2207 = vmatpush1.xpose.msra.mxu0 0.0
        %2208 = vmatprep.mubr.f32.mxu0 0.0
        %2209 = vmatmul.mubr.f32.gmra.mrb[0].mxu0 %v2138
        %v2210 = vpop.f32.mrb[0].mxu0
        %v2211 = vadd.f32 0.0, %v2210
        %v2212 = vpop.f32.mrb[0].mxu0
        %2213 = vdwg.mxu0
        %v2214 = vsel %vm1004, %v1971, 0
        %v2216 = vsel %vm1004, %v1983, 0
        %v2218 = vsel %vm1004, %v1985, 0
        %2220 = vmatprep.subr.mxu0 0.0
        %2221 = vmatpush1.xpose.msra.mxu0 %v2216
        %2222 = vmatprep.subr.mxu0 0.0
        %2223 = vmatpush1.xpose.msra.mxu0 %v2218
        %2224 = vmatprep.subr.mxu0 0.0
        %2225 = vmatpush1.xpose.msra.mxu0 0.0
        %2226 = vmatprep.subr.mxu0 0.0
        %2227 = vmatpush1.xpose.msra.mxu0 0.0
        %2228 = vmatprep.subr.mxu0 0.0
        %2229 = vmatpush1.xpose.msra.mxu0 0.0
        %2230 = vmatprep.subr.mxu0 0.0
        %2231 = vmatpush1.xpose.msra.mxu0 0.0
        %2232 = vmatprep.subr.mxu0 0.0
        %2233 = vmatpush1.xpose.msra.mxu0 0.0
        %2234 = vmatprep.subr.mxu0 0.0
        %2235 = vmatpush1.xpose.msra.mxu0 0.0
        %2236 = vmatprep.subr.mxu0 0.0
        %2237 = vmatpush1.xpose.msra.mxu0 0.0
        %2238 = vmatprep.subr.mxu0 0.0
        %2239 = vmatpush1.xpose.msra.mxu0 0.0
        %2240 = vmatprep.subr.mxu0 0.0
        %2241 = vmatpush1.xpose.msra.mxu0 0.0
        %2242 = vmatprep.subr.mxu0 0.0
        %2243 = vmatpush1.xpose.msra.mxu0 0.0
        %2244 = vmatprep.subr.mxu0 0.0
        %2245 = vmatpush1.xpose.msra.mxu0 0.0
        %2246 = vmatprep.subr.mxu0 0.0
        %2247 = vmatpush1.xpose.msra.mxu0 0.0
        %2248 = vmatprep.subr.mxu0 0.0
        %2249 = vmatpush1.xpose.msra.mxu0 0.0
        %2250 = vmatprep.subr.mxu0 0.0
        %2251 = vmatpush1.xpose.msra.mxu0 0.0
        %2252 = vmatprep.subr.mxu0 0.0
        %2253 = vmatpush1.xpose.msra.mxu0 0.0
        %2254 = vmatprep.subr.mxu0 0.0
        %2255 = vmatpush1.xpose.msra.mxu0 0.0
        %2256 = vmatprep.subr.mxu0 0.0
        %2257 = vmatpush1.xpose.msra.mxu0 0.0
        %2258 = vmatprep.subr.mxu0 0.0
        %2259 = vmatpush1.xpose.msra.mxu0 0.0
        %2260 = vmatprep.subr.mxu0 0.0
        %2261 = vmatpush1.xpose.msra.mxu0 0.0
        %2262 = vmatprep.subr.mxu0 0.0
        %2263 = vmatpush1.xpose.msra.mxu0 0.0
        %2264 = vmatprep.subr.mxu0 0.0
        %2265 = vmatpush1.xpose.msra.mxu0 0.0
        %2266 = vmatprep.subr.mxu0 0.0
        %2267 = vmatpush1.xpose.msra.mxu0 0.0
        %2268 = vmatprep.subr.mxu0 0.0
        %2269 = vmatpush1.xpose.msra.mxu0 0.0
        %2270 = vmatprep.subr.mxu0 0.0
        %2271 = vmatpush1.xpose.msra.mxu0 0.0
        %2272 = vmatprep.subr.mxu0 0.0
        %2273 = vmatpush1.xpose.msra.mxu0 0.0
        %2274 = vmatprep.subr.mxu0 0.0
        %2275 = vmatpush1.xpose.msra.mxu0 0.0
        %2276 = vmatprep.subr.mxu0 0.0
        %2277 = vmatpush1.xpose.msra.mxu0 0.0
        %2278 = vmatprep.subr.mxu0 0.0
        %2279 = vmatpush1.xpose.msra.mxu0 0.0
        %2280 = vmatprep.subr.mxu0 0.0
        %2281 = vmatpush1.xpose.msra.mxu0 0.0
        %2282 = vmatprep.subr.mxu0 0.0
        %2283 = vmatpush1.xpose.msra.mxu0 0.0
        %2284 = vmatprep.mubr.f32.mxu0 0.0
        %2285 = vmatmul.mubr.f32.gmra.mrb[0].mxu0 %v2214
        %v2286 = vpop.f32.mrb[0].mxu0
        %v2287 = vadd.f32 0.0, %v2286
        %v2288 = vpop.f32.mrb[0].mxu0
        %2289 = vdwg.mxu0
        %v2290 = vmul.f32 %v2059, 0.35355338
        %v2291 = vmul.f32 %v2135, 0.35355338
        %v2292 = vmul.f32 %v2211, 0.35355338
        %v2293 = vmul.f32 %v2287, 0.35355338
        %vm2294 = vcmask 97280
        %v2295 = vsel %vm2294, %v2290, -inf
        %2296 = vmax.xlane.f32.xlu0 %v2295
        %v2297 = vpop.xlane.xlu0 %2296
        %v2298 = vsel %vm2294, %v2291, -inf
        %2299 = vmax.xlane.f32.xlu0 %v2298
        %v2300 = vpop.xlane.xlu0 %2299
        %v2301 = vsel %vm2294, %v2292, -inf
        %2302 = vmax.xlane.f32.xlu0 %v2301
        %v2303 = vpop.xlane.xlu0 %2302
        %v2304 = vsel %vm2294, %v2293, -inf
        %2305 = vmax.xlane.f32.xlu0 %v2304
        %v2306 = vpop.xlane.xlu0 %2305
        %v2307 = vsub.f32 %v2290, %v2297
        %v2308 = vsub.f32 %v2291, %v2300
        %v2309 = vsub.f32 %v2292, %v2303
        %v2310 = vsub.f32 %v2293, %v2306
        %v2311 = vmul.f32 %v2307, 1.442695
        %v2312 = vpow.pop %v2311
        %v2313 = vmul.f32 %v2308, 1.442695
        %v2314 = vpow.pop %v2313
        %v2315 = vmul.f32 %v2309, 1.442695
        %v2316 = vpow.pop %v2315
        %v2317 = vmul.f32 %v2310, 1.442695
        %v2318 = vpow.pop %v2317
        %v2319 = vsel %vm2294, %v2312, 0.0
        %2320 = vadd.xlane.f32.xlu0 %v2319
        %v2321 = vpop.xlane.xlu0 %2320
        %v2322 = vsel %vm2294, %v2314, 0.0
        %2323 = vadd.xlane.f32.xlu0 %v2322
        %v2324 = vpop.xlane.xlu0 %2323
        %v2325 = vsel %vm2294, %v2316, 0.0
        %2326 = vadd.xlane.f32.xlu0 %v2325
        %v2327 = vpop.xlane.xlu0 %2326
        %v2328 = vsel %vm2294, %v2318, 0.0
        %2329 = vadd.xlane.f32.xlu0 %v2328
        %v2330 = vpop.xlane.xlu0 %2329
        %v2331 = vrcp.pop %v2321
        %v2332 = vrcp.pop %v2324
        %v2333 = vrcp.pop %v2327
        %v2334 = vrcp.pop %v2330
        %v2335 = vmul.f32 %v2312, %v2331
        %v2336 = vmul.f32 %v2314, %v2332
        %v2337 = vmul.f32 %v2316, %v2333
        %v2338 = vmul.f32 %v2318, %v2334
        %2339 = vrot.lane.b32.xlu0 %v1957, 96
        %v2340 = vpop.permute.xlu0 %2339
        %2341 = vrot.lane.b32.xlu0 %v1962, 96
        %v2342 = vpop.permute.xlu0 %2341
        %v2345 = vsel %vm2294, %v2335, 0
        %vm2347 = vcmask 1043456
        %v2348 = vsel %vm2347, %v2342, 0
        %2350 = vmatprep.subr.mxu0 0.0
        %2351 = vmatpush1.msra.mxu0 %v2340
        %2352 = vmatprep.subr.mxu0 0.0
        %2353 = vmatpush1.msra.mxu0 %v2348
        %2354 = vmatprep.subr.mxu0 0.0
        %2355 = vmatpush1.msra.mxu0 0.0
        %2356 = vmatprep.subr.mxu0 0.0
        %2357 = vmatpush1.msra.mxu0 0.0
        %2358 = vmatprep.subr.mxu0 0.0
        %2359 = vmatpush1.msra.mxu0 0.0
        %2360 = vmatprep.subr.mxu0 0.0
        %2361 = vmatpush1.msra.mxu0 0.0
        %2362 = vmatprep.subr.mxu0 0.0
        %2363 = vmatpush1.msra.mxu0 0.0
        %2364 = vmatprep.subr.mxu0 0.0
        %2365 = vmatpush1.msra.mxu0 0.0
        %2366 = vmatprep.subr.mxu0 0.0
        %2367 = vmatpush1.msra.mxu0 0.0
        %2368 = vmatprep.subr.mxu0 0.0
        %2369 = vmatpush1.msra.mxu0 0.0
        %2370 = vmatprep.subr.mxu0 0.0
        %2371 = vmatpush1.msra.mxu0 0.0
        %2372 = vmatprep.subr.mxu0 0.0
        %2373 = vmatpush1.msra.mxu0 0.0
        %2374 = vmatprep.subr.mxu0 0.0
        %2375 = vmatpush1.msra.mxu0 0.0
        %2376 = vmatprep.subr.mxu0 0.0
        %2377 = vmatpush1.msra.mxu0 0.0
        %2378 = vmatprep.subr.mxu0 0.0
        %2379 = vmatpush1.msra.mxu0 0.0
        %2380 = vmatprep.subr.mxu0 0.0
        %2381 = vmatpush1.msra.mxu0 0.0
        %2382 = vmatprep.subr.mxu0 0.0
        %2383 = vmatpush1.msra.mxu0 0.0
        %2384 = vmatprep.subr.mxu0 0.0
        %2385 = vmatpush1.msra.mxu0 0.0
        %2386 = vmatprep.subr.mxu0 0.0
        %2387 = vmatpush1.msra.mxu0 0.0
        %2388 = vmatprep.subr.mxu0 0.0
        %2389 = vmatpush1.msra.mxu0 0.0
        %2390 = vmatprep.subr.mxu0 0.0
        %2391 = vmatpush1.msra.mxu0 0.0
        %2392 = vmatprep.subr.mxu0 0.0
        %2393 = vmatpush1.msra.mxu0 0.0
        %2394 = vmatprep.subr.mxu0 0.0
        %2395 = vmatpush1.msra.mxu0 0.0
        %2396 = vmatprep.subr.mxu0 0.0
        %2397 = vmatpush1.msra.mxu0 0.0
        %2398 = vmatprep.subr.mxu0 0.0
        %2399 = vmatpush1.msra.mxu0 0.0
        %2400 = vmatprep.subr.mxu0 0.0
        %2401 = vmatpush1.msra.mxu0 0.0
        %2402 = vmatprep.subr.mxu0 0.0
        %2403 = vmatpush1.msra.mxu0 0.0
        %2404 = vmatprep.subr.mxu0 0.0
        %2405 = vmatpush1.msra.mxu0 0.0
        %2406 = vmatprep.subr.mxu0 0.0
        %2407 = vmatpush1.msra.mxu0 0.0
        %2408 = vmatprep.subr.mxu0 0.0
        %2409 = vmatpush1.msra.mxu0 0.0
        %2410 = vmatprep.subr.mxu0 0.0
        %2411 = vmatpush1.msra.mxu0 0.0
        %2412 = vmatprep.subr.mxu0 0.0
        %2413 = vmatpush1.msra.mxu0 0.0
        %2414 = vmatprep.mubr.f32.mxu0 0.0
        %2415 = vmatmul.mubr.f32.gmra.mrb[0].mxu0 %v2345
        %v2416 = vpop.f32.mrb[0].mxu0
        %v2417 = vadd.f32 0.0, %v2416
        %v2418 = vpop.f32.mrb[0].mxu0
        %2419 = vdwg.mxu0
        %2420 = vrot.lane.b32.xlu0 %v1975, 96
        %v2421 = vpop.permute.xlu0 %2420
        %2422 = vrot.lane.b32.xlu0 %v1977, 96
        %v2423 = vpop.permute.xlu0 %2422
        %v2426 = vsel %vm2294, %v2336, 0
        %v2428 = vsel %vm2347, %v2423, 0
        %2430 = vmatprep.subr.mxu0 0.0
        %2431 = vmatpush1.msra.mxu0 %v2421
        %2432 = vmatprep.subr.mxu0 0.0
        %2433 = vmatpush1.msra.mxu0 %v2428
        %2434 = vmatprep.subr.mxu0 0.0
        %2435 = vmatpush1.msra.mxu0 0.0
        %2436 = vmatprep.subr.mxu0 0.0
        %2437 = vmatpush1.msra.mxu0 0.0
        %2438 = vmatprep.subr.mxu0 0.0
        %2439 = vmatpush1.msra.mxu0 0.0
        %2440 = vmatprep.subr.mxu0 0.0
        %2441 = vmatpush1.msra.mxu0 0.0
        %2442 = vmatprep.subr.mxu0 0.0
        %2443 = vmatpush1.msra.mxu0 0.0
        %2444 = vmatprep.subr.mxu0 0.0
        %2445 = vmatpush1.msra.mxu0 0.0
        %2446 = vmatprep.subr.mxu0 0.0
        %2447 = vmatpush1.msra.mxu0 0.0
        %2448 = vmatprep.subr.mxu0 0.0
        %2449 = vmatpush1.msra.mxu0 0.0
        %2450 = vmatprep.subr.mxu0 0.0
        %2451 = vmatpush1.msra.mxu0 0.0
        %2452 = vmatprep.subr.mxu0 0.0
        %2453 = vmatpush1.msra.mxu0 0.0
        %2454 = vmatprep.subr.mxu0 0.0
        %2455 = vmatpush1.msra.mxu0 0.0
        %2456 = vmatprep.subr.mxu0 0.0
        %2457 = vmatpush1.msra.mxu0 0.0
        %2458 = vmatprep.subr.mxu0 0.0
        %2459 = vmatpush1.msra.mxu0 0.0
        %2460 = vmatprep.subr.mxu0 0.0
        %2461 = vmatpush1.msra.mxu0 0.0
        %2462 = vmatprep.subr.mxu0 0.0
        %2463 = vmatpush1.msra.mxu0 0.0
        %2464 = vmatprep.subr.mxu0 0.0
        %2465 = vmatpush1.msra.mxu0 0.0
        %2466 = vmatprep.subr.mxu0 0.0
        %2467 = vmatpush1.msra.mxu0 0.0
        %2468 = vmatprep.subr.mxu0 0.0
        %2469 = vmatpush1.msra.mxu0 0.0
        %2470 = vmatprep.subr.mxu0 0.0
        %2471 = vmatpush1.msra.mxu0 0.0
        %2472 = vmatprep.subr.mxu0 0.0
        %2473 = vmatpush1.msra.mxu0 0.0
        %2474 = vmatprep.subr.mxu0 0.0
        %2475 = vmatpush1.msra.mxu0 0.0
        %2476 = vmatprep.subr.mxu0 0.0
        %2477 = vmatpush1.msra.mxu0 0.0
        %2478 = vmatprep.subr.mxu0 0.0
        %2479 = vmatpush1.msra.mxu0 0.0
        %2480 = vmatprep.subr.mxu0 0.0
        %2481 = vmatpush1.msra.mxu0 0.0
        %2482 = vmatprep.subr.mxu0 0.0
        %2483 = vmatpush1.msra.mxu0 0.0
        %2484 = vmatprep.subr.mxu0 0.0
        %2485 = vmatpush1.msra.mxu0 0.0
        %2486 = vmatprep.subr.mxu0 0.0
        %2487 = vmatpush1.msra.mxu0 0.0
        %2488 = vmatprep.subr.mxu0 0.0
        %2489 = vmatpush1.msra.mxu0 0.0
        %2490 = vmatprep.subr.mxu0 0.0
        %2491 = vmatpush1.msra.mxu0 0.0
        %2492 = vmatprep.subr.mxu0 0.0
        %2493 = vmatpush1.msra.mxu0 0.0
        %2494 = vmatprep.mubr.f32.mxu0 0.0
        %2495 = vmatmul.mubr.f32.gmra.mrb[0].mxu0 %v2426
        %v2496 = vpop.f32.mrb[0].mxu0
        %v2497 = vadd.f32 0.0, %v2496
        %v2498 = vpop.f32.mrb[0].mxu0
        %2499 = vdwg.mxu0
        %2500 = vrot.lane.b32.xlu0 %v1979, 96
        %v2501 = vpop.permute.xlu0 %2500
        %2502 = vrot.lane.b32.xlu0 %v1981, 96
        %v2503 = vpop.permute.xlu0 %2502
        %v2506 = vsel %vm2294, %v2337, 0
        %v2508 = vsel %vm2347, %v2503, 0
        %2510 = vmatprep.subr.mxu0 0.0
        %2511 = vmatpush1.msra.mxu0 %v2501
        %2512 = vmatprep.subr.mxu0 0.0
        %2513 = vmatpush1.msra.mxu0 %v2508
        %2514 = vmatprep.subr.mxu0 0.0
        %2515 = vmatpush1.msra.mxu0 0.0
        %2516 = vmatprep.subr.mxu0 0.0
        %2517 = vmatpush1.msra.mxu0 0.0
        %2518 = vmatprep.subr.mxu0 0.0
        %2519 = vmatpush1.msra.mxu0 0.0
        %2520 = vmatprep.subr.mxu0 0.0
        %2521 = vmatpush1.msra.mxu0 0.0
        %2522 = vmatprep.subr.mxu0 0.0
        %2523 = vmatpush1.msra.mxu0 0.0
        %2524 = vmatprep.subr.mxu0 0.0
        %2525 = vmatpush1.msra.mxu0 0.0
        %2526 = vmatprep.subr.mxu0 0.0
        %2527 = vmatpush1.msra.mxu0 0.0
        %2528 = vmatprep.subr.mxu0 0.0
        %2529 = vmatpush1.msra.mxu0 0.0
        %2530 = vmatprep.subr.mxu0 0.0
        %2531 = vmatpush1.msra.mxu0 0.0
        %2532 = vmatprep.subr.mxu0 0.0
        %2533 = vmatpush1.msra.mxu0 0.0
        %2534 = vmatprep.subr.mxu0 0.0
        %2535 = vmatpush1.msra.mxu0 0.0
        %2536 = vmatprep.subr.mxu0 0.0
        %2537 = vmatpush1.msra.mxu0 0.0
        %2538 = vmatprep.subr.mxu0 0.0
        %2539 = vmatpush1.msra.mxu0 0.0
        %2540 = vmatprep.subr.mxu0 0.0
        %2541 = vmatpush1.msra.mxu0 0.0
        %2542 = vmatprep.subr.mxu0 0.0
        %2543 = vmatpush1.msra.mxu0 0.0
        %2544 = vmatprep.subr.mxu0 0.0
        %2545 = vmatpush1.msra.mxu0 0.0
        %2546 = vmatprep.subr.mxu0 0.0
        %2547 = vmatpush1.msra.mxu0 0.0
        %2548 = vmatprep.subr.mxu0 0.0
        %2549 = vmatpush1.msra.mxu0 0.0
        %2550 = vmatprep.subr.mxu0 0.0
        %2551 = vmatpush1.msra.mxu0 0.0
        %2552 = vmatprep.subr.mxu0 0.0
        %2553 = vmatpush1.msra.mxu0 0.0
        %2554 = vmatprep.subr.mxu0 0.0
        %2555 = vmatpush1.msra.mxu0 0.0
        %2556 = vmatprep.subr.mxu0 0.0
        %2557 = vmatpush1.msra.mxu0 0.0
        %2558 = vmatprep.subr.mxu0 0.0
        %2559 = vmatpush1.msra.mxu0 0.0
        %2560 = vmatprep.subr.mxu0 0.0
        %2561 = vmatpush1.msra.mxu0 0.0
        %2562 = vmatprep.subr.mxu0 0.0
        %2563 = vmatpush1.msra.mxu0 0.0
        %2564 = vmatprep.subr.mxu0 0.0
        %2565 = vmatpush1.msra.mxu0 0.0
        %2566 = vmatprep.subr.mxu0 0.0
        %2567 = vmatpush1.msra.mxu0 0.0
        %2568 = vmatprep.subr.mxu0 0.0
        %2569 = vmatpush1.msra.mxu0 0.0
        %2570 = vmatprep.subr.mxu0 0.0
        %2571 = vmatpush1.msra.mxu0 0.0
        %2572 = vmatprep.subr.mxu0 0.0
        %2573 = vmatpush1.msra.mxu0 0.0
        %2574 = vmatprep.mubr.f32.mxu0 0.0
        %2575 = vmatmul.mubr.f32.gmra.mrb[0].mxu0 %v2506
        %v2576 = vpop.f32.mrb[0].mxu0
        %v2577 = vadd.f32 0.0, %v2576
        %v2578 = vpop.f32.mrb[0].mxu0
        %2579 = vdwg.mxu0
        %2580 = vrot.lane.b32.xlu0 %v1983, 96
        %v2581 = vpop.permute.xlu0 %2580
        %2582 = vrot.lane.b32.xlu0 %v1985, 96
        %v2583 = vpop.permute.xlu0 %2582
        %v2586 = vsel %vm2294, %v2338, 0
        %v2588 = vsel %vm2347, %v2583, 0
        %2590 = vmatprep.subr.mxu0 0.0
        %2591 = vmatpush1.msra.mxu0 %v2581
        %2592 = vmatprep.subr.mxu0 0.0
        %2593 = vmatpush1.msra.mxu0 %v2588
        %2594 = vmatprep.subr.mxu0 0.0
        %2595 = vmatpush1.msra.mxu0 0.0
        %2596 = vmatprep.subr.mxu0 0.0
        %2597 = vmatpush1.msra.mxu0 0.0
        %2598 = vmatprep.subr.mxu0 0.0
        %2599 = vmatpush1.msra.mxu0 0.0
        %2600 = vmatprep.subr.mxu0 0.0
        %2601 = vmatpush1.msra.mxu0 0.0
        %2602 = vmatprep.subr.mxu0 0.0
        %2603 = vmatpush1.msra.mxu0 0.0
        %2604 = vmatprep.subr.mxu0 0.0
        %2605 = vmatpush1.msra.mxu0 0.0
        %2606 = vmatprep.subr.mxu0 0.0
        %2607 = vmatpush1.msra.mxu0 0.0
        %2608 = vmatprep.subr.mxu0 0.0
        %2609 = vmatpush1.msra.mxu0 0.0
        %2610 = vmatprep.subr.mxu0 0.0
        %2611 = vmatpush1.msra.mxu0 0.0
        %2612 = vmatprep.subr.mxu0 0.0
        %2613 = vmatpush1.msra.mxu0 0.0
        %2614 = vmatprep.subr.mxu0 0.0
        %2615 = vmatpush1.msra.mxu0 0.0
        %2616 = vmatprep.subr.mxu0 0.0
        %2617 = vmatpush1.msra.mxu0 0.0
        %2618 = vmatprep.subr.mxu0 0.0
        %2619 = vmatpush1.msra.mxu0 0.0
        %2620 = vmatprep.subr.mxu0 0.0
        %2621 = vmatpush1.msra.mxu0 0.0
        %2622 = vmatprep.subr.mxu0 0.0
        %2623 = vmatpush1.msra.mxu0 0.0
        %2624 = vmatprep.subr.mxu0 0.0
        %2625 = vmatpush1.msra.mxu0 0.0
        %2626 = vmatprep.subr.mxu0 0.0
        %2627 = vmatpush1.msra.mxu0 0.0
        %2628 = vmatprep.subr.mxu0 0.0
        %2629 = vmatpush1.msra.mxu0 0.0
        %2630 = vmatprep.subr.mxu0 0.0
        %2631 = vmatpush1.msra.mxu0 0.0
        %2632 = vmatprep.subr.mxu0 0.0
        %2633 = vmatpush1.msra.mxu0 0.0
        %2634 = vmatprep.subr.mxu0 0.0
        %2635 = vmatpush1.msra.mxu0 0.0
        %2636 = vmatprep.subr.mxu0 0.0
        %2637 = vmatpush1.msra.mxu0 0.0
        %2638 = vmatprep.subr.mxu0 0.0
        %2639 = vmatpush1.msra.mxu0 0.0
        %2640 = vmatprep.subr.mxu0 0.0
        %2641 = vmatpush1.msra.mxu0 0.0
        %2642 = vmatprep.subr.mxu0 0.0
        %2643 = vmatpush1.msra.mxu0 0.0
        %2644 = vmatprep.subr.mxu0 0.0
        %2645 = vmatpush1.msra.mxu0 0.0
        %2646 = vmatprep.subr.mxu0 0.0
        %2647 = vmatpush1.msra.mxu0 0.0
        %2648 = vmatprep.subr.mxu0 0.0
        %2649 = vmatpush1.msra.mxu0 0.0
        %2650 = vmatprep.subr.mxu0 0.0
        %2651 = vmatpush1.msra.mxu0 0.0
        %2652 = vmatprep.subr.mxu0 0.0
        %2653 = vmatpush1.msra.mxu0 0.0
        %2654 = vmatprep.mubr.f32.mxu0 0.0
        %2655 = vmatmul.mubr.f32.gmra.mrb[0].mxu0 %v2586
        %v2656 = vpop.f32.mrb[0].mxu0
        %v2657 = vadd.f32 0.0, %v2656
        %v2658 = vpop.f32.mrb[0].mxu0
        %2659 = vdwg.mxu0
        %2661 = vrot.lane.b32.xlu0 %v2497, 8
        %v2662 = vpop.permute.xlu0 %2661
        %2665 = vrot.lane.b32.xlu0 %v2577, 16
        %v2666 = vpop.permute.xlu0 %2665
        %2669 = vrot.lane.b32.xlu0 %v2657, 24
        %v2670 = vpop.permute.xlu0 %2669
        %v2672 = vsel %vm1004, %v2417, %v2662
        %v2673 = vsel %vm1672, %v2672, %v2666
        %v2674 = vsel %vm1674, %v2673, %v2670
        %v2675 = vld [vmem:[%s14] sm:$0xff]
        %v2676 = vld [vmem:[%s14 + $0x8] sm:$0xff]
        %v2677 = vld [vmem:[%s14 + $0x10] sm:$0xff]
        %v2678 = vld [vmem:[%s14 + $0x18] sm:$0xff]
        %v2679 = vld [vmem:[%s15] sm:$0x1]
        %v2681 = vlaneseq
        %v2682 = vshrl.u32 %v2681, 7
        %v2683 = vsub.s32 0, %v2682
        %v2684 = vrot.slane %v2679, %v2683
        %v2687 = vsel %vm835, %v2674, 0
        %2689 = vmatprep.subr.mxu0 0.0
        %2690 = vmatpush1.msra.mxu0 %v2675
        %2691 = vmatprep.subr.mxu0 0.0
        %2692 = vmatpush1.msra.mxu0 %v2676
        %2693 = vmatprep.subr.mxu0 0.0
        %2694 = vmatpush1.msra.mxu0 %v2677
        %2695 = vmatprep.subr.mxu0 0.0
        %2696 = vmatpush1.msra.mxu0 %v2678
        %2697 = vmatprep.subr.mxu0 0.0
        %2698 = vmatpush1.msra.mxu0 0.0
        %2699 = vmatprep.subr.mxu0 0.0
        %2700 = vmatpush1.msra.mxu0 0.0
        %2701 = vmatprep.subr.mxu0 0.0
        %2702 = vmatpush1.msra.mxu0 0.0
        %2703 = vmatprep.subr.mxu0 0.0
        %2704 = vmatpush1.msra.mxu0 0.0
        %2705 = vmatprep.subr.mxu0 0.0
        %2706 = vmatpush1.msra.mxu0 0.0
        %2707 = vmatprep.subr.mxu0 0.0
        %2708 = vmatpush1.msra.mxu0 0.0
        %2709 = vmatprep.subr.mxu0 0.0
        %2710 = vmatpush1.msra.mxu0 0.0
        %2711 = vmatprep.subr.mxu0 0.0
        %2712 = vmatpush1.msra.mxu0 0.0
        %2713 = vmatprep.subr.mxu0 0.0
        %2714 = vmatpush1.msra.mxu0 0.0
        %2715 = vmatprep.subr.mxu0 0.0
        %2716 = vmatpush1.msra.mxu0 0.0
        %2717 = vmatprep.subr.mxu0 0.0
        %2718 = vmatpush1.msra.mxu0 0.0
        %2719 = vmatprep.subr.mxu0 0.0
        %2720 = vmatpush1.msra.mxu0 0.0
        %2721 = vmatprep.subr.mxu0 0.0
        %2722 = vmatpush1.msra.mxu0 0.0
        %2723 = vmatprep.subr.mxu0 0.0
        %2724 = vmatpush1.msra.mxu0 0.0
        %2725 = vmatprep.subr.mxu0 0.0
        %2726 = vmatpush1.msra.mxu0 0.0
        %2727 = vmatprep.subr.mxu0 0.0
        %2728 = vmatpush1.msra.mxu0 0.0
        %2729 = vmatprep.subr.mxu0 0.0
        %2730 = vmatpush1.msra.mxu0 0.0
        %2731 = vmatprep.subr.mxu0 0.0
        %2732 = vmatpush1.msra.mxu0 0.0
        %2733 = vmatprep.subr.mxu0 0.0
        %2734 = vmatpush1.msra.mxu0 0.0
        %2735 = vmatprep.subr.mxu0 0.0
        %2736 = vmatpush1.msra.mxu0 0.0
        %2737 = vmatprep.subr.mxu0 0.0
        %2738 = vmatpush1.msra.mxu0 0.0
        %2739 = vmatprep.subr.mxu0 0.0
        %2740 = vmatpush1.msra.mxu0 0.0
        %2741 = vmatprep.subr.mxu0 0.0
        %2742 = vmatpush1.msra.mxu0 0.0
        %2743 = vmatprep.subr.mxu0 0.0
        %2744 = vmatpush1.msra.mxu0 0.0
        %2745 = vmatprep.subr.mxu0 0.0
        %2746 = vmatpush1.msra.mxu0 0.0
        %2747 = vmatprep.subr.mxu0 0.0
        %2748 = vmatpush1.msra.mxu0 0.0
        %2749 = vmatprep.subr.mxu0 0.0
        %2750 = vmatpush1.msra.mxu0 0.0
        %2751 = vmatprep.subr.mxu0 0.0
        %2752 = vmatpush1.msra.mxu0 0.0
        %2753 = vmatprep.mubr.f32.mxu0 0.0
        %2754 = vmatmul.mubr.f32.gmra.mrb[0].mxu0 %v2687
        %v2755 = vpop.f32.mrb[0].mxu0
        %v2756 = vadd.f32 %v2684, %v2755
        %v2757 = vpop.f32.mrb[0].mxu0
        %2758 = vdwg.mxu0
        %v2759 = vadd.f32 %v1788, %v2756
        %v2760 = vsel %vm835, %v2759, 0.0
        %2761 = vadd.xlane.f32.xlu0 %v2760
        %v2762 = vpop.xlane.xlu0 %2761
        %v2763 = vmul.f32 %v2762, %v1764
        %v2764 = vsub.f32 %v2759, %v2763
        %v2765 = vmul.f32 %v2764, %v2764
        %v2766 = vsel %vm835, %v2765, 0.0
        %2767 = vadd.xlane.f32.xlu0 %v2766
        %v2768 = vpop.xlane.xlu0 %2767
        %v2769 = vmul.f32 %v2768, %v1764
        %v2770 = vadd.f32 %v2769, 1e-05
        %v2771 = vrsqrt.pop %v2770
        %v2772 = vmul.f32 %v2764, %v2771
        %v2773 = vmul.f32 %v2772, %v1779
        %v2774 = vadd.f32 %v2773, %v1786
        %v2775 = vld [vmem:[%s16] sm:$0xff]
        %v2776 = vld [vmem:[%s16 + $0x8] sm:$0xff]
        %v2777 = vld [vmem:[%s16 + $0x10] sm:$0xff]
        %v2778 = vld [vmem:[%s16 + $0x18] sm:$0xff]
        %v2779 = vld [vmem:[%s17] sm:$0x1]
        %v2781 = vlaneseq
        %v2782 = vshrl.u32 %v2781, 7
        %v2783 = vsub.s32 0, %v2782
        %v2784 = vrot.slane %v2779, %v2783
        %v2787 = vsel %vm835, %v2774, 0
        %2789 = vmatprep.subr.mxu0 0.0
        %2790 = vmatpush1.msra.mxu0 %v2775
        %2791 = vmatprep.subr.mxu0 0.0
        %2792 = vmatpush1.msra.mxu0 %v2776
        %2793 = vmatprep.subr.mxu0 0.0
        %2794 = vmatpush1.msra.mxu0 %v2777
        %2795 = vmatprep.subr.mxu0 0.0
        %2796 = vmatpush1.msra.mxu0 %v2778
        %2797 = vmatprep.subr.mxu0 0.0
        %2798 = vmatpush1.msra.mxu0 0.0
        %2799 = vmatprep.subr.mxu0 0.0
        %2800 = vmatpush1.msra.mxu0 0.0
        %2801 = vmatprep.subr.mxu0 0.0
        %2802 = vmatpush1.msra.mxu0 0.0
        %2803 = vmatprep.subr.mxu0 0.0
        %2804 = vmatpush1.msra.mxu0 0.0
        %2805 = vmatprep.subr.mxu0 0.0
        %2806 = vmatpush1.msra.mxu0 0.0
        %2807 = vmatprep.subr.mxu0 0.0
        %2808 = vmatpush1.msra.mxu0 0.0
        %2809 = vmatprep.subr.mxu0 0.0
        %2810 = vmatpush1.msra.mxu0 0.0
        %2811 = vmatprep.subr.mxu0 0.0
        %2812 = vmatpush1.msra.mxu0 0.0
        %2813 = vmatprep.subr.mxu0 0.0
        %2814 = vmatpush1.msra.mxu0 0.0
        %2815 = vmatprep.subr.mxu0 0.0
        %2816 = vmatpush1.msra.mxu0 0.0
        %2817 = vmatprep.subr.mxu0 0.0
        %2818 = vmatpush1.msra.mxu0 0.0
        %2819 = vmatprep.subr.mxu0 0.0
        %2820 = vmatpush1.msra.mxu0 0.0
        %2821 = vmatprep.subr.mxu0 0.0
        %2822 = vmatpush1.msra.mxu0 0.0
        %2823 = vmatprep.subr.mxu0 0.0
        %2824 = vmatpush1.msra.mxu0 0.0
        %2825 = vmatprep.subr.mxu0 0.0
        %2826 = vmatpush1.msra.mxu0 0.0
        %2827 = vmatprep.subr.mxu0 0.0
        %2828 = vmatpush1.msra.mxu0 0.0
        %2829 = vmatprep.subr.mxu0 0.0
        %2830 = vmatpush1.msra.mxu0 0.0
        %2831 = vmatprep.subr.mxu0 0.0
        %2832 = vmatpush1.msra.mxu0 0.0
        %2833 = vmatprep.subr.mxu0 0.0
        %2834 = vmatpush1.msra.mxu0 0.0
        %2835 = vmatprep.subr.mxu0 0.0
        %2836 = vmatpush1.msra.mxu0 0.0
        %2837 = vmatprep.subr.mxu0 0.0
        %2838 = vmatpush1.msra.mxu0 0.0
        %2839 = vmatprep.subr.mxu0 0.0
        %2840 = vmatpush1.msra.mxu0 0.0
        %2841 = vmatprep.subr.mxu0 0.0
        %2842 = vmatpush1.msra.mxu0 0.0
        %2843 = vmatprep.subr.mxu0 0.0
        %2844 = vmatpush1.msra.mxu0 0.0
        %2845 = vmatprep.subr.mxu0 0.0
        %2846 = vmatpush1.msra.mxu0 0.0
        %2847 = vmatprep.subr.mxu0 0.0
        %2848 = vmatpush1.msra.mxu0 0.0
        %2849 = vmatprep.subr.mxu0 0.0
        %2850 = vmatpush1.msra.mxu0 0.0
        %2851 = vmatprep.subr.mxu0 0.0
        %2852 = vmatpush1.msra.mxu0 0.0
        %2853 = vmatprep.mubr.f32.mxu0 0.0
        %2854 = vmatmul.mubr.f32.gmra.mrb[0].mxu0 %v2787
        %v2855 = vpop.f32.mrb[0].mxu0
        %v2856 = vadd.f32 %v2784, %v2855
        %v2857 = vpop.f32.mrb[0].mxu0
        %2858 = vdwg.mxu0
        %v2859 = vmax.f32 %v2856, 0.0
        %v2860 = vld [vmem:[%s18] sm:$0xff]
        %v2861 = vld [vmem:[%s18 + $0x8] sm:$0xff]
        %v2862 = vld [vmem:[%s18 + $0x10] sm:$0xff]
        %v2863 = vld [vmem:[%s18 + $0x18] sm:$0xff]
        %v2864 = vld [vmem:[%s18 + $0x20] sm:$0xff]
        %v2865 = vld [vmem:[%s18 + $0x28] sm:$0xff]
        %v2866 = vld [vmem:[%s18 + $0x30] sm:$0xff]
        %v2867 = vld [vmem:[%s18 + $0x38] sm:$0xff]
        %v2868 = vld [vmem:[%s19] sm:$0x1]
        %v2870 = vlaneseq
        %v2871 = vshrl.u32 %v2870, 7
        %v2872 = vsub.s32 0, %v2871
        %v2873 = vrot.slane %v2868, %v2872
        %vm2875 = vcmask 523264
        %v2877 = vsel %vm2875, %v2859, 0
        %2879 = vmatprep.subr.mxu0 0.0
        %2880 = vmatpush1.msra.mxu0 %v2860
        %2881 = vmatprep.subr.mxu0 0.0
        %2882 = vmatpush1.msra.mxu0 %v2861
        %2883 = vmatprep.subr.mxu0 0.0
        %2884 = vmatpush1.msra.mxu0 %v2862
        %2885 = vmatprep.subr.mxu0 0.0
        %2886 = vmatpush1.msra.mxu0 %v2863
        %2887 = vmatprep.subr.mxu0 0.0
        %2888 = vmatpush1.msra.mxu0 %v2864
        %2889 = vmatprep.subr.mxu0 0.0
        %2890 = vmatpush1.msra.mxu0 %v2865
        %2891 = vmatprep.subr.mxu0 0.0
        %2892 = vmatpush1.msra.mxu0 %v2866
        %2893 = vmatprep.subr.mxu0 0.0
        %2894 = vmatpush1.msra.mxu0 %v2867
        %2895 = vmatprep.subr.mxu0 0.0
        %2896 = vmatpush1.msra.mxu0 0.0
        %2897 = vmatprep.subr.mxu0 0.0
        %2898 = vmatpush1.msra.mxu0 0.0
        %2899 = vmatprep.subr.mxu0 0.0
        %2900 = vmatpush1.msra.mxu0 0.0
        %2901 = vmatprep.subr.mxu0 0.0
        %2902 = vmatpush1.msra.mxu0 0.0
        %2903 = vmatprep.subr.mxu0 0.0
        %2904 = vmatpush1.msra.mxu0 0.0
        %2905 = vmatprep.subr.mxu0 0.0
        %2906 = vmatpush1.msra.mxu0 0.0
        %2907 = vmatprep.subr.mxu0 0.0
        %2908 = vmatpush1.msra.mxu0 0.0
        %2909 = vmatprep.subr.mxu0 0.0
        %2910 = vmatpush1.msra.mxu0 0.0
        %2911 = vmatprep.subr.mxu0 0.0
        %2912 = vmatpush1.msra.mxu0 0.0
        %2913 = vmatprep.subr.mxu0 0.0
        %2914 = vmatpush1.msra.mxu0 0.0
        %2915 = vmatprep.subr.mxu0 0.0
        %2916 = vmatpush1.msra.mxu0 0.0
        %2917 = vmatprep.subr.mxu0 0.0
        %2918 = vmatpush1.msra.mxu0 0.0
        %2919 = vmatprep.subr.mxu0 0.0
        %2920 = vmatpush1.msra.mxu0 0.0
        %2921 = vmatprep.subr.mxu0 0.0
        %2922 = vmatpush1.msra.mxu0 0.0
        %2923 = vmatprep.subr.mxu0 0.0
        %2924 = vmatpush1.msra.mxu0 0.0
        %2925 = vmatprep.subr.mxu0 0.0
        %2926 = vmatpush1.msra.mxu0 0.0
        %2927 = vmatprep.subr.mxu0 0.0
        %2928 = vmatpush1.msra.mxu0 0.0
        %2929 = vmatprep.subr.mxu0 0.0
        %2930 = vmatpush1.msra.mxu0 0.0
        %2931 = vmatprep.subr.mxu0 0.0
        %2932 = vmatpush1.msra.mxu0 0.0
        %2933 = vmatprep.subr.mxu0 0.0
        %2934 = vmatpush1.msra.mxu0 0.0
        %2935 = vmatprep.subr.mxu0 0.0
        %2936 = vmatpush1.msra.mxu0 0.0
        %2937 = vmatprep.subr.mxu0 0.0
        %2938 = vmatpush1.msra.mxu0 0.0
        %2939 = vmatprep.subr.mxu0 0.0
        %2940 = vmatpush1.msra.mxu0 0.0
        %2941 = vmatprep.subr.mxu0 0.0
        %2942 = vmatpush1.msra.mxu0 0.0
        %2943 = vmatprep.mubr.f32.mxu0 0.0
        %2944 = vmatmul.mubr.f32.gmra.mrb[0].mxu0 %v2877
        %v2945 = vpop.f32.mrb[0].mxu0
        %v2946 = vadd.f32 %v2873, %v2945
        %v2947 = vpop.f32.mrb[0].mxu0
        %2948 = vdwg.mxu0
        %v2949 = vadd.f32 %v2774, %v2946
        %v2950 = vsel %vm835, %v2949, 0.0
        %2951 = vadd.xlane.f32.xlu0 %v2950
        %v2952 = vpop.xlane.xlu0 %2951
        %v2953 = vmul.f32 %v2952, %v1764
        %v2954 = vsub.f32 %v2949, %v2953
        %v2955 = vmul.f32 %v2954, %v2954
        %v2956 = vsel %vm835, %v2955, 0.0
        %2957 = vadd.xlane.f32.xlu0 %v2956
        %v2958 = vpop.xlane.xlu0 %2957
        %v2959 = vmul.f32 %v2958, %v1764
        %v2960 = vadd.f32 %v2959, 1e-05
        %v2961 = vrsqrt.pop %v2960
        %v2962 = vmul.f32 %v2954, %v2961
        %v2963 = vmul.f32 %v2962, %v1779
        %v2964 = vadd.f32 %v2963, %v1786
        %s2965 = scalar_lea.vmem %s4, 1
        %v2966 = vld [vmem:[%s2965] sm:$0x1]
        %s2967 = scalar_lea.vmem %s5, 1
        %v2968 = vld [vmem:[%s2967] sm:$0x1]
        %s2969 = scalar_lea.vmem %s6, 32
        %v2970 = vld [vmem:[%s2969] sm:$0xff]
        %v2971 = vld [vmem:[%s2969 + $0x8] sm:$0xff]
        %v2972 = vld [vmem:[%s2969 + $0x10] sm:$0xff]
        %v2973 = vld [vmem:[%s2969 + $0x18] sm:$0xff]
        %s2974 = scalar_lea.vmem %s7, 1
        %v2975 = vld [vmem:[%s2974] sm:$0x1]
        %v2977 = vlaneseq
        %v2978 = vshrl.u32 %v2977, 7
        %v2979 = vsub.s32 0, %v2978
        %v2980 = vrot.slane %v2975, %v2979
        %v2983 = vsel %vm835, %v2964, 0
        %2985 = vmatprep.subr.mxu0 0.0
        %2986 = vmatpush1.msra.mxu0 %v2970
        %2987 = vmatprep.subr.mxu0 0.0
        %2988 = vmatpush1.msra.mxu0 %v2971
        %2989 = vmatprep.subr.mxu0 0.0
        %2990 = vmatpush1.msra.mxu0 %v2972
        %2991 = vmatprep.subr.mxu0 0.0
        %2992 = vmatpush1.msra.mxu0 %v2973
        %2993 = vmatprep.subr.mxu0 0.0
        %2994 = vmatpush1.msra.mxu0 0.0
        %2995 = vmatprep.subr.mxu0 0.0
        %2996 = vmatpush1.msra.mxu0 0.0
        %2997 = vmatprep.subr.mxu0 0.0
        %2998 = vmatpush1.msra.mxu0 0.0
        %2999 = vmatprep.subr.mxu0 0.0
        %3000 = vmatpush1.msra.mxu0 0.0
        %3001 = vmatprep.subr.mxu0 0.0
        %3002 = vmatpush1.msra.mxu0 0.0
        %3003 = vmatprep.subr.mxu0 0.0
        %3004 = vmatpush1.msra.mxu0 0.0
        %3005 = vmatprep.subr.mxu0 0.0
        %3006 = vmatpush1.msra.mxu0 0.0
        %3007 = vmatprep.subr.mxu0 0.0
        %3008 = vmatpush1.msra.mxu0 0.0
        %3009 = vmatprep.subr.mxu0 0.0
        %3010 = vmatpush1.msra.mxu0 0.0
        %3011 = vmatprep.subr.mxu0 0.0
        %3012 = vmatpush1.msra.mxu0 0.0
        %3013 = vmatprep.subr.mxu0 0.0
        %3014 = vmatpush1.msra.mxu0 0.0
        %3015 = vmatprep.subr.mxu0 0.0
        %3016 = vmatpush1.msra.mxu0 0.0
        %3017 = vmatprep.subr.mxu0 0.0
        %3018 = vmatpush1.msra.mxu0 0.0
        %3019 = vmatprep.subr.mxu0 0.0
        %3020 = vmatpush1.msra.mxu0 0.0
        %3021 = vmatprep.subr.mxu0 0.0
        %3022 = vmatpush1.msra.mxu0 0.0
        %3023 = vmatprep.subr.mxu0 0.0
        %3024 = vmatpush1.msra.mxu0 0.0
        %3025 = vmatprep.subr.mxu0 0.0
        %3026 = vmatpush1.msra.mxu0 0.0
        %3027 = vmatprep.subr.mxu0 0.0
        %3028 = vmatpush1.msra.mxu0 0.0
        %3029 = vmatprep.subr.mxu0 0.0
        %3030 = vmatpush1.msra.mxu0 0.0
        %3031 = vmatprep.subr.mxu0 0.0
        %3032 = vmatpush1.msra.mxu0 0.0
        %3033 = vmatprep.subr.mxu0 0.0
        %3034 = vmatpush1.msra.mxu0 0.0
        %3035 = vmatprep.subr.mxu0 0.0
        %3036 = vmatpush1.msra.mxu0 0.0
        %3037 = vmatprep.subr.mxu0 0.0
        %3038 = vmatpush1.msra.mxu0 0.0
        %3039 = vmatprep.subr.mxu0 0.0
        %3040 = vmatpush1.msra.mxu0 0.0
        %3041 = vmatprep.subr.mxu0 0.0
        %3042 = vmatpush1.msra.mxu0 0.0
        %3043 = vmatprep.subr.mxu0 0.0
        %3044 = vmatpush1.msra.mxu0 0.0
        %3045 = vmatprep.subr.mxu0 0.0
        %3046 = vmatpush1.msra.mxu0 0.0
        %3047 = vmatprep.subr.mxu0 0.0
        %3048 = vmatpush1.msra.mxu0 0.0
        %3049 = vmatprep.mubr.f32.mxu0 0.0
        %3050 = vmatmul.mubr.f32.gmra.mrb[0].mxu0 %v2983
        %v3051 = vpop.f32.mrb[0].mxu0
        %v3052 = vadd.f32 %v2980, %v3051
        %v3053 = vpop.f32.mrb[0].mxu0
        %3054 = vdwg.mxu0
        %3056 = vrot.lane.b32.xlu0 %v3052, 120
        %v3057 = vpop.permute.xlu0 %3056
        %3058 = vrot.lane.b32.xlu0 %v3052, 112
        %v3059 = vpop.permute.xlu0 %3058
        %3060 = vrot.lane.b32.xlu0 %v3052, 104
        %v3061 = vpop.permute.xlu0 %3060
        %3062 = vrot.lane.b32.xlu0 %v3052, 96
        %v3063 = vpop.permute.xlu0 %3062
        %v3064 = vsel %vm1004, %v3052, 0
        %v3066 = vsel %vm1004, %v3063, 0
        %3068 = vmatprep.subr.mxu0 0.0
        %3069 = vmatpush1.xpose.msra.mxu0 %v3066
        %3070 = vmatprep.subr.mxu0 0.0
        %3071 = vmatpush1.xpose.msra.mxu0 0.0
        %3072 = vmatprep.subr.mxu0 0.0
        %3073 = vmatpush1.xpose.msra.mxu0 0.0
        %3074 = vmatprep.subr.mxu0 0.0
        %3075 = vmatpush1.xpose.msra.mxu0 0.0
        %3076 = vmatprep.subr.mxu0 0.0
        %3077 = vmatpush1.xpose.msra.mxu0 0.0
        %3078 = vmatprep.subr.mxu0 0.0
        %3079 = vmatpush1.xpose.msra.mxu0 0.0
        %3080 = vmatprep.subr.mxu0 0.0
        %3081 = vmatpush1.xpose.msra.mxu0 0.0
        %3082 = vmatprep.subr.mxu0 0.0
        %3083 = vmatpush1.xpose.msra.mxu0 0.0
        %3084 = vmatprep.subr.mxu0 0.0
        %3085 = vmatpush1.xpose.msra.mxu0 0.0
        %3086 = vmatprep.subr.mxu0 0.0
        %3087 = vmatpush1.xpose.msra.mxu0 0.0
        %3088 = vmatprep.subr.mxu0 0.0
        %3089 = vmatpush1.xpose.msra.mxu0 0.0
        %3090 = vmatprep.subr.mxu0 0.0
        %3091 = vmatpush1.xpose.msra.mxu0 0.0
        %3092 = vmatprep.subr.mxu0 0.0
        %3093 = vmatpush1.xpose.msra.mxu0 0.0
        %3094 = vmatprep.subr.mxu0 0.0
        %3095 = vmatpush1.xpose.msra.mxu0 0.0
        %3096 = vmatprep.subr.mxu0 0.0
        %3097 = vmatpush1.xpose.msra.mxu0 0.0
        %3098 = vmatprep.subr.mxu0 0.0
        %3099 = vmatpush1.xpose.msra.mxu0 0.0
        %3100 = vmatprep.subr.mxu0 0.0
        %3101 = vmatpush1.xpose.msra.mxu0 0.0
        %3102 = vmatprep.subr.mxu0 0.0
        %3103 = vmatpush1.xpose.msra.mxu0 0.0
        %3104 = vmatprep.subr.mxu0 0.0
        %3105 = vmatpush1.xpose.msra.mxu0 0.0
        %3106 = vmatprep.subr.mxu0 0.0
        %3107 = vmatpush1.xpose.msra.mxu0 0.0
        %3108 = vmatprep.subr.mxu0 0.0
        %3109 = vmatpush1.xpose.msra.mxu0 0.0
        %3110 = vmatprep.subr.mxu0 0.0
        %3111 = vmatpush1.xpose.msra.mxu0 0.0
        %3112 = vmatprep.subr.mxu0 0.0
        %3113 = vmatpush1.xpose.msra.mxu0 0.0
        %3114 = vmatprep.subr.mxu0 0.0
        %3115 = vmatpush1.xpose.msra.mxu0 0.0
        %3116 = vmatprep.subr.mxu0 0.0
        %3117 = vmatpush1.xpose.msra.mxu0 0.0
        %3118 = vmatprep.subr.mxu0 0.0
        %3119 = vmatpush1.xpose.msra.mxu0 0.0
        %3120 = vmatprep.subr.mxu0 0.0
        %3121 = vmatpush1.xpose.msra.mxu0 0.0
        %3122 = vmatprep.subr.mxu0 0.0
        %3123 = vmatpush1.xpose.msra.mxu0 0.0
        %3124 = vmatprep.subr.mxu0 0.0
        %3125 = vmatpush1.xpose.msra.mxu0 0.0
        %3126 = vmatprep.subr.mxu0 0.0
        %3127 = vmatpush1.xpose.msra.mxu0 0.0
        %3128 = vmatprep.subr.mxu0 0.0
        %3129 = vmatpush1.xpose.msra.mxu0 0.0
        %3130 = vmatprep.subr.mxu0 0.0
        %3131 = vmatpush1.xpose.msra.mxu0 0.0
        %3132 = vmatprep.mubr.f32.mxu0 0.0
        %3133 = vmatmul.mubr.f32.gmra.mrb[0].mxu0 %v3064
        %v3134 = vpop.f32.mrb[0].mxu0
        %v3135 = vadd.f32 0.0, %v3134
        %v3136 = vpop.f32.mrb[0].mxu0
        %3137 = vdwg.mxu0
        %3138 = vrot.lane.b32.xlu0 %v3057, 96
        %v3139 = vpop.permute.xlu0 %3138
        %v3140 = vsel %vm1004, %v3057, 0
        %v3142 = vsel %vm1004, %v3139, 0
        %3144 = vmatprep.subr.mxu0 0.0
        %3145 = vmatpush1.xpose.msra.mxu0 %v3142
        %3146 = vmatprep.subr.mxu0 0.0
        %3147 = vmatpush1.xpose.msra.mxu0 0.0
        %3148 = vmatprep.subr.mxu0 0.0
        %3149 = vmatpush1.xpose.msra.mxu0 0.0
        %3150 = vmatprep.subr.mxu0 0.0
        %3151 = vmatpush1.xpose.msra.mxu0 0.0
        %3152 = vmatprep.subr.mxu0 0.0
        %3153 = vmatpush1.xpose.msra.mxu0 0.0
        %3154 = vmatprep.subr.mxu0 0.0
        %3155 = vmatpush1.xpose.msra.mxu0 0.0
        %3156 = vmatprep.subr.mxu0 0.0
        %3157 = vmatpush1.xpose.msra.mxu0 0.0
        %3158 = vmatprep.subr.mxu0 0.0
        %3159 = vmatpush1.xpose.msra.mxu0 0.0
        %3160 = vmatprep.subr.mxu0 0.0
        %3161 = vmatpush1.xpose.msra.mxu0 0.0
        %3162 = vmatprep.subr.mxu0 0.0
        %3163 = vmatpush1.xpose.msra.mxu0 0.0
        %3164 = vmatprep.subr.mxu0 0.0
        %3165 = vmatpush1.xpose.msra.mxu0 0.0
        %3166 = vmatprep.subr.mxu0 0.0
        %3167 = vmatpush1.xpose.msra.mxu0 0.0
        %3168 = vmatprep.subr.mxu0 0.0
        %3169 = vmatpush1.xpose.msra.mxu0 0.0
        %3170 = vmatprep.subr.mxu0 0.0
        %3171 = vmatpush1.xpose.msra.mxu0 0.0
        %3172 = vmatprep.subr.mxu0 0.0
        %3173 = vmatpush1.xpose.msra.mxu0 0.0
        %3174 = vmatprep.subr.mxu0 0.0
        %3175 = vmatpush1.xpose.msra.mxu0 0.0
        %3176 = vmatprep.subr.mxu0 0.0
        %3177 = vmatpush1.xpose.msra.mxu0 0.0
        %3178 = vmatprep.subr.mxu0 0.0
        %3179 = vmatpush1.xpose.msra.mxu0 0.0
        %3180 = vmatprep.subr.mxu0 0.0
        %3181 = vmatpush1.xpose.msra.mxu0 0.0
        %3182 = vmatprep.subr.mxu0 0.0
        %3183 = vmatpush1.xpose.msra.mxu0 0.0
        %3184 = vmatprep.subr.mxu0 0.0
        %3185 = vmatpush1.xpose.msra.mxu0 0.0
        %3186 = vmatprep.subr.mxu0 0.0
        %3187 = vmatpush1.xpose.msra.mxu0 0.0
        %3188 = vmatprep.subr.mxu0 0.0
        %3189 = vmatpush1.xpose.msra.mxu0 0.0
        %3190 = vmatprep.subr.mxu0 0.0
        %3191 = vmatpush1.xpose.msra.mxu0 0.0
        %3192 = vmatprep.subr.mxu0 0.0
        %3193 = vmatpush1.xpose.msra.mxu0 0.0
        %3194 = vmatprep.subr.mxu0 0.0
        %3195 = vmatpush1.xpose.msra.mxu0 0.0
        %3196 = vmatprep.subr.mxu0 0.0
        %3197 = vmatpush1.xpose.msra.mxu0 0.0
        %3198 = vmatprep.subr.mxu0 0.0
        %3199 = vmatpush1.xpose.msra.mxu0 0.0
        %3200 = vmatprep.subr.mxu0 0.0
        %3201 = vmatpush1.xpose.msra.mxu0 0.0
        %3202 = vmatprep.subr.mxu0 0.0
        %3203 = vmatpush1.xpose.msra.mxu0 0.0
        %3204 = vmatprep.subr.mxu0 0.0
        %3205 = vmatpush1.xpose.msra.mxu0 0.0
        %3206 = vmatprep.subr.mxu0 0.0
        %3207 = vmatpush1.xpose.msra.mxu0 0.0
        %3208 = vmatprep.mubr.f32.mxu0 0.0
        %3209 = vmatmul.mubr.f32.gmra.mrb[0].mxu0 %v3140
        %v3210 = vpop.f32.mrb[0].mxu0
        %v3211 = vadd.f32 0.0, %v3210
        %v3212 = vpop.f32.mrb[0].mxu0
        %3213 = vdwg.mxu0
        %3214 = vrot.lane.b32.xlu0 %v3059, 96
        %v3215 = vpop.permute.xlu0 %3214
        %v3216 = vsel %vm1004, %v3059, 0
        %v3218 = vsel %vm1004, %v3215, 0
        %3220 = vmatprep.subr.mxu0 0.0
        %3221 = vmatpush1.xpose.msra.mxu0 %v3218
        %3222 = vmatprep.subr.mxu0 0.0
        %3223 = vmatpush1.xpose.msra.mxu0 0.0
        %3224 = vmatprep.subr.mxu0 0.0
        %3225 = vmatpush1.xpose.msra.mxu0 0.0
        %3226 = vmatprep.subr.mxu0 0.0
        %3227 = vmatpush1.xpose.msra.mxu0 0.0
        %3228 = vmatprep.subr.mxu0 0.0
        %3229 = vmatpush1.xpose.msra.mxu0 0.0
        %3230 = vmatprep.subr.mxu0 0.0
        %3231 = vmatpush1.xpose.msra.mxu0 0.0
        %3232 = vmatprep.subr.mxu0 0.0
        %3233 = vmatpush1.xpose.msra.mxu0 0.0
        %3234 = vmatprep.subr.mxu0 0.0
        %3235 = vmatpush1.xpose.msra.mxu0 0.0
        %3236 = vmatprep.subr.mxu0 0.0
        %3237 = vmatpush1.xpose.msra.mxu0 0.0
        %3238 = vmatprep.subr.mxu0 0.0
        %3239 = vmatpush1.xpose.msra.mxu0 0.0
        %3240 = vmatprep.subr.mxu0 0.0
        %3241 = vmatpush1.xpose.msra.mxu0 0.0
        %3242 = vmatprep.subr.mxu0 0.0
        %3243 = vmatpush1.xpose.msra.mxu0 0.0
        %3244 = vmatprep.subr.mxu0 0.0
        %3245 = vmatpush1.xpose.msra.mxu0 0.0
        %3246 = vmatprep.subr.mxu0 0.0
        %3247 = vmatpush1.xpose.msra.mxu0 0.0
        %3248 = vmatprep.subr.mxu0 0.0
        %3249 = vmatpush1.xpose.msra.mxu0 0.0
        %3250 = vmatprep.subr.mxu0 0.0
        %3251 = vmatpush1.xpose.msra.mxu0 0.0
        %3252 = vmatprep.subr.mxu0 0.0
        %3253 = vmatpush1.xpose.msra.mxu0 0.0
        %3254 = vmatprep.subr.mxu0 0.0
        %3255 = vmatpush1.xpose.msra.mxu0 0.0
        %3256 = vmatprep.subr.mxu0 0.0
        %3257 = vmatpush1.xpose.msra.mxu0 0.0
        %3258 = vmatprep.subr.mxu0 0.0
        %3259 = vmatpush1.xpose.msra.mxu0 0.0
        %3260 = vmatprep.subr.mxu0 0.0
        %3261 = vmatpush1.xpose.msra.mxu0 0.0
        %3262 = vmatprep.subr.mxu0 0.0
        %3263 = vmatpush1.xpose.msra.mxu0 0.0
        %3264 = vmatprep.subr.mxu0 0.0
        %3265 = vmatpush1.xpose.msra.mxu0 0.0
        %3266 = vmatprep.subr.mxu0 0.0
        %3267 = vmatpush1.xpose.msra.mxu0 0.0
        %3268 = vmatprep.subr.mxu0 0.0
        %3269 = vmatpush1.xpose.msra.mxu0 0.0
        %3270 = vmatprep.subr.mxu0 0.0
        %3271 = vmatpush1.xpose.msra.mxu0 0.0
        %3272 = vmatprep.subr.mxu0 0.0
        %3273 = vmatpush1.xpose.msra.mxu0 0.0
        %3274 = vmatprep.subr.mxu0 0.0
        %3275 = vmatpush1.xpose.msra.mxu0 0.0
        %3276 = vmatprep.subr.mxu0 0.0
        %3277 = vmatpush1.xpose.msra.mxu0 0.0
        %3278 = vmatprep.subr.mxu0 0.0
        %3279 = vmatpush1.xpose.msra.mxu0 0.0
        %3280 = vmatprep.subr.mxu0 0.0
        %3281 = vmatpush1.xpose.msra.mxu0 0.0
        %3282 = vmatprep.subr.mxu0 0.0
        %3283 = vmatpush1.xpose.msra.mxu0 0.0
        %3284 = vmatprep.mubr.f32.mxu0 0.0
        %3285 = vmatmul.mubr.f32.gmra.mrb[0].mxu0 %v3216
        %v3286 = vpop.f32.mrb[0].mxu0
        %v3287 = vadd.f32 0.0, %v3286
        %v3288 = vpop.f32.mrb[0].mxu0
        %3289 = vdwg.mxu0
        %3290 = vrot.lane.b32.xlu0 %v3061, 96
        %v3291 = vpop.permute.xlu0 %3290
        %v3292 = vsel %vm1004, %v3061, 0
        %v3294 = vsel %vm1004, %v3291, 0
        %3296 = vmatprep.subr.mxu0 0.0
        %3297 = vmatpush1.xpose.msra.mxu0 %v3294
        %3298 = vmatprep.subr.mxu0 0.0
        %3299 = vmatpush1.xpose.msra.mxu0 0.0
        %3300 = vmatprep.subr.mxu0 0.0
        %3301 = vmatpush1.xpose.msra.mxu0 0.0
        %3302 = vmatprep.subr.mxu0 0.0
        %3303 = vmatpush1.xpose.msra.mxu0 0.0
        %3304 = vmatprep.subr.mxu0 0.0
        %3305 = vmatpush1.xpose.msra.mxu0 0.0
        %3306 = vmatprep.subr.mxu0 0.0
        %3307 = vmatpush1.xpose.msra.mxu0 0.0
        %3308 = vmatprep.subr.mxu0 0.0
        %3309 = vmatpush1.xpose.msra.mxu0 0.0
        %3310 = vmatprep.subr.mxu0 0.0
        %3311 = vmatpush1.xpose.msra.mxu0 0.0
        %3312 = vmatprep.subr.mxu0 0.0
        %3313 = vmatpush1.xpose.msra.mxu0 0.0
        %3314 = vmatprep.subr.mxu0 0.0
        %3315 = vmatpush1.xpose.msra.mxu0 0.0
        %3316 = vmatprep.subr.mxu0 0.0
        %3317 = vmatpush1.xpose.msra.mxu0 0.0
        %3318 = vmatprep.subr.mxu0 0.0
        %3319 = vmatpush1.xpose.msra.mxu0 0.0
        %3320 = vmatprep.subr.mxu0 0.0
        %3321 = vmatpush1.xpose.msra.mxu0 0.0
        %3322 = vmatprep.subr.mxu0 0.0
        %3323 = vmatpush1.xpose.msra.mxu0 0.0
        %3324 = vmatprep.subr.mxu0 0.0
        %3325 = vmatpush1.xpose.msra.mxu0 0.0
        %3326 = vmatprep.subr.mxu0 0.0
        %3327 = vmatpush1.xpose.msra.mxu0 0.0
        %3328 = vmatprep.subr.mxu0 0.0
        %3329 = vmatpush1.xpose.msra.mxu0 0.0
        %3330 = vmatprep.subr.mxu0 0.0
        %3331 = vmatpush1.xpose.msra.mxu0 0.0
        %3332 = vmatprep.subr.mxu0 0.0
        %3333 = vmatpush1.xpose.msra.mxu0 0.0
        %3334 = vmatprep.subr.mxu0 0.0
        %3335 = vmatpush1.xpose.msra.mxu0 0.0
        %3336 = vmatprep.subr.mxu0 0.0
        %3337 = vmatpush1.xpose.msra.mxu0 0.0
        %3338 = vmatprep.subr.mxu0 0.0
        %3339 = vmatpush1.xpose.msra.mxu0 0.0
        %3340 = vmatprep.subr.mxu0 0.0
        %3341 = vmatpush1.xpose.msra.mxu0 0.0
        %3342 = vmatprep.subr.mxu0 0.0
        %3343 = vmatpush1.xpose.msra.mxu0 0.0
        %3344 = vmatprep.subr.mxu0 0.0
        %3345 = vmatpush1.xpose.msra.mxu0 0.0
        %3346 = vmatprep.subr.mxu0 0.0
        %3347 = vmatpush1.xpose.msra.mxu0 0.0
        %3348 = vmatprep.subr.mxu0 0.0
        %3349 = vmatpush1.xpose.msra.mxu0 0.0
        %3350 = vmatprep.subr.mxu0 0.0
        %3351 = vmatpush1.xpose.msra.mxu0 0.0
        %3352 = vmatprep.subr.mxu0 0.0
        %3353 = vmatpush1.xpose.msra.mxu0 0.0
        %3354 = vmatprep.subr.mxu0 0.0
        %3355 = vmatpush1.xpose.msra.mxu0 0.0
        %3356 = vmatprep.subr.mxu0 0.0
        %3357 = vmatpush1.xpose.msra.mxu0 0.0
        %3358 = vmatprep.subr.mxu0 0.0
        %3359 = vmatpush1.xpose.msra.mxu0 0.0
        %3360 = vmatprep.mubr.f32.mxu0 0.0
        %3361 = vmatmul.mubr.f32.gmra.mrb[0].mxu0 %v3292
        %v3362 = vpop.f32.mrb[0].mxu0
        %v3363 = vadd.f32 0.0, %v3362
        %v3364 = vpop.f32.mrb[0].mxu0
        %3365 = vdwg.mxu0
        %v3366 = vmul.f32 %v3135, 0.35355338
        %v3367 = vmul.f32 %v3211, 0.35355338
        %v3368 = vmul.f32 %v3287, 0.35355338
        %v3369 = vmul.f32 %v3363, 0.35355338
        %v3370 = vsel %vm1004, %v3366, -inf
        %3371 = vmax.xlane.f32.xlu0 %v3370
        %v3372 = vpop.xlane.xlu0 %3371
        %v3373 = vsel %vm1004, %v3367, -inf
        %3374 = vmax.xlane.f32.xlu0 %v3373
        %v3375 = vpop.xlane.xlu0 %3374
        %v3376 = vsel %vm1004, %v3368, -inf
        %3377 = vmax.xlane.f32.xlu0 %v3376
        %v3378 = vpop.xlane.xlu0 %3377
        %v3379 = vsel %vm1004, %v3369, -inf
        %3380 = vmax.xlane.f32.xlu0 %v3379
        %v3381 = vpop.xlane.xlu0 %3380
        %v3382 = vsub.f32 %v3366, %v3372
        %v3383 = vsub.f32 %v3367, %v3375
        %v3384 = vsub.f32 %v3368, %v3378
        %v3385 = vsub.f32 %v3369, %v3381
        %v3386 = vmul.f32 %v3382, 1.442695
        %v3387 = vpow.pop %v3386
        %v3388 = vmul.f32 %v3383, 1.442695
        %v3389 = vpow.pop %v3388
        %v3390 = vmul.f32 %v3384, 1.442695
        %v3391 = vpow.pop %v3390
        %v3392 = vmul.f32 %v3385, 1.442695
        %v3393 = vpow.pop %v3392
        %v3394 = vsel %vm1004, %v3387, 0.0
        %3395 = vadd.xlane.f32.xlu0 %v3394
        %v3396 = vpop.xlane.xlu0 %3395
        %v3397 = vsel %vm1004, %v3389, 0.0
        %3398 = vadd.xlane.f32.xlu0 %v3397
        %v3399 = vpop.xlane.xlu0 %3398
        %v3400 = vsel %vm1004, %v3391, 0.0
        %3401 = vadd.xlane.f32.xlu0 %v3400
        %v3402 = vpop.xlane.xlu0 %3401
        %v3403 = vsel %vm1004, %v3393, 0.0
        %3404 = vadd.xlane.f32.xlu0 %v3403
        %v3405 = vpop.xlane.xlu0 %3404
        %v3406 = vrcp.pop %v3396
        %v3407 = vrcp.pop %v3399
        %v3408 = vrcp.pop %v3402
        %v3409 = vrcp.pop %v3405
        %v3410 = vmul.f32 %v3387, %v3406
        %v3411 = vmul.f32 %v3389, %v3407
        %v3412 = vmul.f32 %v3391, %v3408
        %v3413 = vmul.f32 %v3393, %v3409
        %3414 = vrot.lane.b32.xlu0 %v3052, 64
        %v3415 = vpop.permute.xlu0 %3414
        %v3418 = vsel %vm1004, %v3410, 0
        %3420 = vmatprep.subr.mxu0 0.0
        %3421 = vmatpush1.msra.mxu0 %v3415
        %3422 = vmatprep.subr.mxu0 0.0
        %3423 = vmatpush1.msra.mxu0 0.0
        %3424 = vmatprep.subr.mxu0 0.0
        %3425 = vmatpush1.msra.mxu0 0.0
        %3426 = vmatprep.subr.mxu0 0.0
        %3427 = vmatpush1.msra.mxu0 0.0
        %3428 = vmatprep.subr.mxu0 0.0
        %3429 = vmatpush1.msra.mxu0 0.0
        %3430 = vmatprep.subr.mxu0 0.0
        %3431 = vmatpush1.msra.mxu0 0.0
        %3432 = vmatprep.subr.mxu0 0.0
        %3433 = vmatpush1.msra.mxu0 0.0
        %3434 = vmatprep.subr.mxu0 0.0
        %3435 = vmatpush1.msra.mxu0 0.0
        %3436 = vmatprep.subr.mxu0 0.0
        %3437 = vmatpush1.msra.mxu0 0.0
        %3438 = vmatprep.subr.mxu0 0.0
        %3439 = vmatpush1.msra.mxu0 0.0
        %3440 = vmatprep.subr.mxu0 0.0
        %3441 = vmatpush1.msra.mxu0 0.0
        %3442 = vmatprep.subr.mxu0 0.0
        %3443 = vmatpush1.msra.mxu0 0.0
        %3444 = vmatprep.subr.mxu0 0.0
        %3445 = vmatpush1.msra.mxu0 0.0
        %3446 = vmatprep.subr.mxu0 0.0
        %3447 = vmatpush1.msra.mxu0 0.0
        %3448 = vmatprep.subr.mxu0 0.0
        %3449 = vmatpush1.msra.mxu0 0.0
        %3450 = vmatprep.subr.mxu0 0.0
        %3451 = vmatpush1.msra.mxu0 0.0
        %3452 = vmatprep.subr.mxu0 0.0
        %3453 = vmatpush1.msra.mxu0 0.0
        %3454 = vmatprep.subr.mxu0 0.0
        %3455 = vmatpush1.msra.mxu0 0.0
        %3456 = vmatprep.subr.mxu0 0.0
        %3457 = vmatpush1.msra.mxu0 0.0
        %3458 = vmatprep.subr.mxu0 0.0
        %3459 = vmatpush1.msra.mxu0 0.0
        %3460 = vmatprep.subr.mxu0 0.0
        %3461 = vmatpush1.msra.mxu0 0.0
        %3462 = vmatprep.subr.mxu0 0.0
        %3463 = vmatpush1.msra.mxu0 0.0
        %3464 = vmatprep.subr.mxu0 0.0
        %3465 = vmatpush1.msra.mxu0 0.0
        %3466 = vmatprep.subr.mxu0 0.0
        %3467 = vmatpush1.msra.mxu0 0.0
        %3468 = vmatprep.subr.mxu0 0.0
        %3469 = vmatpush1.msra.mxu0 0.0
        %3470 = vmatprep.subr.mxu0 0.0
        %3471 = vmatpush1.msra.mxu0 0.0
        %3472 = vmatprep.subr.mxu0 0.0
        %3473 = vmatpush1.msra.mxu0 0.0
        %3474 = vmatprep.subr.mxu0 0.0
        %3475 = vmatpush1.msra.mxu0 0.0
        %3476 = vmatprep.subr.mxu0 0.0
        %3477 = vmatpush1.msra.mxu0 0.0
        %3478 = vmatprep.subr.mxu0 0.0
        %3479 = vmatpush1.msra.mxu0 0.0
        %3480 = vmatprep.subr.mxu0 0.0
        %3481 = vmatpush1.msra.mxu0 0.0
        %3482 = vmatprep.subr.mxu0 0.0
        %3483 = vmatpush1.msra.mxu0 0.0
        %3484 = vmatprep.mubr.f32.mxu0 0.0
        %3485 = vmatmul.mubr.f32.gmra.mrb[0].mxu0 %v3418
        %v3486 = vpop.f32.mrb[0].mxu0
        %v3487 = vadd.f32 0.0, %v3486
        %v3488 = vpop.f32.mrb[0].mxu0
        %3489 = vdwg.mxu0
        %3490 = vrot.lane.b32.xlu0 %v3057, 64
        %v3491 = vpop.permute.xlu0 %3490
        %v3494 = vsel %vm1004, %v3411, 0
        %3496 = vmatprep.subr.mxu0 0.0
        %3497 = vmatpush1.msra.mxu0 %v3491
        %3498 = vmatprep.subr.mxu0 0.0
        %3499 = vmatpush1.msra.mxu0 0.0
        %3500 = vmatprep.subr.mxu0 0.0
        %3501 = vmatpush1.msra.mxu0 0.0
        %3502 = vmatprep.subr.mxu0 0.0
        %3503 = vmatpush1.msra.mxu0 0.0
        %3504 = vmatprep.subr.mxu0 0.0
        %3505 = vmatpush1.msra.mxu0 0.0
        %3506 = vmatprep.subr.mxu0 0.0
        %3507 = vmatpush1.msra.mxu0 0.0
        %3508 = vmatprep.subr.mxu0 0.0
        %3509 = vmatpush1.msra.mxu0 0.0
        %3510 = vmatprep.subr.mxu0 0.0
        %3511 = vmatpush1.msra.mxu0 0.0
        %3512 = vmatprep.subr.mxu0 0.0
        %3513 = vmatpush1.msra.mxu0 0.0
        %3514 = vmatprep.subr.mxu0 0.0
        %3515 = vmatpush1.msra.mxu0 0.0
        %3516 = vmatprep.subr.mxu0 0.0
        %3517 = vmatpush1.msra.mxu0 0.0
        %3518 = vmatprep.subr.mxu0 0.0
        %3519 = vmatpush1.msra.mxu0 0.0
        %3520 = vmatprep.subr.mxu0 0.0
        %3521 = vmatpush1.msra.mxu0 0.0
        %3522 = vmatprep.subr.mxu0 0.0
        %3523 = vmatpush1.msra.mxu0 0.0
        %3524 = vmatprep.subr.mxu0 0.0
        %3525 = vmatpush1.msra.mxu0 0.0
        %3526 = vmatprep.subr.mxu0 0.0
        %3527 = vmatpush1.msra.mxu0 0.0
        %3528 = vmatprep.subr.mxu0 0.0
        %3529 = vmatpush1.msra.mxu0 0.0
        %3530 = vmatprep.subr.mxu0 0.0
        %3531 = vmatpush1.msra.mxu0 0.0
        %3532 = vmatprep.subr.mxu0 0.0
        %3533 = vmatpush1.msra.mxu0 0.0
        %3534 = vmatprep.subr.mxu0 0.0
        %3535 = vmatpush1.msra.mxu0 0.0
        %3536 = vmatprep.subr.mxu0 0.0
        %3537 = vmatpush1.msra.mxu0 0.0
        %3538 = vmatprep.subr.mxu0 0.0
        %3539 = vmatpush1.msra.mxu0 0.0
        %3540 = vmatprep.subr.mxu0 0.0
        %3541 = vmatpush1.msra.mxu0 0.0
        %3542 = vmatprep.subr.mxu0 0.0
        %3543 = vmatpush1.msra.mxu0 0.0
        %3544 = vmatprep.subr.mxu0 0.0
        %3545 = vmatpush1.msra.mxu0 0.0
        %3546 = vmatprep.subr.mxu0 0.0
        %3547 = vmatpush1.msra.mxu0 0.0
        %3548 = vmatprep.subr.mxu0 0.0
        %3549 = vmatpush1.msra.mxu0 0.0
        %3550 = vmatprep.subr.mxu0 0.0
        %3551 = vmatpush1.msra.mxu0 0.0
        %3552 = vmatprep.subr.mxu0 0.0
        %3553 = vmatpush1.msra.mxu0 0.0
        %3554 = vmatprep.subr.mxu0 0.0
        %3555 = vmatpush1.msra.mxu0 0.0
        %3556 = vmatprep.subr.mxu0 0.0
        %3557 = vmatpush1.msra.mxu0 0.0
        %3558 = vmatprep.subr.mxu0 0.0
        %3559 = vmatpush1.msra.mxu0 0.0
        %3560 = vmatprep.mubr.f32.mxu0 0.0
        %3561 = vmatmul.mubr.f32.gmra.mrb[0].mxu0 %v3494
        %v3562 = vpop.f32.mrb[0].mxu0
        %v3563 = vadd.f32 0.0, %v3562
        %v3564 = vpop.f32.mrb[0].mxu0
        %3565 = vdwg.mxu0
        %3566 = vrot.lane.b32.xlu0 %v3059, 64
        %v3567 = vpop.permute.xlu0 %3566
        %v3570 = vsel %vm1004, %v3412, 0
        %3572 = vmatprep.subr.mxu0 0.0
        %3573 = vmatpush1.msra.mxu0 %v3567
        %3574 = vmatprep.subr.mxu0 0.0
        %3575 = vmatpush1.msra.mxu0 0.0
        %3576 = vmatprep.subr.mxu0 0.0
        %3577 = vmatpush1.msra.mxu0 0.0
        %3578 = vmatprep.subr.mxu0 0.0
        %3579 = vmatpush1.msra.mxu0 0.0
        %3580 = vmatprep.subr.mxu0 0.0
        %3581 = vmatpush1.msra.mxu0 0.0
        %3582 = vmatprep.subr.mxu0 0.0
        %3583 = vmatpush1.msra.mxu0 0.0
        %3584 = vmatprep.subr.mxu0 0.0
        %3585 = vmatpush1.msra.mxu0 0.0
        %3586 = vmatprep.subr.mxu0 0.0
        %3587 = vmatpush1.msra.mxu0 0.0
        %3588 = vmatprep.subr.mxu0 0.0
        %3589 = vmatpush1.msra.mxu0 0.0
        %3590 = vmatprep.subr.mxu0 0.0
        %3591 = vmatpush1.msra.mxu0 0.0
        %3592 = vmatprep.subr.mxu0 0.0
        %3593 = vmatpush1.msra.mxu0 0.0
        %3594 = vmatprep.subr.mxu0 0.0
        %3595 = vmatpush1.msra.mxu0 0.0
        %3596 = vmatprep.subr.mxu0 0.0
        %3597 = vmatpush1.msra.mxu0 0.0
        %3598 = vmatprep.subr.mxu0 0.0
        %3599 = vmatpush1.msra.mxu0 0.0
        %3600 = vmatprep.subr.mxu0 0.0
        %3601 = vmatpush1.msra.mxu0 0.0
        %3602 = vmatprep.subr.mxu0 0.0
        %3603 = vmatpush1.msra.mxu0 0.0
        %3604 = vmatprep.subr.mxu0 0.0
        %3605 = vmatpush1.msra.mxu0 0.0
        %3606 = vmatprep.subr.mxu0 0.0
        %3607 = vmatpush1.msra.mxu0 0.0
        %3608 = vmatprep.subr.mxu0 0.0
        %3609 = vmatpush1.msra.mxu0 0.0
        %3610 = vmatprep.subr.mxu0 0.0
        %3611 = vmatpush1.msra.mxu0 0.0
        %3612 = vmatprep.subr.mxu0 0.0
        %3613 = vmatpush1.msra.mxu0 0.0
        %3614 = vmatprep.subr.mxu0 0.0
        %3615 = vmatpush1.msra.mxu0 0.0
        %3616 = vmatprep.subr.mxu0 0.0
        %3617 = vmatpush1.msra.mxu0 0.0
        %3618 = vmatprep.subr.mxu0 0.0
        %3619 = vmatpush1.msra.mxu0 0.0
        %3620 = vmatprep.subr.mxu0 0.0
        %3621 = vmatpush1.msra.mxu0 0.0
        %3622 = vmatprep.subr.mxu0 0.0
        %3623 = vmatpush1.msra.mxu0 0.0
        %3624 = vmatprep.subr.mxu0 0.0
        %3625 = vmatpush1.msra.mxu0 0.0
        %3626 = vmatprep.subr.mxu0 0.0
        %3627 = vmatpush1.msra.mxu0 0.0
        %3628 = vmatprep.subr.mxu0 0.0
        %3629 = vmatpush1.msra.mxu0 0.0
        %3630 = vmatprep.subr.mxu0 0.0
        %3631 = vmatpush1.msra.mxu0 0.0
        %3632 = vmatprep.subr.mxu0 0.0
        %3633 = vmatpush1.msra.mxu0 0.0
        %3634 = vmatprep.subr.mxu0 0.0
        %3635 = vmatpush1.msra.mxu0 0.0
        %3636 = vmatprep.mubr.f32.mxu0 0.0
        %3637 = vmatmul.mubr.f32.gmra.mrb[0].mxu0 %v3570
        %v3638 = vpop.f32.mrb[0].mxu0
        %v3639 = vadd.f32 0.0, %v3638
        %v3640 = vpop.f32.mrb[0].mxu0
        %3641 = vdwg.mxu0
        %3642 = vrot.lane.b32.xlu0 %v3061, 64
        %v3643 = vpop.permute.xlu0 %3642
        %v3646 = vsel %vm1004, %v3413, 0
        %3648 = vmatprep.subr.mxu0 0.0
        %3649 = vmatpush1.msra.mxu0 %v3643
        %3650 = vmatprep.subr.mxu0 0.0
        %3651 = vmatpush1.msra.mxu0 0.0
        %3652 = vmatprep.subr.mxu0 0.0
        %3653 = vmatpush1.msra.mxu0 0.0
        %3654 = vmatprep.subr.mxu0 0.0
        %3655 = vmatpush1.msra.mxu0 0.0
        %3656 = vmatprep.subr.mxu0 0.0
        %3657 = vmatpush1.msra.mxu0 0.0
        %3658 = vmatprep.subr.mxu0 0.0
        %3659 = vmatpush1.msra.mxu0 0.0
        %3660 = vmatprep.subr.mxu0 0.0
        %3661 = vmatpush1.msra.mxu0 0.0
        %3662 = vmatprep.subr.mxu0 0.0
        %3663 = vmatpush1.msra.mxu0 0.0
        %3664 = vmatprep.subr.mxu0 0.0
        %3665 = vmatpush1.msra.mxu0 0.0
        %3666 = vmatprep.subr.mxu0 0.0
        %3667 = vmatpush1.msra.mxu0 0.0
        %3668 = vmatprep.subr.mxu0 0.0
        %3669 = vmatpush1.msra.mxu0 0.0
        %3670 = vmatprep.subr.mxu0 0.0
        %3671 = vmatpush1.msra.mxu0 0.0
        %3672 = vmatprep.subr.mxu0 0.0
        %3673 = vmatpush1.msra.mxu0 0.0
        %3674 = vmatprep.subr.mxu0 0.0
        %3675 = vmatpush1.msra.mxu0 0.0
        %3676 = vmatprep.subr.mxu0 0.0
        %3677 = vmatpush1.msra.mxu0 0.0
        %3678 = vmatprep.subr.mxu0 0.0
        %3679 = vmatpush1.msra.mxu0 0.0
        %3680 = vmatprep.subr.mxu0 0.0
        %3681 = vmatpush1.msra.mxu0 0.0
        %3682 = vmatprep.subr.mxu0 0.0
        %3683 = vmatpush1.msra.mxu0 0.0
        %3684 = vmatprep.subr.mxu0 0.0
        %3685 = vmatpush1.msra.mxu0 0.0
        %3686 = vmatprep.subr.mxu0 0.0
        %3687 = vmatpush1.msra.mxu0 0.0
        %3688 = vmatprep.subr.mxu0 0.0
        %3689 = vmatpush1.msra.mxu0 0.0
        %3690 = vmatprep.subr.mxu0 0.0
        %3691 = vmatpush1.msra.mxu0 0.0
        %3692 = vmatprep.subr.mxu0 0.0
        %3693 = vmatpush1.msra.mxu0 0.0
        %3694 = vmatprep.subr.mxu0 0.0
        %3695 = vmatpush1.msra.mxu0 0.0
        %3696 = vmatprep.subr.mxu0 0.0
        %3697 = vmatpush1.msra.mxu0 0.0
        %3698 = vmatprep.subr.mxu0 0.0
        %3699 = vmatpush1.msra.mxu0 0.0
        %3700 = vmatprep.subr.mxu0 0.0
        %3701 = vmatpush1.msra.mxu0 0.0
        %3702 = vmatprep.subr.mxu0 0.0
        %3703 = vmatpush1.msra.mxu0 0.0
        %3704 = vmatprep.subr.mxu0 0.0
        %3705 = vmatpush1.msra.mxu0 0.0
        %3706 = vmatprep.subr.mxu0 0.0
        %3707 = vmatpush1.msra.mxu0 0.0
        %3708 = vmatprep.subr.mxu0 0.0
        %3709 = vmatpush1.msra.mxu0 0.0
        %3710 = vmatprep.subr.mxu0 0.0
        %3711 = vmatpush1.msra.mxu0 0.0
        %3712 = vmatprep.mubr.f32.mxu0 0.0
        %3713 = vmatmul.mubr.f32.gmra.mrb[0].mxu0 %v3646
        %v3714 = vpop.f32.mrb[0].mxu0
        %v3715 = vadd.f32 0.0, %v3714
        %v3716 = vpop.f32.mrb[0].mxu0
        %3717 = vdwg.mxu0
        %3719 = vrot.lane.b32.xlu0 %v3563, 8
        %v3720 = vpop.permute.xlu0 %3719
        %3723 = vrot.lane.b32.xlu0 %v3639, 16
        %v3724 = vpop.permute.xlu0 %3723
        %3727 = vrot.lane.b32.xlu0 %v3715, 24
        %v3728 = vpop.permute.xlu0 %3727
        %v3730 = vsel %vm1004, %v3487, %v3720
        %v3731 = vsel %vm1672, %v3730, %v3724
        %v3732 = vsel %vm1674, %v3731, %v3728
        %s3733 = scalar_lea.vmem %s8, 32
        %v3734 = vld [vmem:[%s3733] sm:$0xff]
        %v3735 = vld [vmem:[%s3733 + $0x8] sm:$0xff]
        %v3736 = vld [vmem:[%s3733 + $0x10] sm:$0xff]
        %v3737 = vld [vmem:[%s3733 + $0x18] sm:$0xff]
        %s3738 = scalar_lea.vmem %s9, 1
        %v3739 = vld [vmem:[%s3738] sm:$0x1]
        %v3741 = vlaneseq
        %v3742 = vshrl.u32 %v3741, 7
        %v3743 = vsub.s32 0, %v3742
        %v3744 = vrot.slane %v3739, %v3743
        %v3747 = vsel %vm835, %v3732, 0
        %3749 = vmatprep.subr.mxu0 0.0
        %3750 = vmatpush1.msra.mxu0 %v3734
        %3751 = vmatprep.subr.mxu0 0.0
        %3752 = vmatpush1.msra.mxu0 %v3735
        %3753 = vmatprep.subr.mxu0 0.0
        %3754 = vmatpush1.msra.mxu0 %v3736
        %3755 = vmatprep.subr.mxu0 0.0
        %3756 = vmatpush1.msra.mxu0 %v3737
        %3757 = vmatprep.subr.mxu0 0.0
        %3758 = vmatpush1.msra.mxu0 0.0
        %3759 = vmatprep.subr.mxu0 0.0
        %3760 = vmatpush1.msra.mxu0 0.0
        %3761 = vmatprep.subr.mxu0 0.0
        %3762 = vmatpush1.msra.mxu0 0.0
        %3763 = vmatprep.subr.mxu0 0.0
        %3764 = vmatpush1.msra.mxu0 0.0
        %3765 = vmatprep.subr.mxu0 0.0
        %3766 = vmatpush1.msra.mxu0 0.0
        %3767 = vmatprep.subr.mxu0 0.0
        %3768 = vmatpush1.msra.mxu0 0.0
        %3769 = vmatprep.subr.mxu0 0.0
        %3770 = vmatpush1.msra.mxu0 0.0
        %3771 = vmatprep.subr.mxu0 0.0
        %3772 = vmatpush1.msra.mxu0 0.0
        %3773 = vmatprep.subr.mxu0 0.0
        %3774 = vmatpush1.msra.mxu0 0.0
        %3775 = vmatprep.subr.mxu0 0.0
        %3776 = vmatpush1.msra.mxu0 0.0
        %3777 = vmatprep.subr.mxu0 0.0
        %3778 = vmatpush1.msra.mxu0 0.0
        %3779 = vmatprep.subr.mxu0 0.0
        %3780 = vmatpush1.msra.mxu0 0.0
        %3781 = vmatprep.subr.mxu0 0.0
        %3782 = vmatpush1.msra.mxu0 0.0
        %3783 = vmatprep.subr.mxu0 0.0
        %3784 = vmatpush1.msra.mxu0 0.0
        %3785 = vmatprep.subr.mxu0 0.0
        %3786 = vmatpush1.msra.mxu0 0.0
        %3787 = vmatprep.subr.mxu0 0.0
        %3788 = vmatpush1.msra.mxu0 0.0
        %3789 = vmatprep.subr.mxu0 0.0
        %3790 = vmatpush1.msra.mxu0 0.0
        %3791 = vmatprep.subr.mxu0 0.0
        %3792 = vmatpush1.msra.mxu0 0.0
        %3793 = vmatprep.subr.mxu0 0.0
        %3794 = vmatpush1.msra.mxu0 0.0
        %3795 = vmatprep.subr.mxu0 0.0
        %3796 = vmatpush1.msra.mxu0 0.0
        %3797 = vmatprep.subr.mxu0 0.0
        %3798 = vmatpush1.msra.mxu0 0.0
        %3799 = vmatprep.subr.mxu0 0.0
        %3800 = vmatpush1.msra.mxu0 0.0
        %3801 = vmatprep.subr.mxu0 0.0
        %3802 = vmatpush1.msra.mxu0 0.0
        %3803 = vmatprep.subr.mxu0 0.0
        %3804 = vmatpush1.msra.mxu0 0.0
        %3805 = vmatprep.subr.mxu0 0.0
        %3806 = vmatpush1.msra.mxu0 0.0
        %3807 = vmatprep.subr.mxu0 0.0
        %3808 = vmatpush1.msra.mxu0 0.0
        %3809 = vmatprep.subr.mxu0 0.0
        %3810 = vmatpush1.msra.mxu0 0.0
        %3811 = vmatprep.subr.mxu0 0.0
        %3812 = vmatpush1.msra.mxu0 0.0
        %3813 = vmatprep.mubr.f32.mxu0 0.0
        %3814 = vmatmul.mubr.f32.gmra.mrb[0].mxu0 %v3747
        %v3815 = vpop.f32.mrb[0].mxu0
        %v3816 = vadd.f32 %v3744, %v3815
        %v3817 = vpop.f32.mrb[0].mxu0
        %3818 = vdwg.mxu0
        %v3819 = vadd.f32 %v2964, %v3816
        %v3820 = vsel %vm835, %v3819, 0.0
        %3821 = vadd.xlane.f32.xlu0 %v3820
        %v3822 = vpop.xlane.xlu0 %3821
        %v3823 = vmul.f32 %v3822, %v1764
        %v3824 = vsub.f32 %v3819, %v3823
        %v3825 = vmul.f32 %v3824, %v3824
        %v3826 = vsel %vm835, %v3825, 0.0
        %3827 = vadd.xlane.f32.xlu0 %v3826
        %v3828 = vpop.xlane.xlu0 %3827
        %v3829 = vmul.f32 %v3828, %v1764
        %v3830 = vadd.f32 %v3829, 1e-05
        %v3831 = vrsqrt.pop %v3830
        %v3832 = vmul.f32 %v3824, %v3831
        %v3834 = vlaneseq
        %v3835 = vshrl.u32 %v3834, 7
        %v3836 = vsub.s32 0, %v3835
        %v3837 = vrot.slane %v2966, %v3836
        %v3839 = vmul.f32 %v3832, %v3837
        %v3841 = vlaneseq
        %v3842 = vshrl.u32 %v3841, 7
        %v3843 = vsub.s32 0, %v3842
        %v3844 = vrot.slane %v2968, %v3843
        %v3846 = vadd.f32 %v3839, %v3844
        %s3847 = scalar_lea.vmem %s10, 32
        %v3848 = vld [vmem:[%s3847] sm:$0xff]
        %v3849 = vld [vmem:[%s3847 + $0x8] sm:$0xff]
        %v3850 = vld [vmem:[%s3847 + $0x10] sm:$0xff]
        %v3851 = vld [vmem:[%s3847 + $0x18] sm:$0xff]
        %s3852 = scalar_lea.vmem %s11, 1
        %v3853 = vld [vmem:[%s3852] sm:$0x1]
        %v3855 = vlaneseq
        %v3856 = vshrl.u32 %v3855, 7
        %v3857 = vsub.s32 0, %v3856
        %v3858 = vrot.slane %v3853, %v3857
        %v3861 = vsel %vm835, %v3846, 0
        %3863 = vmatprep.subr.mxu0 0.0
        %3864 = vmatpush1.msra.mxu0 %v3848
        %3865 = vmatprep.subr.mxu0 0.0
        %3866 = vmatpush1.msra.mxu0 %v3849
        %3867 = vmatprep.subr.mxu0 0.0
        %3868 = vmatpush1.msra.mxu0 %v3850
        %3869 = vmatprep.subr.mxu0 0.0
        %3870 = vmatpush1.msra.mxu0 %v3851
        %3871 = vmatprep.subr.mxu0 0.0
        %3872 = vmatpush1.msra.mxu0 0.0
        %3873 = vmatprep.subr.mxu0 0.0
        %3874 = vmatpush1.msra.mxu0 0.0
        %3875 = vmatprep.subr.mxu0 0.0
        %3876 = vmatpush1.msra.mxu0 0.0
        %3877 = vmatprep.subr.mxu0 0.0
        %3878 = vmatpush1.msra.mxu0 0.0
        %3879 = vmatprep.subr.mxu0 0.0
        %3880 = vmatpush1.msra.mxu0 0.0
        %3881 = vmatprep.subr.mxu0 0.0
        %3882 = vmatpush1.msra.mxu0 0.0
        %3883 = vmatprep.subr.mxu0 0.0
        %3884 = vmatpush1.msra.mxu0 0.0
        %3885 = vmatprep.subr.mxu0 0.0
        %3886 = vmatpush1.msra.mxu0 0.0
        %3887 = vmatprep.subr.mxu0 0.0
        %3888 = vmatpush1.msra.mxu0 0.0
        %3889 = vmatprep.subr.mxu0 0.0
        %3890 = vmatpush1.msra.mxu0 0.0
        %3891 = vmatprep.subr.mxu0 0.0
        %3892 = vmatpush1.msra.mxu0 0.0
        %3893 = vmatprep.subr.mxu0 0.0
        %3894 = vmatpush1.msra.mxu0 0.0
        %3895 = vmatprep.subr.mxu0 0.0
        %3896 = vmatpush1.msra.mxu0 0.0
        %3897 = vmatprep.subr.mxu0 0.0
        %3898 = vmatpush1.msra.mxu0 0.0
        %3899 = vmatprep.subr.mxu0 0.0
        %3900 = vmatpush1.msra.mxu0 0.0
        %3901 = vmatprep.subr.mxu0 0.0
        %3902 = vmatpush1.msra.mxu0 0.0
        %3903 = vmatprep.subr.mxu0 0.0
        %3904 = vmatpush1.msra.mxu0 0.0
        %3905 = vmatprep.subr.mxu0 0.0
        %3906 = vmatpush1.msra.mxu0 0.0
        %3907 = vmatprep.subr.mxu0 0.0
        %3908 = vmatpush1.msra.mxu0 0.0
        %3909 = vmatprep.subr.mxu0 0.0
        %3910 = vmatpush1.msra.mxu0 0.0
        %3911 = vmatprep.subr.mxu0 0.0
        %3912 = vmatpush1.msra.mxu0 0.0
        %3913 = vmatprep.subr.mxu0 0.0
        %3914 = vmatpush1.msra.mxu0 0.0
        %3915 = vmatprep.subr.mxu0 0.0
        %3916 = vmatpush1.msra.mxu0 0.0
        %3917 = vmatprep.subr.mxu0 0.0
        %3918 = vmatpush1.msra.mxu0 0.0
        %3919 = vmatprep.subr.mxu0 0.0
        %3920 = vmatpush1.msra.mxu0 0.0
        %3921 = vmatprep.subr.mxu0 0.0
        %3922 = vmatpush1.msra.mxu0 0.0
        %3923 = vmatprep.subr.mxu0 0.0
        %3924 = vmatpush1.msra.mxu0 0.0
        %3925 = vmatprep.subr.mxu0 0.0
        %3926 = vmatpush1.msra.mxu0 0.0
        %3927 = vmatprep.mubr.f32.mxu0 0.0
        %3928 = vmatmul.mubr.f32.gmra.mrb[0].mxu0 %v3861
        %v3929 = vpop.f32.mrb[0].mxu0
        %v3930 = vadd.f32 %v3858, %v3929
        %v3931 = vpop.f32.mrb[0].mxu0
        %3932 = vdwg.mxu0
        %s3933 = scalar_lea.vmem %s12, 32
        %v3934 = vld [vmem:[%s3933] sm:$0xff]
        %v3935 = vld [vmem:[%s3933 + $0x8] sm:$0xff]
        %v3936 = vld [vmem:[%s3933 + $0x10] sm:$0xff]
        %v3937 = vld [vmem:[%s3933 + $0x18] sm:$0xff]
        %s3938 = scalar_lea.vmem %s13, 1
        %v3939 = vld [vmem:[%s3938] sm:$0x1]
        %v3941 = vlaneseq
        %v3942 = vshrl.u32 %v3941, 7
        %v3943 = vsub.s32 0, %v3942
        %v3944 = vrot.slane %v3939, %v3943
        %3946 = vmatprep.subr.mxu0 0.0
        %3947 = vmatpush1.msra.mxu0 %v3934
        %3948 = vmatprep.subr.mxu0 0.0
        %3949 = vmatpush1.msra.mxu0 %v3935
        %3950 = vmatprep.subr.mxu0 0.0
        %3951 = vmatpush1.msra.mxu0 %v3936
        %3952 = vmatprep.subr.mxu0 0.0
        %3953 = vmatpush1.msra.mxu0 %v3937
        %3954 = vmatprep.subr.mxu0 0.0
        %3955 = vmatpush1.msra.mxu0 0.0
        %3956 = vmatprep.subr.mxu0 0.0
        %3957 = vmatpush1.msra.mxu0 0.0
        %3958 = vmatprep.subr.mxu0 0.0
        %3959 = vmatpush1.msra.mxu0 0.0
        %3960 = vmatprep.subr.mxu0 0.0
        %3961 = vmatpush1.msra.mxu0 0.0
        %3962 = vmatprep.subr.mxu0 0.0
        %3963 = vmatpush1.msra.mxu0 0.0
        %3964 = vmatprep.subr.mxu0 0.0
        %3965 = vmatpush1.msra.mxu0 0.0
        %3966 = vmatprep.subr.mxu0 0.0
        %3967 = vmatpush1.msra.mxu0 0.0
        %3968 = vmatprep.subr.mxu0 0.0
        %3969 = vmatpush1.msra.mxu0 0.0
        %3970 = vmatprep.subr.mxu0 0.0
        %3971 = vmatpush1.msra.mxu0 0.0
        %3972 = vmatprep.subr.mxu0 0.0
        %3973 = vmatpush1.msra.mxu0 0.0
        %3974 = vmatprep.subr.mxu0 0.0
        %3975 = vmatpush1.msra.mxu0 0.0
        %3976 = vmatprep.subr.mxu0 0.0
        %3977 = vmatpush1.msra.mxu0 0.0
        %3978 = vmatprep.subr.mxu0 0.0
        %3979 = vmatpush1.msra.mxu0 0.0
        %3980 = vmatprep.subr.mxu0 0.0
        %3981 = vmatpush1.msra.mxu0 0.0
        %3982 = vmatprep.subr.mxu0 0.0
        %3983 = vmatpush1.msra.mxu0 0.0
        %3984 = vmatprep.subr.mxu0 0.0
        %3985 = vmatpush1.msra.mxu0 0.0
        %3986 = vmatprep.subr.mxu0 0.0
        %3987 = vmatpush1.msra.mxu0 0.0
        %3988 = vmatprep.subr.mxu0 0.0
        %3989 = vmatpush1.msra.mxu0 0.0
        %3990 = vmatprep.subr.mxu0 0.0
        %3991 = vmatpush1.msra.mxu0 0.0
        %3992 = vmatprep.subr.mxu0 0.0
        %3993 = vmatpush1.msra.mxu0 0.0
        %3994 = vmatprep.subr.mxu0 0.0
        %3995 = vmatpush1.msra.mxu0 0.0
        %3996 = vmatprep.subr.mxu0 0.0
        %3997 = vmatpush1.msra.mxu0 0.0
        %3998 = vmatprep.subr.mxu0 0.0
        %3999 = vmatpush1.msra.mxu0 0.0
        %4000 = vmatprep.subr.mxu0 0.0
        %4001 = vmatpush1.msra.mxu0 0.0
        %4002 = vmatprep.subr.mxu0 0.0
        %4003 = vmatpush1.msra.mxu0 0.0
        %4004 = vmatprep.subr.mxu0 0.0
        %4005 = vmatpush1.msra.mxu0 0.0
        %4006 = vmatprep.subr.mxu0 0.0
        %4007 = vmatpush1.msra.mxu0 0.0
        %4008 = vmatprep.subr.mxu0 0.0
        %4009 = vmatpush1.msra.mxu0 0.0
        %4010 = vmatprep.mubr.f32.mxu0 0.0
        %4011 = vmatmul.mubr.f32.gmra.mrb[0].mxu0 %v1885
        %v4012 = vpop.f32.mrb[0].mxu0
        %v4013 = vadd.f32 %v3944, %v4012
        %v4014 = vpop.f32.mrb[0].mxu0
        %4015 = vmatprep.mubr.f32.mxu0 0.0
        %4016 = vmatmul.mubr.f32.gmra.mrb[0].mxu0 %v1888
        %v4017 = vpop.f32.mrb[0].mxu0
        %v4018 = vadd.f32 %v3944, %v4017
        %v4019 = vpop.f32.mrb[0].mxu0
        %4020 = vdwg.mxu0
        %4022 = vrot.lane.b32.xlu0 %v3930, 120
        %v4023 = vpop.permute.xlu0 %4022
        %4024 = vrot.lane.b32.xlu0 %v3930, 112
        %v4025 = vpop.permute.xlu0 %4024
        %4026 = vrot.lane.b32.xlu0 %v3930, 104
        %v4027 = vpop.permute.xlu0 %4026
        %4030 = vrot.lane.b32.xlu0 %v4013, 120
        %v4031 = vpop.permute.xlu0 %4030
        %4032 = vrot.lane.b32.xlu0 %v4018, 120
        %v4033 = vpop.permute.xlu0 %4032
        %4034 = vrot.lane.b32.xlu0 %v4013, 112
        %v4035 = vpop.permute.xlu0 %4034
        %4036 = vrot.lane.b32.xlu0 %v4018, 112
        %v4037 = vpop.permute.xlu0 %4036
        %4038 = vrot.lane.b32.xlu0 %v4013, 104
        %v4039 = vpop.permute.xlu0 %4038
        %4040 = vrot.lane.b32.xlu0 %v4018, 104
        %v4041 = vpop.permute.xlu0 %4040
        %v4042 = vsel %vm1004, %v3930, 0
        %v4044 = vsel %vm1004, %v4013, 0
        %v4046 = vsel %vm1004, %v4018, 0
        %4048 = vmatprep.subr.mxu0 0.0
        %4049 = vmatpush1.xpose.msra.mxu0 %v4044
        %4050 = vmatprep.subr.mxu0 0.0
        %4051 = vmatpush1.xpose.msra.mxu0 %v4046
        %4052 = vmatprep.subr.mxu0 0.0
        %4053 = vmatpush1.xpose.msra.mxu0 0.0
        %4054 = vmatprep.subr.mxu0 0.0
        %4055 = vmatpush1.xpose.msra.mxu0 0.0
        %4056 = vmatprep.subr.mxu0 0.0
        %4057 = vmatpush1.xpose.msra.mxu0 0.0
        %4058 = vmatprep.subr.mxu0 0.0
        %4059 = vmatpush1.xpose.msra.mxu0 0.0
        %4060 = vmatprep.subr.mxu0 0.0
        %4061 = vmatpush1.xpose.msra.mxu0 0.0
        %4062 = vmatprep.subr.mxu0 0.0
        %4063 = vmatpush1.xpose.msra.mxu0 0.0
        %4064 = vmatprep.subr.mxu0 0.0
        %4065 = vmatpush1.xpose.msra.mxu0 0.0
        %4066 = vmatprep.subr.mxu0 0.0
        %4067 = vmatpush1.xpose.msra.mxu0 0.0
        %4068 = vmatprep.subr.mxu0 0.0
        %4069 = vmatpush1.xpose.msra.mxu0 0.0
        %4070 = vmatprep.subr.mxu0 0.0
        %4071 = vmatpush1.xpose.msra.mxu0 0.0
        %4072 = vmatprep.subr.mxu0 0.0
        %4073 = vmatpush1.xpose.msra.mxu0 0.0
        %4074 = vmatprep.subr.mxu0 0.0
        %4075 = vmatpush1.xpose.msra.mxu0 0.0
        %4076 = vmatprep.subr.mxu0 0.0
        %4077 = vmatpush1.xpose.msra.mxu0 0.0
        %4078 = vmatprep.subr.mxu0 0.0
        %4079 = vmatpush1.xpose.msra.mxu0 0.0
        %4080 = vmatprep.subr.mxu0 0.0
        %4081 = vmatpush1.xpose.msra.mxu0 0.0
        %4082 = vmatprep.subr.mxu0 0.0
        %4083 = vmatpush1.xpose.msra.mxu0 0.0
        %4084 = vmatprep.subr.mxu0 0.0
        %4085 = vmatpush1.xpose.msra.mxu0 0.0
        %4086 = vmatprep.subr.mxu0 0.0
        %4087 = vmatpush1.xpose.msra.mxu0 0.0
        %4088 = vmatprep.subr.mxu0 0.0
        %4089 = vmatpush1.xpose.msra.mxu0 0.0
        %4090 = vmatprep.subr.mxu0 0.0
        %4091 = vmatpush1.xpose.msra.mxu0 0.0
        %4092 = vmatprep.subr.mxu0 0.0
        %4093 = vmatpush1.xpose.msra.mxu0 0.0
        %4094 = vmatprep.subr.mxu0 0.0
        %4095 = vmatpush1.xpose.msra.mxu0 0.0
        %4096 = vmatprep.subr.mxu0 0.0
        %4097 = vmatpush1.xpose.msra.mxu0 0.0
        %4098 = vmatprep.subr.mxu0 0.0
        %4099 = vmatpush1.xpose.msra.mxu0 0.0
        %4100 = vmatprep.subr.mxu0 0.0
        %4101 = vmatpush1.xpose.msra.mxu0 0.0
        %4102 = vmatprep.subr.mxu0 0.0
        %4103 = vmatpush1.xpose.msra.mxu0 0.0
        %4104 = vmatprep.subr.mxu0 0.0
        %4105 = vmatpush1.xpose.msra.mxu0 0.0
        %4106 = vmatprep.subr.mxu0 0.0
        %4107 = vmatpush1.xpose.msra.mxu0 0.0
        %4108 = vmatprep.subr.mxu0 0.0
        %4109 = vmatpush1.xpose.msra.mxu0 0.0
        %4110 = vmatprep.subr.mxu0 0.0
        %4111 = vmatpush1.xpose.msra.mxu0 0.0
        %4112 = vmatprep.mubr.f32.mxu0 0.0
        %4113 = vmatmul.mubr.f32.gmra.mrb[0].mxu0 %v4042
        %v4114 = vpop.f32.mrb[0].mxu0
        %v4115 = vadd.f32 0.0, %v4114
        %v4116 = vpop.f32.mrb[0].mxu0
        %4117 = vdwg.mxu0
        %v4118 = vsel %vm1004, %v4023, 0
        %v4120 = vsel %vm1004, %v4031, 0
        %v4122 = vsel %vm1004, %v4033, 0
        %4124 = vmatprep.subr.mxu0 0.0
        %4125 = vmatpush1.xpose.msra.mxu0 %v4120
        %4126 = vmatprep.subr.mxu0 0.0
        %4127 = vmatpush1.xpose.msra.mxu0 %v4122
        %4128 = vmatprep.subr.mxu0 0.0
        %4129 = vmatpush1.xpose.msra.mxu0 0.0
        %4130 = vmatprep.subr.mxu0 0.0
        %4131 = vmatpush1.xpose.msra.mxu0 0.0
        %4132 = vmatprep.subr.mxu0 0.0
        %4133 = vmatpush1.xpose.msra.mxu0 0.0
        %4134 = vmatprep.subr.mxu0 0.0
        %4135 = vmatpush1.xpose.msra.mxu0 0.0
        %4136 = vmatprep.subr.mxu0 0.0
        %4137 = vmatpush1.xpose.msra.mxu0 0.0
        %4138 = vmatprep.subr.mxu0 0.0
        %4139 = vmatpush1.xpose.msra.mxu0 0.0
        %4140 = vmatprep.subr.mxu0 0.0
        %4141 = vmatpush1.xpose.msra.mxu0 0.0
        %4142 = vmatprep.subr.mxu0 0.0
        %4143 = vmatpush1.xpose.msra.mxu0 0.0
        %4144 = vmatprep.subr.mxu0 0.0
        %4145 = vmatpush1.xpose.msra.mxu0 0.0
        %4146 = vmatprep.subr.mxu0 0.0
        %4147 = vmatpush1.xpose.msra.mxu0 0.0
        %4148 = vmatprep.subr.mxu0 0.0
        %4149 = vmatpush1.xpose.msra.mxu0 0.0
        %4150 = vmatprep.subr.mxu0 0.0
        %4151 = vmatpush1.xpose.msra.mxu0 0.0
        %4152 = vmatprep.subr.mxu0 0.0
        %4153 = vmatpush1.xpose.msra.mxu0 0.0
        %4154 = vmatprep.subr.mxu0 0.0
        %4155 = vmatpush1.xpose.msra.mxu0 0.0
        %4156 = vmatprep.subr.mxu0 0.0
        %4157 = vmatpush1.xpose.msra.mxu0 0.0
        %4158 = vmatprep.subr.mxu0 0.0
        %4159 = vmatpush1.xpose.msra.mxu0 0.0
        %4160 = vmatprep.subr.mxu0 0.0
        %4161 = vmatpush1.xpose.msra.mxu0 0.0
        %4162 = vmatprep.subr.mxu0 0.0
        %4163 = vmatpush1.xpose.msra.mxu0 0.0
        %4164 = vmatprep.subr.mxu0 0.0
        %4165 = vmatpush1.xpose.msra.mxu0 0.0
        %4166 = vmatprep.subr.mxu0 0.0
        %4167 = vmatpush1.xpose.msra.mxu0 0.0
        %4168 = vmatprep.subr.mxu0 0.0
        %4169 = vmatpush1.xpose.msra.mxu0 0.0
        %4170 = vmatprep.subr.mxu0 0.0
        %4171 = vmatpush1.xpose.msra.mxu0 0.0
        %4172 = vmatprep.subr.mxu0 0.0
        %4173 = vmatpush1.xpose.msra.mxu0 0.0
        %4174 = vmatprep.subr.mxu0 0.0
        %4175 = vmatpush1.xpose.msra.mxu0 0.0
        %4176 = vmatprep.subr.mxu0 0.0
        %4177 = vmatpush1.xpose.msra.mxu0 0.0
        %4178 = vmatprep.subr.mxu0 0.0
        %4179 = vmatpush1.xpose.msra.mxu0 0.0
        %4180 = vmatprep.subr.mxu0 0.0
        %4181 = vmatpush1.xpose.msra.mxu0 0.0
        %4182 = vmatprep.subr.mxu0 0.0
        %4183 = vmatpush1.xpose.msra.mxu0 0.0
        %4184 = vmatprep.subr.mxu0 0.0
        %4185 = vmatpush1.xpose.msra.mxu0 0.0
        %4186 = vmatprep.subr.mxu0 0.0
        %4187 = vmatpush1.xpose.msra.mxu0 0.0
        %4188 = vmatprep.mubr.f32.mxu0 0.0
        %4189 = vmatmul.mubr.f32.gmra.mrb[0].mxu0 %v4118
        %v4190 = vpop.f32.mrb[0].mxu0
        %v4191 = vadd.f32 0.0, %v4190
        %v4192 = vpop.f32.mrb[0].mxu0
        %4193 = vdwg.mxu0
        %v4194 = vsel %vm1004, %v4025, 0
        %v4196 = vsel %vm1004, %v4035, 0
        %v4198 = vsel %vm1004, %v4037, 0
        %4200 = vmatprep.subr.mxu0 0.0
        %4201 = vmatpush1.xpose.msra.mxu0 %v4196
        %4202 = vmatprep.subr.mxu0 0.0
        %4203 = vmatpush1.xpose.msra.mxu0 %v4198
        %4204 = vmatprep.subr.mxu0 0.0
        %4205 = vmatpush1.xpose.msra.mxu0 0.0
        %4206 = vmatprep.subr.mxu0 0.0
        %4207 = vmatpush1.xpose.msra.mxu0 0.0
        %4208 = vmatprep.subr.mxu0 0.0
        %4209 = vmatpush1.xpose.msra.mxu0 0.0
        %4210 = vmatprep.subr.mxu0 0.0
        %4211 = vmatpush1.xpose.msra.mxu0 0.0
        %4212 = vmatprep.subr.mxu0 0.0
        %4213 = vmatpush1.xpose.msra.mxu0 0.0
        %4214 = vmatprep.subr.mxu0 0.0
        %4215 = vmatpush1.xpose.msra.mxu0 0.0
        %4216 = vmatprep.subr.mxu0 0.0
        %4217 = vmatpush1.xpose.msra.mxu0 0.0
        %4218 = vmatprep.subr.mxu0 0.0
        %4219 = vmatpush1.xpose.msra.mxu0 0.0
        %4220 = vmatprep.subr.mxu0 0.0
        %4221 = vmatpush1.xpose.msra.mxu0 0.0
        %4222 = vmatprep.subr.mxu0 0.0
        %4223 = vmatpush1.xpose.msra.mxu0 0.0
        %4224 = vmatprep.subr.mxu0 0.0
        %4225 = vmatpush1.xpose.msra.mxu0 0.0
        %4226 = vmatprep.subr.mxu0 0.0
        %4227 = vmatpush1.xpose.msra.mxu0 0.0
        %4228 = vmatprep.subr.mxu0 0.0
        %4229 = vmatpush1.xpose.msra.mxu0 0.0
        %4230 = vmatprep.subr.mxu0 0.0
        %4231 = vmatpush1.xpose.msra.mxu0 0.0
        %4232 = vmatprep.subr.mxu0 0.0
        %4233 = vmatpush1.xpose.msra.mxu0 0.0
        %4234 = vmatprep.subr.mxu0 0.0
        %4235 = vmatpush1.xpose.msra.mxu0 0.0
        %4236 = vmatprep.subr.mxu0 0.0
        %4237 = vmatpush1.xpose.msra.mxu0 0.0
        %4238 = vmatprep.subr.mxu0 0.0
        %4239 = vmatpush1.xpose.msra.mxu0 0.0
        %4240 = vmatprep.subr.mxu0 0.0
        %4241 = vmatpush1.xpose.msra.mxu0 0.0
        %4242 = vmatprep.subr.mxu0 0.0
        %4243 = vmatpush1.xpose.msra.mxu0 0.0
        %4244 = vmatprep.subr.mxu0 0.0
        %4245 = vmatpush1.xpose.msra.mxu0 0.0
        %4246 = vmatprep.subr.mxu0 0.0
        %4247 = vmatpush1.xpose.msra.mxu0 0.0
        %4248 = vmatprep.subr.mxu0 0.0
        %4249 = vmatpush1.xpose.msra.mxu0 0.0
        %4250 = vmatprep.subr.mxu0 0.0
        %4251 = vmatpush1.xpose.msra.mxu0 0.0
        %4252 = vmatprep.subr.mxu0 0.0
        %4253 = vmatpush1.xpose.msra.mxu0 0.0
        %4254 = vmatprep.subr.mxu0 0.0
        %4255 = vmatpush1.xpose.msra.mxu0 0.0
        %4256 = vmatprep.subr.mxu0 0.0
        %4257 = vmatpush1.xpose.msra.mxu0 0.0
        %4258 = vmatprep.subr.mxu0 0.0
        %4259 = vmatpush1.xpose.msra.mxu0 0.0
        %4260 = vmatprep.subr.mxu0 0.0
        %4261 = vmatpush1.xpose.msra.mxu0 0.0
        %4262 = vmatprep.subr.mxu0 0.0
        %4263 = vmatpush1.xpose.msra.mxu0 0.0
        %4264 = vmatprep.mubr.f32.mxu0 0.0
        %4265 = vmatmul.mubr.f32.gmra.mrb[0].mxu0 %v4194
        %v4266 = vpop.f32.mrb[0].mxu0
        %v4267 = vadd.f32 0.0, %v4266
        %v4268 = vpop.f32.mrb[0].mxu0
        %4269 = vdwg.mxu0
        %v4270 = vsel %vm1004, %v4027, 0
        %v4272 = vsel %vm1004, %v4039, 0
        %v4274 = vsel %vm1004, %v4041, 0
        %4276 = vmatprep.subr.mxu0 0.0
        %4277 = vmatpush1.xpose.msra.mxu0 %v4272
        %4278 = vmatprep.subr.mxu0 0.0
        %4279 = vmatpush1.xpose.msra.mxu0 %v4274
        %4280 = vmatprep.subr.mxu0 0.0
        %4281 = vmatpush1.xpose.msra.mxu0 0.0
        %4282 = vmatprep.subr.mxu0 0.0
        %4283 = vmatpush1.xpose.msra.mxu0 0.0
        %4284 = vmatprep.subr.mxu0 0.0
        %4285 = vmatpush1.xpose.msra.mxu0 0.0
        %4286 = vmatprep.subr.mxu0 0.0
        %4287 = vmatpush1.xpose.msra.mxu0 0.0
        %4288 = vmatprep.subr.mxu0 0.0
        %4289 = vmatpush1.xpose.msra.mxu0 0.0
        %4290 = vmatprep.subr.mxu0 0.0
        %4291 = vmatpush1.xpose.msra.mxu0 0.0
        %4292 = vmatprep.subr.mxu0 0.0
        %4293 = vmatpush1.xpose.msra.mxu0 0.0
        %4294 = vmatprep.subr.mxu0 0.0
        %4295 = vmatpush1.xpose.msra.mxu0 0.0
        %4296 = vmatprep.subr.mxu0 0.0
        %4297 = vmatpush1.xpose.msra.mxu0 0.0
        %4298 = vmatprep.subr.mxu0 0.0
        %4299 = vmatpush1.xpose.msra.mxu0 0.0
        %4300 = vmatprep.subr.mxu0 0.0
        %4301 = vmatpush1.xpose.msra.mxu0 0.0
        %4302 = vmatprep.subr.mxu0 0.0
        %4303 = vmatpush1.xpose.msra.mxu0 0.0
        %4304 = vmatprep.subr.mxu0 0.0
        %4305 = vmatpush1.xpose.msra.mxu0 0.0
        %4306 = vmatprep.subr.mxu0 0.0
        %4307 = vmatpush1.xpose.msra.mxu0 0.0
        %4308 = vmatprep.subr.mxu0 0.0
        %4309 = vmatpush1.xpose.msra.mxu0 0.0
        %4310 = vmatprep.subr.mxu0 0.0
        %4311 = vmatpush1.xpose.msra.mxu0 0.0
        %4312 = vmatprep.subr.mxu0 0.0
        %4313 = vmatpush1.xpose.msra.mxu0 0.0
        %4314 = vmatprep.subr.mxu0 0.0
        %4315 = vmatpush1.xpose.msra.mxu0 0.0
        %4316 = vmatprep.subr.mxu0 0.0
        %4317 = vmatpush1.xpose.msra.mxu0 0.0
        %4318 = vmatprep.subr.mxu0 0.0
        %4319 = vmatpush1.xpose.msra.mxu0 0.0
        %4320 = vmatprep.subr.mxu0 0.0
        %4321 = vmatpush1.xpose.msra.mxu0 0.0
        %4322 = vmatprep.subr.mxu0 0.0
        %4323 = vmatpush1.xpose.msra.mxu0 0.0
        %4324 = vmatprep.subr.mxu0 0.0
        %4325 = vmatpush1.xpose.msra.mxu0 0.0
        %4326 = vmatprep.subr.mxu0 0.0
        %4327 = vmatpush1.xpose.msra.mxu0 0.0
        %4328 = vmatprep.subr.mxu0 0.0
        %4329 = vmatpush1.xpose.msra.mxu0 0.0
        %4330 = vmatprep.subr.mxu0 0.0
        %4331 = vmatpush1.xpose.msra.mxu0 0.0
        %4332 = vmatprep.subr.mxu0 0.0
        %4333 = vmatpush1.xpose.msra.mxu0 0.0
        %4334 = vmatprep.subr.mxu0 0.0
        %4335 = vmatpush1.xpose.msra.mxu0 0.0
        %4336 = vmatprep.subr.mxu0 0.0
        %4337 = vmatpush1.xpose.msra.mxu0 0.0
        %4338 = vmatprep.subr.mxu0 0.0
        %4339 = vmatpush1.xpose.msra.mxu0 0.0
        %4340 = vmatprep.mubr.f32.mxu0 0.0
        %4341 = vmatmul.mubr.f32.gmra.mrb[0].mxu0 %v4270
        %v4342 = vpop.f32.mrb[0].mxu0
        %v4343 = vadd.f32 0.0, %v4342
        %v4344 = vpop.f32.mrb[0].mxu0
        %4345 = vdwg.mxu0
        %v4346 = vmul.f32 %v4115, 0.35355338
        %v4347 = vmul.f32 %v4191, 0.35355338
        %v4348 = vmul.f32 %v4267, 0.35355338
        %v4349 = vmul.f32 %v4343, 0.35355338
        %v4350 = vsel %vm2294, %v4346, -inf
        %4351 = vmax.xlane.f32.xlu0 %v4350
        %v4352 = vpop.xlane.xlu0 %4351
        %v4353 = vsel %vm2294, %v4347, -inf
        %4354 = vmax.xlane.f32.xlu0 %v4353
        %v4355 = vpop.xlane.xlu0 %4354
        %v4356 = vsel %vm2294, %v4348, -inf
        %4357 = vmax.xlane.f32.xlu0 %v4356
        %v4358 = vpop.xlane.xlu0 %4357
        %v4359 = vsel %vm2294, %v4349, -inf
        %4360 = vmax.xlane.f32.xlu0 %v4359
        %v4361 = vpop.xlane.xlu0 %4360
        %v4362 = vsub.f32 %v4346, %v4352
        %v4363 = vsub.f32 %v4347, %v4355
        %v4364 = vsub.f32 %v4348, %v4358
        %v4365 = vsub.f32 %v4349, %v4361
        %v4366 = vmul.f32 %v4362, 1.442695
        %v4367 = vpow.pop %v4366
        %v4368 = vmul.f32 %v4363, 1.442695
        %v4369 = vpow.pop %v4368
        %v4370 = vmul.f32 %v4364, 1.442695
        %v4371 = vpow.pop %v4370
        %v4372 = vmul.f32 %v4365, 1.442695
        %v4373 = vpow.pop %v4372
        %v4374 = vsel %vm2294, %v4367, 0.0
        %4375 = vadd.xlane.f32.xlu0 %v4374
        %v4376 = vpop.xlane.xlu0 %4375
        %v4377 = vsel %vm2294, %v4369, 0.0
        %4378 = vadd.xlane.f32.xlu0 %v4377
        %v4379 = vpop.xlane.xlu0 %4378
        %v4380 = vsel %vm2294, %v4371, 0.0
        %4381 = vadd.xlane.f32.xlu0 %v4380
        %v4382 = vpop.xlane.xlu0 %4381
        %v4383 = vsel %vm2294, %v4373, 0.0
        %4384 = vadd.xlane.f32.xlu0 %v4383
        %v4385 = vpop.xlane.xlu0 %4384
        %v4386 = vrcp.pop %v4376
        %v4387 = vrcp.pop %v4379
        %v4388 = vrcp.pop %v4382
        %v4389 = vrcp.pop %v4385
        %v4390 = vmul.f32 %v4367, %v4386
        %v4391 = vmul.f32 %v4369, %v4387
        %v4392 = vmul.f32 %v4371, %v4388
        %v4393 = vmul.f32 %v4373, %v4389
        %4394 = vrot.lane.b32.xlu0 %v4013, 96
        %v4395 = vpop.permute.xlu0 %4394
        %4396 = vrot.lane.b32.xlu0 %v4018, 96
        %v4397 = vpop.permute.xlu0 %4396
        %v4400 = vsel %vm2294, %v4390, 0
        %v4402 = vsel %vm2347, %v4397, 0
        %4404 = vmatprep.subr.mxu0 0.0
        %4405 = vmatpush1.msra.mxu0 %v4395
        %4406 = vmatprep.subr.mxu0 0.0
        %4407 = vmatpush1.msra.mxu0 %v4402
        %4408 = vmatprep.subr.mxu0 0.0
        %4409 = vmatpush1.msra.mxu0 0.0
        %4410 = vmatprep.subr.mxu0 0.0
        %4411 = vmatpush1.msra.mxu0 0.0
        %4412 = vmatprep.subr.mxu0 0.0
        %4413 = vmatpush1.msra.mxu0 0.0
        %4414 = vmatprep.subr.mxu0 0.0
        %4415 = vmatpush1.msra.mxu0 0.0
        %4416 = vmatprep.subr.mxu0 0.0
        %4417 = vmatpush1.msra.mxu0 0.0
        %4418 = vmatprep.subr.mxu0 0.0
        %4419 = vmatpush1.msra.mxu0 0.0
        %4420 = vmatprep.subr.mxu0 0.0
        %4421 = vmatpush1.msra.mxu0 0.0
        %4422 = vmatprep.subr.mxu0 0.0
        %4423 = vmatpush1.msra.mxu0 0.0
        %4424 = vmatprep.subr.mxu0 0.0
        %4425 = vmatpush1.msra.mxu0 0.0
        %4426 = vmatprep.subr.mxu0 0.0
        %4427 = vmatpush1.msra.mxu0 0.0
        %4428 = vmatprep.subr.mxu0 0.0
        %4429 = vmatpush1.msra.mxu0 0.0
        %4430 = vmatprep.subr.mxu0 0.0
        %4431 = vmatpush1.msra.mxu0 0.0
        %4432 = vmatprep.subr.mxu0 0.0
        %4433 = vmatpush1.msra.mxu0 0.0
        %4434 = vmatprep.subr.mxu0 0.0
        %4435 = vmatpush1.msra.mxu0 0.0
        %4436 = vmatprep.subr.mxu0 0.0
        %4437 = vmatpush1.msra.mxu0 0.0
        %4438 = vmatprep.subr.mxu0 0.0
        %4439 = vmatpush1.msra.mxu0 0.0
        %4440 = vmatprep.subr.mxu0 0.0
        %4441 = vmatpush1.msra.mxu0 0.0
        %4442 = vmatprep.subr.mxu0 0.0
        %4443 = vmatpush1.msra.mxu0 0.0
        %4444 = vmatprep.subr.mxu0 0.0
        %4445 = vmatpush1.msra.mxu0 0.0
        %4446 = vmatprep.subr.mxu0 0.0
        %4447 = vmatpush1.msra.mxu0 0.0
        %4448 = vmatprep.subr.mxu0 0.0
        %4449 = vmatpush1.msra.mxu0 0.0
        %4450 = vmatprep.subr.mxu0 0.0
        %4451 = vmatpush1.msra.mxu0 0.0
        %4452 = vmatprep.subr.mxu0 0.0
        %4453 = vmatpush1.msra.mxu0 0.0
        %4454 = vmatprep.subr.mxu0 0.0
        %4455 = vmatpush1.msra.mxu0 0.0
        %4456 = vmatprep.subr.mxu0 0.0
        %4457 = vmatpush1.msra.mxu0 0.0
        %4458 = vmatprep.subr.mxu0 0.0
        %4459 = vmatpush1.msra.mxu0 0.0
        %4460 = vmatprep.subr.mxu0 0.0
        %4461 = vmatpush1.msra.mxu0 0.0
        %4462 = vmatprep.subr.mxu0 0.0
        %4463 = vmatpush1.msra.mxu0 0.0
        %4464 = vmatprep.subr.mxu0 0.0
        %4465 = vmatpush1.msra.mxu0 0.0
        %4466 = vmatprep.subr.mxu0 0.0
        %4467 = vmatpush1.msra.mxu0 0.0
        %4468 = vmatprep.mubr.f32.mxu0 0.0
        %4469 = vmatmul.mubr.f32.gmra.mrb[0].mxu0 %v4400
        %v4470 = vpop.f32.mrb[0].mxu0
        %v4471 = vadd.f32 0.0, %v4470
        %v4472 = vpop.f32.mrb[0].mxu0
        %4473 = vdwg.mxu0
        %4474 = vrot.lane.b32.xlu0 %v4031, 96
        %v4475 = vpop.permute.xlu0 %4474
        %4476 = vrot.lane.b32.xlu0 %v4033, 96
        %v4477 = vpop.permute.xlu0 %4476
        %v4480 = vsel %vm2294, %v4391, 0
        %v4482 = vsel %vm2347, %v4477, 0
        %4484 = vmatprep.subr.mxu0 0.0
        %4485 = vmatpush1.msra.mxu0 %v4475
        %4486 = vmatprep.subr.mxu0 0.0
        %4487 = vmatpush1.msra.mxu0 %v4482
        %4488 = vmatprep.subr.mxu0 0.0
        %4489 = vmatpush1.msra.mxu0 0.0
        %4490 = vmatprep.subr.mxu0 0.0
        %4491 = vmatpush1.msra.mxu0 0.0
        %4492 = vmatprep.subr.mxu0 0.0
        %4493 = vmatpush1.msra.mxu0 0.0
        %4494 = vmatprep.subr.mxu0 0.0
        %4495 = vmatpush1.msra.mxu0 0.0
        %4496 = vmatprep.subr.mxu0 0.0
        %4497 = vmatpush1.msra.mxu0 0.0
        %4498 = vmatprep.subr.mxu0 0.0
        %4499 = vmatpush1.msra.mxu0 0.0
        %4500 = vmatprep.subr.mxu0 0.0
        %4501 = vmatpush1.msra.mxu0 0.0
        %4502 = vmatprep.subr.mxu0 0.0
        %4503 = vmatpush1.msra.mxu0 0.0
        %4504 = vmatprep.subr.mxu0 0.0
        %4505 = vmatpush1.msra.mxu0 0.0
        %4506 = vmatprep.subr.mxu0 0.0
        %4507 = vmatpush1.msra.mxu0 0.0
        %4508 = vmatprep.subr.mxu0 0.0
        %4509 = vmatpush1.msra.mxu0 0.0
        %4510 = vmatprep.subr.mxu0 0.0
        %4511 = vmatpush1.msra.mxu0 0.0
        %4512 = vmatprep.subr.mxu0 0.0
        %4513 = vmatpush1.msra.mxu0 0.0
        %4514 = vmatprep.subr.mxu0 0.0
        %4515 = vmatpush1.msra.mxu0 0.0
        %4516 = vmatprep.subr.mxu0 0.0
        %4517 = vmatpush1.msra.mxu0 0.0
        %4518 = vmatprep.subr.mxu0 0.0
        %4519 = vmatpush1.msra.mxu0 0.0
        %4520 = vmatprep.subr.mxu0 0.0
        %4521 = vmatpush1.msra.mxu0 0.0
        %4522 = vmatprep.subr.mxu0 0.0
        %4523 = vmatpush1.msra.mxu0 0.0
        %4524 = vmatprep.subr.mxu0 0.0
        %4525 = vmatpush1.msra.mxu0 0.0
        %4526 = vmatprep.subr.mxu0 0.0
        %4527 = vmatpush1.msra.mxu0 0.0
        %4528 = vmatprep.subr.mxu0 0.0
        %4529 = vmatpush1.msra.mxu0 0.0
        %4530 = vmatprep.subr.mxu0 0.0
        %4531 = vmatpush1.msra.mxu0 0.0
        %4532 = vmatprep.subr.mxu0 0.0
        %4533 = vmatpush1.msra.mxu0 0.0
        %4534 = vmatprep.subr.mxu0 0.0
        %4535 = vmatpush1.msra.mxu0 0.0
        %4536 = vmatprep.subr.mxu0 0.0
        %4537 = vmatpush1.msra.mxu0 0.0
        %4538 = vmatprep.subr.mxu0 0.0
        %4539 = vmatpush1.msra.mxu0 0.0
        %4540 = vmatprep.subr.mxu0 0.0
        %4541 = vmatpush1.msra.mxu0 0.0
        %4542 = vmatprep.subr.mxu0 0.0
        %4543 = vmatpush1.msra.mxu0 0.0
        %4544 = vmatprep.subr.mxu0 0.0
        %4545 = vmatpush1.msra.mxu0 0.0
        %4546 = vmatprep.subr.mxu0 0.0
        %4547 = vmatpush1.msra.mxu0 0.0
        %4548 = vmatprep.mubr.f32.mxu0 0.0
        %4549 = vmatmul.mubr.f32.gmra.mrb[0].mxu0 %v4480
        %v4550 = vpop.f32.mrb[0].mxu0
        %v4551 = vadd.f32 0.0, %v4550
        %v4552 = vpop.f32.mrb[0].mxu0
        %4553 = vdwg.mxu0
        %4554 = vrot.lane.b32.xlu0 %v4035, 96
        %v4555 = vpop.permute.xlu0 %4554
        %4556 = vrot.lane.b32.xlu0 %v4037, 96
        %v4557 = vpop.permute.xlu0 %4556
        %v4560 = vsel %vm2294, %v4392, 0
        %v4562 = vsel %vm2347, %v4557, 0
        %4564 = vmatprep.subr.mxu0 0.0
        %4565 = vmatpush1.msra.mxu0 %v4555
        %4566 = vmatprep.subr.mxu0 0.0
        %4567 = vmatpush1.msra.mxu0 %v4562
        %4568 = vmatprep.subr.mxu0 0.0
        %4569 = vmatpush1.msra.mxu0 0.0
        %4570 = vmatprep.subr.mxu0 0.0
        %4571 = vmatpush1.msra.mxu0 0.0
        %4572 = vmatprep.subr.mxu0 0.0
        %4573 = vmatpush1.msra.mxu0 0.0
        %4574 = vmatprep.subr.mxu0 0.0
        %4575 = vmatpush1.msra.mxu0 0.0
        %4576 = vmatprep.subr.mxu0 0.0
        %4577 = vmatpush1.msra.mxu0 0.0
        %4578 = vmatprep.subr.mxu0 0.0
        %4579 = vmatpush1.msra.mxu0 0.0
        %4580 = vmatprep.subr.mxu0 0.0
        %4581 = vmatpush1.msra.mxu0 0.0
        %4582 = vmatprep.subr.mxu0 0.0
        %4583 = vmatpush1.msra.mxu0 0.0
        %4584 = vmatprep.subr.mxu0 0.0
        %4585 = vmatpush1.msra.mxu0 0.0
        %4586 = vmatprep.subr.mxu0 0.0
        %4587 = vmatpush1.msra.mxu0 0.0
        %4588 = vmatprep.subr.mxu0 0.0
        %4589 = vmatpush1.msra.mxu0 0.0
        %4590 = vmatprep.subr.mxu0 0.0
        %4591 = vmatpush1.msra.mxu0 0.0
        %4592 = vmatprep.subr.mxu0 0.0
        %4593 = vmatpush1.msra.mxu0 0.0
        %4594 = vmatprep.subr.mxu0 0.0
        %4595 = vmatpush1.msra.mxu0 0.0
        %4596 = vmatprep.subr.mxu0 0.0
        %4597 = vmatpush1.msra.mxu0 0.0
        %4598 = vmatprep.subr.mxu0 0.0
        %4599 = vmatpush1.msra.mxu0 0.0
        %4600 = vmatprep.subr.mxu0 0.0
        %4601 = vmatpush1.msra.mxu0 0.0
        %4602 = vmatprep.subr.mxu0 0.0
        %4603 = vmatpush1.msra.mxu0 0.0
        %4604 = vmatprep.subr.mxu0 0.0
        %4605 = vmatpush1.msra.mxu0 0.0
        %4606 = vmatprep.subr.mxu0 0.0
        %4607 = vmatpush1.msra.mxu0 0.0
        %4608 = vmatprep.subr.mxu0 0.0
        %4609 = vmatpush1.msra.mxu0 0.0
        %4610 = vmatprep.subr.mxu0 0.0
        %4611 = vmatpush1.msra.mxu0 0.0
        %4612 = vmatprep.subr.mxu0 0.0
        %4613 = vmatpush1.msra.mxu0 0.0
        %4614 = vmatprep.subr.mxu0 0.0
        %4615 = vmatpush1.msra.mxu0 0.0
        %4616 = vmatprep.subr.mxu0 0.0
        %4617 = vmatpush1.msra.mxu0 0.0
        %4618 = vmatprep.subr.mxu0 0.0
        %4619 = vmatpush1.msra.mxu0 0.0
        %4620 = vmatprep.subr.mxu0 0.0
        %4621 = vmatpush1.msra.mxu0 0.0
        %4622 = vmatprep.subr.mxu0 0.0
        %4623 = vmatpush1.msra.mxu0 0.0
        %4624 = vmatprep.subr.mxu0 0.0
        %4625 = vmatpush1.msra.mxu0 0.0
        %4626 = vmatprep.subr.mxu0 0.0
        %4627 = vmatpush1.msra.mxu0 0.0
        %4628 = vmatprep.mubr.f32.mxu0 0.0
        %4629 = vmatmul.mubr.f32.gmra.mrb[0].mxu0 %v4560
        %v4630 = vpop.f32.mrb[0].mxu0
        %v4631 = vadd.f32 0.0, %v4630
        %v4632 = vpop.f32.mrb[0].mxu0
        %4633 = vdwg.mxu0
        %4634 = vrot.lane.b32.xlu0 %v4039, 96
        %v4635 = vpop.permute.xlu0 %4634
        %4636 = vrot.lane.b32.xlu0 %v4041, 96
        %v4637 = vpop.permute.xlu0 %4636
        %v4640 = vsel %vm2294, %v4393, 0
        %v4642 = vsel %vm2347, %v4637, 0
        %4644 = vmatprep.subr.mxu0 0.0
        %4645 = vmatpush1.msra.mxu0 %v4635
        %4646 = vmatprep.subr.mxu0 0.0
        %4647 = vmatpush1.msra.mxu0 %v4642
        %4648 = vmatprep.subr.mxu0 0.0
        %4649 = vmatpush1.msra.mxu0 0.0
        %4650 = vmatprep.subr.mxu0 0.0
        %4651 = vmatpush1.msra.mxu0 0.0
        %4652 = vmatprep.subr.mxu0 0.0
        %4653 = vmatpush1.msra.mxu0 0.0
        %4654 = vmatprep.subr.mxu0 0.0
        %4655 = vmatpush1.msra.mxu0 0.0
        %4656 = vmatprep.subr.mxu0 0.0
        %4657 = vmatpush1.msra.mxu0 0.0
        %4658 = vmatprep.subr.mxu0 0.0
        %4659 = vmatpush1.msra.mxu0 0.0
        %4660 = vmatprep.subr.mxu0 0.0
        %4661 = vmatpush1.msra.mxu0 0.0
        %4662 = vmatprep.subr.mxu0 0.0
        %4663 = vmatpush1.msra.mxu0 0.0
        %4664 = vmatprep.subr.mxu0 0.0
        %4665 = vmatpush1.msra.mxu0 0.0
        %4666 = vmatprep.subr.mxu0 0.0
        %4667 = vmatpush1.msra.mxu0 0.0
        %4668 = vmatprep.subr.mxu0 0.0
        %4669 = vmatpush1.msra.mxu0 0.0
        %4670 = vmatprep.subr.mxu0 0.0
        %4671 = vmatpush1.msra.mxu0 0.0
        %4672 = vmatprep.subr.mxu0 0.0
        %4673 = vmatpush1.msra.mxu0 0.0
        %4674 = vmatprep.subr.mxu0 0.0
        %4675 = vmatpush1.msra.mxu0 0.0
        %4676 = vmatprep.subr.mxu0 0.0
        %4677 = vmatpush1.msra.mxu0 0.0
        %4678 = vmatprep.subr.mxu0 0.0
        %4679 = vmatpush1.msra.mxu0 0.0
        %4680 = vmatprep.subr.mxu0 0.0
        %4681 = vmatpush1.msra.mxu0 0.0
        %4682 = vmatprep.subr.mxu0 0.0
        %4683 = vmatpush1.msra.mxu0 0.0
        %4684 = vmatprep.subr.mxu0 0.0
        %4685 = vmatpush1.msra.mxu0 0.0
        %4686 = vmatprep.subr.mxu0 0.0
        %4687 = vmatpush1.msra.mxu0 0.0
        %4688 = vmatprep.subr.mxu0 0.0
        %4689 = vmatpush1.msra.mxu0 0.0
        %4690 = vmatprep.subr.mxu0 0.0
        %4691 = vmatpush1.msra.mxu0 0.0
        %4692 = vmatprep.subr.mxu0 0.0
        %4693 = vmatpush1.msra.mxu0 0.0
        %4694 = vmatprep.subr.mxu0 0.0
        %4695 = vmatpush1.msra.mxu0 0.0
        %4696 = vmatprep.subr.mxu0 0.0
        %4697 = vmatpush1.msra.mxu0 0.0
        %4698 = vmatprep.subr.mxu0 0.0
        %4699 = vmatpush1.msra.mxu0 0.0
        %4700 = vmatprep.subr.mxu0 0.0
        %4701 = vmatpush1.msra.mxu0 0.0
        %4702 = vmatprep.subr.mxu0 0.0
        %4703 = vmatpush1.msra.mxu0 0.0
        %4704 = vmatprep.subr.mxu0 0.0
        %4705 = vmatpush1.msra.mxu0 0.0
        %4706 = vmatprep.subr.mxu0 0.0
        %4707 = vmatpush1.msra.mxu0 0.0
        %4708 = vmatprep.mubr.f32.mxu0 0.0
        %4709 = vmatmul.mubr.f32.gmra.mrb[0].mxu0 %v4640
        %v4710 = vpop.f32.mrb[0].mxu0
        %v4711 = vadd.f32 0.0, %v4710
        %v4712 = vpop.f32.mrb[0].mxu0
        %4713 = vdwg.mxu0
        %4715 = vrot.lane.b32.xlu0 %v4551, 8
        %v4716 = vpop.permute.xlu0 %4715
        %4719 = vrot.lane.b32.xlu0 %v4631, 16
        %v4720 = vpop.permute.xlu0 %4719
        %4723 = vrot.lane.b32.xlu0 %v4711, 24
        %v4724 = vpop.permute.xlu0 %4723
        %v4726 = vsel %vm1004, %v4471, %v4716
        %v4727 = vsel %vm1672, %v4726, %v4720
        %v4728 = vsel %vm1674, %v4727, %v4724
        %s4729 = scalar_lea.vmem %s14, 32
        %v4730 = vld [vmem:[%s4729] sm:$0xff]
        %v4731 = vld [vmem:[%s4729 + $0x8] sm:$0xff]
        %v4732 = vld [vmem:[%s4729 + $0x10] sm:$0xff]
        %v4733 = vld [vmem:[%s4729 + $0x18] sm:$0xff]
        %s4734 = scalar_lea.vmem %s15, 1
        %v4735 = vld [vmem:[%s4734] sm:$0x1]
        %v4737 = vlaneseq
        %v4738 = vshrl.u32 %v4737, 7
        %v4739 = vsub.s32 0, %v4738
        %v4740 = vrot.slane %v4735, %v4739
        %v4743 = vsel %vm835, %v4728, 0
        %4745 = vmatprep.subr.mxu0 0.0
        %4746 = vmatpush1.msra.mxu0 %v4730
        %4747 = vmatprep.subr.mxu0 0.0
        %4748 = vmatpush1.msra.mxu0 %v4731
        %4749 = vmatprep.subr.mxu0 0.0
        %4750 = vmatpush1.msra.mxu0 %v4732
        %4751 = vmatprep.subr.mxu0 0.0
        %4752 = vmatpush1.msra.mxu0 %v4733
        %4753 = vmatprep.subr.mxu0 0.0
        %4754 = vmatpush1.msra.mxu0 0.0
        %4755 = vmatprep.subr.mxu0 0.0
        %4756 = vmatpush1.msra.mxu0 0.0
        %4757 = vmatprep.subr.mxu0 0.0
        %4758 = vmatpush1.msra.mxu0 0.0
        %4759 = vmatprep.subr.mxu0 0.0
        %4760 = vmatpush1.msra.mxu0 0.0
        %4761 = vmatprep.subr.mxu0 0.0
        %4762 = vmatpush1.msra.mxu0 0.0
        %4763 = vmatprep.subr.mxu0 0.0
        %4764 = vmatpush1.msra.mxu0 0.0
        %4765 = vmatprep.subr.mxu0 0.0
        %4766 = vmatpush1.msra.mxu0 0.0
        %4767 = vmatprep.subr.mxu0 0.0
        %4768 = vmatpush1.msra.mxu0 0.0
        %4769 = vmatprep.subr.mxu0 0.0
        %4770 = vmatpush1.msra.mxu0 0.0
        %4771 = vmatprep.subr.mxu0 0.0
        %4772 = vmatpush1.msra.mxu0 0.0
        %4773 = vmatprep.subr.mxu0 0.0
        %4774 = vmatpush1.msra.mxu0 0.0
        %4775 = vmatprep.subr.mxu0 0.0
        %4776 = vmatpush1.msra.mxu0 0.0
        %4777 = vmatprep.subr.mxu0 0.0
        %4778 = vmatpush1.msra.mxu0 0.0
        %4779 = vmatprep.subr.mxu0 0.0
        %4780 = vmatpush1.msra.mxu0 0.0
        %4781 = vmatprep.subr.mxu0 0.0
        %4782 = vmatpush1.msra.mxu0 0.0
        %4783 = vmatprep.subr.mxu0 0.0
        %4784 = vmatpush1.msra.mxu0 0.0
        %4785 = vmatprep.subr.mxu0 0.0
        %4786 = vmatpush1.msra.mxu0 0.0
        %4787 = vmatprep.subr.mxu0 0.0
        %4788 = vmatpush1.msra.mxu0 0.0
        %4789 = vmatprep.subr.mxu0 0.0
        %4790 = vmatpush1.msra.mxu0 0.0
        %4791 = vmatprep.subr.mxu0 0.0
        %4792 = vmatpush1.msra.mxu0 0.0
        %4793 = vmatprep.subr.mxu0 0.0
        %4794 = vmatpush1.msra.mxu0 0.0
        %4795 = vmatprep.subr.mxu0 0.0
        %4796 = vmatpush1.msra.mxu0 0.0
        %4797 = vmatprep.subr.mxu0 0.0
        %4798 = vmatpush1.msra.mxu0 0.0
        %4799 = vmatprep.subr.mxu0 0.0
        %4800 = vmatpush1.msra.mxu0 0.0
        %4801 = vmatprep.subr.mxu0 0.0
        %4802 = vmatpush1.msra.mxu0 0.0
        %4803 = vmatprep.subr.mxu0 0.0
        %4804 = vmatpush1.msra.mxu0 0.0
        %4805 = vmatprep.subr.mxu0 0.0
        %4806 = vmatpush1.msra.mxu0 0.0
        %4807 = vmatprep.subr.mxu0 0.0
        %4808 = vmatpush1.msra.mxu0 0.0
        %4809 = vmatprep.mubr.f32.mxu0 0.0
        %4810 = vmatmul.mubr.f32.gmra.mrb[0].mxu0 %v4743
        %v4811 = vpop.f32.mrb[0].mxu0
        %v4812 = vadd.f32 %v4740, %v4811
        %v4813 = vpop.f32.mrb[0].mxu0
        %4814 = vdwg.mxu0
        %v4815 = vadd.f32 %v3846, %v4812
        %v4816 = vsel %vm835, %v4815, 0.0
        %4817 = vadd.xlane.f32.xlu0 %v4816
        %v4818 = vpop.xlane.xlu0 %4817
        %v4819 = vmul.f32 %v4818, %v1764
        %v4820 = vsub.f32 %v4815, %v4819
        %v4821 = vmul.f32 %v4820, %v4820
        %v4822 = vsel %vm835, %v4821, 0.0
        %4823 = vadd.xlane.f32.xlu0 %v4822
        %v4824 = vpop.xlane.xlu0 %4823
        %v4825 = vmul.f32 %v4824, %v1764
        %v4826 = vadd.f32 %v4825, 1e-05
        %v4827 = vrsqrt.pop %v4826
        %v4828 = vmul.f32 %v4820, %v4827
        %v4829 = vmul.f32 %v4828, %v3837
        %v4830 = vadd.f32 %v4829, %v3844
        %s4831 = scalar_lea.vmem %s16, 32
        %v4832 = vld [vmem:[%s4831] sm:$0xff]
        %v4833 = vld [vmem:[%s4831 + $0x8] sm:$0xff]
        %v4834 = vld [vmem:[%s4831 + $0x10] sm:$0xff]
        %v4835 = vld [vmem:[%s4831 + $0x18] sm:$0xff]
        %s4836 = scalar_lea.vmem %s17, 1
        %v4837 = vld [vmem:[%s4836] sm:$0x1]
        %v4839 = vlaneseq
        %v4840 = vshrl.u32 %v4839, 7
        %v4841 = vsub.s32 0, %v4840
        %v4842 = vrot.slane %v4837, %v4841
        %v4845 = vsel %vm835, %v4830, 0
        %4847 = vmatprep.subr.mxu0 0.0
        %4848 = vmatpush1.msra.mxu0 %v4832
        %4849 = vmatprep.subr.mxu0 0.0
        %4850 = vmatpush1.msra.mxu0 %v4833
        %4851 = vmatprep.subr.mxu0 0.0
        %4852 = vmatpush1.msra.mxu0 %v4834
        %4853 = vmatprep.subr.mxu0 0.0
        %4854 = vmatpush1.msra.mxu0 %v4835
        %4855 = vmatprep.subr.mxu0 0.0
        %4856 = vmatpush1.msra.mxu0 0.0
        %4857 = vmatprep.subr.mxu0 0.0
        %4858 = vmatpush1.msra.mxu0 0.0
        %4859 = vmatprep.subr.mxu0 0.0
        %4860 = vmatpush1.msra.mxu0 0.0
        %4861 = vmatprep.subr.mxu0 0.0
        %4862 = vmatpush1.msra.mxu0 0.0
        %4863 = vmatprep.subr.mxu0 0.0
        %4864 = vmatpush1.msra.mxu0 0.0
        %4865 = vmatprep.subr.mxu0 0.0
        %4866 = vmatpush1.msra.mxu0 0.0
        %4867 = vmatprep.subr.mxu0 0.0
        %4868 = vmatpush1.msra.mxu0 0.0
        %4869 = vmatprep.subr.mxu0 0.0
        %4870 = vmatpush1.msra.mxu0 0.0
        %4871 = vmatprep.subr.mxu0 0.0
        %4872 = vmatpush1.msra.mxu0 0.0
        %4873 = vmatprep.subr.mxu0 0.0
        %4874 = vmatpush1.msra.mxu0 0.0
        %4875 = vmatprep.subr.mxu0 0.0
        %4876 = vmatpush1.msra.mxu0 0.0
        %4877 = vmatprep.subr.mxu0 0.0
        %4878 = vmatpush1.msra.mxu0 0.0
        %4879 = vmatprep.subr.mxu0 0.0
        %4880 = vmatpush1.msra.mxu0 0.0
        %4881 = vmatprep.subr.mxu0 0.0
        %4882 = vmatpush1.msra.mxu0 0.0
        %4883 = vmatprep.subr.mxu0 0.0
        %4884 = vmatpush1.msra.mxu0 0.0
        %4885 = vmatprep.subr.mxu0 0.0
        %4886 = vmatpush1.msra.mxu0 0.0
        %4887 = vmatprep.subr.mxu0 0.0
        %4888 = vmatpush1.msra.mxu0 0.0
        %4889 = vmatprep.subr.mxu0 0.0
        %4890 = vmatpush1.msra.mxu0 0.0
        %4891 = vmatprep.subr.mxu0 0.0
        %4892 = vmatpush1.msra.mxu0 0.0
        %4893 = vmatprep.subr.mxu0 0.0
        %4894 = vmatpush1.msra.mxu0 0.0
        %4895 = vmatprep.subr.mxu0 0.0
        %4896 = vmatpush1.msra.mxu0 0.0
        %4897 = vmatprep.subr.mxu0 0.0
        %4898 = vmatpush1.msra.mxu0 0.0
        %4899 = vmatprep.subr.mxu0 0.0
        %4900 = vmatpush1.msra.mxu0 0.0
        %4901 = vmatprep.subr.mxu0 0.0
        %4902 = vmatpush1.msra.mxu0 0.0
        %4903 = vmatprep.subr.mxu0 0.0
        %4904 = vmatpush1.msra.mxu0 0.0
        %4905 = vmatprep.subr.mxu0 0.0
        %4906 = vmatpush1.msra.mxu0 0.0
        %4907 = vmatprep.subr.mxu0 0.0
        %4908 = vmatpush1.msra.mxu0 0.0
        %4909 = vmatprep.subr.mxu0 0.0
        %4910 = vmatpush1.msra.mxu0 0.0
        %4911 = vmatprep.mubr.f32.mxu0 0.0
        %4912 = vmatmul.mubr.f32.gmra.mrb[0].mxu0 %v4845
        %v4913 = vpop.f32.mrb[0].mxu0
        %v4914 = vadd.f32 %v4842, %v4913
        %v4915 = vpop.f32.mrb[0].mxu0
        %4916 = vdwg.mxu0
        %v4917 = vmax.f32 %v4914, 0.0
        %s4918 = scalar_lea.vmem %s18, 64
        %v4919 = vld [vmem:[%s4918] sm:$0xff]
        %v4920 = vld [vmem:[%s4918 + $0x8] sm:$0xff]
        %v4921 = vld [vmem:[%s4918 + $0x10] sm:$0xff]
        %v4922 = vld [vmem:[%s4918 + $0x18] sm:$0xff]
        %v4923 = vld [vmem:[%s4918 + $0x20] sm:$0xff]
        %v4924 = vld [vmem:[%s4918 + $0x28] sm:$0xff]
        %v4925 = vld [vmem:[%s4918 + $0x30] sm:$0xff]
        %v4926 = vld [vmem:[%s4918 + $0x38] sm:$0xff]
        %s4927 = scalar_lea.vmem %s19, 1
        %v4928 = vld [vmem:[%s4927] sm:$0x1]
        %v4930 = vlaneseq
        %v4931 = vshrl.u32 %v4930, 7
        %v4932 = vsub.s32 0, %v4931
        %v4933 = vrot.slane %v4928, %v4932
        %v4936 = vsel %vm2875, %v4917, 0
        %4938 = vmatprep.subr.mxu0 0.0
        %4939 = vmatpush1.msra.mxu0 %v4919
        %4940 = vmatprep.subr.mxu0 0.0
        %4941 = vmatpush1.msra.mxu0 %v4920
        %4942 = vmatprep.subr.mxu0 0.0
        %4943 = vmatpush1.msra.mxu0 %v4921
        %4944 = vmatprep.subr.mxu0 0.0
        %4945 = vmatpush1.msra.mxu0 %v4922
        %4946 = vmatprep.subr.mxu0 0.0
        %4947 = vmatpush1.msra.mxu0 %v4923
        %4948 = vmatprep.subr.mxu0 0.0
        %4949 = vmatpush1.msra.mxu0 %v4924
        %4950 = vmatprep.subr.mxu0 0.0
        %4951 = vmatpush1.msra.mxu0 %v4925
        %4952 = vmatprep.subr.mxu0 0.0
        %4953 = vmatpush1.msra.mxu0 %v4926
        %4954 = vmatprep.subr.mxu0 0.0
        %4955 = vmatpush1.msra.mxu0 0.0
        %4956 = vmatprep.subr.mxu0 0.0
        %4957 = vmatpush1.msra.mxu0 0.0
        %4958 = vmatprep.subr.mxu0 0.0
        %4959 = vmatpush1.msra.mxu0 0.0
        %4960 = vmatprep.subr.mxu0 0.0
        %4961 = vmatpush1.msra.mxu0 0.0
        %4962 = vmatprep.subr.mxu0 0.0
        %4963 = vmatpush1.msra.mxu0 0.0
        %4964 = vmatprep.subr.mxu0 0.0
        %4965 = vmatpush1.msra.mxu0 0.0
        %4966 = vmatprep.subr.mxu0 0.0
        %4967 = vmatpush1.msra.mxu0 0.0
        %4968 = vmatprep.subr.mxu0 0.0
        %4969 = vmatpush1.msra.mxu0 0.0
        %4970 = vmatprep.subr.mxu0 0.0
        %4971 = vmatpush1.msra.mxu0 0.0
        %4972 = vmatprep.subr.mxu0 0.0
        %4973 = vmatpush1.msra.mxu0 0.0
        %4974 = vmatprep.subr.mxu0 0.0
        %4975 = vmatpush1.msra.mxu0 0.0
        %4976 = vmatprep.subr.mxu0 0.0
        %4977 = vmatpush1.msra.mxu0 0.0
        %4978 = vmatprep.subr.mxu0 0.0
        %4979 = vmatpush1.msra.mxu0 0.0
        %4980 = vmatprep.subr.mxu0 0.0
        %4981 = vmatpush1.msra.mxu0 0.0
        %4982 = vmatprep.subr.mxu0 0.0
        %4983 = vmatpush1.msra.mxu0 0.0
        %4984 = vmatprep.subr.mxu0 0.0
        %4985 = vmatpush1.msra.mxu0 0.0
        %4986 = vmatprep.subr.mxu0 0.0
        %4987 = vmatpush1.msra.mxu0 0.0
        %4988 = vmatprep.subr.mxu0 0.0
        %4989 = vmatpush1.msra.mxu0 0.0
        %4990 = vmatprep.subr.mxu0 0.0
        %4991 = vmatpush1.msra.mxu0 0.0
        %4992 = vmatprep.subr.mxu0 0.0
        %4993 = vmatpush1.msra.mxu0 0.0
        %4994 = vmatprep.subr.mxu0 0.0
        %4995 = vmatpush1.msra.mxu0 0.0
        %4996 = vmatprep.subr.mxu0 0.0
        %4997 = vmatpush1.msra.mxu0 0.0
        %4998 = vmatprep.subr.mxu0 0.0
        %4999 = vmatpush1.msra.mxu0 0.0
        %5000 = vmatprep.subr.mxu0 0.0
        %5001 = vmatpush1.msra.mxu0 0.0
        %5002 = vmatprep.mubr.f32.mxu0 0.0
        %5003 = vmatmul.mubr.f32.gmra.mrb[0].mxu0 %v4936
        %v5004 = vpop.f32.mrb[0].mxu0
        %v5005 = vadd.f32 %v4933, %v5004
        %v5006 = vpop.f32.mrb[0].mxu0
        %5007 = vdwg.mxu0
        %v5008 = vadd.f32 %v4830, %v5005
        %v5009 = vsel %vm835, %v5008, 0.0
        %5010 = vadd.xlane.f32.xlu0 %v5009
        %v5011 = vpop.xlane.xlu0 %5010
        %v5012 = vmul.f32 %v5011, %v1764
        %v5013 = vsub.f32 %v5008, %v5012
        %v5014 = vmul.f32 %v5013, %v5013
        %v5015 = vsel %vm835, %v5014, 0.0
        %5016 = vadd.xlane.f32.xlu0 %v5015
        %v5017 = vpop.xlane.xlu0 %5016
        %v5018 = vmul.f32 %v5017, %v1764
        %v5019 = vadd.f32 %v5018, 1e-05
        %v5020 = vrsqrt.pop %v5019
        %v5021 = vmul.f32 %v5013, %v5020
        %v5022 = vmul.f32 %v5021, %v3837
        %v5023 = vadd.f32 %v5022, %v3844
        %v5024 = vld [vmem:[%s20] sm:$0xff]
        %v5025 = vld [vmem:[%s20 + $0x8] sm:$0xff]
        %v5026 = vld [vmem:[%s20 + $0x10] sm:$0xff]
        %v5027 = vld [vmem:[%s20 + $0x18] sm:$0xff]
        %v5028 = vld [vmem:[#allocation2] sm:$0x1]
        %v5030 = vlaneseq
        %v5031 = vshrl.u32 %v5030, 7
        %v5032 = vsub.s32 0, %v5031
        %v5033 = vrot.slane %v5028, %v5032
        %v5036 = vsel %vm835, %v5023, 0
        %5038 = vmatprep.subr.mxu0 0.0
        %5039 = vmatpush1.msra.mxu0 %v5024
        %5040 = vmatprep.subr.mxu0 0.0
        %5041 = vmatpush1.msra.mxu0 %v5025
        %5042 = vmatprep.subr.mxu0 0.0
        %5043 = vmatpush1.msra.mxu0 %v5026
        %5044 = vmatprep.subr.mxu0 0.0
        %5045 = vmatpush1.msra.mxu0 %v5027
        %5046 = vmatprep.subr.mxu0 0.0
        %5047 = vmatpush1.msra.mxu0 0.0
        %5048 = vmatprep.subr.mxu0 0.0
        %5049 = vmatpush1.msra.mxu0 0.0
        %5050 = vmatprep.subr.mxu0 0.0
        %5051 = vmatpush1.msra.mxu0 0.0
        %5052 = vmatprep.subr.mxu0 0.0
        %5053 = vmatpush1.msra.mxu0 0.0
        %5054 = vmatprep.subr.mxu0 0.0
        %5055 = vmatpush1.msra.mxu0 0.0
        %5056 = vmatprep.subr.mxu0 0.0
        %5057 = vmatpush1.msra.mxu0 0.0
        %5058 = vmatprep.subr.mxu0 0.0
        %5059 = vmatpush1.msra.mxu0 0.0
        %5060 = vmatprep.subr.mxu0 0.0
        %5061 = vmatpush1.msra.mxu0 0.0
        %5062 = vmatprep.subr.mxu0 0.0
        %5063 = vmatpush1.msra.mxu0 0.0
        %5064 = vmatprep.subr.mxu0 0.0
        %5065 = vmatpush1.msra.mxu0 0.0
        %5066 = vmatprep.subr.mxu0 0.0
        %5067 = vmatpush1.msra.mxu0 0.0
        %5068 = vmatprep.subr.mxu0 0.0
        %5069 = vmatpush1.msra.mxu0 0.0
        %5070 = vmatprep.subr.mxu0 0.0
        %5071 = vmatpush1.msra.mxu0 0.0
        %5072 = vmatprep.subr.mxu0 0.0
        %5073 = vmatpush1.msra.mxu0 0.0
        %5074 = vmatprep.subr.mxu0 0.0
        %5075 = vmatpush1.msra.mxu0 0.0
        %5076 = vmatprep.subr.mxu0 0.0
        %5077 = vmatpush1.msra.mxu0 0.0
        %5078 = vmatprep.subr.mxu0 0.0
        %5079 = vmatpush1.msra.mxu0 0.0
        %5080 = vmatprep.subr.mxu0 0.0
        %5081 = vmatpush1.msra.mxu0 0.0
        %5082 = vmatprep.subr.mxu0 0.0
        %5083 = vmatpush1.msra.mxu0 0.0
        %5084 = vmatprep.subr.mxu0 0.0
        %5085 = vmatpush1.msra.mxu0 0.0
        %5086 = vmatprep.subr.mxu0 0.0
        %5087 = vmatpush1.msra.mxu0 0.0
        %5088 = vmatprep.subr.mxu0 0.0
        %5089 = vmatpush1.msra.mxu0 0.0
        %5090 = vmatprep.subr.mxu0 0.0
        %5091 = vmatpush1.msra.mxu0 0.0
        %5092 = vmatprep.subr.mxu0 0.0
        %5093 = vmatpush1.msra.mxu0 0.0
        %5094 = vmatprep.subr.mxu0 0.0
        %5095 = vmatpush1.msra.mxu0 0.0
        %5096 = vmatprep.subr.mxu0 0.0
        %5097 = vmatpush1.msra.mxu0 0.0
        %5098 = vmatprep.subr.mxu0 0.0
        %5099 = vmatpush1.msra.mxu0 0.0
        %5100 = vmatprep.subr.mxu0 0.0
        %5101 = vmatpush1.msra.mxu0 0.0
        %5102 = vmatprep.mubr.f32.mxu0 0.0
        %5103 = vmatmul.mubr.f32.gmra.mrb[0].mxu0 %v5036
        %v5104 = vpop.f32.mrb[0].mxu0
        %v5105 = vadd.f32 %v5033, %v5104
        %v5106 = vpop.f32.mrb[0].mxu0
        %5107 = vdwg.mxu0
        %vm5108 = vcmask 7168
        %v5109 = vsel %vm5108, %v5105, -inf
        %v5110 = vrot.slane %v5109, 4
        %v5111 = vmax.f32 %v5109, %v5110
        %v5112 = vrot.slane %v5111, 2
        %v5113 = vmax.f32 %v5111, %v5112
        %v5114 = vrot.slane %v5113, 1
        %v5115 = vmax.f32 %v5113, %v5114
        %v5116 = vsub.f32 %v5105, %v5115
        %v5117 = vmul.f32 %v5116, 1.442695
        %v5118 = vpow.pop %v5117
        %v5119 = vsel %vm5108, %v5118, 0.0
        %v5120 = vrot.slane %v5119, 4
        %v5121 = vadd.f32 %v5119, %v5120
        %v5122 = vrot.slane %v5121, 2
        %v5123 = vadd.f32 %v5121, %v5122
        %v5124 = vrot.slane %v5123, 1
        %v5125 = vadd.f32 %v5123, %v5124
        %v5126 = vrcp.pop %v5125
        %v5127 = vmul.f32 %v5118, %v5126
        %5129 = vset.pattern.permute.xlu0 0
        %5130 = vperm.xlu0 %5129, %v5127
        %v5131 = vpop.permute.xlu0 %5130
        %v5133 = vmul.f32 %v5131, %v5023
        %v5134 = vsel %vm835, %v5133, 0.0
        %v5135 = vrot.slane %v5134, 4
        %v5136 = vadd.f32 %v5134, %v5135
        %v5137 = vrot.slane %v5136, 2
        %v5138 = vadd.f32 %v5136, %v5137
        %v5139 = vrot.slane %v5138, 1
        %v5140 = vadd.f32 %v5138, %v5139
        %v5141 = vld [vmem:[%s22] sm:$0xff]
        %v5142 = vld [vmem:[%s22 + $0x8] sm:$0xff]
        %v5143 = vld [vmem:[%s22 + $0x10] sm:$0xff]
        %v5144 = vld [vmem:[%s22 + $0x18] sm:$0xff]
        %v5145 = vld [vmem:[%s22 + $0x20] sm:$0xff]
        %v5146 = vld [vmem:[%s22 + $0x28] sm:$0xff]
        %v5147 = vld [vmem:[%s22 + $0x30] sm:$0xff]
        %v5148 = vld [vmem:[%s22 + $0x38] sm:$0xff]
        %v5149 = vld [vmem:[%s23] sm:$0x3]
        %v5151 = vlaneseq
        %v5152 = vshrl.u32 %v5151, 7
        %v5153 = vsub.s32 0, %v5152
        %v5154 = vrot.slane %v5149, %v5153
        %v5155 = vlaneseq
        %v5156 = vshrl.u32 %v5155, 7
        %v5157 = vsub.s32 1, %v5156
        %v5158 = vrot.slane %v5149, %v5157
        %v5162 = vsel %vm835, %v5140, 0
        %5164 = vmatprep.subr.mxu0 %v5142
        %5165 = vmatpush1.msra.mxu0 %v5141
        %5166 = vmatprep.subr.mxu0 %v5144
        %5167 = vmatpush1.msra.mxu0 %v5143
        %5168 = vmatprep.subr.mxu0 %v5146
        %5169 = vmatpush1.msra.mxu0 %v5145
        %5170 = vmatprep.subr.mxu0 %v5148
        %5171 = vmatpush1.msra.mxu0 %v5147
        %5172 = vmatprep.subr.mxu0 0.0
        %5173 = vmatpush1.msra.mxu0 0.0
        %5174 = vmatprep.subr.mxu0 0.0
        %5175 = vmatpush1.msra.mxu0 0.0
        %5176 = vmatprep.subr.mxu0 0.0
        %5177 = vmatpush1.msra.mxu0 0.0
        %5178 = vmatprep.subr.mxu0 0.0
        %5179 = vmatpush1.msra.mxu0 0.0
        %5180 = vmatprep.subr.mxu0 0.0
        %5181 = vmatpush1.msra.mxu0 0.0
        %5182 = vmatprep.subr.mxu0 0.0
        %5183 = vmatpush1.msra.mxu0 0.0
        %5184 = vmatprep.subr.mxu0 0.0
        %5185 = vmatpush1.msra.mxu0 0.0
        %5186 = vmatprep.subr.mxu0 0.0
        %5187 = vmatpush1.msra.mxu0 0.0
        %5188 = vmatprep.subr.mxu0 0.0
        %5189 = vmatpush1.msra.mxu0 0.0
        %5190 = vmatprep.subr.mxu0 0.0
        %5191 = vmatpush1.msra.mxu0 0.0
        %5192 = vmatprep.subr.mxu0 0.0
        %5193 = vmatpush1.msra.mxu0 0.0
        %5194 = vmatprep.subr.mxu0 0.0
        %5195 = vmatpush1.msra.mxu0 0.0
        %5196 = vmatprep.subr.mxu0 0.0
        %5197 = vmatpush1.msra.mxu0 0.0
        %5198 = vmatprep.subr.mxu0 0.0
        %5199 = vmatpush1.msra.mxu0 0.0
        %5200 = vmatprep.subr.mxu0 0.0
        %5201 = vmatpush1.msra.mxu0 0.0
        %5202 = vmatprep.subr.mxu0 0.0
        %5203 = vmatpush1.msra.mxu0 0.0
        %5204 = vmatprep.subr.mxu0 0.0
        %5205 = vmatpush1.msra.mxu0 0.0
        %5206 = vmatprep.subr.mxu0 0.0
        %5207 = vmatpush1.msra.mxu0 0.0
        %5208 = vmatprep.subr.mxu0 0.0
        %5209 = vmatpush1.msra.mxu0 0.0
        %5210 = vmatprep.subr.mxu0 0.0
        %5211 = vmatpush1.msra.mxu0 0.0
        %5212 = vmatprep.subr.mxu0 0.0
        %5213 = vmatpush1.msra.mxu0 0.0
        %5214 = vmatprep.subr.mxu0 0.0
        %5215 = vmatpush1.msra.mxu0 0.0
        %5216 = vmatprep.subr.mxu0 0.0
        %5217 = vmatpush1.msra.mxu0 0.0
        %5218 = vmatprep.subr.mxu0 0.0
        %5219 = vmatpush1.msra.mxu0 0.0
        %5220 = vmatprep.subr.mxu0 0.0
        %5221 = vmatpush1.msra.mxu0 0.0
        %5222 = vmatprep.subr.mxu0 0.0
        %5223 = vmatpush1.msra.mxu0 0.0
        %5224 = vmatprep.subr.mxu0 0.0
        %5225 = vmatpush1.msra.mxu0 0.0
        %5226 = vmatprep.subr.mxu0 0.0
        %5227 = vmatpush1.msra.mxu0 0.0
        %5228 = vmatprep.mubr.f32.mxu0 0.0
        %5229 = vmatmul.mubr.f32.gmra.mrb[0].mxu0 %v5162
        %v5230 = vpop.f32.mrb[0].mxu0
        %v5231 = vadd.f32 %v5154, %v5230
        %v5232 = vpop.f32.mrb[0].mxu0
        %v5233 = vadd.f32 %v5158, %v5232
        %5234 = vdwg.mxu0
        %v5235 = vmax.f32 %v5231, 0.0
        %v5236 = vmax.f32 %v5233, 0.0
        %v5237 = vld [vmem:[%s24] sm:$0xff]
        %v5238 = vld [vmem:[%s24 + $0x8] sm:$0xff]
        %v5239 = vld [vmem:[%s24 + $0x10] sm:$0xff]
        %v5240 = vld [vmem:[%s24 + $0x18] sm:$0xff]
        %v5241 = vld [vmem:[%s24 + $0x20] sm:$0xff]
        %v5242 = vld [vmem:[%s24 + $0x28] sm:$0xff]
        %v5243 = vld [vmem:[%s24 + $0x30] sm:$0xff]
        %v5244 = vld [vmem:[%s24 + $0x38] sm:$0xff]
        %v5245 = vld [vmem:[%s24 + $0x40] sm:$0xff]
        %v5246 = vld [vmem:[%s24 + $0x48] sm:$0xff]
        %v5247 = vld [vmem:[%s24 + $0x50] sm:$0xff]
        %v5248 = vld [vmem:[%s24 + $0x58] sm:$0xff]
        %v5249 = vld [vmem:[%s24 + $0x60] sm:$0xff]
        %v5250 = vld [vmem:[%s24 + $0x68] sm:$0xff]
        %v5251 = vld [vmem:[%s24 + $0x70] sm:$0xff]
        %v5252 = vld [vmem:[%s24 + $0x78] sm:$0xff]
        %v5253 = vld [vmem:[%s24 + $0x80] sm:$0xff]
        %v5254 = vld [vmem:[%s24 + $0x88] sm:$0xff]
        %v5255 = vld [vmem:[%s24 + $0x90] sm:$0xff]
        %v5256 = vld [vmem:[%s24 + $0x98] sm:$0xff]
        %v5257 = vld [vmem:[%s24 + $0xa0] sm:$0xff]
        %v5258 = vld [vmem:[%s24 + $0xa8] sm:$0xff]
        %v5259 = vld [vmem:[%s24 + $0xb0] sm:$0xff]
        %v5260 = vld [vmem:[%s24 + $0xb8] sm:$0xff]
        %v5261 = vld [vmem:[%s24 + $0xc0] sm:$0xff]
        %v5262 = vld [vmem:[%s24 + $0xc8] sm:$0xff]
        %v5263 = vld [vmem:[%s24 + $0xd0] sm:$0xff]
        %v5264 = vld [vmem:[%s24 + $0xd8] sm:$0xff]
        %v5265 = vld [vmem:[%s24 + $0xe0] sm:$0xff]
        %v5266 = vld [vmem:[%s24 + $0xe8] sm:$0xff]
        %v5267 = vld [vmem:[%s24 + $0xf0] sm:$0xff]
        %v5268 = vld [vmem:[%s24 + $0xf8] sm:$0xff]
        %v5269 = vld [vmem:[%s25] sm:$0x1]
        %5270 = vmatprep.subr.mxu0 0.0
        %5271 = vmatpush1.msra.mxu0 %v5237
        %5272 = vmatprep.subr.mxu0 0.0
        %5273 = vmatpush1.msra.mxu0 %v5238
        %5274 = vmatprep.subr.mxu0 0.0
        %5275 = vmatpush1.msra.mxu0 %v5239
        %5276 = vmatprep.subr.mxu0 0.0
        %5277 = vmatpush1.msra.mxu0 %v5240
        %5278 = vmatprep.subr.mxu0 0.0
        %5279 = vmatpush1.msra.mxu0 %v5241
        %5280 = vmatprep.subr.mxu0 0.0
        %5281 = vmatpush1.msra.mxu0 %v5242
        %5282 = vmatprep.subr.mxu0 0.0
        %5283 = vmatpush1.msra.mxu0 %v5243
        %5284 = vmatprep.subr.mxu0 0.0
        %5285 = vmatpush1.msra.mxu0 %v5244
        %5286 = vmatprep.subr.mxu0 0.0
        %5287 = vmatpush1.msra.mxu0 %v5245
        %5288 = vmatprep.subr.mxu0 0.0
        %5289 = vmatpush1.msra.mxu0 %v5246
        %5290 = vmatprep.subr.mxu0 0.0
        %5291 = vmatpush1.msra.mxu0 %v5247
        %5292 = vmatprep.subr.mxu0 0.0
        %5293 = vmatpush1.msra.mxu0 %v5248
        %5294 = vmatprep.subr.mxu0 0.0
        %5295 = vmatpush1.msra.mxu0 %v5249
        %5296 = vmatprep.subr.mxu0 0.0
        %5297 = vmatpush1.msra.mxu0 %v5250
        %5298 = vmatprep.subr.mxu0 0.0
        %5299 = vmatpush1.msra.mxu0 %v5251
        %5300 = vmatprep.subr.mxu0 0.0
        %5301 = vmatpush1.msra.mxu0 %v5252
        %5302 = vmatprep.subr.mxu0 0.0
        %5303 = vmatpush1.msra.mxu0 %v5253
        %5304 = vmatprep.subr.mxu0 0.0
        %5305 = vmatpush1.msra.mxu0 %v5254
        %5306 = vmatprep.subr.mxu0 0.0
        %5307 = vmatpush1.msra.mxu0 %v5255
        %5308 = vmatprep.subr.mxu0 0.0
        %5309 = vmatpush1.msra.mxu0 %v5256
        %5310 = vmatprep.subr.mxu0 0.0
        %5311 = vmatpush1.msra.mxu0 %v5257
        %5312 = vmatprep.subr.mxu0 0.0
        %5313 = vmatpush1.msra.mxu0 %v5258
        %5314 = vmatprep.subr.mxu0 0.0
        %5315 = vmatpush1.msra.mxu0 %v5259
        %5316 = vmatprep.subr.mxu0 0.0
        %5317 = vmatpush1.msra.mxu0 %v5260
        %5318 = vmatprep.subr.mxu0 0.0
        %5319 = vmatpush1.msra.mxu0 %v5261
        %5320 = vmatprep.subr.mxu0 0.0
        %5321 = vmatpush1.msra.mxu0 %v5262
        %5322 = vmatprep.subr.mxu0 0.0
        %5323 = vmatpush1.msra.mxu0 %v5263
        %5324 = vmatprep.subr.mxu0 0.0
        %5325 = vmatpush1.msra.mxu0 %v5264
        %5326 = vmatprep.subr.mxu0 0.0
        %5327 = vmatpush1.msra.mxu0 %v5265
        %5328 = vmatprep.subr.mxu0 0.0
        %5329 = vmatpush1.msra.mxu0 %v5266
        %5330 = vmatprep.subr.mxu0 0.0
        %5331 = vmatpush1.msra.mxu0 %v5267
        %5332 = vmatprep.subr.mxu0 0.0
        %5333 = vmatpush1.msra.mxu0 %v5268
        %5334 = vmatprep.mubr.f32.mxu0 %v5236
        %5335 = vmatmul.mubr.f32.gmra.mrb[0].mxu0 %v5235
        %v5336 = vpop.f32.mrb[0].mxu0
        %v5337 = vadd.f32 %v5269, %v5336
        %v5338 = vpop.f32.mrb[0].mxu0
        %5339 = vdwg.mxu0
        %vm5340 = vcmask 8192
        %5341 = vst.msk [vmem:[%s811] sm:$0x1] %vm5340, %v5337
        %s5342 = sand.u32 %s607, 1
        %s5343 = scalar_lea.sflag [#allocation5], %s5342
        %s5344 = sand.u32 %s607, 1
        %s5345 = scalar_lea.vmem [#allocation6], %s5344
        // Predicated region
        $region129: #{tpu_custom_call.1} parent=123 // pred_check
          %p5346 = pneg %p617
        $region130: #{tpu_custom_call.1} parent=123 // pred_check_branch
          %5348 = sbr.rel (%p5346) target = $region132
        $region131: #{tpu_custom_call.1} parent=123 // pred_region
          %s5350 = ssub.s32 16, 16
          %5351 = vsyncadd %s5343, %s5350
          %s5352 = smul.addr %s43, 16
          %s5353 = scalar_lea.hbm %s26, %s5352
          %s5355 = sshll.u32 %s5345, 4
          %s5356 = int_to_ptr.vmem [resolvable:$true] %s5355
          %5358 = dma.vmem_to_hbm [thread:$0]  %s5356, 16, %s5353, %s5343
        $region132: #{tpu_custom_call.1} parent=123 // pred_fallthru
          _
      $region124: #{tpu_custom_call.1} parent=5 // pred_fallthru
        _
      %p5359 = scmp.le.s32.totalorder 2, %s38
      // Predicated region
      $region133: #{tpu_custom_call.1} parent=5 // pred_check
        %p5360 = pneg %p5359
      $region134: #{tpu_custom_call.1} parent=5 // pred_check_branch
        %5362 = sbr.rel (%p5360) target = $region136
      $region135: #{tpu_custom_call.1} parent=5 // pred_region
        %s5363 = ssub.s32 %s38, 2
        // Predicated region
        $region137: #{tpu_custom_call.1} parent=135 // pred_check
          %p5364 = pneg %p623
        $region138: #{tpu_custom_call.1} parent=135 // pred_check_branch
          %5366 = sbr.rel (%p5364) target = $region140
        $region139: #{tpu_custom_call.1} parent=135 // pred_region
          %s5367 = sand.u32 %s608, 1
          %s5368 = scalar_lea.sflag [#allocation5], %s5367
          %s5369 = sand.u32 %s608, 1
          %s5370 = scalar_lea.vmem [#allocation6], %s5369
          %5371 = dma.done %s5368, 16
        $region140: #{tpu_custom_call.1} parent=135 // pred_fallthru
          _
      $region136: #{tpu_custom_call.1} parent=5 // pred_fallthru
        _
    $region6: #{tpu_custom_call.1} parent=1 // loop_footer
      %s42 = sadd.s32 1, %s38
    $region7: #{tpu_custom_call.1} parent=1 // loop_footer_branch
      %37 = sbr.rel target = $region3
    $region8: #{tpu_custom_call.1} parent=1 // loop_exit
      _
    %5372 = vsyncpa [#allocation4], 1
    %s5373 = scalar_lea.sflag [#allocation4], 1
    %5374 = vsyncpa %s5373, 1
    %5375 = vsyncpa [#allocation5], 1
    %s5376 = scalar_lea.sflag [#allocation5], 1
    %5377 = vsyncpa %s5376, 1

</llo_original>
